<compile_context>
chip_gen: v6e
topology: v6e:2x2x1
jax: 0.10.0
libtpu: 0.0.40
codegen_flags: <defaults>
</compile_context>

<pallas_src>
import jax
import jax.numpy as jnp
import numpy as np
from jax.experimental import pallas as pl
from jax.experimental.pallas import tpu as pltpu


# ----------------------------------------------------------------------------
# Fused U-Net kernel (one grid step == bt batch elements, full sequence length)
# ----------------------------------------------------------------------------
def _unet_kernel(x_ref,
                 w1_ref, b1_ref,            # conv1 (k=3)
                 w2_ref, b2_ref,            # conv2 (k=3)
                 w3_ref, b3_ref,            # conv3 (k=3)
                 w4_ref, b4_ref,            # conv4 (k=3)
                 wu5_ref, bu5_ref,          # up5 (transposed conv, k=3)
                 w5a_ref, w5b_ref, b5_ref,  # conv5 split: a -> conv3 skip, b -> up5
                 wu6_ref, bu6_ref,          # up6 (k=1)
                 w6_ref, b6_ref,            # conv6 (k=1, unsplit [c2|u6] -> 128)
                 wu7_ref, bu7_ref,          # up7 (k=1)
                 w7_ref, b7_ref,            # conv7 (k=1, unsplit [c1|u7] -> 64)
                 wo_ref, bo_ref,            # output layer (k=1, sigmoid)
                 o_ref):
    f32, bf16 = jnp.float32, jnp.bfloat16
    bt, L, cin = x_ref.shape
    M = bt * L

    # Per-row boundary masks: rows where l == 0 (sequence start) must see a zero
    # "left" neighbour, rows where l == L-1 a zero "right" neighbour.  This also
    # prevents bleed between batch elements folded into one block, and kills the
    # wrap-around of the circular roll.
    row = jax.lax.broadcasted_iota(jnp.int32, (M, 1), 0)
    not_first = (row % L) != 0
    not_last = (row % L) != (L - 1)

    def shift3(a):
        """f32 [M, C] -> (a[l-1], a[l], a[l+1]) with exact zero 'same' padding.

        pltpu.roll is a sublane (XLU) rotation -- no MXU / minimal VPU cost."""
        am1 = jnp.where(not_first, pltpu.roll(a, 1, axis=0), 0.0)
        ap1 = jnp.where(not_last, pltpu.roll(a, M - 1, axis=0), 0.0)  # == shift -1
        return am1, a, ap1

    def taps(trip, w_ref):
        """k=3 conv: sum_k trip[k] @ w[k]; bf16 operands, f32 accumulation."""
        acc = jnp.dot(trip[0].astype(bf16), w_ref[0], preferred_element_type=f32)
        acc = acc + jnp.dot(trip[1].astype(bf16), w_ref[1], preferred_element_type=f32)
        acc = acc + jnp.dot(trip[2].astype(bf16), w_ref[2], preferred_element_type=f32)
        return acc

    def dot1(a, w_ref):
        """k=1 conv as a single matmul (bf16 operands, f32 accumulation)."""
        return jnp.dot(a.astype(bf16), w_ref[...], preferred_element_type=f32)

    relu = lambda v: jnp.maximum(v, 0.0)

    # ---------------- encoder ----------------
    x = x_ref[...].reshape(M, cin).astype(f32)
    c1 = relu(taps(shift3(x), w1_ref) + b1_ref[...])             # [M, 64]
    c2 = relu(taps(shift3(c1), w2_ref) + b2_ref[...])            # [M, 128]
    c3 = relu(taps(shift3(c2), w3_ref) + b3_ref[...])            # [M, 256]
    t3 = shift3(c3)                                              # reused by conv4 & conv5
    c4 = relu(taps(t3, w4_ref) + b4_ref[...])                    # [M, 512]

    # ---------------- decoder ----------------
    u5 = relu(taps(shift3(c4), wu5_ref) + bu5_ref[...])          # [M, 256]
    # conv5 over concat([c3, u5]): split-weight accumulation (each half is
    # already K=256 = full MXU depth, so merging would not save passes).
    c5 = relu(taps(t3, w5a_ref) + taps(shift3(u5), w5b_ref) + b5_ref[...])   # [M, 256]
    u6 = relu(dot1(c5, wu6_ref) + bu6_ref[...])                  # [M, 128]
    # conv6 / conv7: lane-dim concat of the skip and upsampled halves so the
    # layer is one full(er)-depth matmul (K=256 / K=128) instead of two.
    c6 = relu(dot1(jnp.concatenate([c2, u6], axis=1), w6_ref) + b6_ref[...])  # [M, 128]
    u7 = relu(dot1(c6, wu7_ref) + bu7_ref[...])                  # [M, 64]
    c7 = relu(dot1(jnp.concatenate([c1, u7], axis=1), w7_ref) + b7_ref[...])  # [M, 64]

    # Output layer (64 -> cin) + sigmoid. The Cout=2 store is unavoidably narrow,
    # but it is the only activation that ever leaves VMEM.
    out = jax.nn.sigmoid(dot1(c7, wo_ref) + bo_ref[...])         # [M, cin]
    o_ref[...] = out.reshape(bt, L, cin).astype(o_ref.dtype)


def _full_spec(a):
    """Full-array block with a constant index_map -> loaded to VMEM once, resident."""
    return pl.BlockSpec(a.shape, lambda *_: (0,) * a.ndim)


def unet_forward(x_ncl, kp, *, batch_tile=None, row_target=256):
    """x_ncl: [B, Cin, L] (PyTorch layout) -> [B, Cin, L].

    row_target: target matmul rows per grid step (M = bt*L).  256 fills the
    v6e/v7x MXU; on v5e anything >=128 is equivalent (extra rows just serialize).
    """
    B, cin, L = x_ncl.shape
    assert L % 8 == 0, "L must be a multiple of 8 (sublane tile)"

    if batch_tile is None:
        bt = max(1, row_target // L)     # fill MXU rows: M = bt*L ~ row_target
        if B >= 2:
            bt = min(bt, B // 2)         # keep >=2 grid blocks so both v7x TCs get work
        bt = max(1, min(bt, B))
        while B % bt:                    # keep the grid un-ragged
            bt -= 1
    else:
        bt = batch_tile
    assert B % bt == 0
    # Note: M = bt*L is a multiple of 8; multiples of 16 avoid bf16 sublane repacking.

    x_nlc = jnp.transpose(x_ncl, (0, 2, 1))          # NCL -> NLC (tiny boundary op)

    args = [
        x_nlc,
        kp["conv1"][0], kp["conv1"][1],
        kp["conv2"][0], kp["conv2"][1],
        kp["conv3"][0], kp["conv3"][1],
        kp["conv4"][0], kp["conv4"][1],
        kp["up5"][0], kp["up5"][1],
        kp["conv5"][0], kp["conv5"][1], kp["conv5"][2],
        kp["up6"][0], kp["up6"][1],
        kp["conv6"][0], kp["conv6"][1],
        kp["up7"][0], kp["up7"][1],
        kp["conv7"][0], kp["conv7"][1],
        kp["output"][0], kp["output"][1],
    ]
    in_specs = [pl.BlockSpec((bt, L, cin), lambda i: (i, 0, 0))]
    in_specs += [_full_spec(a) for a in args[1:]]

    # Advisory cost estimate so XLA can schedule the boundary ops around the call.
    macs_per_pos = (3 * cin * 64 + 3 * 64 * 128 + 3 * 128 * 256 + 3 * 256 * 512
                    + 3 * 512 * 256 + 3 * 512 * 256          # up5, conv5(both halves)
                    + 256 * 128 + 256 * 128 + 128 * 64 + 128 * 64 + 64 * cin)
    flops = int(2 * B * L * macs_per_pos)
    weight_bytes = int(sum(int(np.prod(a.shape)) * a.dtype.itemsize for a in args[1:]))
    bytes_accessed = int(x_ncl.size * 4 + B * L * cin * 4 + weight_bytes)

    out_nlc = pl.pallas_call(
        _unet_kernel,
        out_shape=jax.ShapeDtypeStruct((B, L, cin), jnp.float32),
        grid_spec=pltpu.PrefetchScalarGridSpec(
            num_scalar_prefetch=0,
            grid=(B // bt,),
            in_specs=in_specs,
            out_specs=pl.BlockSpec((bt, L, cin), lambda i: (i, 0, 0)),
        ),
        compiler_params=pltpu.CompilerParams(
            dimension_semantics=("parallel",),        # batch tiles are independent
            vmem_limit_bytes=48 * 1024 * 1024),       # fits v7x's 64 MiB physical VMEM
        cost_estimate=pl.CostEstimate(
            flops=flops,
            transcendentals=int(B * L * cin),         # final sigmoid
            bytes_accessed=bytes_accessed),
    )(*args)
    # NOTE: for very long sequences, additionally tile L with a (K-1)-row halo.
    return jnp.transpose(out_nlc, (0, 2, 1))         # NLC -> NCL


# ----------------------------------------------------------------------------
# Deterministic parameter init (PyTorch layer shapes) + conversion to kernel form
# ----------------------------------------------------------------------------
def _uniform(key, shape, bound):
    return jax.random.uniform(key, shape, jnp.float32, -bound, bound)


def init_torch_params(key, in_channels=2):
    # (name, kind, cin, cout, k)   kind: "conv" -> Conv1d, "convT" -> ConvTranspose1d
    layer_specs = [
        ("conv1", "conv", in_channels, 64, 3),
        ("conv2", "conv", 64, 128, 3),
        ("conv3", "conv", 128, 256, 3),
        ("conv4", "conv", 256, 512, 3),
        ("up5", "convT", 512, 256, 3),
        ("conv5", "conv", 512, 256, 3),
        ("up6", "convT", 256, 128, 1),
        ("conv6", "conv", 256, 128, 1),
        ("up7", "convT", 128, 64, 1),
        ("conv7", "conv", 128, 64, 1),
        ("output", "conv", 64, in_channels, 1),
    ]
    params = {}
    for name, kind, cin, cout, k in layer_specs:
        key, kw, kb = jax.random.split(key, 3)
        bound = 1.0 / np.sqrt(cin * k)
        if kind == "conv":
            w = _uniform(kw, (cout, cin, k), bound)      # torch Conv1d: [Cout, Cin, K]
        else:
            w = _uniform(kw, (cin, cout, k), bound)      # torch ConvTranspose1d: [Cin, Cout, K]
        b = _uniform(kb, (cout,), bound)
        params[name] = (kind, w, b)
    return params


def to_kernel_params(tp):
    """Torch-shaped weights -> fused-kernel form.

    Conv1d [Cout, Cin, K]            -> [K, Cin, Cout]
    ConvTranspose1d [Cin, Cout, K]   -> flip taps -> [K, Cin, Cout]   (stride 1)
    k=1 layers are squeezed to [Cin, Cout]. conv5's weight is split into the
    [skip | upsampled] channel halves (each half already fills the MXU depth);
    conv6/conv7 stay unsplit and consume the in-kernel lane concat.
    All MXU weights are cast to bfloat16; biases stay f32 as [1, Cout] rows.
    """
    conv_w = lambda w: jnp.transpose(w, (2, 1, 0))
    convT_w = lambda w: jnp.transpose(jnp.flip(w, axis=2), (2, 0, 1))
    bf = lambda a: a.astype(jnp.bfloat16)
    b2 = lambda b: b.reshape(1, -1).astype(jnp.float32)

    kp = {}
    for name in ("conv1", "conv2", "conv3", "conv4"):
        _, w, b = tp[name]
        kp[name] = (bf(conv_w(w)), b2(b))
    _, w, b = tp["up5"]
    kp["up5"] = (bf(convT_w(w)), b2(b))                    # [3, 512, 256]
    _, w, b = tp["conv5"]
    wk = conv_w(w)                                         # [3, 512, 256]
    kp["conv5"] = (bf(wk[:, :256, :]), bf(wk[:, 256:, :]), b2(b))
    _, w, b = tp["up6"]
    kp["up6"] = (bf(convT_w(w)[0]), b2(b))                 # [256, 128]
    _, w, b = tp["conv6"]
    kp["conv6"] = (bf(conv_w(w)[0]), b2(b))                # [256, 128]  (unsplit)
    _, w, b = tp["up7"]
    kp["up7"] = (bf(convT_w(w)[0]), b2(b))                 # [128, 64]
    _, w, b = tp["conv7"]
    kp["conv7"] = (bf(conv_w(w)[0]), b2(b))                # [128, 64]   (unsplit)
    _, w, b = tp["output"]
    kp["output"] = (bf(conv_w(w)[0]), b2(b))               # [64, in_channels]
    return kp


# ----------------------------------------------------------------------------
# Pure-JAX reference (mirrors PyTorch Conv1d / ConvTranspose1d semantics in NCL)
# ----------------------------------------------------------------------------
def _ref_conv(x, w, b, pad):            # w: [Cout, Cin, K]
    y = jax.lax.conv_general_dilated(
        x, w, window_strides=(1,), padding=[(pad, pad)],
        dimension_numbers=("NCH", "OIH", "NCH"))
    return y + b[None, :, None]


def _ref_convT(x, w, b, pad):           # w: [Cin, Cout, K], stride 1
    K = w.shape[2]
    wc = jnp.transpose(jnp.flip(w, axis=2), (1, 0, 2))     # [Cout, Cin, K]
    y = jax.lax.conv_general_dilated(
        x, wc, window_strides=(1,), padding=[(K - 1 - pad, K - 1 - pad)],
        dimension_numbers=("NCH", "OIH", "NCH"))
    return y + b[None, :, None]


def unet_reference(x, tp):
    relu = lambda v: jnp.maximum(v, 0.0)
    c1 = relu(_ref_conv(x, tp["conv1"][1], tp["conv1"][2], 1))
    c2 = relu(_ref_conv(c1, tp["conv2"][1], tp["conv2"][2], 1))
    c3 = relu(_ref_conv(c2, tp["conv3"][1], tp["conv3"][2], 1))
    c4 = relu(_ref_conv(c3, tp["conv4"][1], tp["conv4"][2], 1))
    u5 = relu(_ref_convT(c4, tp["up5"][1], tp["up5"][2], 1))
    c5 = relu(_ref_conv(jnp.concatenate([c3, u5], axis=1), tp["conv5"][1], tp["conv5"][2], 1))
    u6 = relu(_ref_convT(c5, tp["up6"][1], tp["up6"][2], 0))
    c6 = relu(_ref_conv(jnp.concatenate([c2, u6], axis=1), tp["conv6"][1], tp["conv6"][2], 0))
    u7 = relu(_ref_convT(c6, tp["up7"][1], tp["up7"][2], 0))
    c7 = relu(_ref_conv(jnp.concatenate([c1, u7], axis=1), tp["conv7"][1], tp["conv7"][2], 0))
    return jax.nn.sigmoid(_ref_conv(c7, tp["output"][1], tp["output"][2], 0))


def _round_weights_like_kernel(tp):
    """bf16-round all weights so the reference matches the kernel's dtype choices."""
    return {name: (kind, w.astype(jnp.bfloat16).astype(jnp.float32), b)
            for name, (kind, w, b) in tp.items()}


if __name__ == "__main__":
    key = jax.random.PRNGKey(0)
    kx, kparam = jax.random.split(key)

    B, C_IN, L = 2, 2, 16
    x = jax.random.normal(kx, (B, C_IN, L), jnp.float32)        # PyTorch NCL input

    torch_params = init_torch_params(kparam, in_channels=C_IN)
    kernel_params = to_kernel_params(torch_params)

    fwd = jax.jit(unet_forward)
    out = jax.block_until_ready(fwd(x, kernel_params))
    assert out.shape == (B, C_IN, L), out.shape

    # Reference uses the same bf16-rounded weights; the kernel additionally rounds
    # activations to bf16 at MXU inputs (f32 accumulation), hence the tolerance.
    ref = jax.block_until_ready(unet_reference(x, _round_weights_like_kernel(torch_params)))
    np.testing.assert_allclose(np.asarray(out), np.asarray(ref), rtol=3e-2, atol=3e-2)

    print("KERNEL_OK")
</pallas_src>

<mosaic_0001>
module attributes {stable_mosaic.version = 11 : i64} {
  func.func @_unet_kernel(%arg0: i32, %arg1: memref<1x16x2xf32, #tpu.memory_space<vmem>>, %arg2: memref<3x2x64xbf16, #tpu.memory_space<vmem>>, %arg3: memref<1x64xf32, #tpu.memory_space<vmem>>, %arg4: memref<3x64x128xbf16, #tpu.memory_space<vmem>>, %arg5: memref<1x128xf32, #tpu.memory_space<vmem>>, %arg6: memref<3x128x256xbf16, #tpu.memory_space<vmem>>, %arg7: memref<1x256xf32, #tpu.memory_space<vmem>>, %arg8: memref<3x256x512xbf16, #tpu.memory_space<vmem>>, %arg9: memref<1x512xf32, #tpu.memory_space<vmem>>, %arg10: memref<3x512x256xbf16, #tpu.memory_space<vmem>>, %arg11: memref<1x256xf32, #tpu.memory_space<vmem>>, %arg12: memref<3x256x256xbf16, #tpu.memory_space<vmem>>, %arg13: memref<3x256x256xbf16, #tpu.memory_space<vmem>>, %arg14: memref<1x256xf32, #tpu.memory_space<vmem>>, %arg15: memref<256x128xbf16, #tpu.memory_space<vmem>>, %arg16: memref<1x128xf32, #tpu.memory_space<vmem>>, %arg17: memref<256x128xbf16, #tpu.memory_space<vmem>>, %arg18: memref<1x128xf32, #tpu.memory_space<vmem>>, %arg19: memref<128x64xbf16, #tpu.memory_space<vmem>>, %arg20: memref<1x64xf32, #tpu.memory_space<vmem>>, %arg21: memref<128x64xbf16, #tpu.memory_space<vmem>>, %arg22: memref<1x64xf32, #tpu.memory_space<vmem>>, %arg23: memref<64x2xbf16, #tpu.memory_space<vmem>>, %arg24: memref<1x2xf32, #tpu.memory_space<vmem>>, %arg25: memref<1x16x2xf32, #tpu.memory_space<vmem>>) attributes {dimension_semantics = [#tpu.dimension_semantics<parallel>], iteration_bounds = array<i64: 2>, scalar_prefetch = 0 : i64, scratch_operands = 0 : i64, tpu.core_type = #tpu.core_type<tc>, window_params = [{transform_indices = @transform_0, window_bounds = array<i64: 1, 16, 2>}, {pipeline_mode = #tpu.pipeline_mode<synchronous>, transform_indices = @transform_1, window_bounds = array<i64: 3, 2, 64>}, {pipeline_mode = #tpu.pipeline_mode<synchronous>, transform_indices = @transform_2, window_bounds = array<i64: 1, 64>}, {pipeline_mode = #tpu.pipeline_mode<synchronous>, transform_indices = @transform_3, window_bounds = array<i64: 3, 64, 128>}, {pipeline_mode = #tpu.pipeline_mode<synchronous>, transform_indices = @transform_4, window_bounds = array<i64: 1, 128>}, {pipeline_mode = #tpu.pipeline_mode<synchronous>, transform_indices = @transform_5, window_bounds = array<i64: 3, 128, 256>}, {pipeline_mode = #tpu.pipeline_mode<synchronous>, transform_indices = @transform_6, window_bounds = array<i64: 1, 256>}, {pipeline_mode = #tpu.pipeline_mode<synchronous>, transform_indices = @transform_7, window_bounds = array<i64: 3, 256, 512>}, {pipeline_mode = #tpu.pipeline_mode<synchronous>, transform_indices = @transform_8, window_bounds = array<i64: 1, 512>}, {pipeline_mode = #tpu.pipeline_mode<synchronous>, transform_indices = @transform_9, window_bounds = array<i64: 3, 512, 256>}, {pipeline_mode = #tpu.pipeline_mode<synchronous>, transform_indices = @transform_10, window_bounds = array<i64: 1, 256>}, {pipeline_mode = #tpu.pipeline_mode<synchronous>, transform_indices = @transform_11, window_bounds = array<i64: 3, 256, 256>}, {pipeline_mode = #tpu.pipeline_mode<synchronous>, transform_indices = @transform_12, window_bounds = array<i64: 3, 256, 256>}, {pipeline_mode = #tpu.pipeline_mode<synchronous>, transform_indices = @transform_13, window_bounds = array<i64: 1, 256>}, {pipeline_mode = #tpu.pipeline_mode<synchronous>, transform_indices = @transform_14, window_bounds = array<i64: 256, 128>}, {pipeline_mode = #tpu.pipeline_mode<synchronous>, transform_indices = @transform_15, window_bounds = array<i64: 1, 128>}, {pipeline_mode = #tpu.pipeline_mode<synchronous>, transform_indices = @transform_16, window_bounds = array<i64: 256, 128>}, {pipeline_mode = #tpu.pipeline_mode<synchronous>, transform_indices = @transform_17, window_bounds = array<i64: 1, 128>}, {pipeline_mode = #tpu.pipeline_mode<synchronous>, transform_indices = @transform_18, window_bounds = array<i64: 128, 64>}, {pipeline_mode = #tpu.pipeline_mode<synchronous>, transform_indices = @transform_19, window_bounds = array<i64: 1, 64>}, {pipeline_mode = #tpu.pipeline_mode<synchronous>, transform_indices = @transform_20, window_bounds = array<i64: 128, 64>}, {pipeline_mode = #tpu.pipeline_mode<synchronous>, transform_indices = @transform_21, window_bounds = array<i64: 1, 64>}, {pipeline_mode = #tpu.pipeline_mode<synchronous>, transform_indices = @transform_22, window_bounds = array<i64: 64, 2>}, {pipeline_mode = #tpu.pipeline_mode<synchronous>, transform_indices = @transform_23, window_bounds = array<i64: 1, 2>}, {transform_indices = @transform_24, window_bounds = array<i64: 1, 16, 2>}]} {
    %0 = tpu.iota {dimensions = array<i32: 0>} : vector<16x1xi32>
    %c16_i32 = arith.constant 16 : i32
    %c0_i32 = arith.constant 0 : i32
    %1 = arith.cmpi eq, %c16_i32, %c0_i32 : i32
    %c1_i32 = arith.constant 1 : i32
    %2 = arith.select %1, %c1_i32, %c16_i32 : i32
    %3 = vector.broadcast %2 : i32 to vector<16x1xi32>
    %4 = arith.remsi %0, %3 : vector<16x1xi32>
    %c0_i32_0 = arith.constant 0 : i32
    %5 = vector.broadcast %c0_i32_0 : i32 to vector<16x1xi32>
    %6 = arith.cmpi ne, %4, %5 : vector<16x1xi32>
    %c0_i32_1 = arith.constant 0 : i32
    %7 = vector.broadcast %c0_i32_1 : i32 to vector<16x1xi32>
    %8 = arith.cmpi slt, %4, %7 : vector<16x1xi32>
    %c0_i32_2 = arith.constant 0 : i32
    %9 = arith.cmpi slt, %2, %c0_i32_2 : i32
    %10 = vector.broadcast %9 : i1 to vector<16x1xi1>
    %11 = vector.broadcast %10 : vector<16x1xi1> to vector<16x1xi1>
    %12 = arith.xori %8, %11 : vector<16x1xi1>
    %13 = arith.andi %12, %6 : vector<16x1xi1>
    %14 = vector.broadcast %2 : i32 to vector<16x1xi32>
    %15 = arith.addi %4, %14 : vector<16x1xi32>
    %16 = arith.select %13, %15, %4 : vector<16x1xi1>, vector<16x1xi32>
    %c0_i32_3 = arith.constant 0 : i32
    %17 = vector.broadcast %c0_i32_3 : i32 to vector<16x1xi32>
    %18 = arith.cmpi ne, %16, %17 : vector<16x1xi32>
    %c16_i32_4 = arith.constant 16 : i32
    %c0_i32_5 = arith.constant 0 : i32
    %19 = arith.cmpi eq, %c16_i32_4, %c0_i32_5 : i32
    %c1_i32_6 = arith.constant 1 : i32
    %20 = arith.select %19, %c1_i32_6, %c16_i32_4 : i32
    %21 = vector.broadcast %20 : i32 to vector<16x1xi32>
    %22 = arith.remsi %0, %21 : vector<16x1xi32>
    %c0_i32_7 = arith.constant 0 : i32
    %23 = vector.broadcast %c0_i32_7 : i32 to vector<16x1xi32>
    %24 = arith.cmpi ne, %22, %23 : vector<16x1xi32>
    %c0_i32_8 = arith.constant 0 : i32
    %25 = vector.broadcast %c0_i32_8 : i32 to vector<16x1xi32>
    %26 = arith.cmpi slt, %22, %25 : vector<16x1xi32>
    %c0_i32_9 = arith.constant 0 : i32
    %27 = arith.cmpi slt, %20, %c0_i32_9 : i32
    %28 = vector.broadcast %27 : i1 to vector<16x1xi1>
    %29 = vector.broadcast %28 : vector<16x1xi1> to vector<16x1xi1>
    %30 = arith.xori %26, %29 : vector<16x1xi1>
    %31 = arith.andi %30, %24 : vector<16x1xi1>
    %32 = vector.broadcast %20 : i32 to vector<16x1xi32>
    %33 = arith.addi %22, %32 : vector<16x1xi32>
    %34 = arith.select %31, %33, %22 : vector<16x1xi1>, vector<16x1xi32>
    %c15_i32 = arith.constant 15 : i32
    %35 = vector.broadcast %c15_i32 : i32 to vector<16x1xi32>
    %36 = arith.cmpi ne, %34, %35 : vector<16x1xi32>
    %c0 = arith.constant 0 : index
    %c0_10 = arith.constant 0 : index
    %c0_11 = arith.constant 0 : index
    %37 = vector.load %arg1[%c0, %c0_10, %c0_11] : memref<1x16x2xf32, #tpu.memory_space<vmem>>, vector<1x16x2xf32>
    %38 = vector.shape_cast %37 : vector<1x16x2xf32> to vector<16x2xf32>
    %c1_i32_12 = arith.constant 1 : i32
    %39 = tpu.dynamic_rotate %38 by %c1_i32_12 dim 0 : vector<16x2xf32>, i32 -> vector<16x2xf32>
    %cst = arith.constant 0.000000e+00 : f32
    %40 = vector.shape_cast %18 : vector<16x1xi1> to vector<16x1xi1>
    %41 = vector.broadcast %40 : vector<16x1xi1> to vector<16x2xi1>
    %42 = vector.broadcast %cst : f32 to vector<16x2xf32>
    %43 = arith.select %41, %39, %42 : vector<16x2xi1>, vector<16x2xf32>
    %c15_i32_13 = arith.constant 15 : i32
    %44 = tpu.dynamic_rotate %38 by %c15_i32_13 dim 0 : vector<16x2xf32>, i32 -> vector<16x2xf32>
    %cst_14 = arith.constant 0.000000e+00 : f32
    %45 = vector.shape_cast %36 : vector<16x1xi1> to vector<16x1xi1>
    %46 = vector.broadcast %45 : vector<16x1xi1> to vector<16x2xi1>
    %47 = vector.broadcast %cst_14 : f32 to vector<16x2xf32>
    %48 = arith.select %46, %44, %47 : vector<16x2xi1>, vector<16x2xf32>
    %49 = arith.truncf %43 : vector<16x2xf32> to vector<16x2xbf16>
    %c0_15 = arith.constant 0 : index
    %c0_16 = arith.constant 0 : index
    %c0_17 = arith.constant 0 : index
    %50 = vector.load %arg2[%c0_15, %c0_16, %c0_17] : memref<3x2x64xbf16, #tpu.memory_space<vmem>>, vector<1x2x64xbf16>
    %51 = vector.shape_cast %50 : vector<1x2x64xbf16> to vector<2x64xbf16>
    %cst_18 = arith.constant dense<0.000000e+00> : vector<16x64xf32>
    %52 = tpu.matmul %49, %51, %cst_18 {dimension_numbers = #tpu.dot_dimension_numbers<[1], [0], [0], [1], [0, 0, 1, 1], [], []>} : vector<16x2xbf16>, vector<2x64xbf16>, vector<16x64xf32> -> vector<16x64xf32>
    %53 = arith.truncf %38 : vector<16x2xf32> to vector<16x2xbf16>
    %c1 = arith.constant 1 : index
    %c0_19 = arith.constant 0 : index
    %c0_20 = arith.constant 0 : index
    %54 = vector.load %arg2[%c1, %c0_19, %c0_20] : memref<3x2x64xbf16, #tpu.memory_space<vmem>>, vector<1x2x64xbf16>
    %55 = vector.shape_cast %54 : vector<1x2x64xbf16> to vector<2x64xbf16>
    %cst_21 = arith.constant dense<0.000000e+00> : vector<16x64xf32>
    %56 = tpu.matmul %53, %55, %cst_21 {dimension_numbers = #tpu.dot_dimension_numbers<[1], [0], [0], [1], [0, 0, 1, 1], [], []>} : vector<16x2xbf16>, vector<2x64xbf16>, vector<16x64xf32> -> vector<16x64xf32>
    %57 = arith.addf %52, %56 : vector<16x64xf32>
    %58 = arith.truncf %48 : vector<16x2xf32> to vector<16x2xbf16>
    %c2 = arith.constant 2 : index
    %c0_22 = arith.constant 0 : index
    %c0_23 = arith.constant 0 : index
    %59 = vector.load %arg2[%c2, %c0_22, %c0_23] : memref<3x2x64xbf16, #tpu.memory_space<vmem>>, vector<1x2x64xbf16>
    %60 = vector.shape_cast %59 : vector<1x2x64xbf16> to vector<2x64xbf16>
    %cst_24 = arith.constant dense<0.000000e+00> : vector<16x64xf32>
    %61 = tpu.matmul %58, %60, %cst_24 {dimension_numbers = #tpu.dot_dimension_numbers<[1], [0], [0], [1], [0, 0, 1, 1], [], []>} : vector<16x2xbf16>, vector<2x64xbf16>, vector<16x64xf32> -> vector<16x64xf32>
    %62 = arith.addf %57, %61 : vector<16x64xf32>
    %c0_25 = arith.constant 0 : index
    %c0_26 = arith.constant 0 : index
    %63 = vector.load %arg3[%c0_25, %c0_26] : memref<1x64xf32, #tpu.memory_space<vmem>>, vector<1x64xf32>
    %64 = vector.broadcast %63 : vector<1x64xf32> to vector<16x64xf32>
    %65 = arith.addf %62, %64 : vector<16x64xf32>
    %cst_27 = arith.constant 0.000000e+00 : f32
    %66 = vector.broadcast %cst_27 : f32 to vector<16x64xf32>
    %67 = arith.maximumf %65, %66 : vector<16x64xf32>
    %c1_i32_28 = arith.constant 1 : i32
    %68 = tpu.dynamic_rotate %67 by %c1_i32_28 dim 0 : vector<16x64xf32>, i32 -> vector<16x64xf32>
    %cst_29 = arith.constant 0.000000e+00 : f32
    %69 = vector.shape_cast %18 : vector<16x1xi1> to vector<16x1xi1>
    %70 = vector.broadcast %69 : vector<16x1xi1> to vector<16x64xi1>
    %71 = vector.broadcast %cst_29 : f32 to vector<16x64xf32>
    %72 = arith.select %70, %68, %71 : vector<16x64xi1>, vector<16x64xf32>
    %c15_i32_30 = arith.constant 15 : i32
    %73 = tpu.dynamic_rotate %67 by %c15_i32_30 dim 0 : vector<16x64xf32>, i32 -> vector<16x64xf32>
    %cst_31 = arith.constant 0.000000e+00 : f32
    %74 = vector.shape_cast %36 : vector<16x1xi1> to vector<16x1xi1>
    %75 = vector.broadcast %74 : vector<16x1xi1> to vector<16x64xi1>
    %76 = vector.broadcast %cst_31 : f32 to vector<16x64xf32>
    %77 = arith.select %75, %73, %76 : vector<16x64xi1>, vector<16x64xf32>
    %78 = arith.truncf %72 : vector<16x64xf32> to vector<16x64xbf16>
    %c0_32 = arith.constant 0 : index
    %c0_33 = arith.constant 0 : index
    %c0_34 = arith.constant 0 : index
    %79 = vector.load %arg4[%c0_32, %c0_33, %c0_34] : memref<3x64x128xbf16, #tpu.memory_space<vmem>>, vector<1x64x128xbf16>
    %80 = vector.shape_cast %79 : vector<1x64x128xbf16> to vector<64x128xbf16>
    %cst_35 = arith.constant dense<0.000000e+00> : vector<16x128xf32>
    %81 = tpu.matmul %78, %80, %cst_35 {dimension_numbers = #tpu.dot_dimension_numbers<[1], [0], [0], [1], [0, 0, 1, 1], [], []>} : vector<16x64xbf16>, vector<64x128xbf16>, vector<16x128xf32> -> vector<16x128xf32>
    %82 = arith.truncf %67 : vector<16x64xf32> to vector<16x64xbf16>
    %c1_36 = arith.constant 1 : index
    %c0_37 = arith.constant 0 : index
    %c0_38 = arith.constant 0 : index
    %83 = vector.load %arg4[%c1_36, %c0_37, %c0_38] : memref<3x64x128xbf16, #tpu.memory_space<vmem>>, vector<1x64x128xbf16>
    %84 = vector.shape_cast %83 : vector<1x64x128xbf16> to vector<64x128xbf16>
    %cst_39 = arith.constant dense<0.000000e+00> : vector<16x128xf32>
    %85 = tpu.matmul %82, %84, %cst_39 {dimension_numbers = #tpu.dot_dimension_numbers<[1], [0], [0], [1], [0, 0, 1, 1], [], []>} : vector<16x64xbf16>, vector<64x128xbf16>, vector<16x128xf32> -> vector<16x128xf32>
    %86 = arith.addf %81, %85 : vector<16x128xf32>
    %87 = arith.truncf %77 : vector<16x64xf32> to vector<16x64xbf16>
    %c2_40 = arith.constant 2 : index
    %c0_41 = arith.constant 0 : index
    %c0_42 = arith.constant 0 : index
    %88 = vector.load %arg4[%c2_40, %c0_41, %c0_42] : memref<3x64x128xbf16, #tpu.memory_space<vmem>>, vector<1x64x128xbf16>
    %89 = vector.shape_cast %88 : vector<1x64x128xbf16> to vector<64x128xbf16>
    %cst_43 = arith.constant dense<0.000000e+00> : vector<16x128xf32>
    %90 = tpu.matmul %87, %89, %cst_43 {dimension_numbers = #tpu.dot_dimension_numbers<[1], [0], [0], [1], [0, 0, 1, 1], [], []>} : vector<16x64xbf16>, vector<64x128xbf16>, vector<16x128xf32> -> vector<16x128xf32>
    %91 = arith.addf %86, %90 : vector<16x128xf32>
    %c0_44 = arith.constant 0 : index
    %c0_45 = arith.constant 0 : index
    %92 = vector.load %arg5[%c0_44, %c0_45] : memref<1x128xf32, #tpu.memory_space<vmem>>, vector<1x128xf32>
    %93 = vector.broadcast %92 : vector<1x128xf32> to vector<16x128xf32>
    %94 = arith.addf %91, %93 : vector<16x128xf32>
    %cst_46 = arith.constant 0.000000e+00 : f32
    %95 = vector.broadcast %cst_46 : f32 to vector<16x128xf32>
    %96 = arith.maximumf %94, %95 : vector<16x128xf32>
    %c1_i32_47 = arith.constant 1 : i32
    %97 = tpu.dynamic_rotate %96 by %c1_i32_47 dim 0 : vector<16x128xf32>, i32 -> vector<16x128xf32>
    %cst_48 = arith.constant 0.000000e+00 : f32
    %98 = vector.shape_cast %18 : vector<16x1xi1> to vector<16x1xi1>
    %99 = vector.broadcast %98 : vector<16x1xi1> to vector<16x128xi1>
    %100 = vector.broadcast %cst_48 : f32 to vector<16x128xf32>
    %101 = arith.select %99, %97, %100 : vector<16x128xi1>, vector<16x128xf32>
    %c15_i32_49 = arith.constant 15 : i32
    %102 = tpu.dynamic_rotate %96 by %c15_i32_49 dim 0 : vector<16x128xf32>, i32 -> vector<16x128xf32>
    %cst_50 = arith.constant 0.000000e+00 : f32
    %103 = vector.shape_cast %36 : vector<16x1xi1> to vector<16x1xi1>
    %104 = vector.broadcast %103 : vector<16x1xi1> to vector<16x128xi1>
    %105 = vector.broadcast %cst_50 : f32 to vector<16x128xf32>
    %106 = arith.select %104, %102, %105 : vector<16x128xi1>, vector<16x128xf32>
    %107 = arith.truncf %101 : vector<16x128xf32> to vector<16x128xbf16>
    %c0_51 = arith.constant 0 : index
    %c0_52 = arith.constant 0 : index
    %c0_53 = arith.constant 0 : index
    %108 = vector.load %arg6[%c0_51, %c0_52, %c0_53] : memref<3x128x256xbf16, #tpu.memory_space<vmem>>, vector<1x128x256xbf16>
    %109 = vector.shape_cast %108 : vector<1x128x256xbf16> to vector<128x256xbf16>
    %cst_54 = arith.constant dense<0.000000e+00> : vector<16x256xf32>
    %110 = tpu.matmul %107, %109, %cst_54 {dimension_numbers = #tpu.dot_dimension_numbers<[1], [0], [0], [1], [0, 0, 1, 1], [], []>} : vector<16x128xbf16>, vector<128x256xbf16>, vector<16x256xf32> -> vector<16x256xf32>
    %111 = arith.truncf %96 : vector<16x128xf32> to vector<16x128xbf16>
    %c1_55 = arith.constant 1 : index
    %c0_56 = arith.constant 0 : index
    %c0_57 = arith.constant 0 : index
    %112 = vector.load %arg6[%c1_55, %c0_56, %c0_57] : memref<3x128x256xbf16, #tpu.memory_space<vmem>>, vector<1x128x256xbf16>
    %113 = vector.shape_cast %112 : vector<1x128x256xbf16> to vector<128x256xbf16>
    %cst_58 = arith.constant dense<0.000000e+00> : vector<16x256xf32>
    %114 = tpu.matmul %111, %113, %cst_58 {dimension_numbers = #tpu.dot_dimension_numbers<[1], [0], [0], [1], [0, 0, 1, 1], [], []>} : vector<16x128xbf16>, vector<128x256xbf16>, vector<16x256xf32> -> vector<16x256xf32>
    %115 = arith.addf %110, %114 : vector<16x256xf32>
    %116 = arith.truncf %106 : vector<16x128xf32> to vector<16x128xbf16>
    %c2_59 = arith.constant 2 : index
    %c0_60 = arith.constant 0 : index
    %c0_61 = arith.constant 0 : index
    %117 = vector.load %arg6[%c2_59, %c0_60, %c0_61] : memref<3x128x256xbf16, #tpu.memory_space<vmem>>, vector<1x128x256xbf16>
    %118 = vector.shape_cast %117 : vector<1x128x256xbf16> to vector<128x256xbf16>
    %cst_62 = arith.constant dense<0.000000e+00> : vector<16x256xf32>
    %119 = tpu.matmul %116, %118, %cst_62 {dimension_numbers = #tpu.dot_dimension_numbers<[1], [0], [0], [1], [0, 0, 1, 1], [], []>} : vector<16x128xbf16>, vector<128x256xbf16>, vector<16x256xf32> -> vector<16x256xf32>
    %120 = arith.addf %115, %119 : vector<16x256xf32>
    %c0_63 = arith.constant 0 : index
    %c0_64 = arith.constant 0 : index
    %121 = vector.load %arg7[%c0_63, %c0_64] : memref<1x256xf32, #tpu.memory_space<vmem>>, vector<1x256xf32>
    %122 = vector.broadcast %121 : vector<1x256xf32> to vector<16x256xf32>
    %123 = arith.addf %120, %122 : vector<16x256xf32>
    %cst_65 = arith.constant 0.000000e+00 : f32
    %124 = vector.broadcast %cst_65 : f32 to vector<16x256xf32>
    %125 = arith.maximumf %123, %124 : vector<16x256xf32>
    %c1_i32_66 = arith.constant 1 : i32
    %126 = tpu.dynamic_rotate %125 by %c1_i32_66 dim 0 : vector<16x256xf32>, i32 -> vector<16x256xf32>
    %cst_67 = arith.constant 0.000000e+00 : f32
    %127 = vector.shape_cast %18 : vector<16x1xi1> to vector<16x1xi1>
    %128 = vector.broadcast %127 : vector<16x1xi1> to vector<16x256xi1>
    %129 = vector.broadcast %cst_67 : f32 to vector<16x256xf32>
    %130 = arith.select %128, %126, %129 : vector<16x256xi1>, vector<16x256xf32>
    %c15_i32_68 = arith.constant 15 : i32
    %131 = tpu.dynamic_rotate %125 by %c15_i32_68 dim 0 : vector<16x256xf32>, i32 -> vector<16x256xf32>
    %cst_69 = arith.constant 0.000000e+00 : f32
    %132 = vector.shape_cast %36 : vector<16x1xi1> to vector<16x1xi1>
    %133 = vector.broadcast %132 : vector<16x1xi1> to vector<16x256xi1>
    %134 = vector.broadcast %cst_69 : f32 to vector<16x256xf32>
    %135 = arith.select %133, %131, %134 : vector<16x256xi1>, vector<16x256xf32>
    %136 = arith.truncf %130 : vector<16x256xf32> to vector<16x256xbf16>
    %c0_70 = arith.constant 0 : index
    %c0_71 = arith.constant 0 : index
    %c0_72 = arith.constant 0 : index
    %137 = vector.load %arg8[%c0_70, %c0_71, %c0_72] : memref<3x256x512xbf16, #tpu.memory_space<vmem>>, vector<1x256x512xbf16>
    %138 = vector.shape_cast %137 : vector<1x256x512xbf16> to vector<256x512xbf16>
    %cst_73 = arith.constant dense<0.000000e+00> : vector<16x512xf32>
    %139 = tpu.matmul %136, %138, %cst_73 {dimension_numbers = #tpu.dot_dimension_numbers<[1], [0], [0], [1], [0, 0, 1, 1], [], []>} : vector<16x256xbf16>, vector<256x512xbf16>, vector<16x512xf32> -> vector<16x512xf32>
    %140 = arith.truncf %125 : vector<16x256xf32> to vector<16x256xbf16>
    %c1_74 = arith.constant 1 : index
    %c0_75 = arith.constant 0 : index
    %c0_76 = arith.constant 0 : index
    %141 = vector.load %arg8[%c1_74, %c0_75, %c0_76] : memref<3x256x512xbf16, #tpu.memory_space<vmem>>, vector<1x256x512xbf16>
    %142 = vector.shape_cast %141 : vector<1x256x512xbf16> to vector<256x512xbf16>
    %cst_77 = arith.constant dense<0.000000e+00> : vector<16x512xf32>
    %143 = tpu.matmul %140, %142, %cst_77 {dimension_numbers = #tpu.dot_dimension_numbers<[1], [0], [0], [1], [0, 0, 1, 1], [], []>} : vector<16x256xbf16>, vector<256x512xbf16>, vector<16x512xf32> -> vector<16x512xf32>
    %144 = arith.addf %139, %143 : vector<16x512xf32>
    %145 = arith.truncf %135 : vector<16x256xf32> to vector<16x256xbf16>
    %c2_78 = arith.constant 2 : index
    %c0_79 = arith.constant 0 : index
    %c0_80 = arith.constant 0 : index
    %146 = vector.load %arg8[%c2_78, %c0_79, %c0_80] : memref<3x256x512xbf16, #tpu.memory_space<vmem>>, vector<1x256x512xbf16>
    %147 = vector.shape_cast %146 : vector<1x256x512xbf16> to vector<256x512xbf16>
    %cst_81 = arith.constant dense<0.000000e+00> : vector<16x512xf32>
    %148 = tpu.matmul %145, %147, %cst_81 {dimension_numbers = #tpu.dot_dimension_numbers<[1], [0], [0], [1], [0, 0, 1, 1], [], []>} : vector<16x256xbf16>, vector<256x512xbf16>, vector<16x512xf32> -> vector<16x512xf32>
    %149 = arith.addf %144, %148 : vector<16x512xf32>
    %c0_82 = arith.constant 0 : index
    %c0_83 = arith.constant 0 : index
    %150 = vector.load %arg9[%c0_82, %c0_83] : memref<1x512xf32, #tpu.memory_space<vmem>>, vector<1x512xf32>
    %151 = vector.broadcast %150 : vector<1x512xf32> to vector<16x512xf32>
    %152 = arith.addf %149, %151 : vector<16x512xf32>
    %cst_84 = arith.constant 0.000000e+00 : f32
    %153 = vector.broadcast %cst_84 : f32 to vector<16x512xf32>
    %154 = arith.maximumf %152, %153 : vector<16x512xf32>
    %c1_i32_85 = arith.constant 1 : i32
    %155 = tpu.dynamic_rotate %154 by %c1_i32_85 dim 0 : vector<16x512xf32>, i32 -> vector<16x512xf32>
    %cst_86 = arith.constant 0.000000e+00 : f32
    %156 = vector.shape_cast %18 : vector<16x1xi1> to vector<16x1xi1>
    %157 = vector.broadcast %156 : vector<16x1xi1> to vector<16x512xi1>
    %158 = vector.broadcast %cst_86 : f32 to vector<16x512xf32>
    %159 = arith.select %157, %155, %158 : vector<16x512xi1>, vector<16x512xf32>
    %c15_i32_87 = arith.constant 15 : i32
    %160 = tpu.dynamic_rotate %154 by %c15_i32_87 dim 0 : vector<16x512xf32>, i32 -> vector<16x512xf32>
    %cst_88 = arith.constant 0.000000e+00 : f32
    %161 = vector.shape_cast %36 : vector<16x1xi1> to vector<16x1xi1>
    %162 = vector.broadcast %161 : vector<16x1xi1> to vector<16x512xi1>
    %163 = vector.broadcast %cst_88 : f32 to vector<16x512xf32>
    %164 = arith.select %162, %160, %163 : vector<16x512xi1>, vector<16x512xf32>
    %165 = arith.truncf %159 : vector<16x512xf32> to vector<16x512xbf16>
    %c0_89 = arith.constant 0 : index
    %c0_90 = arith.constant 0 : index
    %c0_91 = arith.constant 0 : index
    %166 = vector.load %arg10[%c0_89, %c0_90, %c0_91] : memref<3x512x256xbf16, #tpu.memory_space<vmem>>, vector<1x512x256xbf16>
    %167 = vector.shape_cast %166 : vector<1x512x256xbf16> to vector<512x256xbf16>
    %cst_92 = arith.constant dense<0.000000e+00> : vector<16x256xf32>
    %168 = tpu.matmul %165, %167, %cst_92 {dimension_numbers = #tpu.dot_dimension_numbers<[1], [0], [0], [1], [0, 0, 1, 1], [], []>} : vector<16x512xbf16>, vector<512x256xbf16>, vector<16x256xf32> -> vector<16x256xf32>
    %169 = arith.truncf %154 : vector<16x512xf32> to vector<16x512xbf16>
    %c1_93 = arith.constant 1 : index
    %c0_94 = arith.constant 0 : index
    %c0_95 = arith.constant 0 : index
    %170 = vector.load %arg10[%c1_93, %c0_94, %c0_95] : memref<3x512x256xbf16, #tpu.memory_space<vmem>>, vector<1x512x256xbf16>
    %171 = vector.shape_cast %170 : vector<1x512x256xbf16> to vector<512x256xbf16>
    %cst_96 = arith.constant dense<0.000000e+00> : vector<16x256xf32>
    %172 = tpu.matmul %169, %171, %cst_96 {dimension_numbers = #tpu.dot_dimension_numbers<[1], [0], [0], [1], [0, 0, 1, 1], [], []>} : vector<16x512xbf16>, vector<512x256xbf16>, vector<16x256xf32> -> vector<16x256xf32>
    %173 = arith.addf %168, %172 : vector<16x256xf32>
    %174 = arith.truncf %164 : vector<16x512xf32> to vector<16x512xbf16>
    %c2_97 = arith.constant 2 : index
    %c0_98 = arith.constant 0 : index
    %c0_99 = arith.constant 0 : index
    %175 = vector.load %arg10[%c2_97, %c0_98, %c0_99] : memref<3x512x256xbf16, #tpu.memory_space<vmem>>, vector<1x512x256xbf16>
    %176 = vector.shape_cast %175 : vector<1x512x256xbf16> to vector<512x256xbf16>
    %cst_100 = arith.constant dense<0.000000e+00> : vector<16x256xf32>
    %177 = tpu.matmul %174, %176, %cst_100 {dimension_numbers = #tpu.dot_dimension_numbers<[1], [0], [0], [1], [0, 0, 1, 1], [], []>} : vector<16x512xbf16>, vector<512x256xbf16>, vector<16x256xf32> -> vector<16x256xf32>
    %178 = arith.addf %173, %177 : vector<16x256xf32>
    %c0_101 = arith.constant 0 : index
    %c0_102 = arith.constant 0 : index
    %179 = vector.load %arg11[%c0_101, %c0_102] : memref<1x256xf32, #tpu.memory_space<vmem>>, vector<1x256xf32>
    %180 = vector.broadcast %179 : vector<1x256xf32> to vector<16x256xf32>
    %181 = arith.addf %178, %180 : vector<16x256xf32>
    %cst_103 = arith.constant 0.000000e+00 : f32
    %182 = vector.broadcast %cst_103 : f32 to vector<16x256xf32>
    %183 = arith.maximumf %181, %182 : vector<16x256xf32>
    %184 = arith.truncf %130 : vector<16x256xf32> to vector<16x256xbf16>
    %c0_104 = arith.constant 0 : index
    %c0_105 = arith.constant 0 : index
    %c0_106 = arith.constant 0 : index
    %185 = vector.load %arg12[%c0_104, %c0_105, %c0_106] : memref<3x256x256xbf16, #tpu.memory_space<vmem>>, vector<1x256x256xbf16>
    %186 = vector.shape_cast %185 : vector<1x256x256xbf16> to vector<256x256xbf16>
    %cst_107 = arith.constant dense<0.000000e+00> : vector<16x256xf32>
    %187 = tpu.matmul %184, %186, %cst_107 {dimension_numbers = #tpu.dot_dimension_numbers<[1], [0], [0], [1], [0, 0, 1, 1], [], []>} : vector<16x256xbf16>, vector<256x256xbf16>, vector<16x256xf32> -> vector<16x256xf32>
    %188 = arith.truncf %125 : vector<16x256xf32> to vector<16x256xbf16>
    %c1_108 = arith.constant 1 : index
    %c0_109 = arith.constant 0 : index
    %c0_110 = arith.constant 0 : index
    %189 = vector.load %arg12[%c1_108, %c0_109, %c0_110] : memref<3x256x256xbf16, #tpu.memory_space<vmem>>, vector<1x256x256xbf16>
    %190 = vector.shape_cast %189 : vector<1x256x256xbf16> to vector<256x256xbf16>
    %cst_111 = arith.constant dense<0.000000e+00> : vector<16x256xf32>
    %191 = tpu.matmul %188, %190, %cst_111 {dimension_numbers = #tpu.dot_dimension_numbers<[1], [0], [0], [1], [0, 0, 1, 1], [], []>} : vector<16x256xbf16>, vector<256x256xbf16>, vector<16x256xf32> -> vector<16x256xf32>
    %192 = arith.addf %187, %191 : vector<16x256xf32>
    %193 = arith.truncf %135 : vector<16x256xf32> to vector<16x256xbf16>
    %c2_112 = arith.constant 2 : index
    %c0_113 = arith.constant 0 : index
    %c0_114 = arith.constant 0 : index
    %194 = vector.load %arg12[%c2_112, %c0_113, %c0_114] : memref<3x256x256xbf16, #tpu.memory_space<vmem>>, vector<1x256x256xbf16>
    %195 = vector.shape_cast %194 : vector<1x256x256xbf16> to vector<256x256xbf16>
    %cst_115 = arith.constant dense<0.000000e+00> : vector<16x256xf32>
    %196 = tpu.matmul %193, %195, %cst_115 {dimension_numbers = #tpu.dot_dimension_numbers<[1], [0], [0], [1], [0, 0, 1, 1], [], []>} : vector<16x256xbf16>, vector<256x256xbf16>, vector<16x256xf32> -> vector<16x256xf32>
    %197 = arith.addf %192, %196 : vector<16x256xf32>
    %c1_i32_116 = arith.constant 1 : i32
    %198 = tpu.dynamic_rotate %183 by %c1_i32_116 dim 0 : vector<16x256xf32>, i32 -> vector<16x256xf32>
    %cst_117 = arith.constant 0.000000e+00 : f32
    %199 = vector.shape_cast %18 : vector<16x1xi1> to vector<16x1xi1>
    %200 = vector.broadcast %199 : vector<16x1xi1> to vector<16x256xi1>
    %201 = vector.broadcast %cst_117 : f32 to vector<16x256xf32>
    %202 = arith.select %200, %198, %201 : vector<16x256xi1>, vector<16x256xf32>
    %c15_i32_118 = arith.constant 15 : i32
    %203 = tpu.dynamic_rotate %183 by %c15_i32_118 dim 0 : vector<16x256xf32>, i32 -> vector<16x256xf32>
    %cst_119 = arith.constant 0.000000e+00 : f32
    %204 = vector.shape_cast %36 : vector<16x1xi1> to vector<16x1xi1>
    %205 = vector.broadcast %204 : vector<16x1xi1> to vector<16x256xi1>
    %206 = vector.broadcast %cst_119 : f32 to vector<16x256xf32>
    %207 = arith.select %205, %203, %206 : vector<16x256xi1>, vector<16x256xf32>
    %208 = arith.truncf %202 : vector<16x256xf32> to vector<16x256xbf16>
    %c0_120 = arith.constant 0 : index
    %c0_121 = arith.constant 0 : index
    %c0_122 = arith.constant 0 : index
    %209 = vector.load %arg13[%c0_120, %c0_121, %c0_122] : memref<3x256x256xbf16, #tpu.memory_space<vmem>>, vector<1x256x256xbf16>
    %210 = vector.shape_cast %209 : vector<1x256x256xbf16> to vector<256x256xbf16>
    %cst_123 = arith.constant dense<0.000000e+00> : vector<16x256xf32>
    %211 = tpu.matmul %208, %210, %cst_123 {dimension_numbers = #tpu.dot_dimension_numbers<[1], [0], [0], [1], [0, 0, 1, 1], [], []>} : vector<16x256xbf16>, vector<256x256xbf16>, vector<16x256xf32> -> vector<16x256xf32>
    %212 = arith.truncf %183 : vector<16x256xf32> to vector<16x256xbf16>
    %c1_124 = arith.constant 1 : index
    %c0_125 = arith.constant 0 : index
    %c0_126 = arith.constant 0 : index
    %213 = vector.load %arg13[%c1_124, %c0_125, %c0_126] : memref<3x256x256xbf16, #tpu.memory_space<vmem>>, vector<1x256x256xbf16>
    %214 = vector.shape_cast %213 : vector<1x256x256xbf16> to vector<256x256xbf16>
    %cst_127 = arith.constant dense<0.000000e+00> : vector<16x256xf32>
    %215 = tpu.matmul %212, %214, %cst_127 {dimension_numbers = #tpu.dot_dimension_numbers<[1], [0], [0], [1], [0, 0, 1, 1], [], []>} : vector<16x256xbf16>, vector<256x256xbf16>, vector<16x256xf32> -> vector<16x256xf32>
    %216 = arith.addf %211, %215 : vector<16x256xf32>
    %217 = arith.truncf %207 : vector<16x256xf32> to vector<16x256xbf16>
    %c2_128 = arith.constant 2 : index
    %c0_129 = arith.constant 0 : index
    %c0_130 = arith.constant 0 : index
    %218 = vector.load %arg13[%c2_128, %c0_129, %c0_130] : memref<3x256x256xbf16, #tpu.memory_space<vmem>>, vector<1x256x256xbf16>
    %219 = vector.shape_cast %218 : vector<1x256x256xbf16> to vector<256x256xbf16>
    %cst_131 = arith.constant dense<0.000000e+00> : vector<16x256xf32>
    %220 = tpu.matmul %217, %219, %cst_131 {dimension_numbers = #tpu.dot_dimension_numbers<[1], [0], [0], [1], [0, 0, 1, 1], [], []>} : vector<16x256xbf16>, vector<256x256xbf16>, vector<16x256xf32> -> vector<16x256xf32>
    %221 = arith.addf %216, %220 : vector<16x256xf32>
    %222 = arith.addf %197, %221 : vector<16x256xf32>
    %c0_132 = arith.constant 0 : index
    %c0_133 = arith.constant 0 : index
    %223 = vector.load %arg14[%c0_132, %c0_133] : memref<1x256xf32, #tpu.memory_space<vmem>>, vector<1x256xf32>
    %224 = vector.broadcast %223 : vector<1x256xf32> to vector<16x256xf32>
    %225 = arith.addf %222, %224 : vector<16x256xf32>
    %cst_134 = arith.constant 0.000000e+00 : f32
    %226 = vector.broadcast %cst_134 : f32 to vector<16x256xf32>
    %227 = arith.maximumf %225, %226 : vector<16x256xf32>
    %228 = arith.truncf %227 : vector<16x256xf32> to vector<16x256xbf16>
    %c0_135 = arith.constant 0 : index
    %c0_136 = arith.constant 0 : index
    %229 = vector.load %arg15[%c0_135, %c0_136] : memref<256x128xbf16, #tpu.memory_space<vmem>>, vector<256x128xbf16>
    %cst_137 = arith.constant dense<0.000000e+00> : vector<16x128xf32>
    %230 = tpu.matmul %228, %229, %cst_137 {dimension_numbers = #tpu.dot_dimension_numbers<[1], [0], [0], [1], [0, 0, 1, 1], [], []>} : vector<16x256xbf16>, vector<256x128xbf16>, vector<16x128xf32> -> vector<16x128xf32>
    %c0_138 = arith.constant 0 : index
    %c0_139 = arith.constant 0 : index
    %231 = vector.load %arg16[%c0_138, %c0_139] : memref<1x128xf32, #tpu.memory_space<vmem>>, vector<1x128xf32>
    %232 = vector.broadcast %231 : vector<1x128xf32> to vector<16x128xf32>
    %233 = arith.addf %230, %232 : vector<16x128xf32>
    %cst_140 = arith.constant 0.000000e+00 : f32
    %234 = vector.broadcast %cst_140 : f32 to vector<16x128xf32>
    %235 = arith.maximumf %233, %234 : vector<16x128xf32>
    %236 = tpu.concatenate %96, %235 in 1 : vector<16x128xf32>, vector<16x128xf32> -> vector<16x256xf32>
    %237 = arith.truncf %236 : vector<16x256xf32> to vector<16x256xbf16>
    %c0_141 = arith.constant 0 : index
    %c0_142 = arith.constant 0 : index
    %238 = vector.load %arg17[%c0_141, %c0_142] : memref<256x128xbf16, #tpu.memory_space<vmem>>, vector<256x128xbf16>
    %cst_143 = arith.constant dense<0.000000e+00> : vector<16x128xf32>
    %239 = tpu.matmul %237, %238, %cst_143 {dimension_numbers = #tpu.dot_dimension_numbers<[1], [0], [0], [1], [0, 0, 1, 1], [], []>} : vector<16x256xbf16>, vector<256x128xbf16>, vector<16x128xf32> -> vector<16x128xf32>
    %c0_144 = arith.constant 0 : index
    %c0_145 = arith.constant 0 : index
    %240 = vector.load %arg18[%c0_144, %c0_145] : memref<1x128xf32, #tpu.memory_space<vmem>>, vector<1x128xf32>
    %241 = vector.broadcast %240 : vector<1x128xf32> to vector<16x128xf32>
    %242 = arith.addf %239, %241 : vector<16x128xf32>
    %cst_146 = arith.constant 0.000000e+00 : f32
    %243 = vector.broadcast %cst_146 : f32 to vector<16x128xf32>
    %244 = arith.maximumf %242, %243 : vector<16x128xf32>
    %245 = arith.truncf %244 : vector<16x128xf32> to vector<16x128xbf16>
    %c0_147 = arith.constant 0 : index
    %c0_148 = arith.constant 0 : index
    %246 = vector.load %arg19[%c0_147, %c0_148] : memref<128x64xbf16, #tpu.memory_space<vmem>>, vector<128x64xbf16>
    %cst_149 = arith.constant dense<0.000000e+00> : vector<16x64xf32>
    %247 = tpu.matmul %245, %246, %cst_149 {dimension_numbers = #tpu.dot_dimension_numbers<[1], [0], [0], [1], [0, 0, 1, 1], [], []>} : vector<16x128xbf16>, vector<128x64xbf16>, vector<16x64xf32> -> vector<16x64xf32>
    %c0_150 = arith.constant 0 : index
    %c0_151 = arith.constant 0 : index
    %248 = vector.load %arg20[%c0_150, %c0_151] : memref<1x64xf32, #tpu.memory_space<vmem>>, vector<1x64xf32>
    %249 = vector.broadcast %248 : vector<1x64xf32> to vector<16x64xf32>
    %250 = arith.addf %247, %249 : vector<16x64xf32>
    %cst_152 = arith.constant 0.000000e+00 : f32
    %251 = vector.broadcast %cst_152 : f32 to vector<16x64xf32>
    %252 = arith.maximumf %250, %251 : vector<16x64xf32>
    %253 = tpu.concatenate %67, %252 in 1 : vector<16x64xf32>, vector<16x64xf32> -> vector<16x128xf32>
    %254 = arith.truncf %253 : vector<16x128xf32> to vector<16x128xbf16>
    %c0_153 = arith.constant 0 : index
    %c0_154 = arith.constant 0 : index
    %255 = vector.load %arg21[%c0_153, %c0_154] : memref<128x64xbf16, #tpu.memory_space<vmem>>, vector<128x64xbf16>
    %cst_155 = arith.constant dense<0.000000e+00> : vector<16x64xf32>
    %256 = tpu.matmul %254, %255, %cst_155 {dimension_numbers = #tpu.dot_dimension_numbers<[1], [0], [0], [1], [0, 0, 1, 1], [], []>} : vector<16x128xbf16>, vector<128x64xbf16>, vector<16x64xf32> -> vector<16x64xf32>
    %c0_156 = arith.constant 0 : index
    %c0_157 = arith.constant 0 : index
    %257 = vector.load %arg22[%c0_156, %c0_157] : memref<1x64xf32, #tpu.memory_space<vmem>>, vector<1x64xf32>
    %258 = vector.broadcast %257 : vector<1x64xf32> to vector<16x64xf32>
    %259 = arith.addf %256, %258 : vector<16x64xf32>
    %cst_158 = arith.constant 0.000000e+00 : f32
    %260 = vector.broadcast %cst_158 : f32 to vector<16x64xf32>
    %261 = arith.maximumf %259, %260 : vector<16x64xf32>
    %262 = arith.truncf %261 : vector<16x64xf32> to vector<16x64xbf16>
    %c0_159 = arith.constant 0 : index
    %c0_160 = arith.constant 0 : index
    %263 = vector.load %arg23[%c0_159, %c0_160] : memref<64x2xbf16, #tpu.memory_space<vmem>>, vector<64x2xbf16>
    %cst_161 = arith.constant dense<0.000000e+00> : vector<16x2xf32>
    %264 = tpu.matmul %262, %263, %cst_161 {dimension_numbers = #tpu.dot_dimension_numbers<[1], [0], [0], [1], [0, 0, 1, 1], [], []>} : vector<16x64xbf16>, vector<64x2xbf16>, vector<16x2xf32> -> vector<16x2xf32>
    %c0_162 = arith.constant 0 : index
    %c0_163 = arith.constant 0 : index
    %265 = vector.load %arg24[%c0_162, %c0_163] : memref<1x2xf32, #tpu.memory_space<vmem>>, vector<1x2xf32>
    %266 = vector.broadcast %265 : vector<1x2xf32> to vector<16x2xf32>
    %267 = arith.addf %264, %266 : vector<16x2xf32>
    %268 = arith.negf %267 : vector<16x2xf32>
    %269 = math.exp %268 : vector<16x2xf32>
    %cst_164 = arith.constant 1.000000e+00 : f32
    %270 = vector.broadcast %cst_164 : f32 to vector<16x2xf32>
    %271 = arith.addf %270, %269 : vector<16x2xf32>
    %272 = arith.divf %270, %271 : vector<16x2xf32>
    %273 = vector.shape_cast %272 : vector<16x2xf32> to vector<1x16x2xf32>
    %c0_165 = arith.constant 0 : index
    %c0_166 = arith.constant 0 : index
    %c0_167 = arith.constant 0 : index
    %274 = vector.load %arg25[%c0_165, %c0_166, %c0_167] : memref<1x16x2xf32, #tpu.memory_space<vmem>>, vector<1x16x2xf32>
    tpu.vector_store %arg25[%c0_165, %c0_166, %c0_167], %273 {strides = array<i32>} : memref<1x16x2xf32, #tpu.memory_space<vmem>>, vector<1x16x2xf32>,
    return
  }
  func.func @transform_0(%arg0: i32) -> (i32, i32, i32) {
    %c0_i32 = arith.constant 0 : i32
    %c0_i32_0 = arith.constant 0 : i32
    %c0_i32_1 = arith.constant 0 : i32
    return %arg0, %c0_i32, %c0_i32_0 : i32, i32, i32
  }
  func.func @transform_1(%arg0: i32) -> (i32, i32, i32) {
    %c0_i32 = arith.constant 0 : i32
    %c0_i32_0 = arith.constant 0 : i32
    %c0_i32_1 = arith.constant 0 : i32
    %c0_i32_2 = arith.constant 0 : i32
    return %c0_i32, %c0_i32_0, %c0_i32_1 : i32, i32, i32
  }
  func.func @transform_2(%arg0: i32) -> (i32, i32) {
    %c0_i32 = arith.constant 0 : i32
    %c0_i32_0 = arith.constant 0 : i32
    %c0_i32_1 = arith.constant 0 : i32
    return %c0_i32, %c0_i32_0 : i32, i32
  }
  func.func @transform_3(%arg0: i32) -> (i32, i32, i32) {
    %c0_i32 = arith.constant 0 : i32
    %c0_i32_0 = arith.constant 0 : i32
    %c0_i32_1 = arith.constant 0 : i32
    %c0_i32_2 = arith.constant 0 : i32
    return %c0_i32, %c0_i32_0, %c0_i32_1 : i32, i32, i32
  }
  func.func @transform_4(%arg0: i32) -> (i32, i32) {
    %c0_i32 = arith.constant 0 : i32
    %c0_i32_0 = arith.constant 0 : i32
    %c0_i32_1 = arith.constant 0 : i32
    return %c0_i32, %c0_i32_0 : i32, i32
  }
  func.func @transform_5(%arg0: i32) -> (i32, i32, i32) {
    %c0_i32 = arith.constant 0 : i32
    %c0_i32_0 = arith.constant 0 : i32
    %c0_i32_1 = arith.constant 0 : i32
    %c0_i32_2 = arith.constant 0 : i32
    return %c0_i32, %c0_i32_0, %c0_i32_1 : i32, i32, i32
  }
  func.func @transform_6(%arg0: i32) -> (i32, i32) {
    %c0_i32 = arith.constant 0 : i32
    %c0_i32_0 = arith.constant 0 : i32
    %c0_i32_1 = arith.constant 0 : i32
    return %c0_i32, %c0_i32_0 : i32, i32
  }
  func.func @transform_7(%arg0: i32) -> (i32, i32, i32) {
    %c0_i32 = arith.constant 0 : i32
    %c0_i32_0 = arith.constant 0 : i32
    %c0_i32_1 = arith.constant 0 : i32
    %c0_i32_2 = arith.constant 0 : i32
    return %c0_i32, %c0_i32_0, %c0_i32_1 : i32, i32, i32
  }
  func.func @transform_8(%arg0: i32) -> (i32, i32) {
    %c0_i32 = arith.constant 0 : i32
    %c0_i32_0 = arith.constant 0 : i32
    %c0_i32_1 = arith.constant 0 : i32
    return %c0_i32, %c0_i32_0 : i32, i32
  }
  func.func @transform_9(%arg0: i32) -> (i32, i32, i32) {
    %c0_i32 = arith.constant 0 : i32
    %c0_i32_0 = arith.constant 0 : i32
    %c0_i32_1 = arith.constant 0 : i32
    %c0_i32_2 = arith.constant 0 : i32
    return %c0_i32, %c0_i32_0, %c0_i32_1 : i32, i32, i32
  }
  func.func @transform_10(%arg0: i32) -> (i32, i32) {
    %c0_i32 = arith.constant 0 : i32
    %c0_i32_0 = arith.constant 0 : i32
    %c0_i32_1 = arith.constant 0 : i32
    return %c0_i32, %c0_i32_0 : i32, i32
  }
  func.func @transform_11(%arg0: i32) -> (i32, i32, i32) {
    %c0_i32 = arith.constant 0 : i32
    %c0_i32_0 = arith.constant 0 : i32
    %c0_i32_1 = arith.constant 0 : i32
    %c0_i32_2 = arith.constant 0 : i32
    return %c0_i32, %c0_i32_0, %c0_i32_1 : i32, i32, i32
  }
  func.func @transform_12(%arg0: i32) -> (i32, i32, i32) {
    %c0_i32 = arith.constant 0 : i32
    %c0_i32_0 = arith.constant 0 : i32
    %c0_i32_1 = arith.constant 0 : i32
    %c0_i32_2 = arith.constant 0 : i32
    return %c0_i32, %c0_i32_0, %c0_i32_1 : i32, i32, i32
  }
  func.func @transform_13(%arg0: i32) -> (i32, i32) {
    %c0_i32 = arith.constant 0 : i32
    %c0_i32_0 = arith.constant 0 : i32
    %c0_i32_1 = arith.constant 0 : i32
    return %c0_i32, %c0_i32_0 : i32, i32
  }
  func.func @transform_14(%arg0: i32) -> (i32, i32) {
    %c0_i32 = arith.constant 0 : i32
    %c0_i32_0 = arith.constant 0 : i32
    %c0_i32_1 = arith.constant 0 : i32
    return %c0_i32, %c0_i32_0 : i32, i32
  }
  func.func @transform_15(%arg0: i32) -> (i32, i32) {
    %c0_i32 = arith.constant 0 : i32
    %c0_i32_0 = arith.constant 0 : i32
    %c0_i32_1 = arith.constant 0 : i32
    return %c0_i32, %c0_i32_0 : i32, i32
  }
  func.func @transform_16(%arg0: i32) -> (i32, i32) {
    %c0_i32 = arith.constant 0 : i32
    %c0_i32_0 = arith.constant 0 : i32
    %c0_i32_1 = arith.constant 0 : i32
    return %c0_i32, %c0_i32_0 : i32, i32
  }
  func.func @transform_17(%arg0: i32) -> (i32, i32) {
    %c0_i32 = arith.constant 0 : i32
    %c0_i32_0 = arith.constant 0 : i32
    %c0_i32_1 = arith.constant 0 : i32
    return %c0_i32, %c0_i32_0 : i32, i32
  }
  func.func @transform_18(%arg0: i32) -> (i32, i32) {
    %c0_i32 = arith.constant 0 : i32
    %c0_i32_0 = arith.constant 0 : i32
    %c0_i32_1 = arith.constant 0 : i32
    return %c0_i32, %c0_i32_0 : i32, i32
  }
  func.func @transform_19(%arg0: i32) -> (i32, i32) {
    %c0_i32 = arith.constant 0 : i32
    %c0_i32_0 = arith.constant 0 : i32
    %c0_i32_1 = arith.constant 0 : i32
    return %c0_i32, %c0_i32_0 : i32, i32
  }
  func.func @transform_20(%arg0: i32) -> (i32, i32) {
    %c0_i32 = arith.constant 0 : i32
    %c0_i32_0 = arith.constant 0 : i32
    %c0_i32_1 = arith.constant 0 : i32
    return %c0_i32, %c0_i32_0 : i32, i32
  }
  func.func @transform_21(%arg0: i32) -> (i32, i32) {
    %c0_i32 = arith.constant 0 : i32
    %c0_i32_0 = arith.constant 0 : i32
    %c0_i32_1 = arith.constant 0 : i32
    return %c0_i32, %c0_i32_0 : i32, i32
  }
  func.func @transform_22(%arg0: i32) -> (i32, i32) {
    %c0_i32 = arith.constant 0 : i32
    %c0_i32_0 = arith.constant 0 : i32
    %c0_i32_1 = arith.constant 0 : i32
    return %c0_i32, %c0_i32_0 : i32, i32
  }
  func.func @transform_23(%arg0: i32) -> (i32, i32) {
    %c0_i32 = arith.constant 0 : i32
    %c0_i32_0 = arith.constant 0 : i32
    %c0_i32_1 = arith.constant 0 : i32
    return %c0_i32, %c0_i32_0 : i32, i32
  }
  func.func @transform_24(%arg0: i32) -> (i32, i32, i32) {
    %c0_i32 = arith.constant 0 : i32
    %c0_i32_0 = arith.constant 0 : i32
    %c0_i32_1 = arith.constant 0 : i32
    return %arg0, %c0_i32, %c0_i32_0 : i32, i32, i32
  }
}

</mosaic_0001>

<llo_original>
// kernel: unet_forward.1
$region0: #{unet_forward.1}
  #allocation0 [shape = 'u32[]', space=smem, size = 0x4, offset = 0x4, fixed_abs, tag = 'smem constant byte address 0x4 - core index']
  #allocation1 [shape = 'u32[144,128]{1,0:T(1,128)}', space=vmem, size = 0x12000, scoped, tag = 'internal scratch']
  %s0 = inlined_call_operand.vmem [shape: f32[2,16,2], index: 0, kind: input, shape index: {}]
  %s1 = inlined_call_operand.hbm [shape: bf16[3,2,64], index: 1, kind: input, shape index: {}]
  %s2 = inlined_call_operand.hbm [shape: f32[1,64], index: 2, kind: input, shape index: {}]
  %s3 = inlined_call_operand.hbm [shape: bf16[3,64,128], index: 3, kind: input, shape index: {}]
  %s4 = inlined_call_operand.hbm [shape: f32[1,128], index: 4, kind: input, shape index: {}]
  %s5 = inlined_call_operand.hbm [shape: bf16[3,128,256], index: 5, kind: input, shape index: {}]
  %s6 = inlined_call_operand.hbm [shape: f32[1,256], index: 6, kind: input, shape index: {}]
  %s7 = inlined_call_operand.hbm [shape: bf16[3,256,512], index: 7, kind: input, shape index: {}]
  %s8 = inlined_call_operand.hbm [shape: f32[1,512], index: 8, kind: input, shape index: {}]
  %s9 = inlined_call_operand.hbm [shape: bf16[3,512,256], index: 9, kind: input, shape index: {}]
  %s10 = inlined_call_operand.vmem [shape: f32[1,256], index: 10, kind: input, shape index: {}]
  %s11 = inlined_call_operand.hbm [shape: bf16[3,256,256], index: 11, kind: input, shape index: {}]
  %s12 = inlined_call_operand.hbm [shape: bf16[3,256,256], index: 12, kind: input, shape index: {}]
  %s13 = inlined_call_operand.hbm [shape: f32[1,256], index: 13, kind: input, shape index: {}]
  %s14 = inlined_call_operand.vmem [shape: bf16[256,128], index: 14, kind: input, shape index: {}]
  %s15 = inlined_call_operand.vmem [shape: f32[1,128], index: 15, kind: input, shape index: {}]
  %s16 = inlined_call_operand.vmem [shape: bf16[256,128], index: 16, kind: input, shape index: {}]
  %s17 = inlined_call_operand.hbm [shape: f32[1,128], index: 17, kind: input, shape index: {}]
  %s18 = inlined_call_operand.vmem [shape: bf16[128,64], index: 18, kind: input, shape index: {}]
  %s19 = inlined_call_operand.vmem [shape: f32[1,64], index: 19, kind: input, shape index: {}]
  %s20 = inlined_call_operand.vmem [shape: bf16[128,64], index: 20, kind: input, shape index: {}]
  %s21 = inlined_call_operand.hbm [shape: f32[1,64], index: 21, kind: input, shape index: {}]
  %s22 = inlined_call_operand.vmem [shape: bf16[64,2], index: 22, kind: input, shape index: {}]
  %s23 = inlined_call_operand.hbm [shape: f32[1,2], index: 23, kind: input, shape index: {}]
  %s24 = inlined_call_operand.vmem [shape: f32[2,16,2], index: 24, kind: output, shape index: {}]
  %s25 = sld [smem:[#allocation0]]
  $region189: #{unet_forward.1} parent=0
    _
  %s27 = ssub.s32 1, %s25
  %s28 = scalar_select 0, %s27, %s25
  $region1: #{unet_forward.1} parent=0
    #allocation2 [shape = 'u8[1536]{0}', space=vmem, size = 0x800, scoped, tag = 'input window, operand 1, single buffered']
    #allocation3 [shape = 's32[2]{0}', space=sflag, size = 0x8, scoped, tag = 'scoped memory for unet_forward.1']
    #allocation4 [shape = 'u8[512]{0}', space=vmem, size = 0x400, scoped, tag = 'input window, operand 2, single buffered']
    #allocation5 [shape = 's32[1]{0}', space=sflag, size = 0x4, scoped, tag = 'scoped memory for unet_forward.1']
    #allocation6 [shape = 'u8[49152]{0}', space=vmem, size = 0xc000, scoped, tag = 'input window, operand 3, single buffered']
    #allocation7 [shape = 'u8[512]{0}', space=vmem, size = 0x400, scoped, tag = 'input window, operand 4, single buffered']
    #allocation8 [shape = 's32[1]{0}', space=sflag, size = 0x4, scoped, tag = 'scoped memory for unet_forward.1']
    #allocation9 [shape = 'u8[196608]{0}', space=vmem, size = 0x30000, scoped, tag = 'input window, operand 5, single buffered']
    #allocation10 [shape = 'u8[1024]{0}', space=vmem, size = 0x400, scoped, tag = 'input window, operand 6, single buffered']
    #allocation11 [shape = 's32[1]{0}', space=sflag, size = 0x4, scoped, tag = 'scoped memory for unet_forward.1']
    #allocation12 [shape = 'u8[786432]{0}', space=vmem, size = 0xc0000, scoped, tag = 'input window, operand 7, single buffered']
    #allocation13 [shape = 'u8[2048]{0}', space=vmem, size = 0x800, scoped, tag = 'input window, operand 8, single buffered']
    #allocation14 [shape = 's32[1]{0}', space=sflag, size = 0x4, scoped, tag = 'scoped memory for unet_forward.1']
    #allocation15 [shape = 'u8[786432]{0}', space=vmem, size = 0xc0000, scoped, tag = 'input window, operand 9, single buffered']
    #allocation16 [shape = 'u8[393216]{0}', space=vmem, size = 0x60000, scoped, tag = 'input window, operand 11, single buffered']
    #allocation17 [shape = 's32[1]{0}', space=sflag, size = 0x4, scoped, tag = 'scoped memory for unet_forward.1']
    #allocation18 [shape = 'u8[393216]{0}', space=vmem, size = 0x60000, scoped, tag = 'input window, operand 12, single buffered']
    #allocation19 [shape = 'u8[1024]{0}', space=vmem, size = 0x400, scoped, tag = 'input window, operand 13, single buffered']
    #allocation20 [shape = 's32[1]{0}', space=sflag, size = 0x4, scoped, tag = 'scoped memory for unet_forward.1']
    #allocation21 [shape = 'u8[512]{0}', space=vmem, size = 0x400, scoped, tag = 'input window, operand 17, single buffered']
    #allocation22 [shape = 'u8[512]{0}', space=vmem, size = 0x400, scoped, tag = 'input window, operand 21, single buffered']
    #allocation23 [shape = 's32[1]{0}', space=sflag, size = 0x4, scoped, tag = 'scoped memory for unet_forward.1']
    #allocation24 [shape = 'u8[512]{0}', space=vmem, size = 0x400, scoped, tag = 'input window, operand 23, single buffered']
    %29 = vsyncpa [#allocation3], 0
    %30 = vsyncpa [#allocation5], 0
    %31 = vsyncpa [#allocation8], 0
    %32 = vsyncpa [#allocation11], 0
    %33 = vsyncpa [#allocation14], 0
    %34 = vsyncpa [#allocation17], 0
    %35 = vsyncpa [#allocation20], 0
    %36 = vsyncpa [#allocation23], 0
    loop: start=0, step=1, limit=4
    $region2: #{unet_forward.1} parent=1 // loop_pre_header
      _
    $region3: #{unet_forward.1} parent=1 // loop_header
      %s38 = sphi 0, %s42
      %p39 = scmp.ge.s32.totalorder %s38, 4
      %s48 = sphi 0, %s50
      %s51 = sphi 0, %s48
      %s52 = sphi 0, %s51
      %s68 = sphi 0, %s52
      %s72 = sphi 0, %s72
      %s74 = sphi 0, %s72
      %s75 = sphi 0, %s74
      %s89 = sphi 0, %s75
      %s93 = sphi 0, %s93
      %s95 = sphi 0, %s93
      %s96 = sphi 0, %s95
      %s110 = sphi 0, %s96
      %s114 = sphi 0, %s114
      %s116 = sphi 0, %s114
      %s117 = sphi 0, %s116
      %s131 = sphi 0, %s117
      %s135 = sphi 0, %s135
      %s137 = sphi 0, %s135
      %s138 = sphi 0, %s137
      %s152 = sphi 0, %s138
      %s156 = sphi 0, %s156
      %s158 = sphi 0, %s156
      %s159 = sphi 0, %s158
      %s173 = sphi 0, %s159
      %s177 = sphi 0, %s177
      %s179 = sphi 0, %s177
      %s180 = sphi 0, %s179
      %s194 = sphi 0, %s180
      %s198 = sphi 0, %s198
      %s200 = sphi 0, %s198
      %s201 = sphi 0, %s200
      %s215 = sphi 0, %s201
      %s219 = sphi 0, %s219
      %s221 = sphi 0, %s219
      %s222 = sphi 0, %s221
      %s236 = sphi 0, %s222
      %s240 = sphi 0, %s240
      %s242 = sphi 0, %s240
      %s243 = sphi 0, %s242
      %s257 = sphi 0, %s243
      %s261 = sphi 0, %s261
      %s263 = sphi 0, %s261
      %s264 = sphi 0, %s263
      %s278 = sphi 0, %s264
      %s282 = sphi 0, %s282
      %s284 = sphi 0, %s282
      %s285 = sphi 0, %s284
      %s299 = sphi 0, %s285
      %s303 = sphi 0, %s303
      %s305 = sphi 0, %s303
      %s306 = sphi 0, %s305
      %s320 = sphi 0, %s306
      %s324 = sphi 0, %s324
      %s326 = sphi 0, %s324
      %s327 = sphi 0, %s326
      %s341 = sphi 0, %s327
      %s345 = sphi 0, %s345
      %s347 = sphi 0, %s345
      %s348 = sphi 0, %s347
      %s362 = sphi 0, %s348
      %s366 = sphi 0, %s366
      %s368 = sphi 0, %s366
      %s369 = sphi 0, %s368
      %s383 = sphi 0, %s369
      %s387 = sphi 0, %s387
      %s389 = sphi 0, %s387
      %s390 = sphi 0, %s389
      %s404 = sphi 0, %s390
      %s408 = sphi 0, %s408
      %s410 = sphi 0, %s408
      %s411 = sphi 0, %s410
      %s425 = sphi 0, %s411
      %s429 = sphi 0, %s429
      %s431 = sphi 0, %s429
      %s432 = sphi 0, %s431
      %s446 = sphi 0, %s432
      %s450 = sphi 0, %s450
      %s452 = sphi 0, %s450
      %s453 = sphi 0, %s452
      %s467 = sphi 0, %s453
      %s471 = sphi 0, %s471
      %s473 = sphi 0, %s471
      %s474 = sphi 0, %s473
      %s488 = sphi 0, %s474
      %s492 = sphi 0, %s492
      %s494 = sphi 0, %s492
      %s495 = sphi 0, %s494
      %s509 = sphi 0, %s495
      %s513 = sphi 0, %s513
      %s515 = sphi 0, %s513
      %s516 = sphi 0, %s515
      %s530 = sphi 0, %s516
      %s534 = sphi 0, %s534
      %s536 = sphi 0, %s534
      %s537 = sphi 0, %s536
      %s551 = sphi 0, %s537
      %s557 = sphi 0, %s559
      %s560 = sphi 0, %s557
      %s561 = sphi 0, %s560
      %s577 = sphi 0, %s561
    $region4: #{unet_forward.1} parent=1 // loop_header_branch
      %41 = sbr.rel (%p39) target = $region8
    $region5: #{unet_forward.1} parent=1 // loop_body
      %s43 = ssub.s32 %s38, 1
      %s44 = ssub.s32 %s38, 2
      %s45 = sadd.s32 %s38, 1
      %s46 = ssub.s32 %s38, %s45
      %p47 = scmp.eq.s32.totalorder %s46, 0
      %s49 = sadd.s32 %s48, 1
      %s50 = scalar_select %p47, %s48, %s49
      %p53 = pneg %p47
      %p54 = scmp.eq.s32.totalorder %s38, 1
      %p55 = por %p53, %p54
      %p56 = scmp.ne.s32.totalorder %s48, %s51
      %p57 = scmp.eq.s32.totalorder %s38, 0
      %p58 = por %p56, %p57
      %p59 = scmp.ne.s32.totalorder %s48, %s51
      %p60 = scmp.eq.s32.totalorder %s43, 1
      %p61 = por %p59, %p60
      %p62 = scmp.ne.s32.totalorder %s51, %s52
      %p63 = scmp.eq.s32.totalorder %s43, 0
      %p64 = por %p62, %p63
      %p65 = scmp.ne.s32.totalorder %s51, %s52
      %p66 = scmp.eq.s32.totalorder %s44, 1
      %p67 = por %p65, %p66
      %p69 = scmp.ne.s32.totalorder %s52, %s68
      %p70 = scmp.eq.s32.totalorder %s44, 0
      %p71 = por %p69, %p70
      %s73 = sadd.s32 %s72, 1
      %p76 = scmp.eq.s32.totalorder %s38, 1
      %p77 = scmp.ne.s32.totalorder %s72, %s74
      %p78 = scmp.eq.s32.totalorder %s38, 0
      %p79 = por %p77, %p78
      %p80 = scmp.ne.s32.totalorder %s72, %s74
      %p81 = scmp.eq.s32.totalorder %s43, 1
      %p82 = por %p80, %p81
      %p83 = scmp.ne.s32.totalorder %s74, %s75
      %p84 = scmp.eq.s32.totalorder %s43, 0
      %p85 = por %p83, %p84
      %p86 = scmp.ne.s32.totalorder %s74, %s75
      %p87 = scmp.eq.s32.totalorder %s44, 1
      %p88 = por %p86, %p87
      %p90 = scmp.ne.s32.totalorder %s75, %s89
      %p91 = scmp.eq.s32.totalorder %s44, 0
      %p92 = por %p90, %p91
      %s94 = sadd.s32 %s93, 1
      %p97 = scmp.eq.s32.totalorder %s38, 1
      %p98 = scmp.ne.s32.totalorder %s93, %s95
      %p99 = scmp.eq.s32.totalorder %s38, 0
      %p100 = por %p98, %p99
      %p101 = scmp.ne.s32.totalorder %s93, %s95
      %p102 = scmp.eq.s32.totalorder %s43, 1
      %p103 = por %p101, %p102
      %p104 = scmp.ne.s32.totalorder %s95, %s96
      %p105 = scmp.eq.s32.totalorder %s43, 0
      %p106 = por %p104, %p105
      %p107 = scmp.ne.s32.totalorder %s95, %s96
      %p108 = scmp.eq.s32.totalorder %s44, 1
      %p109 = por %p107, %p108
      %p111 = scmp.ne.s32.totalorder %s96, %s110
      %p112 = scmp.eq.s32.totalorder %s44, 0
      %p113 = por %p111, %p112
      %s115 = sadd.s32 %s114, 1
      %p118 = scmp.eq.s32.totalorder %s38, 1
      %p119 = scmp.ne.s32.totalorder %s114, %s116
      %p120 = scmp.eq.s32.totalorder %s38, 0
      %p121 = por %p119, %p120
      %p122 = scmp.ne.s32.totalorder %s114, %s116
      %p123 = scmp.eq.s32.totalorder %s43, 1
      %p124 = por %p122, %p123
      %p125 = scmp.ne.s32.totalorder %s116, %s117
      %p126 = scmp.eq.s32.totalorder %s43, 0
      %p127 = por %p125, %p126
      %p128 = scmp.ne.s32.totalorder %s116, %s117
      %p129 = scmp.eq.s32.totalorder %s44, 1
      %p130 = por %p128, %p129
      %p132 = scmp.ne.s32.totalorder %s117, %s131
      %p133 = scmp.eq.s32.totalorder %s44, 0
      %p134 = por %p132, %p133
      %s136 = sadd.s32 %s135, 1
      %p139 = scmp.eq.s32.totalorder %s38, 1
      %p140 = scmp.ne.s32.totalorder %s135, %s137
      %p141 = scmp.eq.s32.totalorder %s38, 0
      %p142 = por %p140, %p141
      %p143 = scmp.ne.s32.totalorder %s135, %s137
      %p144 = scmp.eq.s32.totalorder %s43, 1
      %p145 = por %p143, %p144
      %p146 = scmp.ne.s32.totalorder %s137, %s138
      %p147 = scmp.eq.s32.totalorder %s43, 0
      %p148 = por %p146, %p147
      %p149 = scmp.ne.s32.totalorder %s137, %s138
      %p150 = scmp.eq.s32.totalorder %s44, 1
      %p151 = por %p149, %p150
      %p153 = scmp.ne.s32.totalorder %s138, %s152
      %p154 = scmp.eq.s32.totalorder %s44, 0
      %p155 = por %p153, %p154
      %s157 = sadd.s32 %s156, 1
      %p160 = scmp.eq.s32.totalorder %s38, 1
      %p161 = scmp.ne.s32.totalorder %s156, %s158
      %p162 = scmp.eq.s32.totalorder %s38, 0
      %p163 = por %p161, %p162
      %p164 = scmp.ne.s32.totalorder %s156, %s158
      %p165 = scmp.eq.s32.totalorder %s43, 1
      %p166 = por %p164, %p165
      %p167 = scmp.ne.s32.totalorder %s158, %s159
      %p168 = scmp.eq.s32.totalorder %s43, 0
      %p169 = por %p167, %p168
      %p170 = scmp.ne.s32.totalorder %s158, %s159
      %p171 = scmp.eq.s32.totalorder %s44, 1
      %p172 = por %p170, %p171
      %p174 = scmp.ne.s32.totalorder %s159, %s173
      %p175 = scmp.eq.s32.totalorder %s44, 0
      %p176 = por %p174, %p175
      %s178 = sadd.s32 %s177, 1
      %p181 = scmp.eq.s32.totalorder %s38, 1
      %p182 = scmp.ne.s32.totalorder %s177, %s179
      %p183 = scmp.eq.s32.totalorder %s38, 0
      %p184 = por %p182, %p183
      %p185 = scmp.ne.s32.totalorder %s177, %s179
      %p186 = scmp.eq.s32.totalorder %s43, 1
      %p187 = por %p185, %p186
      %p188 = scmp.ne.s32.totalorder %s179, %s180
      %p189 = scmp.eq.s32.totalorder %s43, 0
      %p190 = por %p188, %p189
      %p191 = scmp.ne.s32.totalorder %s179, %s180
      %p192 = scmp.eq.s32.totalorder %s44, 1
      %p193 = por %p191, %p192
      %p195 = scmp.ne.s32.totalorder %s180, %s194
      %p196 = scmp.eq.s32.totalorder %s44, 0
      %p197 = por %p195, %p196
      %s199 = sadd.s32 %s198, 1
      %p202 = scmp.eq.s32.totalorder %s38, 1
      %p203 = scmp.ne.s32.totalorder %s198, %s200
      %p204 = scmp.eq.s32.totalorder %s38, 0
      %p205 = por %p203, %p204
      %p206 = scmp.ne.s32.totalorder %s198, %s200
      %p207 = scmp.eq.s32.totalorder %s43, 1
      %p208 = por %p206, %p207
      %p209 = scmp.ne.s32.totalorder %s200, %s201
      %p210 = scmp.eq.s32.totalorder %s43, 0
      %p211 = por %p209, %p210
      %p212 = scmp.ne.s32.totalorder %s200, %s201
      %p213 = scmp.eq.s32.totalorder %s44, 1
      %p214 = por %p212, %p213
      %p216 = scmp.ne.s32.totalorder %s201, %s215
      %p217 = scmp.eq.s32.totalorder %s44, 0
      %p218 = por %p216, %p217
      %s220 = sadd.s32 %s219, 1
      %p223 = scmp.eq.s32.totalorder %s38, 1
      %p224 = scmp.ne.s32.totalorder %s219, %s221
      %p225 = scmp.eq.s32.totalorder %s38, 0
      %p226 = por %p224, %p225
      %p227 = scmp.ne.s32.totalorder %s219, %s221
      %p228 = scmp.eq.s32.totalorder %s43, 1
      %p229 = por %p227, %p228
      %p230 = scmp.ne.s32.totalorder %s221, %s222
      %p231 = scmp.eq.s32.totalorder %s43, 0
      %p232 = por %p230, %p231
      %p233 = scmp.ne.s32.totalorder %s221, %s222
      %p234 = scmp.eq.s32.totalorder %s44, 1
      %p235 = por %p233, %p234
      %p237 = scmp.ne.s32.totalorder %s222, %s236
      %p238 = scmp.eq.s32.totalorder %s44, 0
      %p239 = por %p237, %p238
      %s241 = sadd.s32 %s240, 1
      %p244 = scmp.eq.s32.totalorder %s38, 1
      %p245 = scmp.ne.s32.totalorder %s240, %s242
      %p246 = scmp.eq.s32.totalorder %s38, 0
      %p247 = por %p245, %p246
      %p248 = scmp.ne.s32.totalorder %s240, %s242
      %p249 = scmp.eq.s32.totalorder %s43, 1
      %p250 = por %p248, %p249
      %p251 = scmp.ne.s32.totalorder %s242, %s243
      %p252 = scmp.eq.s32.totalorder %s43, 0
      %p253 = por %p251, %p252
      %p254 = scmp.ne.s32.totalorder %s242, %s243
      %p255 = scmp.eq.s32.totalorder %s44, 1
      %p256 = por %p254, %p255
      %p258 = scmp.ne.s32.totalorder %s243, %s257
      %p259 = scmp.eq.s32.totalorder %s44, 0
      %p260 = por %p258, %p259
      %s262 = sadd.s32 %s261, 1
      %p265 = scmp.eq.s32.totalorder %s38, 1
      %p266 = scmp.ne.s32.totalorder %s261, %s263
      %p267 = scmp.eq.s32.totalorder %s38, 0
      %p268 = por %p266, %p267
      %p269 = scmp.ne.s32.totalorder %s261, %s263
      %p270 = scmp.eq.s32.totalorder %s43, 1
      %p271 = por %p269, %p270
      %p272 = scmp.ne.s32.totalorder %s263, %s264
      %p273 = scmp.eq.s32.totalorder %s43, 0
      %p274 = por %p272, %p273
      %p275 = scmp.ne.s32.totalorder %s263, %s264
      %p276 = scmp.eq.s32.totalorder %s44, 1
      %p277 = por %p275, %p276
      %p279 = scmp.ne.s32.totalorder %s264, %s278
      %p280 = scmp.eq.s32.totalorder %s44, 0
      %p281 = por %p279, %p280
      %s283 = sadd.s32 %s282, 1
      %p286 = scmp.eq.s32.totalorder %s38, 1
      %p287 = scmp.ne.s32.totalorder %s282, %s284
      %p288 = scmp.eq.s32.totalorder %s38, 0
      %p289 = por %p287, %p288
      %p290 = scmp.ne.s32.totalorder %s282, %s284
      %p291 = scmp.eq.s32.totalorder %s43, 1
      %p292 = por %p290, %p291
      %p293 = scmp.ne.s32.totalorder %s284, %s285
      %p294 = scmp.eq.s32.totalorder %s43, 0
      %p295 = por %p293, %p294
      %p296 = scmp.ne.s32.totalorder %s284, %s285
      %p297 = scmp.eq.s32.totalorder %s44, 1
      %p298 = por %p296, %p297
      %p300 = scmp.ne.s32.totalorder %s285, %s299
      %p301 = scmp.eq.s32.totalorder %s44, 0
      %p302 = por %p300, %p301
      %s304 = sadd.s32 %s303, 1
      %p307 = scmp.eq.s32.totalorder %s38, 1
      %p308 = scmp.ne.s32.totalorder %s303, %s305
      %p309 = scmp.eq.s32.totalorder %s38, 0
      %p310 = por %p308, %p309
      %p311 = scmp.ne.s32.totalorder %s303, %s305
      %p312 = scmp.eq.s32.totalorder %s43, 1
      %p313 = por %p311, %p312
      %p314 = scmp.ne.s32.totalorder %s305, %s306
      %p315 = scmp.eq.s32.totalorder %s43, 0
      %p316 = por %p314, %p315
      %p317 = scmp.ne.s32.totalorder %s305, %s306
      %p318 = scmp.eq.s32.totalorder %s44, 1
      %p319 = por %p317, %p318
      %p321 = scmp.ne.s32.totalorder %s306, %s320
      %p322 = scmp.eq.s32.totalorder %s44, 0
      %p323 = por %p321, %p322
      %s325 = sadd.s32 %s324, 1
      %p328 = scmp.eq.s32.totalorder %s38, 1
      %p329 = scmp.ne.s32.totalorder %s324, %s326
      %p330 = scmp.eq.s32.totalorder %s38, 0
      %p331 = por %p329, %p330
      %p332 = scmp.ne.s32.totalorder %s324, %s326
      %p333 = scmp.eq.s32.totalorder %s43, 1
      %p334 = por %p332, %p333
      %p335 = scmp.ne.s32.totalorder %s326, %s327
      %p336 = scmp.eq.s32.totalorder %s43, 0
      %p337 = por %p335, %p336
      %p338 = scmp.ne.s32.totalorder %s326, %s327
      %p339 = scmp.eq.s32.totalorder %s44, 1
      %p340 = por %p338, %p339
      %p342 = scmp.ne.s32.totalorder %s327, %s341
      %p343 = scmp.eq.s32.totalorder %s44, 0
      %p344 = por %p342, %p343
      %s346 = sadd.s32 %s345, 1
      %p349 = scmp.eq.s32.totalorder %s38, 1
      %p350 = scmp.ne.s32.totalorder %s345, %s347
      %p351 = scmp.eq.s32.totalorder %s38, 0
      %p352 = por %p350, %p351
      %p353 = scmp.ne.s32.totalorder %s345, %s347
      %p354 = scmp.eq.s32.totalorder %s43, 1
      %p355 = por %p353, %p354
      %p356 = scmp.ne.s32.totalorder %s347, %s348
      %p357 = scmp.eq.s32.totalorder %s43, 0
      %p358 = por %p356, %p357
      %p359 = scmp.ne.s32.totalorder %s347, %s348
      %p360 = scmp.eq.s32.totalorder %s44, 1
      %p361 = por %p359, %p360
      %p363 = scmp.ne.s32.totalorder %s348, %s362
      %p364 = scmp.eq.s32.totalorder %s44, 0
      %p365 = por %p363, %p364
      %s367 = sadd.s32 %s366, 1
      %p370 = scmp.eq.s32.totalorder %s38, 1
      %p371 = scmp.ne.s32.totalorder %s366, %s368
      %p372 = scmp.eq.s32.totalorder %s38, 0
      %p373 = por %p371, %p372
      %p374 = scmp.ne.s32.totalorder %s366, %s368
      %p375 = scmp.eq.s32.totalorder %s43, 1
      %p376 = por %p374, %p375
      %p377 = scmp.ne.s32.totalorder %s368, %s369
      %p378 = scmp.eq.s32.totalorder %s43, 0
      %p379 = por %p377, %p378
      %p380 = scmp.ne.s32.totalorder %s368, %s369
      %p381 = scmp.eq.s32.totalorder %s44, 1
      %p382 = por %p380, %p381
      %p384 = scmp.ne.s32.totalorder %s369, %s383
      %p385 = scmp.eq.s32.totalorder %s44, 0
      %p386 = por %p384, %p385
      %s388 = sadd.s32 %s387, 1
      %p391 = scmp.eq.s32.totalorder %s38, 1
      %p392 = scmp.ne.s32.totalorder %s387, %s389
      %p393 = scmp.eq.s32.totalorder %s38, 0
      %p394 = por %p392, %p393
      %p395 = scmp.ne.s32.totalorder %s387, %s389
      %p396 = scmp.eq.s32.totalorder %s43, 1
      %p397 = por %p395, %p396
      %p398 = scmp.ne.s32.totalorder %s389, %s390
      %p399 = scmp.eq.s32.totalorder %s43, 0
      %p400 = por %p398, %p399
      %p401 = scmp.ne.s32.totalorder %s389, %s390
      %p402 = scmp.eq.s32.totalorder %s44, 1
      %p403 = por %p401, %p402
      %p405 = scmp.ne.s32.totalorder %s390, %s404
      %p406 = scmp.eq.s32.totalorder %s44, 0
      %p407 = por %p405, %p406
      %s409 = sadd.s32 %s408, 1
      %p412 = scmp.eq.s32.totalorder %s38, 1
      %p413 = scmp.ne.s32.totalorder %s408, %s410
      %p414 = scmp.eq.s32.totalorder %s38, 0
      %p415 = por %p413, %p414
      %p416 = scmp.ne.s32.totalorder %s408, %s410
      %p417 = scmp.eq.s32.totalorder %s43, 1
      %p418 = por %p416, %p417
      %p419 = scmp.ne.s32.totalorder %s410, %s411
      %p420 = scmp.eq.s32.totalorder %s43, 0
      %p421 = por %p419, %p420
      %p422 = scmp.ne.s32.totalorder %s410, %s411
      %p423 = scmp.eq.s32.totalorder %s44, 1
      %p424 = por %p422, %p423
      %p426 = scmp.ne.s32.totalorder %s411, %s425
      %p427 = scmp.eq.s32.totalorder %s44, 0
      %p428 = por %p426, %p427
      %s430 = sadd.s32 %s429, 1
      %p433 = scmp.eq.s32.totalorder %s38, 1
      %p434 = scmp.ne.s32.totalorder %s429, %s431
      %p435 = scmp.eq.s32.totalorder %s38, 0
      %p436 = por %p434, %p435
      %p437 = scmp.ne.s32.totalorder %s429, %s431
      %p438 = scmp.eq.s32.totalorder %s43, 1
      %p439 = por %p437, %p438
      %p440 = scmp.ne.s32.totalorder %s431, %s432
      %p441 = scmp.eq.s32.totalorder %s43, 0
      %p442 = por %p440, %p441
      %p443 = scmp.ne.s32.totalorder %s431, %s432
      %p444 = scmp.eq.s32.totalorder %s44, 1
      %p445 = por %p443, %p444
      %p447 = scmp.ne.s32.totalorder %s432, %s446
      %p448 = scmp.eq.s32.totalorder %s44, 0
      %p449 = por %p447, %p448
      %s451 = sadd.s32 %s450, 1
      %p454 = scmp.eq.s32.totalorder %s38, 1
      %p455 = scmp.ne.s32.totalorder %s450, %s452
      %p456 = scmp.eq.s32.totalorder %s38, 0
      %p457 = por %p455, %p456
      %p458 = scmp.ne.s32.totalorder %s450, %s452
      %p459 = scmp.eq.s32.totalorder %s43, 1
      %p460 = por %p458, %p459
      %p461 = scmp.ne.s32.totalorder %s452, %s453
      %p462 = scmp.eq.s32.totalorder %s43, 0
      %p463 = por %p461, %p462
      %p464 = scmp.ne.s32.totalorder %s452, %s453
      %p465 = scmp.eq.s32.totalorder %s44, 1
      %p466 = por %p464, %p465
      %p468 = scmp.ne.s32.totalorder %s453, %s467
      %p469 = scmp.eq.s32.totalorder %s44, 0
      %p470 = por %p468, %p469
      %s472 = sadd.s32 %s471, 1
      %p475 = scmp.eq.s32.totalorder %s38, 1
      %p476 = scmp.ne.s32.totalorder %s471, %s473
      %p477 = scmp.eq.s32.totalorder %s38, 0
      %p478 = por %p476, %p477
      %p479 = scmp.ne.s32.totalorder %s471, %s473
      %p480 = scmp.eq.s32.totalorder %s43, 1
      %p481 = por %p479, %p480
      %p482 = scmp.ne.s32.totalorder %s473, %s474
      %p483 = scmp.eq.s32.totalorder %s43, 0
      %p484 = por %p482, %p483
      %p485 = scmp.ne.s32.totalorder %s473, %s474
      %p486 = scmp.eq.s32.totalorder %s44, 1
      %p487 = por %p485, %p486
      %p489 = scmp.ne.s32.totalorder %s474, %s488
      %p490 = scmp.eq.s32.totalorder %s44, 0
      %p491 = por %p489, %p490
      %s493 = sadd.s32 %s492, 1
      %p496 = scmp.eq.s32.totalorder %s38, 1
      %p497 = scmp.ne.s32.totalorder %s492, %s494
      %p498 = scmp.eq.s32.totalorder %s38, 0
      %p499 = por %p497, %p498
      %p500 = scmp.ne.s32.totalorder %s492, %s494
      %p501 = scmp.eq.s32.totalorder %s43, 1
      %p502 = por %p500, %p501
      %p503 = scmp.ne.s32.totalorder %s494, %s495
      %p504 = scmp.eq.s32.totalorder %s43, 0
      %p505 = por %p503, %p504
      %p506 = scmp.ne.s32.totalorder %s494, %s495
      %p507 = scmp.eq.s32.totalorder %s44, 1
      %p508 = por %p506, %p507
      %p510 = scmp.ne.s32.totalorder %s495, %s509
      %p511 = scmp.eq.s32.totalorder %s44, 0
      %p512 = por %p510, %p511
      %s514 = sadd.s32 %s513, 1
      %p517 = scmp.eq.s32.totalorder %s38, 1
      %p518 = scmp.ne.s32.totalorder %s513, %s515
      %p519 = scmp.eq.s32.totalorder %s38, 0
      %p520 = por %p518, %p519
      %p521 = scmp.ne.s32.totalorder %s513, %s515
      %p522 = scmp.eq.s32.totalorder %s43, 1
      %p523 = por %p521, %p522
      %p524 = scmp.ne.s32.totalorder %s515, %s516
      %p525 = scmp.eq.s32.totalorder %s43, 0
      %p526 = por %p524, %p525
      %p527 = scmp.ne.s32.totalorder %s515, %s516
      %p528 = scmp.eq.s32.totalorder %s44, 1
      %p529 = por %p527, %p528
      %p531 = scmp.ne.s32.totalorder %s516, %s530
      %p532 = scmp.eq.s32.totalorder %s44, 0
      %p533 = por %p531, %p532
      %s535 = sadd.s32 %s534, 1
      %p538 = scmp.eq.s32.totalorder %s38, 1
      %p539 = scmp.ne.s32.totalorder %s534, %s536
      %p540 = scmp.eq.s32.totalorder %s38, 0
      %p541 = por %p539, %p540
      %p542 = scmp.ne.s32.totalorder %s534, %s536
      %p543 = scmp.eq.s32.totalorder %s43, 1
      %p544 = por %p542, %p543
      %p545 = scmp.ne.s32.totalorder %s536, %s537
      %p546 = scmp.eq.s32.totalorder %s43, 0
      %p547 = por %p545, %p546
      %p548 = scmp.ne.s32.totalorder %s536, %s537
      %p549 = scmp.eq.s32.totalorder %s44, 1
      %p550 = por %p548, %p549
      %p552 = scmp.ne.s32.totalorder %s537, %s551
      %p553 = scmp.eq.s32.totalorder %s44, 0
      %p554 = por %p552, %p553
      %s555 = ssub.s32 %s38, %s45
      %p556 = scmp.eq.s32.totalorder %s555, 0
      %s558 = sadd.s32 %s557, 1
      %s559 = scalar_select %p556, %s557, %s558
      %p562 = pneg %p556
      %p563 = scmp.eq.s32.totalorder %s38, 1
      %p564 = por %p562, %p563
      %p565 = scmp.ne.s32.totalorder %s557, %s560
      %p566 = scmp.eq.s32.totalorder %s38, 0
      %p567 = por %p565, %p566
      %p568 = scmp.ne.s32.totalorder %s557, %s560
      %p569 = scmp.eq.s32.totalorder %s43, 1
      %p570 = por %p568, %p569
      %p571 = scmp.ne.s32.totalorder %s560, %s561
      %p572 = scmp.eq.s32.totalorder %s43, 0
      %p573 = por %p571, %p572
      %p574 = scmp.ne.s32.totalorder %s560, %s561
      %p575 = scmp.eq.s32.totalorder %s44, 1
      %p576 = por %p574, %p575
      %p578 = scmp.ne.s32.totalorder %s561, %s577
      %p579 = scmp.eq.s32.totalorder %s44, 0
      %p580 = por %p578, %p579
      %p581 = scmp.le.s32.totalorder 1, %s38
      %p582 = scmp.lt.s32.totalorder %s38, 3
      %p583 = pnand %p581, %p582
      %p584 = pneg %p583
      // Predicated region
      $region9: #{unet_forward.1} parent=5 // pred_check
        _
      $region10: #{unet_forward.1} parent=5 // pred_check_branch
        %586 = sbr.rel (%p583) target = $region12
      $region11: #{unet_forward.1} parent=5 // pred_region
        %s587 = ssub.s32 %s38, 1
        // Predicated region
        $region13: #{unet_forward.1} parent=11 // pred_check
          %p588 = pneg %p85
        $region14: #{unet_forward.1} parent=11 // pred_check_branch
          %590 = sbr.rel (%p588) target = $region16
        $region15: #{unet_forward.1} parent=11 // pred_region
          %s592 = ssub.s32 48, 48
          %593 = vsyncadd [#allocation3], %s592
          %s594 = sshll.u32 [#allocation2], 4
          %s595 = int_to_ptr.vmem [resolvable:$true] %s594
          %600 = dma.hbm_to_vmem [thread:$0]  %s1, 48, %s595, [#allocation3], 16, 16, 1
        $region16: #{unet_forward.1} parent=11 // pred_fallthru
          _
        // Predicated region
        $region17: #{unet_forward.1} parent=11 // pred_check
          %p601 = pneg %p106
        $region18: #{unet_forward.1} parent=11 // pred_check_branch
          %603 = sbr.rel (%p601) target = $region20
        $region19: #{unet_forward.1} parent=11 // pred_region
          %s605 = ssub.s32 16, 16
          %606 = vsyncadd [#allocation5], %s605
          %s608 = sshll.u32 [#allocation4], 4
          %s609 = int_to_ptr.vmem [resolvable:$true] %s608
          %611 = dma.hbm_to_vmem [thread:$0]  %s2, 16, %s609, [#allocation5]
        $region20: #{unet_forward.1} parent=11 // pred_fallthru
          _
        // Predicated region
        $region21: #{unet_forward.1} parent=11 // pred_check
          %p612 = pneg %p127
        $region22: #{unet_forward.1} parent=11 // pred_check_branch
          %614 = sbr.rel (%p612) target = $region24
        $region23: #{unet_forward.1} parent=11 // pred_region
          %s616 = ssub.s32 1536, 1536
          %617 = vsyncadd [#allocation5], %s616
          %s618 = sshll.u32 [#allocation6], 4
          %s619 = int_to_ptr.vmem [resolvable:$true] %s618
          %624 = dma.hbm_to_vmem [thread:$0]  %s3, 1536, %s619, [#allocation5], 64, 64, 4
        $region24: #{unet_forward.1} parent=11 // pred_fallthru
          _
        // Predicated region
        $region25: #{unet_forward.1} parent=11 // pred_check
          %p625 = pneg %p148
        $region26: #{unet_forward.1} parent=11 // pred_check_branch
          %627 = sbr.rel (%p625) target = $region28
        $region27: #{unet_forward.1} parent=11 // pred_region
          %s629 = ssub.s32 16, 16
          %630 = vsyncadd [#allocation8], %s629
          %s632 = sshll.u32 [#allocation7], 4
          %s633 = int_to_ptr.vmem [resolvable:$true] %s632
          %635 = dma.hbm_to_vmem [thread:$0]  %s4, 16, %s633, [#allocation8]
        $region28: #{unet_forward.1} parent=11 // pred_fallthru
          _
        // Predicated region
        $region29: #{unet_forward.1} parent=11 // pred_check
          %p636 = pneg %p169
        $region30: #{unet_forward.1} parent=11 // pred_check_branch
          %638 = sbr.rel (%p636) target = $region32
        $region31: #{unet_forward.1} parent=11 // pred_region
          %s640 = ssub.s32 6144, 6144
          %641 = vsyncadd [#allocation8], %s640
          %s642 = sshll.u32 [#allocation9], 4
          %s643 = int_to_ptr.vmem [resolvable:$true] %s642
          %648 = dma.hbm_to_vmem [thread:$0]  %s5, 6144, %s643, [#allocation8], 128, 128, 8
        $region32: #{unet_forward.1} parent=11 // pred_fallthru
          _
        // Predicated region
        $region33: #{unet_forward.1} parent=11 // pred_check
          %p649 = pneg %p190
        $region34: #{unet_forward.1} parent=11 // pred_check_branch
          %651 = sbr.rel (%p649) target = $region36
        $region35: #{unet_forward.1} parent=11 // pred_region
          %s653 = ssub.s32 32, 32
          %654 = vsyncadd [#allocation11], %s653
          %s656 = sshll.u32 [#allocation10], 4
          %s657 = int_to_ptr.vmem [resolvable:$true] %s656
          %659 = dma.hbm_to_vmem [thread:$0]  %s6, 32, %s657, [#allocation11]
        $region36: #{unet_forward.1} parent=11 // pred_fallthru
          _
        // Predicated region
        $region37: #{unet_forward.1} parent=11 // pred_check
          %p660 = pneg %p211
        $region38: #{unet_forward.1} parent=11 // pred_check_branch
          %662 = sbr.rel (%p660) target = $region40
        $region39: #{unet_forward.1} parent=11 // pred_region
          %s664 = ssub.s32 24576, 24576
          %665 = vsyncadd [#allocation11], %s664
          %s666 = sshll.u32 [#allocation12], 4
          %s667 = int_to_ptr.vmem [resolvable:$true] %s666
          %672 = dma.hbm_to_vmem [thread:$0]  %s7, 24576, %s667, [#allocation11], 256, 256, 16
        $region40: #{unet_forward.1} parent=11 // pred_fallthru
          _
        // Predicated region
        $region41: #{unet_forward.1} parent=11 // pred_check
          %p673 = pneg %p232
        $region42: #{unet_forward.1} parent=11 // pred_check_branch
          %675 = sbr.rel (%p673) target = $region44
        $region43: #{unet_forward.1} parent=11 // pred_region
          %s677 = ssub.s32 64, 64
          %678 = vsyncadd [#allocation14], %s677
          %s680 = sshll.u32 [#allocation13], 4
          %s681 = int_to_ptr.vmem [resolvable:$true] %s680
          %683 = dma.hbm_to_vmem [thread:$0]  %s8, 64, %s681, [#allocation14]
        $region44: #{unet_forward.1} parent=11 // pred_fallthru
          _
        // Predicated region
        $region45: #{unet_forward.1} parent=11 // pred_check
          %p684 = pneg %p253
        $region46: #{unet_forward.1} parent=11 // pred_check_branch
          %686 = sbr.rel (%p684) target = $region48
        $region47: #{unet_forward.1} parent=11 // pred_region
          %s688 = ssub.s32 24576, 24576
          %689 = vsyncadd [#allocation14], %s688
          %s690 = sshll.u32 [#allocation15], 4
          %s691 = int_to_ptr.vmem [resolvable:$true] %s690
          %696 = dma.hbm_to_vmem [thread:$0]  %s9, 24576, %s691, [#allocation14], 128, 128, 8
        $region48: #{unet_forward.1} parent=11 // pred_fallthru
          _
        // Predicated region
        $region49: #{unet_forward.1} parent=11 // pred_check
          %p697 = pneg %p274
        $region50: #{unet_forward.1} parent=11 // pred_check_branch
          %699 = sbr.rel (%p697) target = $region52
        $region51: #{unet_forward.1} parent=11 // pred_region
          _
        $region52: #{unet_forward.1} parent=11 // pred_fallthru
          _
        // Predicated region
        $region53: #{unet_forward.1} parent=11 // pred_check
          %p700 = pneg %p295
        $region54: #{unet_forward.1} parent=11 // pred_check_branch
          %702 = sbr.rel (%p700) target = $region56
        $region55: #{unet_forward.1} parent=11 // pred_region
          %s704 = ssub.s32 12288, 12288
          %705 = vsyncadd [#allocation17], %s704
          %s706 = sshll.u32 [#allocation16], 4
          %s707 = int_to_ptr.vmem [resolvable:$true] %s706
          %712 = dma.hbm_to_vmem [thread:$0]  %s11, 12288, %s707, [#allocation17], 128, 128, 8
        $region56: #{unet_forward.1} parent=11 // pred_fallthru
          _
        // Predicated region
        $region57: #{unet_forward.1} parent=11 // pred_check
          %p713 = pneg %p316
        $region58: #{unet_forward.1} parent=11 // pred_check_branch
          %715 = sbr.rel (%p713) target = $region60
        $region59: #{unet_forward.1} parent=11 // pred_region
          %s717 = ssub.s32 12288, 12288
          %718 = vsyncadd [#allocation17], %s717
          %s719 = sshll.u32 [#allocation18], 4
          %s720 = int_to_ptr.vmem [resolvable:$true] %s719
          %725 = dma.hbm_to_vmem [thread:$0]  %s12, 12288, %s720, [#allocation17], 128, 128, 8
        $region60: #{unet_forward.1} parent=11 // pred_fallthru
          _
        // Predicated region
        $region61: #{unet_forward.1} parent=11 // pred_check
          %p726 = pneg %p337
        $region62: #{unet_forward.1} parent=11 // pred_check_branch
          %728 = sbr.rel (%p726) target = $region64
        $region63: #{unet_forward.1} parent=11 // pred_region
          %s730 = ssub.s32 32, 32
          %731 = vsyncadd [#allocation20], %s730
          %s733 = sshll.u32 [#allocation19], 4
          %s734 = int_to_ptr.vmem [resolvable:$true] %s733
          %736 = dma.hbm_to_vmem [thread:$0]  %s13, 32, %s734, [#allocation20]
        $region64: #{unet_forward.1} parent=11 // pred_fallthru
          _
        // Predicated region
        $region65: #{unet_forward.1} parent=11 // pred_check
          %p737 = pneg %p358
        $region66: #{unet_forward.1} parent=11 // pred_check_branch
          %739 = sbr.rel (%p737) target = $region68
        $region67: #{unet_forward.1} parent=11 // pred_region
          _
        $region68: #{unet_forward.1} parent=11 // pred_fallthru
          _
        // Predicated region
        $region69: #{unet_forward.1} parent=11 // pred_check
          %p740 = pneg %p379
        $region70: #{unet_forward.1} parent=11 // pred_check_branch
          %742 = sbr.rel (%p740) target = $region72
        $region71: #{unet_forward.1} parent=11 // pred_region
          _
        $region72: #{unet_forward.1} parent=11 // pred_fallthru
          _
        // Predicated region
        $region73: #{unet_forward.1} parent=11 // pred_check
          %p743 = pneg %p400
        $region74: #{unet_forward.1} parent=11 // pred_check_branch
          %745 = sbr.rel (%p743) target = $region76
        $region75: #{unet_forward.1} parent=11 // pred_region
          _
        $region76: #{unet_forward.1} parent=11 // pred_fallthru
          _
        // Predicated region
        $region77: #{unet_forward.1} parent=11 // pred_check
          %p746 = pneg %p421
        $region78: #{unet_forward.1} parent=11 // pred_check_branch
          %748 = sbr.rel (%p746) target = $region80
        $region79: #{unet_forward.1} parent=11 // pred_region
          %s750 = ssub.s32 16, 16
          %751 = vsyncadd [#allocation20], %s750
          %s753 = sshll.u32 [#allocation21], 4
          %s754 = int_to_ptr.vmem [resolvable:$true] %s753
          %756 = dma.hbm_to_vmem [thread:$0]  %s17, 16, %s754, [#allocation20]
        $region80: #{unet_forward.1} parent=11 // pred_fallthru
          _
        // Predicated region
        $region81: #{unet_forward.1} parent=11 // pred_check
          %p757 = pneg %p442
        $region82: #{unet_forward.1} parent=11 // pred_check_branch
          %759 = sbr.rel (%p757) target = $region84
        $region83: #{unet_forward.1} parent=11 // pred_region
          _
        $region84: #{unet_forward.1} parent=11 // pred_fallthru
          _
        // Predicated region
        $region85: #{unet_forward.1} parent=11 // pred_check
          %p760 = pneg %p463
        $region86: #{unet_forward.1} parent=11 // pred_check_branch
          %762 = sbr.rel (%p760) target = $region88
        $region87: #{unet_forward.1} parent=11 // pred_region
          _
        $region88: #{unet_forward.1} parent=11 // pred_fallthru
          _
        // Predicated region
        $region89: #{unet_forward.1} parent=11 // pred_check
          %p763 = pneg %p484
        $region90: #{unet_forward.1} parent=11 // pred_check_branch
          %765 = sbr.rel (%p763) target = $region92
        $region91: #{unet_forward.1} parent=11 // pred_region
          _
        $region92: #{unet_forward.1} parent=11 // pred_fallthru
          _
        // Predicated region
        $region93: #{unet_forward.1} parent=11 // pred_check
          %p766 = pneg %p505
        $region94: #{unet_forward.1} parent=11 // pred_check_branch
          %768 = sbr.rel (%p766) target = $region96
        $region95: #{unet_forward.1} parent=11 // pred_region
          %s770 = ssub.s32 16, 16
          %771 = vsyncadd [#allocation23], %s770
          %s773 = sshll.u32 [#allocation22], 4
          %s774 = int_to_ptr.vmem [resolvable:$true] %s773
          %776 = dma.hbm_to_vmem [thread:$0]  %s21, 16, %s774, [#allocation23]
        $region96: #{unet_forward.1} parent=11 // pred_fallthru
          _
        // Predicated region
        $region97: #{unet_forward.1} parent=11 // pred_check
          %p777 = pneg %p526
        $region98: #{unet_forward.1} parent=11 // pred_check_branch
          %779 = sbr.rel (%p777) target = $region100
        $region99: #{unet_forward.1} parent=11 // pred_region
          _
        $region100: #{unet_forward.1} parent=11 // pred_fallthru
          _
        // Predicated region
        $region101: #{unet_forward.1} parent=11 // pred_check
          %p780 = pneg %p547
        $region102: #{unet_forward.1} parent=11 // pred_check_branch
          %782 = sbr.rel (%p780) target = $region104
        $region103: #{unet_forward.1} parent=11 // pred_region
          %s784 = ssub.s32 16, 16
          %785 = vsyncadd [#allocation23], %s784
          %s787 = sshll.u32 [#allocation24], 4
          %s788 = int_to_ptr.vmem [resolvable:$true] %s787
          %790 = dma.hbm_to_vmem [thread:$0]  %s23, 16, %s788, [#allocation23]
        $region104: #{unet_forward.1} parent=11 // pred_fallthru
          _
      $region12: #{unet_forward.1} parent=5 // pred_fallthru
        _
      %p791 = scmp.lt.s32.totalorder %s38, 2
      // Predicated region
      $region105: #{unet_forward.1} parent=5 // pred_check
        %p792 = pneg %p791
      $region106: #{unet_forward.1} parent=5 // pred_check_branch
        %794 = sbr.rel (%p792) target = $region108
      $region107: #{unet_forward.1} parent=5 // pred_region
        // Predicated region
        $region109: #{unet_forward.1} parent=107 // pred_check
          %p795 = pneg %p58
        $region110: #{unet_forward.1} parent=107 // pred_check_branch
          %797 = sbr.rel (%p795) target = $region112
        $region111: #{unet_forward.1} parent=107 // pred_region
          %p798 = scmp.lt.s32.totalorder %s38, 1
          %s799 = scalar_select %p798, %s38, 1
          %s800 = smul.addr %s799, 2
          %s801 = smul.addr %s800, 8
          %s802 = scalar_lea.vmem %s0, %s801
        $region112: #{unet_forward.1} parent=107 // pred_fallthru
          _
      $region108: #{unet_forward.1} parent=5 // pred_fallthru
        _
      %p803 = scmp.le.s32.totalorder 1, %s38
      %p804 = scmp.lt.s32.totalorder %s38, 3
      %p805 = pnand %p803, %p804
      %p806 = pneg %p805
      // Predicated region
      $region113: #{unet_forward.1} parent=5 // pred_check
        _
      $region114: #{unet_forward.1} parent=5 // pred_check_branch
        %808 = sbr.rel (%p805) target = $region116
      $region115: #{unet_forward.1} parent=5 // pred_region
        %s809 = ssub.s32 %s38, 1
        // Predicated region
        $region117: #{unet_forward.1} parent=115 // pred_check
          %p810 = pneg %p85
        $region118: #{unet_forward.1} parent=115 // pred_check_branch
          %812 = sbr.rel (%p810) target = $region120
        $region119: #{unet_forward.1} parent=115 // pred_region
          %813 = dma.done [#allocation3], 48
        $region120: #{unet_forward.1} parent=115 // pred_fallthru
          _
        // Predicated region
        $region121: #{unet_forward.1} parent=115 // pred_check
          %p814 = pneg %p106
        $region122: #{unet_forward.1} parent=115 // pred_check_branch
          %816 = sbr.rel (%p814) target = $region124
        $region123: #{unet_forward.1} parent=115 // pred_region
          %817 = dma.done [#allocation5], 16
        $region124: #{unet_forward.1} parent=115 // pred_fallthru
          _
        // Predicated region
        $region125: #{unet_forward.1} parent=115 // pred_check
          %p818 = pneg %p127
        $region126: #{unet_forward.1} parent=115 // pred_check_branch
          %820 = sbr.rel (%p818) target = $region128
        $region127: #{unet_forward.1} parent=115 // pred_region
          %821 = dma.done [#allocation5], 1536
        $region128: #{unet_forward.1} parent=115 // pred_fallthru
          _
        // Predicated region
        $region129: #{unet_forward.1} parent=115 // pred_check
          %p822 = pneg %p148
        $region130: #{unet_forward.1} parent=115 // pred_check_branch
          %824 = sbr.rel (%p822) target = $region132
        $region131: #{unet_forward.1} parent=115 // pred_region
          %825 = dma.done [#allocation8], 16
        $region132: #{unet_forward.1} parent=115 // pred_fallthru
          _
        // Predicated region
        $region133: #{unet_forward.1} parent=115 // pred_check
          %p826 = pneg %p169
        $region134: #{unet_forward.1} parent=115 // pred_check_branch
          %828 = sbr.rel (%p826) target = $region136
        $region135: #{unet_forward.1} parent=115 // pred_region
          %829 = dma.done [#allocation8], 6144
        $region136: #{unet_forward.1} parent=115 // pred_fallthru
          _
        // Predicated region
        $region137: #{unet_forward.1} parent=115 // pred_check
          %p830 = pneg %p190
        $region138: #{unet_forward.1} parent=115 // pred_check_branch
          %832 = sbr.rel (%p830) target = $region140
        $region139: #{unet_forward.1} parent=115 // pred_region
          %833 = dma.done [#allocation11], 32
        $region140: #{unet_forward.1} parent=115 // pred_fallthru
          _
        // Predicated region
        $region141: #{unet_forward.1} parent=115 // pred_check
          %p834 = pneg %p211
        $region142: #{unet_forward.1} parent=115 // pred_check_branch
          %836 = sbr.rel (%p834) target = $region144
        $region143: #{unet_forward.1} parent=115 // pred_region
          %837 = dma.done [#allocation11], 24576
        $region144: #{unet_forward.1} parent=115 // pred_fallthru
          _
        // Predicated region
        $region145: #{unet_forward.1} parent=115 // pred_check
          %p838 = pneg %p232
        $region146: #{unet_forward.1} parent=115 // pred_check_branch
          %840 = sbr.rel (%p838) target = $region148
        $region147: #{unet_forward.1} parent=115 // pred_region
          %841 = dma.done [#allocation14], 64
        $region148: #{unet_forward.1} parent=115 // pred_fallthru
          _
        // Predicated region
        $region149: #{unet_forward.1} parent=115 // pred_check
          %p842 = pneg %p253
        $region150: #{unet_forward.1} parent=115 // pred_check_branch
          %844 = sbr.rel (%p842) target = $region152
        $region151: #{unet_forward.1} parent=115 // pred_region
          %845 = dma.done [#allocation14], 24576
        $region152: #{unet_forward.1} parent=115 // pred_fallthru
          _
        // Predicated region
        $region153: #{unet_forward.1} parent=115 // pred_check
          %p846 = pneg %p295
        $region154: #{unet_forward.1} parent=115 // pred_check_branch
          %848 = sbr.rel (%p846) target = $region156
        $region155: #{unet_forward.1} parent=115 // pred_region
          %849 = dma.done [#allocation17], 12288
        $region156: #{unet_forward.1} parent=115 // pred_fallthru
          _
        // Predicated region
        $region157: #{unet_forward.1} parent=115 // pred_check
          %p850 = pneg %p316
        $region158: #{unet_forward.1} parent=115 // pred_check_branch
          %852 = sbr.rel (%p850) target = $region160
        $region159: #{unet_forward.1} parent=115 // pred_region
          %853 = dma.done [#allocation17], 12288
        $region160: #{unet_forward.1} parent=115 // pred_fallthru
          _
        // Predicated region
        $region161: #{unet_forward.1} parent=115 // pred_check
          %p854 = pneg %p337
        $region162: #{unet_forward.1} parent=115 // pred_check_branch
          %856 = sbr.rel (%p854) target = $region164
        $region163: #{unet_forward.1} parent=115 // pred_region
          %857 = dma.done [#allocation20], 32
        $region164: #{unet_forward.1} parent=115 // pred_fallthru
          _
        // Predicated region
        $region165: #{unet_forward.1} parent=115 // pred_check
          %p858 = pneg %p421
        $region166: #{unet_forward.1} parent=115 // pred_check_branch
          %860 = sbr.rel (%p858) target = $region168
        $region167: #{unet_forward.1} parent=115 // pred_region
          %861 = dma.done [#allocation20], 16
        $region168: #{unet_forward.1} parent=115 // pred_fallthru
          _
        // Predicated region
        $region169: #{unet_forward.1} parent=115 // pred_check
          %p862 = pneg %p505
        $region170: #{unet_forward.1} parent=115 // pred_check_branch
          %864 = sbr.rel (%p862) target = $region172
        $region171: #{unet_forward.1} parent=115 // pred_region
          %865 = dma.done [#allocation23], 16
        $region172: #{unet_forward.1} parent=115 // pred_fallthru
          _
        // Predicated region
        $region173: #{unet_forward.1} parent=115 // pred_check
          %p866 = pneg %p547
        $region174: #{unet_forward.1} parent=115 // pred_check_branch
          %868 = sbr.rel (%p866) target = $region176
        $region175: #{unet_forward.1} parent=115 // pred_region
          %869 = dma.done [#allocation23], 16
        $region176: #{unet_forward.1} parent=115 // pred_fallthru
          _
        %p870 = scmp.lt.s32.totalorder %s43, 1
        %s871 = scalar_select %p870, %s43, 1
        %s872 = smul.addr %s871, 2
        %s873 = smul.addr %s872, 8
        %s874 = scalar_lea.vmem %s0, %s873
        %p875 = pneg %p64
        %p876 = pneg %p61
        %p877 = pneg %p85
        %p878 = pneg %p82
        %p879 = pneg %p106
        %p880 = pneg %p103
        %p881 = pneg %p127
        %p882 = pneg %p124
        %p883 = pneg %p148
        %p884 = pneg %p145
        %p885 = pneg %p169
        %p886 = pneg %p166
        %p887 = pneg %p190
        %p888 = pneg %p187
        %p889 = pneg %p211
        %p890 = pneg %p208
        %p891 = pneg %p232
        %p892 = pneg %p229
        %p893 = pneg %p253
        %p894 = pneg %p250
        %p895 = pneg %p274
        %p896 = pneg %p271
        %p897 = pneg %p295
        %p898 = pneg %p292
        %p899 = pneg %p316
        %p900 = pneg %p313
        %p901 = pneg %p337
        %p902 = pneg %p334
        %p903 = pneg %p358
        %p904 = pneg %p355
        %p905 = pneg %p379
        %p906 = pneg %p376
        %p907 = pneg %p400
        %p908 = pneg %p397
        %p909 = pneg %p421
        %p910 = pneg %p418
        %p911 = pneg %p442
        %p912 = pneg %p439
        %p913 = pneg %p463
        %p914 = pneg %p460
        %p915 = pneg %p484
        %p916 = pneg %p481
        %p917 = pneg %p505
        %p918 = pneg %p502
        %p919 = pneg %p526
        %p920 = pneg %p523
        %p921 = pneg %p547
        %p922 = pneg %p544
        %p923 = pneg %p573
        %p924 = pneg %p570
        %p925 = scmp.lt.s32.totalorder %s43, 1
        %s926 = scalar_select %p925, %s43, 1
        %s927 = smul.addr %s926, 2
        %s928 = smul.addr %s927, 8
        %s929 = scalar_lea.vmem %s24, %s928
        %p930 = scmp.lt.s32.totalorder %s43, 1
        %s931 = scalar_select %p930, %s43, 1
        %s932 = smul.addr %s931, 2
        %s933 = smul.addr %s932, 8
        %s934 = scalar_lea.vmem %s0, %s933
        %p935 = scmp.lt.s32.totalorder %s43, 1
        %s936 = scalar_select %p935, %s43, 1
        %s937 = smul.addr %s936, 2
        %s938 = smul.addr %s937, 8
        %s939 = scalar_lea.vmem %s24, %s938
        %v941 = vlaneseq
        %v942 = vshrl.u32 %v941, 7
        %v943 = vadd.s32 %v942, 8
        %vm944 = vcmp.lt.s32.totalorder %v942, 0
        %v945 = vsub.s32 0, %v942
        %v946 = vsel %vm944, %v945, %v942
        %v947 = vshrl.u32 %v946, 4
        %v948 = vand.u32 %v946, 15
        %v949 = vsub.s32 0, %v948
        %v950 = vsel %vm944, %v949, %v948
        %vm951 = vcmp.lt.s32.totalorder %v943, 0
        %v952 = vsub.s32 0, %v943
        %v953 = vsel %vm951, %v952, %v943
        %v954 = vshrl.u32 %v953, 4
        %v955 = vand.u32 %v953, 15
        %v956 = vsub.s32 0, %v955
        %v957 = vsel %vm951, %v956, %v955
        %vm958 = vcmp.ne.s32.totalorder %v950, 0
        %vm959 = vcmp.ne.s32.totalorder %v957, 0
        %vm960 = vcmp.lt.s32.totalorder %v950, 0
        %vm961 = vcmp.lt.s32.totalorder %v957, 0
        %vm962 = vmand %vm960, %vm958
        %vm963 = vmand %vm961, %vm959
        %v964 = vadd.s32 %v950, 16
        %v965 = vadd.s32 %v957, 16
        %v966 = vsel %vm962, %v964, %v950
        %v967 = vsel %vm963, %v965, %v957
        %vm968 = vcmp.ne.s32.totalorder %v966, 0
        %vm969 = vcmp.ne.s32.totalorder %v967, 0
        %vm970 = vcmp.ne.s32.totalorder %v966, 15
        %vm971 = vcmp.ne.s32.totalorder %v967, 15
        %v972 = vld [vmem:[%s934] sm:$0xff]
        %v973 = vld [vmem:[%s934 + $0x8] sm:$0xff]
        %v974 = vrot.slane %v972, 7
        %v975 = vrot.slane %v973, 7
        %vm976 = vcmp.lt.s32.totalorder %v942, 1
        %v977 = vsel %vm976, %v974, %v975
        %v978 = vsel %vm976, %v975, %v974
        %v979 = vsel %vm968, 1, 0
        %v980 = vsel %vm969, 1, 0
        %vm981 = vcmp.eq.s32.totalorder %v979, 1
        %vm982 = vcmp.eq.s32.totalorder %v980, 1
        %v983 = vsel %vm981, %v978, 0.0
        %v984 = vsel %vm982, %v977, 0.0
        %v985 = vrot.slane %v972, 1
        %v986 = vrot.slane %v973, 1
        %vm987 = vcmp.lt.s32.totalorder %v942, 7
        %v988 = vsel %vm987, %v985, %v986
        %v989 = vsel %vm987, %v986, %v985
        %v990 = vsel %vm970, 1, 0
        %v991 = vsel %vm971, 1, 0
        %vm992 = vcmp.eq.s32.totalorder %v990, 1
        %vm993 = vcmp.eq.s32.totalorder %v991, 1
        %v994 = vsel %vm992, %v988, 0.0
        %v995 = vsel %vm993, %v989, 0.0
        %v996 = vpack.c.bf16 %v984, %v983
        %v997 = vld [vmem:[#allocation2] sm:$0x1]
        %v998 = vpack.c.bf16 %v973, %v972
        %s999 = scalar_lea.vmem [#allocation2], 1
        %v1000 = vld [vmem:[%s999] sm:$0x1]
        %vm1001 = vcmask 15360
        %v1003 = vsel %vm1001, %v998, 0
        %vm1005 = vcmask 1040384
        %v1007 = vsel %vm1005, %v1000, 0
        %1009 = vmatprep.subr.bf16.mxu0 0
        %1010 = vmatpush1.bf16.msra.mxu0 0
        %1011 = vmatprep.subr.bf16.mxu0 0
        %1012 = vmatpush1.bf16.msra.mxu0 0
        %1013 = vmatprep.subr.bf16.mxu0 0
        %1014 = vmatpush1.bf16.msra.mxu0 0
        %1015 = vmatprep.subr.bf16.mxu0 0
        %1016 = vmatpush1.bf16.msra.mxu0 0
        %1017 = vmatprep.subr.bf16.mxu0 0
        %1018 = vmatpush1.bf16.msra.mxu0 0
        %1019 = vmatprep.subr.bf16.mxu0 0
        %1020 = vmatpush1.bf16.msra.mxu0 0
        %1021 = vmatprep.subr.bf16.mxu0 0
        %1022 = vmatpush1.bf16.msra.mxu0 0
        %1023 = vmatprep.subr.bf16.mxu0 0
        %1024 = vmatpush1.bf16.msra.mxu0 %v1007
        %1025 = vmatprep.subr.bf16.mxu0 0
        %1026 = vmatpush2.bf16.msra.mxu0 0
        %1027 = vmatprep.subr.bf16.mxu0 0
        %1028 = vmatpush2.bf16.msra.mxu0 0
        %1029 = vmatprep.subr.bf16.mxu0 0
        %1030 = vmatpush2.bf16.msra.mxu0 0
        %1031 = vmatprep.subr.bf16.mxu0 0
        %1032 = vmatpush2.bf16.msra.mxu0 0
        %1033 = vmatprep.subr.bf16.mxu0 0
        %1034 = vmatpush2.bf16.msra.mxu0 0
        %1035 = vmatprep.subr.bf16.mxu0 0
        %1036 = vmatpush2.bf16.msra.mxu0 0
        %1037 = vmatprep.subr.bf16.mxu0 0
        %1038 = vmatpush2.bf16.msra.mxu0 0
        %1039 = vmatprep.subr.bf16.mxu0 0
        %1040 = vmatpush2.bf16.msra.mxu0 0
        %1041 = vmatprep.mubr.bf16.mxu0 0
        %1042 = vmatmul.mubr.bf16.gmra.mxu0 %v1003
        %v1043 = vpop.f32.mrf.mxu0
        %v1044 = vadd.f32 0.0, %v1043
        %v1045 = vpop.f32.mrf.mxu0
        %v1046 = vpop.f32.mrf.mxu0
        %v1047 = vadd.f32 0.0, %v1046
        %v1048 = vpop.f32.mrf.mxu0
        %1049 = vdwg.mxu0
        %v1051 = vsel %vm1001, %v996, 0
        %v1054 = vsel %vm1005, %v997, 0
        %1056 = vmatprep.subr.bf16.mxu0 0
        %1057 = vmatpush1.bf16.msra.mxu0 0
        %1058 = vmatprep.subr.bf16.mxu0 0
        %1059 = vmatpush1.bf16.msra.mxu0 0
        %1060 = vmatprep.subr.bf16.mxu0 0
        %1061 = vmatpush1.bf16.msra.mxu0 0
        %1062 = vmatprep.subr.bf16.mxu0 0
        %1063 = vmatpush1.bf16.msra.mxu0 0
        %1064 = vmatprep.subr.bf16.mxu0 0
        %1065 = vmatpush1.bf16.msra.mxu0 0
        %1066 = vmatprep.subr.bf16.mxu0 0
        %1067 = vmatpush1.bf16.msra.mxu0 0
        %1068 = vmatprep.subr.bf16.mxu0 0
        %1069 = vmatpush1.bf16.msra.mxu0 0
        %1070 = vmatprep.subr.bf16.mxu0 0
        %1071 = vmatpush1.bf16.msra.mxu0 %v1054
        %1072 = vmatprep.subr.bf16.mxu0 0
        %1073 = vmatpush2.bf16.msra.mxu0 0
        %1074 = vmatprep.subr.bf16.mxu0 0
        %1075 = vmatpush2.bf16.msra.mxu0 0
        %1076 = vmatprep.subr.bf16.mxu0 0
        %1077 = vmatpush2.bf16.msra.mxu0 0
        %1078 = vmatprep.subr.bf16.mxu0 0
        %1079 = vmatpush2.bf16.msra.mxu0 0
        %1080 = vmatprep.subr.bf16.mxu0 0
        %1081 = vmatpush2.bf16.msra.mxu0 0
        %1082 = vmatprep.subr.bf16.mxu0 0
        %1083 = vmatpush2.bf16.msra.mxu0 0
        %1084 = vmatprep.subr.bf16.mxu0 0
        %1085 = vmatpush2.bf16.msra.mxu0 0
        %1086 = vmatprep.subr.bf16.mxu0 0
        %1087 = vmatpush2.bf16.msra.mxu0 0
        %1088 = vmatprep.mubr.bf16.mxu0 0
        %1089 = vmatmul.mubr.bf16.gmra.mxu0 %v1051
        %v1090 = vpop.f32.mrf.mxu0
        %v1091 = vadd.f32 %v1044, %v1090
        %v1092 = vpop.f32.mrf.mxu0
        %v1093 = vpop.f32.mrf.mxu0
        %v1094 = vadd.f32 %v1047, %v1093
        %v1095 = vpop.f32.mrf.mxu0
        %1096 = vdwg.mxu0
        %v1097 = vpack.c.bf16 %v995, %v994
        %s1098 = scalar_lea.vmem [#allocation2], 2
        %v1099 = vld [vmem:[%s1098] sm:$0x1]
        %v1101 = vsel %vm1001, %v1097, 0
        %v1104 = vsel %vm1005, %v1099, 0
        %1106 = vmatprep.subr.bf16.mxu0 0
        %1107 = vmatpush1.bf16.msra.mxu0 0
        %1108 = vmatprep.subr.bf16.mxu0 0
        %1109 = vmatpush1.bf16.msra.mxu0 0
        %1110 = vmatprep.subr.bf16.mxu0 0
        %1111 = vmatpush1.bf16.msra.mxu0 0
        %1112 = vmatprep.subr.bf16.mxu0 0
        %1113 = vmatpush1.bf16.msra.mxu0 0
        %1114 = vmatprep.subr.bf16.mxu0 0
        %1115 = vmatpush1.bf16.msra.mxu0 0
        %1116 = vmatprep.subr.bf16.mxu0 0
        %1117 = vmatpush1.bf16.msra.mxu0 0
        %1118 = vmatprep.subr.bf16.mxu0 0
        %1119 = vmatpush1.bf16.msra.mxu0 0
        %1120 = vmatprep.subr.bf16.mxu0 0
        %1121 = vmatpush1.bf16.msra.mxu0 %v1104
        %1122 = vmatprep.subr.bf16.mxu0 0
        %1123 = vmatpush2.bf16.msra.mxu0 0
        %1124 = vmatprep.subr.bf16.mxu0 0
        %1125 = vmatpush2.bf16.msra.mxu0 0
        %1126 = vmatprep.subr.bf16.mxu0 0
        %1127 = vmatpush2.bf16.msra.mxu0 0
        %1128 = vmatprep.subr.bf16.mxu0 0
        %1129 = vmatpush2.bf16.msra.mxu0 0
        %1130 = vmatprep.subr.bf16.mxu0 0
        %1131 = vmatpush2.bf16.msra.mxu0 0
        %1132 = vmatprep.subr.bf16.mxu0 0
        %1133 = vmatpush2.bf16.msra.mxu0 0
        %1134 = vmatprep.subr.bf16.mxu0 0
        %1135 = vmatpush2.bf16.msra.mxu0 0
        %1136 = vmatprep.subr.bf16.mxu0 0
        %1137 = vmatpush2.bf16.msra.mxu0 0
        %1138 = vmatprep.mubr.bf16.mxu0 0
        %1139 = vmatmul.mubr.bf16.gmra.mxu0 %v1101
        %v1140 = vpop.f32.mrf.mxu0
        %v1141 = vadd.f32 0.0, %v1140
        %v1142 = vpop.f32.mrf.mxu0
        %v1143 = vpop.f32.mrf.mxu0
        %v1144 = vadd.f32 0.0, %v1143
        %v1145 = vpop.f32.mrf.mxu0
        %1146 = vdwg.mxu0
        %v1147 = vadd.f32 %v1091, %v1141
        %v1148 = vadd.f32 %v1094, %v1144
        %v1149 = vld [vmem:[#allocation4] sm:$0x1]
        %v1151 = vlaneseq
        %v1152 = vshrl.u32 %v1151, 7
        %v1153 = vsub.s32 0, %v1152
        %v1154 = vrot.slane %v1149, %v1153
        %v1156 = vadd.f32 %v1147, %v1154
        %v1157 = vadd.f32 %v1148, %v1154
        %v1158 = vmax.f32 %v1156, 0.0
        %v1159 = vmax.f32 %v1157, 0.0
        %v1160 = vrot.slane %v1158, 7
        %v1161 = vrot.slane %v1159, 7
        %v1162 = vsel %vm976, %v1160, %v1161
        %v1163 = vsel %vm976, %v1161, %v1160
        %v1164 = vsel %vm981, %v1163, 0.0
        %v1165 = vsel %vm982, %v1162, 0.0
        %v1166 = vrot.slane %v1158, 1
        %v1167 = vrot.slane %v1159, 1
        %v1168 = vsel %vm987, %v1166, %v1167
        %v1169 = vsel %vm987, %v1167, %v1166
        %v1170 = vsel %vm992, %v1168, 0.0
        %v1171 = vsel %vm993, %v1169, 0.0
        %v1172 = vpack.c.bf16 %v1165, %v1164
        %v1173 = vld [vmem:[#allocation6] sm:$0xf]
        %v1174 = vld [vmem:[#allocation6 + $0x4] sm:$0xf]
        %v1175 = vld [vmem:[#allocation6 + $0x8] sm:$0xf]
        %v1176 = vld [vmem:[#allocation6 + $0xc] sm:$0xf]
        %v1177 = vld [vmem:[#allocation6 + $0x10] sm:$0xf]
        %v1178 = vld [vmem:[#allocation6 + $0x14] sm:$0xf]
        %v1179 = vld [vmem:[#allocation6 + $0x18] sm:$0xf]
        %v1180 = vld [vmem:[#allocation6 + $0x1c] sm:$0xf]
        %v1181 = vpack.c.bf16 %v1159, %v1158
        %s1182 = scalar_lea.vmem [#allocation6], 32
        %v1183 = vld [vmem:[%s1182] sm:$0xf]
        %v1184 = vld [vmem:[%s1182 + $0x4] sm:$0xf]
        %v1185 = vld [vmem:[%s1182 + $0x8] sm:$0xf]
        %v1186 = vld [vmem:[%s1182 + $0xc] sm:$0xf]
        %v1187 = vld [vmem:[%s1182 + $0x10] sm:$0xf]
        %v1188 = vld [vmem:[%s1182 + $0x14] sm:$0xf]
        %v1189 = vld [vmem:[%s1182 + $0x18] sm:$0xf]
        %v1190 = vld [vmem:[%s1182 + $0x1c] sm:$0xf]
        %v1199 = vunpack.c.l.b16 %v1183
        %v1200 = vunpack.c.l.b16 %v1184
        %v1201 = vunpack.c.l.b16 %v1185
        %v1202 = vunpack.c.l.b16 %v1186
        %v1203 = vunpack.c.l.b16 %v1187
        %v1204 = vunpack.c.l.b16 %v1188
        %v1205 = vunpack.c.l.b16 %v1189
        %v1206 = vunpack.c.l.b16 %v1190
        %v1207 = vpack.c.b16 %v1200, %v1199
        %v1208 = vpack.c.b16 %v1202, %v1201
        %v1209 = vpack.c.b16 %v1204, %v1203
        %v1210 = vpack.c.b16 %v1206, %v1205
        %vm1215 = vcmask 523264
        %v1217 = vsel %vm1215, %v1181, 0
        %1219 = vmatprep.subr.bf16.mxu0 0
        %1220 = vmatpush1.bf16.msra.mxu0 0
        %1221 = vmatprep.subr.bf16.mxu0 0
        %1222 = vmatpush1.bf16.msra.mxu0 0
        %1223 = vmatprep.subr.bf16.mxu0 0
        %1224 = vmatpush1.bf16.msra.mxu0 0
        %1225 = vmatprep.subr.bf16.mxu0 0
        %1226 = vmatpush1.bf16.msra.mxu0 0
        %1227 = vmatprep.subr.bf16.mxu0 0
        %1228 = vmatpush1.bf16.msra.mxu0 %v1210
        %1229 = vmatprep.subr.bf16.mxu0 0
        %1230 = vmatpush1.bf16.msra.mxu0 %v1209
        %1231 = vmatprep.subr.bf16.mxu0 0
        %1232 = vmatpush1.bf16.msra.mxu0 %v1208
        %1233 = vmatprep.subr.bf16.mxu0 0
        %1234 = vmatpush1.bf16.msra.mxu0 %v1207
        %1235 = vmatprep.subr.bf16.mxu0 0
        %1236 = vmatpush2.bf16.msra.mxu0 0
        %1237 = vmatprep.subr.bf16.mxu0 0
        %1238 = vmatpush2.bf16.msra.mxu0 0
        %1239 = vmatprep.subr.bf16.mxu0 0
        %1240 = vmatpush2.bf16.msra.mxu0 0
        %1241 = vmatprep.subr.bf16.mxu0 0
        %1242 = vmatpush2.bf16.msra.mxu0 0
        %1243 = vmatprep.subr.bf16.mxu0 0
        %1244 = vmatpush2.bf16.msra.mxu0 0
        %1245 = vmatprep.subr.bf16.mxu0 0
        %1246 = vmatpush2.bf16.msra.mxu0 0
        %1247 = vmatprep.subr.bf16.mxu0 0
        %1248 = vmatpush2.bf16.msra.mxu0 0
        %1249 = vmatprep.subr.bf16.mxu0 0
        %1250 = vmatpush2.bf16.msra.mxu0 0
        %1251 = vmatprep.mubr.bf16.mxu0 0
        %1252 = vmatmul.mubr.bf16.gmra.mxu0 %v1217
        %v1253 = vpop.f32.mrf.mxu0
        %v1254 = vadd.f32 0.0, %v1253
        %v1255 = vpop.f32.mrf.mxu0
        %v1256 = vpop.f32.mrf.mxu0
        %v1257 = vadd.f32 0.0, %v1256
        %v1258 = vpop.f32.mrf.mxu0
        %1259 = vdwg.mxu0
        %v1268 = vunpack.c.l.b16 %v1173
        %v1269 = vunpack.c.l.b16 %v1174
        %v1270 = vunpack.c.l.b16 %v1175
        %v1271 = vunpack.c.l.b16 %v1176
        %v1272 = vunpack.c.l.b16 %v1177
        %v1273 = vunpack.c.l.b16 %v1178
        %v1274 = vunpack.c.l.b16 %v1179
        %v1275 = vunpack.c.l.b16 %v1180
        %v1276 = vpack.c.b16 %v1269, %v1268
        %v1277 = vpack.c.b16 %v1271, %v1270
        %v1278 = vpack.c.b16 %v1273, %v1272
        %v1279 = vpack.c.b16 %v1275, %v1274
        %v1285 = vsel %vm1215, %v1172, 0
        %1287 = vmatprep.subr.bf16.mxu0 0
        %1288 = vmatpush1.bf16.msra.mxu0 0
        %1289 = vmatprep.subr.bf16.mxu0 0
        %1290 = vmatpush1.bf16.msra.mxu0 0
        %1291 = vmatprep.subr.bf16.mxu0 0
        %1292 = vmatpush1.bf16.msra.mxu0 0
        %1293 = vmatprep.subr.bf16.mxu0 0
        %1294 = vmatpush1.bf16.msra.mxu0 0
        %1295 = vmatprep.subr.bf16.mxu0 0
        %1296 = vmatpush1.bf16.msra.mxu0 %v1279
        %1297 = vmatprep.subr.bf16.mxu0 0
        %1298 = vmatpush1.bf16.msra.mxu0 %v1278
        %1299 = vmatprep.subr.bf16.mxu0 0
        %1300 = vmatpush1.bf16.msra.mxu0 %v1277
        %1301 = vmatprep.subr.bf16.mxu0 0
        %1302 = vmatpush1.bf16.msra.mxu0 %v1276
        %1303 = vmatprep.subr.bf16.mxu0 0
        %1304 = vmatpush2.bf16.msra.mxu0 0
        %1305 = vmatprep.subr.bf16.mxu0 0
        %1306 = vmatpush2.bf16.msra.mxu0 0
        %1307 = vmatprep.subr.bf16.mxu0 0
        %1308 = vmatpush2.bf16.msra.mxu0 0
        %1309 = vmatprep.subr.bf16.mxu0 0
        %1310 = vmatpush2.bf16.msra.mxu0 0
        %1311 = vmatprep.subr.bf16.mxu0 0
        %1312 = vmatpush2.bf16.msra.mxu0 0
        %1313 = vmatprep.subr.bf16.mxu0 0
        %1314 = vmatpush2.bf16.msra.mxu0 0
        %1315 = vmatprep.subr.bf16.mxu0 0
        %1316 = vmatpush2.bf16.msra.mxu0 0
        %1317 = vmatprep.subr.bf16.mxu0 0
        %1318 = vmatpush2.bf16.msra.mxu0 0
        %1319 = vmatprep.mubr.bf16.mxu0 0
        %1320 = vmatmul.mubr.bf16.gmra.mxu0 %v1285
        %v1321 = vpop.f32.mrf.mxu0
        %v1322 = vadd.f32 %v1254, %v1321
        %v1323 = vpop.f32.mrf.mxu0
        %v1324 = vpop.f32.mrf.mxu0
        %v1325 = vadd.f32 %v1257, %v1324
        %v1326 = vpop.f32.mrf.mxu0
        %1327 = vdwg.mxu0
        %v1328 = vpack.c.bf16 %v1171, %v1170
        %s1329 = scalar_lea.vmem [#allocation6], 64
        %v1330 = vld [vmem:[%s1329] sm:$0xf]
        %v1331 = vld [vmem:[%s1329 + $0x4] sm:$0xf]
        %v1332 = vld [vmem:[%s1329 + $0x8] sm:$0xf]
        %v1333 = vld [vmem:[%s1329 + $0xc] sm:$0xf]
        %v1334 = vld [vmem:[%s1329 + $0x10] sm:$0xf]
        %v1335 = vld [vmem:[%s1329 + $0x14] sm:$0xf]
        %v1336 = vld [vmem:[%s1329 + $0x18] sm:$0xf]
        %v1337 = vld [vmem:[%s1329 + $0x1c] sm:$0xf]
        %v1346 = vunpack.c.l.b16 %v1330
        %v1347 = vunpack.c.l.b16 %v1331
        %v1348 = vunpack.c.l.b16 %v1332
        %v1349 = vunpack.c.l.b16 %v1333
        %v1350 = vunpack.c.l.b16 %v1334
        %v1351 = vunpack.c.l.b16 %v1335
        %v1352 = vunpack.c.l.b16 %v1336
        %v1353 = vunpack.c.l.b16 %v1337
        %v1354 = vpack.c.b16 %v1347, %v1346
        %v1355 = vpack.c.b16 %v1349, %v1348
        %v1356 = vpack.c.b16 %v1351, %v1350
        %v1357 = vpack.c.b16 %v1353, %v1352
        %v1363 = vsel %vm1215, %v1328, 0
        %1365 = vmatprep.subr.bf16.mxu0 0
        %1366 = vmatpush1.bf16.msra.mxu0 0
        %1367 = vmatprep.subr.bf16.mxu0 0
        %1368 = vmatpush1.bf16.msra.mxu0 0
        %1369 = vmatprep.subr.bf16.mxu0 0
        %1370 = vmatpush1.bf16.msra.mxu0 0
        %1371 = vmatprep.subr.bf16.mxu0 0
        %1372 = vmatpush1.bf16.msra.mxu0 0
        %1373 = vmatprep.subr.bf16.mxu0 0
        %1374 = vmatpush1.bf16.msra.mxu0 %v1357
        %1375 = vmatprep.subr.bf16.mxu0 0
        %1376 = vmatpush1.bf16.msra.mxu0 %v1356
        %1377 = vmatprep.subr.bf16.mxu0 0
        %1378 = vmatpush1.bf16.msra.mxu0 %v1355
        %1379 = vmatprep.subr.bf16.mxu0 0
        %1380 = vmatpush1.bf16.msra.mxu0 %v1354
        %1381 = vmatprep.subr.bf16.mxu0 0
        %1382 = vmatpush2.bf16.msra.mxu0 0
        %1383 = vmatprep.subr.bf16.mxu0 0
        %1384 = vmatpush2.bf16.msra.mxu0 0
        %1385 = vmatprep.subr.bf16.mxu0 0
        %1386 = vmatpush2.bf16.msra.mxu0 0
        %1387 = vmatprep.subr.bf16.mxu0 0
        %1388 = vmatpush2.bf16.msra.mxu0 0
        %1389 = vmatprep.subr.bf16.mxu0 0
        %1390 = vmatpush2.bf16.msra.mxu0 0
        %1391 = vmatprep.subr.bf16.mxu0 0
        %1392 = vmatpush2.bf16.msra.mxu0 0
        %1393 = vmatprep.subr.bf16.mxu0 0
        %1394 = vmatpush2.bf16.msra.mxu0 0
        %1395 = vmatprep.subr.bf16.mxu0 0
        %1396 = vmatpush2.bf16.msra.mxu0 0
        %1397 = vmatprep.mubr.bf16.mxu0 0
        %1398 = vmatmul.mubr.bf16.gmra.mxu0 %v1363
        %v1399 = vpop.f32.mrf.mxu0
        %v1400 = vadd.f32 0.0, %v1399
        %v1401 = vpop.f32.mrf.mxu0
        %v1402 = vpop.f32.mrf.mxu0
        %v1403 = vadd.f32 0.0, %v1402
        %v1404 = vpop.f32.mrf.mxu0
        %1405 = vdwg.mxu0
        %v1406 = vadd.f32 %v1322, %v1400
        %v1407 = vadd.f32 %v1325, %v1403
        %v1408 = vld [vmem:[#allocation7] sm:$0x1]
        %v1410 = vlaneseq
        %v1411 = vshrl.u32 %v1410, 7
        %v1412 = vsub.s32 0, %v1411
        %v1413 = vrot.slane %v1408, %v1412
        %v1415 = vadd.f32 %v1406, %v1413
        %v1416 = vadd.f32 %v1407, %v1413
        %v1417 = vmax.f32 %v1415, 0.0
        %v1418 = vmax.f32 %v1416, 0.0
        %v1419 = vrot.slane %v1417, 7
        %v1420 = vrot.slane %v1418, 7
        %v1421 = vsel %vm976, %v1419, %v1420
        %v1422 = vsel %vm976, %v1420, %v1419
        %v1423 = vsel %vm981, %v1422, 0.0
        %v1424 = vsel %vm982, %v1421, 0.0
        %v1425 = vrot.slane %v1417, 1
        %v1426 = vrot.slane %v1418, 1
        %v1427 = vsel %vm987, %v1425, %v1426
        %v1428 = vsel %vm987, %v1426, %v1425
        %v1429 = vsel %vm992, %v1427, 0.0
        %v1430 = vsel %vm993, %v1428, 0.0
        %v1431 = vpack.c.bf16 %v1424, %v1423
        %v1432 = vld [vmem:[#allocation9] sm:$0xff]
        %v1433 = vld [vmem:[#allocation9 + $0x8] sm:$0xff]
        %v1434 = vld [vmem:[#allocation9 + $0x10] sm:$0xff]
        %v1435 = vld [vmem:[#allocation9 + $0x18] sm:$0xff]
        %v1436 = vld [vmem:[#allocation9 + $0x20] sm:$0xff]
        %v1437 = vld [vmem:[#allocation9 + $0x28] sm:$0xff]
        %v1438 = vld [vmem:[#allocation9 + $0x30] sm:$0xff]
        %v1439 = vld [vmem:[#allocation9 + $0x38] sm:$0xff]
        %v1440 = vld [vmem:[#allocation9 + $0x40] sm:$0xff]
        %v1441 = vld [vmem:[#allocation9 + $0x48] sm:$0xff]
        %v1442 = vld [vmem:[#allocation9 + $0x50] sm:$0xff]
        %v1443 = vld [vmem:[#allocation9 + $0x58] sm:$0xff]
        %v1444 = vld [vmem:[#allocation9 + $0x60] sm:$0xff]
        %v1445 = vld [vmem:[#allocation9 + $0x68] sm:$0xff]
        %v1446 = vld [vmem:[#allocation9 + $0x70] sm:$0xff]
        %v1447 = vld [vmem:[#allocation9 + $0x78] sm:$0xff]
        %v1448 = vpack.c.bf16 %v1418, %v1417
        %s1449 = scalar_lea.vmem [#allocation9], 128
        %v1450 = vld [vmem:[%s1449] sm:$0xff]
        %v1451 = vld [vmem:[%s1449 + $0x8] sm:$0xff]
        %v1452 = vld [vmem:[%s1449 + $0x10] sm:$0xff]
        %v1453 = vld [vmem:[%s1449 + $0x18] sm:$0xff]
        %v1454 = vld [vmem:[%s1449 + $0x20] sm:$0xff]
        %v1455 = vld [vmem:[%s1449 + $0x28] sm:$0xff]
        %v1456 = vld [vmem:[%s1449 + $0x30] sm:$0xff]
        %v1457 = vld [vmem:[%s1449 + $0x38] sm:$0xff]
        %v1458 = vld [vmem:[%s1449 + $0x40] sm:$0xff]
        %v1459 = vld [vmem:[%s1449 + $0x48] sm:$0xff]
        %v1460 = vld [vmem:[%s1449 + $0x50] sm:$0xff]
        %v1461 = vld [vmem:[%s1449 + $0x58] sm:$0xff]
        %v1462 = vld [vmem:[%s1449 + $0x60] sm:$0xff]
        %v1463 = vld [vmem:[%s1449 + $0x68] sm:$0xff]
        %v1464 = vld [vmem:[%s1449 + $0x70] sm:$0xff]
        %v1465 = vld [vmem:[%s1449 + $0x78] sm:$0xff]
        %v1482 = vunpack.c.l.b16 %v1450
        %v1483 = vunpack.c.h.b16 %v1450
        %v1484 = vunpack.c.l.b16 %v1451
        %v1485 = vunpack.c.h.b16 %v1451
        %v1486 = vunpack.c.l.b16 %v1452
        %v1487 = vunpack.c.h.b16 %v1452
        %v1488 = vunpack.c.l.b16 %v1453
        %v1489 = vunpack.c.h.b16 %v1453
        %v1490 = vunpack.c.l.b16 %v1454
        %v1491 = vunpack.c.h.b16 %v1454
        %v1492 = vunpack.c.l.b16 %v1455
        %v1493 = vunpack.c.h.b16 %v1455
        %v1494 = vunpack.c.l.b16 %v1456
        %v1495 = vunpack.c.h.b16 %v1456
        %v1496 = vunpack.c.l.b16 %v1457
        %v1497 = vunpack.c.h.b16 %v1457
        %v1498 = vunpack.c.l.b16 %v1458
        %v1499 = vunpack.c.h.b16 %v1458
        %v1500 = vunpack.c.l.b16 %v1459
        %v1501 = vunpack.c.h.b16 %v1459
        %v1502 = vunpack.c.l.b16 %v1460
        %v1503 = vunpack.c.h.b16 %v1460
        %v1504 = vunpack.c.l.b16 %v1461
        %v1505 = vunpack.c.h.b16 %v1461
        %v1506 = vunpack.c.l.b16 %v1462
        %v1507 = vunpack.c.h.b16 %v1462
        %v1508 = vunpack.c.l.b16 %v1463
        %v1509 = vunpack.c.h.b16 %v1463
        %v1510 = vunpack.c.l.b16 %v1464
        %v1511 = vunpack.c.h.b16 %v1464
        %v1512 = vunpack.c.l.b16 %v1465
        %v1513 = vunpack.c.h.b16 %v1465
        %v1514 = vpack.c.b16 %v1484, %v1482
        %v1515 = vpack.c.b16 %v1485, %v1483
        %v1516 = vpack.c.b16 %v1488, %v1486
        %v1517 = vpack.c.b16 %v1489, %v1487
        %v1518 = vpack.c.b16 %v1492, %v1490
        %v1519 = vpack.c.b16 %v1493, %v1491
        %v1520 = vpack.c.b16 %v1496, %v1494
        %v1521 = vpack.c.b16 %v1497, %v1495
        %v1522 = vpack.c.b16 %v1500, %v1498
        %v1523 = vpack.c.b16 %v1501, %v1499
        %v1524 = vpack.c.b16 %v1504, %v1502
        %v1525 = vpack.c.b16 %v1505, %v1503
        %v1526 = vpack.c.b16 %v1508, %v1506
        %v1527 = vpack.c.b16 %v1509, %v1507
        %v1528 = vpack.c.b16 %v1512, %v1510
        %v1529 = vpack.c.b16 %v1513, %v1511
        %1546 = vmatprep.subr.bf16.mxu0 %v1529
        %1547 = vmatpush1.bf16.msra.mxu0 %v1528
        %1548 = vmatprep.subr.bf16.mxu0 %v1527
        %1549 = vmatpush1.bf16.msra.mxu0 %v1526
        %1550 = vmatprep.subr.bf16.mxu0 %v1525
        %1551 = vmatpush1.bf16.msra.mxu0 %v1524
        %1552 = vmatprep.subr.bf16.mxu0 %v1523
        %1553 = vmatpush1.bf16.msra.mxu0 %v1522
        %1554 = vmatprep.subr.bf16.mxu0 %v1521
        %1555 = vmatpush1.bf16.msra.mxu0 %v1520
        %1556 = vmatprep.subr.bf16.mxu0 %v1519
        %1557 = vmatpush1.bf16.msra.mxu0 %v1518
        %1558 = vmatprep.subr.bf16.mxu0 %v1517
        %1559 = vmatpush1.bf16.msra.mxu0 %v1516
        %1560 = vmatprep.subr.bf16.mxu0 %v1515
        %1561 = vmatpush1.bf16.msra.mxu0 %v1514
        %1562 = vmatprep.subr.bf16.mxu0 0
        %1563 = vmatpush2.bf16.msra.mxu0 0
        %1564 = vmatprep.subr.bf16.mxu0 0
        %1565 = vmatpush2.bf16.msra.mxu0 0
        %1566 = vmatprep.subr.bf16.mxu0 0
        %1567 = vmatpush2.bf16.msra.mxu0 0
        %1568 = vmatprep.subr.bf16.mxu0 0
        %1569 = vmatpush2.bf16.msra.mxu0 0
        %1570 = vmatprep.subr.bf16.mxu0 0
        %1571 = vmatpush2.bf16.msra.mxu0 0
        %1572 = vmatprep.subr.bf16.mxu0 0
        %1573 = vmatpush2.bf16.msra.mxu0 0
        %1574 = vmatprep.subr.bf16.mxu0 0
        %1575 = vmatpush2.bf16.msra.mxu0 0
        %1576 = vmatprep.subr.bf16.mxu0 0
        %1577 = vmatpush2.bf16.msra.mxu0 0
        %1578 = vmatprep.mubr.bf16.mxu0 0
        %1579 = vmatmul.mubr.bf16.gmra.mxu0 %v1448
        %v1580 = vpop.f32.mrf.mxu0
        %v1581 = vadd.f32 0.0, %v1580
        %v1582 = vpop.f32.mrf.mxu0
        %v1583 = vadd.f32 0.0, %v1582
        %v1584 = vpop.f32.mrf.mxu0
        %v1585 = vadd.f32 0.0, %v1584
        %v1586 = vpop.f32.mrf.mxu0
        %v1587 = vadd.f32 0.0, %v1586
        %1588 = vdwg.mxu0
        %v1605 = vunpack.c.l.b16 %v1432
        %v1606 = vunpack.c.h.b16 %v1432
        %v1607 = vunpack.c.l.b16 %v1433
        %v1608 = vunpack.c.h.b16 %v1433
        %v1609 = vunpack.c.l.b16 %v1434
        %v1610 = vunpack.c.h.b16 %v1434
        %v1611 = vunpack.c.l.b16 %v1435
        %v1612 = vunpack.c.h.b16 %v1435
        %v1613 = vunpack.c.l.b16 %v1436
        %v1614 = vunpack.c.h.b16 %v1436
        %v1615 = vunpack.c.l.b16 %v1437
        %v1616 = vunpack.c.h.b16 %v1437
        %v1617 = vunpack.c.l.b16 %v1438
        %v1618 = vunpack.c.h.b16 %v1438
        %v1619 = vunpack.c.l.b16 %v1439
        %v1620 = vunpack.c.h.b16 %v1439
        %v1621 = vunpack.c.l.b16 %v1440
        %v1622 = vunpack.c.h.b16 %v1440
        %v1623 = vunpack.c.l.b16 %v1441
        %v1624 = vunpack.c.h.b16 %v1441
        %v1625 = vunpack.c.l.b16 %v1442
        %v1626 = vunpack.c.h.b16 %v1442
        %v1627 = vunpack.c.l.b16 %v1443
        %v1628 = vunpack.c.h.b16 %v1443
        %v1629 = vunpack.c.l.b16 %v1444
        %v1630 = vunpack.c.h.b16 %v1444
        %v1631 = vunpack.c.l.b16 %v1445
        %v1632 = vunpack.c.h.b16 %v1445
        %v1633 = vunpack.c.l.b16 %v1446
        %v1634 = vunpack.c.h.b16 %v1446
        %v1635 = vunpack.c.l.b16 %v1447
        %v1636 = vunpack.c.h.b16 %v1447
        %v1637 = vpack.c.b16 %v1607, %v1605
        %v1638 = vpack.c.b16 %v1608, %v1606
        %v1639 = vpack.c.b16 %v1611, %v1609
        %v1640 = vpack.c.b16 %v1612, %v1610
        %v1641 = vpack.c.b16 %v1615, %v1613
        %v1642 = vpack.c.b16 %v1616, %v1614
        %v1643 = vpack.c.b16 %v1619, %v1617
        %v1644 = vpack.c.b16 %v1620, %v1618
        %v1645 = vpack.c.b16 %v1623, %v1621
        %v1646 = vpack.c.b16 %v1624, %v1622
        %v1647 = vpack.c.b16 %v1627, %v1625
        %v1648 = vpack.c.b16 %v1628, %v1626
        %v1649 = vpack.c.b16 %v1631, %v1629
        %v1650 = vpack.c.b16 %v1632, %v1630
        %v1651 = vpack.c.b16 %v1635, %v1633
        %v1652 = vpack.c.b16 %v1636, %v1634
        %1669 = vmatprep.subr.bf16.mxu0 %v1652
        %1670 = vmatpush1.bf16.msra.mxu0 %v1651
        %1671 = vmatprep.subr.bf16.mxu0 %v1650
        %1672 = vmatpush1.bf16.msra.mxu0 %v1649
        %1673 = vmatprep.subr.bf16.mxu0 %v1648
        %1674 = vmatpush1.bf16.msra.mxu0 %v1647
        %1675 = vmatprep.subr.bf16.mxu0 %v1646
        %1676 = vmatpush1.bf16.msra.mxu0 %v1645
        %1677 = vmatprep.subr.bf16.mxu0 %v1644
        %1678 = vmatpush1.bf16.msra.mxu0 %v1643
        %1679 = vmatprep.subr.bf16.mxu0 %v1642
        %1680 = vmatpush1.bf16.msra.mxu0 %v1641
        %1681 = vmatprep.subr.bf16.mxu0 %v1640
        %1682 = vmatpush1.bf16.msra.mxu0 %v1639
        %1683 = vmatprep.subr.bf16.mxu0 %v1638
        %1684 = vmatpush1.bf16.msra.mxu0 %v1637
        %1685 = vmatprep.subr.bf16.mxu0 0
        %1686 = vmatpush2.bf16.msra.mxu0 0
        %1687 = vmatprep.subr.bf16.mxu0 0
        %1688 = vmatpush2.bf16.msra.mxu0 0
        %1689 = vmatprep.subr.bf16.mxu0 0
        %1690 = vmatpush2.bf16.msra.mxu0 0
        %1691 = vmatprep.subr.bf16.mxu0 0
        %1692 = vmatpush2.bf16.msra.mxu0 0
        %1693 = vmatprep.subr.bf16.mxu0 0
        %1694 = vmatpush2.bf16.msra.mxu0 0
        %1695 = vmatprep.subr.bf16.mxu0 0
        %1696 = vmatpush2.bf16.msra.mxu0 0
        %1697 = vmatprep.subr.bf16.mxu0 0
        %1698 = vmatpush2.bf16.msra.mxu0 0
        %1699 = vmatprep.subr.bf16.mxu0 0
        %1700 = vmatpush2.bf16.msra.mxu0 0
        %1701 = vmatprep.mubr.bf16.mxu0 0
        %1702 = vmatmul.mubr.bf16.gmra.mxu0 %v1431
        %v1703 = vpop.f32.mrf.mxu0
        %v1704 = vadd.f32 %v1581, %v1703
        %v1705 = vpop.f32.mrf.mxu0
        %v1706 = vadd.f32 %v1583, %v1705
        %v1707 = vpop.f32.mrf.mxu0
        %v1708 = vadd.f32 %v1585, %v1707
        %v1709 = vpop.f32.mrf.mxu0
        %v1710 = vadd.f32 %v1587, %v1709
        %1711 = vdwg.mxu0
        %v1712 = vpack.c.bf16 %v1430, %v1429
        %s1713 = scalar_lea.vmem [#allocation9], 256
        %v1714 = vld [vmem:[%s1713] sm:$0xff]
        %v1715 = vld [vmem:[%s1713 + $0x8] sm:$0xff]
        %v1716 = vld [vmem:[%s1713 + $0x10] sm:$0xff]
        %v1717 = vld [vmem:[%s1713 + $0x18] sm:$0xff]
        %v1718 = vld [vmem:[%s1713 + $0x20] sm:$0xff]
        %v1719 = vld [vmem:[%s1713 + $0x28] sm:$0xff]
        %v1720 = vld [vmem:[%s1713 + $0x30] sm:$0xff]
        %v1721 = vld [vmem:[%s1713 + $0x38] sm:$0xff]
        %v1722 = vld [vmem:[%s1713 + $0x40] sm:$0xff]
        %v1723 = vld [vmem:[%s1713 + $0x48] sm:$0xff]
        %v1724 = vld [vmem:[%s1713 + $0x50] sm:$0xff]
        %v1725 = vld [vmem:[%s1713 + $0x58] sm:$0xff]
        %v1726 = vld [vmem:[%s1713 + $0x60] sm:$0xff]
        %v1727 = vld [vmem:[%s1713 + $0x68] sm:$0xff]
        %v1728 = vld [vmem:[%s1713 + $0x70] sm:$0xff]
        %v1729 = vld [vmem:[%s1713 + $0x78] sm:$0xff]
        %v1746 = vunpack.c.l.b16 %v1714
        %v1747 = vunpack.c.h.b16 %v1714
        %v1748 = vunpack.c.l.b16 %v1715
        %v1749 = vunpack.c.h.b16 %v1715
        %v1750 = vunpack.c.l.b16 %v1716
        %v1751 = vunpack.c.h.b16 %v1716
        %v1752 = vunpack.c.l.b16 %v1717
        %v1753 = vunpack.c.h.b16 %v1717
        %v1754 = vunpack.c.l.b16 %v1718
        %v1755 = vunpack.c.h.b16 %v1718
        %v1756 = vunpack.c.l.b16 %v1719
        %v1757 = vunpack.c.h.b16 %v1719
        %v1758 = vunpack.c.l.b16 %v1720
        %v1759 = vunpack.c.h.b16 %v1720
        %v1760 = vunpack.c.l.b16 %v1721
        %v1761 = vunpack.c.h.b16 %v1721
        %v1762 = vunpack.c.l.b16 %v1722
        %v1763 = vunpack.c.h.b16 %v1722
        %v1764 = vunpack.c.l.b16 %v1723
        %v1765 = vunpack.c.h.b16 %v1723
        %v1766 = vunpack.c.l.b16 %v1724
        %v1767 = vunpack.c.h.b16 %v1724
        %v1768 = vunpack.c.l.b16 %v1725
        %v1769 = vunpack.c.h.b16 %v1725
        %v1770 = vunpack.c.l.b16 %v1726
        %v1771 = vunpack.c.h.b16 %v1726
        %v1772 = vunpack.c.l.b16 %v1727
        %v1773 = vunpack.c.h.b16 %v1727
        %v1774 = vunpack.c.l.b16 %v1728
        %v1775 = vunpack.c.h.b16 %v1728
        %v1776 = vunpack.c.l.b16 %v1729
        %v1777 = vunpack.c.h.b16 %v1729
        %v1778 = vpack.c.b16 %v1748, %v1746
        %v1779 = vpack.c.b16 %v1749, %v1747
        %v1780 = vpack.c.b16 %v1752, %v1750
        %v1781 = vpack.c.b16 %v1753, %v1751
        %v1782 = vpack.c.b16 %v1756, %v1754
        %v1783 = vpack.c.b16 %v1757, %v1755
        %v1784 = vpack.c.b16 %v1760, %v1758
        %v1785 = vpack.c.b16 %v1761, %v1759
        %v1786 = vpack.c.b16 %v1764, %v1762
        %v1787 = vpack.c.b16 %v1765, %v1763
        %v1788 = vpack.c.b16 %v1768, %v1766
        %v1789 = vpack.c.b16 %v1769, %v1767
        %v1790 = vpack.c.b16 %v1772, %v1770
        %v1791 = vpack.c.b16 %v1773, %v1771
        %v1792 = vpack.c.b16 %v1776, %v1774
        %v1793 = vpack.c.b16 %v1777, %v1775
        %1810 = vmatprep.subr.bf16.mxu0 %v1793
        %1811 = vmatpush1.bf16.msra.mxu0 %v1792
        %1812 = vmatprep.subr.bf16.mxu0 %v1791
        %1813 = vmatpush1.bf16.msra.mxu0 %v1790
        %1814 = vmatprep.subr.bf16.mxu0 %v1789
        %1815 = vmatpush1.bf16.msra.mxu0 %v1788
        %1816 = vmatprep.subr.bf16.mxu0 %v1787
        %1817 = vmatpush1.bf16.msra.mxu0 %v1786
        %1818 = vmatprep.subr.bf16.mxu0 %v1785
        %1819 = vmatpush1.bf16.msra.mxu0 %v1784
        %1820 = vmatprep.subr.bf16.mxu0 %v1783
        %1821 = vmatpush1.bf16.msra.mxu0 %v1782
        %1822 = vmatprep.subr.bf16.mxu0 %v1781
        %1823 = vmatpush1.bf16.msra.mxu0 %v1780
        %1824 = vmatprep.subr.bf16.mxu0 %v1779
        %1825 = vmatpush1.bf16.msra.mxu0 %v1778
        %1826 = vmatprep.subr.bf16.mxu0 0
        %1827 = vmatpush2.bf16.msra.mxu0 0
        %1828 = vmatprep.subr.bf16.mxu0 0
        %1829 = vmatpush2.bf16.msra.mxu0 0
        %1830 = vmatprep.subr.bf16.mxu0 0
        %1831 = vmatpush2.bf16.msra.mxu0 0
        %1832 = vmatprep.subr.bf16.mxu0 0
        %1833 = vmatpush2.bf16.msra.mxu0 0
        %1834 = vmatprep.subr.bf16.mxu0 0
        %1835 = vmatpush2.bf16.msra.mxu0 0
        %1836 = vmatprep.subr.bf16.mxu0 0
        %1837 = vmatpush2.bf16.msra.mxu0 0
        %1838 = vmatprep.subr.bf16.mxu0 0
        %1839 = vmatpush2.bf16.msra.mxu0 0
        %1840 = vmatprep.subr.bf16.mxu0 0
        %1841 = vmatpush2.bf16.msra.mxu0 0
        %1842 = vmatprep.mubr.bf16.mxu0 0
        %1843 = vmatmul.mubr.bf16.gmra.mxu0 %v1712
        %v1844 = vpop.f32.mrf.mxu0
        %v1845 = vadd.f32 0.0, %v1844
        %v1846 = vpop.f32.mrf.mxu0
        %v1847 = vadd.f32 0.0, %v1846
        %v1848 = vpop.f32.mrf.mxu0
        %v1849 = vadd.f32 0.0, %v1848
        %v1850 = vpop.f32.mrf.mxu0
        %v1851 = vadd.f32 0.0, %v1850
        %1852 = vdwg.mxu0
        %v1853 = vadd.f32 %v1704, %v1845
        %v1854 = vadd.f32 %v1706, %v1847
        %v1855 = vadd.f32 %v1708, %v1849
        %v1856 = vadd.f32 %v1710, %v1851
        %v1857 = vld [vmem:[#allocation10] sm:$0x3]
        %v1859 = vlaneseq
        %v1860 = vshrl.u32 %v1859, 7
        %v1861 = vsub.s32 0, %v1860
        %v1862 = vrot.slane %v1857, %v1861
        %v1863 = vlaneseq
        %v1864 = vshrl.u32 %v1863, 7
        %v1865 = vsub.s32 1, %v1864
        %v1866 = vrot.slane %v1857, %v1865
        %v1869 = vadd.f32 %v1853, %v1862
        %v1870 = vadd.f32 %v1854, %v1866
        %v1871 = vadd.f32 %v1855, %v1862
        %v1872 = vadd.f32 %v1856, %v1866
        %v1873 = vmax.f32 %v1869, 0.0
        %v1874 = vmax.f32 %v1870, 0.0
        %v1875 = vmax.f32 %v1871, 0.0
        %v1876 = vmax.f32 %v1872, 0.0
        %v1877 = vrot.slane %v1873, 7
        %v1878 = vrot.slane %v1874, 7
        %v1879 = vrot.slane %v1875, 7
        %v1880 = vrot.slane %v1876, 7
        %v1881 = vsel %vm976, %v1877, %v1879
        %v1882 = vsel %vm976, %v1878, %v1880
        %v1883 = vsel %vm976, %v1879, %v1877
        %v1884 = vsel %vm976, %v1880, %v1878
        %v1885 = vsel %vm981, %v1883, 0.0
        %v1886 = vsel %vm981, %v1884, 0.0
        %v1887 = vsel %vm982, %v1881, 0.0
        %v1888 = vsel %vm982, %v1882, 0.0
        %v1889 = vrot.slane %v1873, 1
        %v1890 = vrot.slane %v1874, 1
        %v1891 = vrot.slane %v1875, 1
        %v1892 = vrot.slane %v1876, 1
        %v1893 = vsel %vm987, %v1889, %v1891
        %v1894 = vsel %vm987, %v1890, %v1892
        %v1895 = vsel %vm987, %v1891, %v1889
        %v1896 = vsel %vm987, %v1892, %v1890
        %v1897 = vsel %vm992, %v1893, 0.0
        %v1898 = vsel %vm992, %v1894, 0.0
        %v1899 = vsel %vm993, %v1895, 0.0
        %v1900 = vsel %vm993, %v1896, 0.0
        %v1901 = vpack.c.bf16 %v1887, %v1885
        %v1902 = vpack.c.bf16 %v1888, %v1886
        %v1903 = vld [vmem:[#allocation12] sm:$0xff]
        %v1904 = vld [vmem:[#allocation12 + $0x8] sm:$0xff]
        %v1905 = vld [vmem:[#allocation12 + $0x10] sm:$0xff]
        %v1906 = vld [vmem:[#allocation12 + $0x18] sm:$0xff]
        %v1907 = vld [vmem:[#allocation12 + $0x20] sm:$0xff]
        %v1908 = vld [vmem:[#allocation12 + $0x28] sm:$0xff]
        %v1909 = vld [vmem:[#allocation12 + $0x30] sm:$0xff]
        %v1910 = vld [vmem:[#allocation12 + $0x38] sm:$0xff]
        %v1911 = vld [vmem:[#allocation12 + $0x40] sm:$0xff]
        %v1912 = vld [vmem:[#allocation12 + $0x48] sm:$0xff]
        %v1913 = vld [vmem:[#allocation12 + $0x50] sm:$0xff]
        %v1914 = vld [vmem:[#allocation12 + $0x58] sm:$0xff]
        %v1915 = vld [vmem:[#allocation12 + $0x60] sm:$0xff]
        %v1916 = vld [vmem:[#allocation12 + $0x68] sm:$0xff]
        %v1917 = vld [vmem:[#allocation12 + $0x70] sm:$0xff]
        %v1918 = vld [vmem:[#allocation12 + $0x78] sm:$0xff]
        %v1919 = vld [vmem:[#allocation12 + $0x80] sm:$0xff]
        %v1920 = vld [vmem:[#allocation12 + $0x88] sm:$0xff]
        %v1921 = vld [vmem:[#allocation12 + $0x90] sm:$0xff]
        %v1922 = vld [vmem:[#allocation12 + $0x98] sm:$0xff]
        %v1923 = vld [vmem:[#allocation12 + $0xa0] sm:$0xff]
        %v1924 = vld [vmem:[#allocation12 + $0xa8] sm:$0xff]
        %v1925 = vld [vmem:[#allocation12 + $0xb0] sm:$0xff]
        %v1926 = vld [vmem:[#allocation12 + $0xb8] sm:$0xff]
        %v1927 = vld [vmem:[#allocation12 + $0xc0] sm:$0xff]
        %v1928 = vld [vmem:[#allocation12 + $0xc8] sm:$0xff]
        %v1929 = vld [vmem:[#allocation12 + $0xd0] sm:$0xff]
        %v1930 = vld [vmem:[#allocation12 + $0xd8] sm:$0xff]
        %v1931 = vld [vmem:[#allocation12 + $0xe0] sm:$0xff]
        %v1932 = vld [vmem:[#allocation12 + $0xe8] sm:$0xff]
        %v1933 = vld [vmem:[#allocation12 + $0xf0] sm:$0xff]
        %v1934 = vld [vmem:[#allocation12 + $0xf8] sm:$0xff]
        %v1935 = vld [vmem:[#allocation12 + $0x100] sm:$0xff]
        %v1936 = vld [vmem:[#allocation12 + $0x108] sm:$0xff]
        %v1937 = vld [vmem:[#allocation12 + $0x110] sm:$0xff]
        %v1938 = vld [vmem:[#allocation12 + $0x118] sm:$0xff]
        %v1939 = vld [vmem:[#allocation12 + $0x120] sm:$0xff]
        %v1940 = vld [vmem:[#allocation12 + $0x128] sm:$0xff]
        %v1941 = vld [vmem:[#allocation12 + $0x130] sm:$0xff]
        %v1942 = vld [vmem:[#allocation12 + $0x138] sm:$0xff]
        %v1943 = vld [vmem:[#allocation12 + $0x140] sm:$0xff]
        %v1944 = vld [vmem:[#allocation12 + $0x148] sm:$0xff]
        %v1945 = vld [vmem:[#allocation12 + $0x150] sm:$0xff]
        %v1946 = vld [vmem:[#allocation12 + $0x158] sm:$0xff]
        %v1947 = vld [vmem:[#allocation12 + $0x160] sm:$0xff]
        %v1948 = vld [vmem:[#allocation12 + $0x168] sm:$0xff]
        %v1949 = vld [vmem:[#allocation12 + $0x170] sm:$0xff]
        %v1950 = vld [vmem:[#allocation12 + $0x178] sm:$0xff]
        %v1951 = vld [vmem:[#allocation12 + $0x180] sm:$0xff]
        %v1952 = vld [vmem:[#allocation12 + $0x188] sm:$0xff]
        %v1953 = vld [vmem:[#allocation12 + $0x190] sm:$0xff]
        %v1954 = vld [vmem:[#allocation12 + $0x198] sm:$0xff]
        %v1955 = vld [vmem:[#allocation12 + $0x1a0] sm:$0xff]
        %v1956 = vld [vmem:[#allocation12 + $0x1a8] sm:$0xff]
        %v1957 = vld [vmem:[#allocation12 + $0x1b0] sm:$0xff]
        %v1958 = vld [vmem:[#allocation12 + $0x1b8] sm:$0xff]
        %v1959 = vld [vmem:[#allocation12 + $0x1c0] sm:$0xff]
        %v1960 = vld [vmem:[#allocation12 + $0x1c8] sm:$0xff]
        %v1961 = vld [vmem:[#allocation12 + $0x1d0] sm:$0xff]
        %v1962 = vld [vmem:[#allocation12 + $0x1d8] sm:$0xff]
        %v1963 = vld [vmem:[#allocation12 + $0x1e0] sm:$0xff]
        %v1964 = vld [vmem:[#allocation12 + $0x1e8] sm:$0xff]
        %v1965 = vld [vmem:[#allocation12 + $0x1f0] sm:$0xff]
        %v1966 = vld [vmem:[#allocation12 + $0x1f8] sm:$0xff]
        %v1967 = vpack.c.bf16 %v1875, %v1873
        %v1968 = vpack.c.bf16 %v1876, %v1874
        %s1969 = scalar_lea.vmem [#allocation12], 512
        %v1970 = vld [vmem:[%s1969] sm:$0xff]
        %v1971 = vld [vmem:[%s1969 + $0x8] sm:$0xff]
        %v1972 = vld [vmem:[%s1969 + $0x10] sm:$0xff]
        %v1973 = vld [vmem:[%s1969 + $0x18] sm:$0xff]
        %v1974 = vld [vmem:[%s1969 + $0x20] sm:$0xff]
        %v1975 = vld [vmem:[%s1969 + $0x28] sm:$0xff]
        %v1976 = vld [vmem:[%s1969 + $0x30] sm:$0xff]
        %v1977 = vld [vmem:[%s1969 + $0x38] sm:$0xff]
        %v1978 = vld [vmem:[%s1969 + $0x40] sm:$0xff]
        %v1979 = vld [vmem:[%s1969 + $0x48] sm:$0xff]
        %v1980 = vld [vmem:[%s1969 + $0x50] sm:$0xff]
        %v1981 = vld [vmem:[%s1969 + $0x58] sm:$0xff]
        %v1982 = vld [vmem:[%s1969 + $0x60] sm:$0xff]
        %v1983 = vld [vmem:[%s1969 + $0x68] sm:$0xff]
        %v1984 = vld [vmem:[%s1969 + $0x70] sm:$0xff]
        %v1985 = vld [vmem:[%s1969 + $0x78] sm:$0xff]
        %v1986 = vld [vmem:[%s1969 + $0x80] sm:$0xff]
        %v1987 = vld [vmem:[%s1969 + $0x88] sm:$0xff]
        %v1988 = vld [vmem:[%s1969 + $0x90] sm:$0xff]
        %v1989 = vld [vmem:[%s1969 + $0x98] sm:$0xff]
        %v1990 = vld [vmem:[%s1969 + $0xa0] sm:$0xff]
        %v1991 = vld [vmem:[%s1969 + $0xa8] sm:$0xff]
        %v1992 = vld [vmem:[%s1969 + $0xb0] sm:$0xff]
        %v1993 = vld [vmem:[%s1969 + $0xb8] sm:$0xff]
        %v1994 = vld [vmem:[%s1969 + $0xc0] sm:$0xff]
        %v1995 = vld [vmem:[%s1969 + $0xc8] sm:$0xff]
        %v1996 = vld [vmem:[%s1969 + $0xd0] sm:$0xff]
        %v1997 = vld [vmem:[%s1969 + $0xd8] sm:$0xff]
        %v1998 = vld [vmem:[%s1969 + $0xe0] sm:$0xff]
        %v1999 = vld [vmem:[%s1969 + $0xe8] sm:$0xff]
        %v2000 = vld [vmem:[%s1969 + $0xf0] sm:$0xff]
        %v2001 = vld [vmem:[%s1969 + $0xf8] sm:$0xff]
        %v2002 = vld [vmem:[%s1969 + $0x100] sm:$0xff]
        %v2003 = vld [vmem:[%s1969 + $0x108] sm:$0xff]
        %v2004 = vld [vmem:[%s1969 + $0x110] sm:$0xff]
        %v2005 = vld [vmem:[%s1969 + $0x118] sm:$0xff]
        %v2006 = vld [vmem:[%s1969 + $0x120] sm:$0xff]
        %v2007 = vld [vmem:[%s1969 + $0x128] sm:$0xff]
        %v2008 = vld [vmem:[%s1969 + $0x130] sm:$0xff]
        %v2009 = vld [vmem:[%s1969 + $0x138] sm:$0xff]
        %v2010 = vld [vmem:[%s1969 + $0x140] sm:$0xff]
        %v2011 = vld [vmem:[%s1969 + $0x148] sm:$0xff]
        %v2012 = vld [vmem:[%s1969 + $0x150] sm:$0xff]
        %v2013 = vld [vmem:[%s1969 + $0x158] sm:$0xff]
        %v2014 = vld [vmem:[%s1969 + $0x160] sm:$0xff]
        %v2015 = vld [vmem:[%s1969 + $0x168] sm:$0xff]
        %v2016 = vld [vmem:[%s1969 + $0x170] sm:$0xff]
        %v2017 = vld [vmem:[%s1969 + $0x178] sm:$0xff]
        %v2018 = vld [vmem:[%s1969 + $0x180] sm:$0xff]
        %v2019 = vld [vmem:[%s1969 + $0x188] sm:$0xff]
        %v2020 = vld [vmem:[%s1969 + $0x190] sm:$0xff]
        %v2021 = vld [vmem:[%s1969 + $0x198] sm:$0xff]
        %v2022 = vld [vmem:[%s1969 + $0x1a0] sm:$0xff]
        %v2023 = vld [vmem:[%s1969 + $0x1a8] sm:$0xff]
        %v2024 = vld [vmem:[%s1969 + $0x1b0] sm:$0xff]
        %v2025 = vld [vmem:[%s1969 + $0x1b8] sm:$0xff]
        %v2026 = vld [vmem:[%s1969 + $0x1c0] sm:$0xff]
        %v2027 = vld [vmem:[%s1969 + $0x1c8] sm:$0xff]
        %v2028 = vld [vmem:[%s1969 + $0x1d0] sm:$0xff]
        %v2029 = vld [vmem:[%s1969 + $0x1d8] sm:$0xff]
        %v2030 = vld [vmem:[%s1969 + $0x1e0] sm:$0xff]
        %v2031 = vld [vmem:[%s1969 + $0x1e8] sm:$0xff]
        %v2032 = vld [vmem:[%s1969 + $0x1f0] sm:$0xff]
        %v2033 = vld [vmem:[%s1969 + $0x1f8] sm:$0xff]
        %v2098 = vunpack.c.l.b16 %v1970
        %v2099 = vunpack.c.h.b16 %v1970
        %v2100 = vunpack.c.l.b16 %v1971
        %v2101 = vunpack.c.h.b16 %v1971
        %v2102 = vunpack.c.l.b16 %v1972
        %v2103 = vunpack.c.h.b16 %v1972
        %v2104 = vunpack.c.l.b16 %v1973
        %v2105 = vunpack.c.h.b16 %v1973
        %v2106 = vunpack.c.l.b16 %v1974
        %v2107 = vunpack.c.h.b16 %v1974
        %v2108 = vunpack.c.l.b16 %v1975
        %v2109 = vunpack.c.h.b16 %v1975
        %v2110 = vunpack.c.l.b16 %v1976
        %v2111 = vunpack.c.h.b16 %v1976
        %v2112 = vunpack.c.l.b16 %v1977
        %v2113 = vunpack.c.h.b16 %v1977
        %v2114 = vunpack.c.l.b16 %v1978
        %v2115 = vunpack.c.h.b16 %v1978
        %v2116 = vunpack.c.l.b16 %v1979
        %v2117 = vunpack.c.h.b16 %v1979
        %v2118 = vunpack.c.l.b16 %v1980
        %v2119 = vunpack.c.h.b16 %v1980
        %v2120 = vunpack.c.l.b16 %v1981
        %v2121 = vunpack.c.h.b16 %v1981
        %v2122 = vunpack.c.l.b16 %v1982
        %v2123 = vunpack.c.h.b16 %v1982
        %v2124 = vunpack.c.l.b16 %v1983
        %v2125 = vunpack.c.h.b16 %v1983
        %v2126 = vunpack.c.l.b16 %v1984
        %v2127 = vunpack.c.h.b16 %v1984
        %v2128 = vunpack.c.l.b16 %v1985
        %v2129 = vunpack.c.h.b16 %v1985
        %v2130 = vunpack.c.l.b16 %v1986
        %v2131 = vunpack.c.h.b16 %v1986
        %v2132 = vunpack.c.l.b16 %v1987
        %v2133 = vunpack.c.h.b16 %v1987
        %v2134 = vunpack.c.l.b16 %v1988
        %v2135 = vunpack.c.h.b16 %v1988
        %v2136 = vunpack.c.l.b16 %v1989
        %v2137 = vunpack.c.h.b16 %v1989
        %v2138 = vunpack.c.l.b16 %v1990
        %v2139 = vunpack.c.h.b16 %v1990
        %v2140 = vunpack.c.l.b16 %v1991
        %v2141 = vunpack.c.h.b16 %v1991
        %v2142 = vunpack.c.l.b16 %v1992
        %v2143 = vunpack.c.h.b16 %v1992
        %v2144 = vunpack.c.l.b16 %v1993
        %v2145 = vunpack.c.h.b16 %v1993
        %v2146 = vunpack.c.l.b16 %v1994
        %v2147 = vunpack.c.h.b16 %v1994
        %v2148 = vunpack.c.l.b16 %v1995
        %v2149 = vunpack.c.h.b16 %v1995
        %v2150 = vunpack.c.l.b16 %v1996
        %v2151 = vunpack.c.h.b16 %v1996
        %v2152 = vunpack.c.l.b16 %v1997
        %v2153 = vunpack.c.h.b16 %v1997
        %v2154 = vunpack.c.l.b16 %v1998
        %v2155 = vunpack.c.h.b16 %v1998
        %v2156 = vunpack.c.l.b16 %v1999
        %v2157 = vunpack.c.h.b16 %v1999
        %v2158 = vunpack.c.l.b16 %v2000
        %v2159 = vunpack.c.h.b16 %v2000
        %v2160 = vunpack.c.l.b16 %v2001
        %v2161 = vunpack.c.h.b16 %v2001
        %v2162 = vunpack.c.l.b16 %v2002
        %v2163 = vunpack.c.h.b16 %v2002
        %v2164 = vunpack.c.l.b16 %v2003
        %v2165 = vunpack.c.h.b16 %v2003
        %v2166 = vunpack.c.l.b16 %v2004
        %v2167 = vunpack.c.h.b16 %v2004
        %v2168 = vunpack.c.l.b16 %v2005
        %v2169 = vunpack.c.h.b16 %v2005
        %v2170 = vunpack.c.l.b16 %v2006
        %v2171 = vunpack.c.h.b16 %v2006
        %v2172 = vunpack.c.l.b16 %v2007
        %v2173 = vunpack.c.h.b16 %v2007
        %v2174 = vunpack.c.l.b16 %v2008
        %v2175 = vunpack.c.h.b16 %v2008
        %v2176 = vunpack.c.l.b16 %v2009
        %v2177 = vunpack.c.h.b16 %v2009
        %v2178 = vunpack.c.l.b16 %v2010
        %v2179 = vunpack.c.h.b16 %v2010
        %v2180 = vunpack.c.l.b16 %v2011
        %v2181 = vunpack.c.h.b16 %v2011
        %v2182 = vunpack.c.l.b16 %v2012
        %v2183 = vunpack.c.h.b16 %v2012
        %v2184 = vunpack.c.l.b16 %v2013
        %v2185 = vunpack.c.h.b16 %v2013
        %v2186 = vunpack.c.l.b16 %v2014
        %v2187 = vunpack.c.h.b16 %v2014
        %v2188 = vunpack.c.l.b16 %v2015
        %v2189 = vunpack.c.h.b16 %v2015
        %v2190 = vunpack.c.l.b16 %v2016
        %v2191 = vunpack.c.h.b16 %v2016
        %v2192 = vunpack.c.l.b16 %v2017
        %v2193 = vunpack.c.h.b16 %v2017
        %v2194 = vunpack.c.l.b16 %v2018
        %v2195 = vunpack.c.h.b16 %v2018
        %v2196 = vunpack.c.l.b16 %v2019
        %v2197 = vunpack.c.h.b16 %v2019
        %v2198 = vunpack.c.l.b16 %v2020
        %v2199 = vunpack.c.h.b16 %v2020
        %v2200 = vunpack.c.l.b16 %v2021
        %v2201 = vunpack.c.h.b16 %v2021
        %v2202 = vunpack.c.l.b16 %v2022
        %v2203 = vunpack.c.h.b16 %v2022
        %v2204 = vunpack.c.l.b16 %v2023
        %v2205 = vunpack.c.h.b16 %v2023
        %v2206 = vunpack.c.l.b16 %v2024
        %v2207 = vunpack.c.h.b16 %v2024
        %v2208 = vunpack.c.l.b16 %v2025
        %v2209 = vunpack.c.h.b16 %v2025
        %v2210 = vunpack.c.l.b16 %v2026
        %v2211 = vunpack.c.h.b16 %v2026
        %v2212 = vunpack.c.l.b16 %v2027
        %v2213 = vunpack.c.h.b16 %v2027
        %v2214 = vunpack.c.l.b16 %v2028
        %v2215 = vunpack.c.h.b16 %v2028
        %v2216 = vunpack.c.l.b16 %v2029
        %v2217 = vunpack.c.h.b16 %v2029
        %v2218 = vunpack.c.l.b16 %v2030
        %v2219 = vunpack.c.h.b16 %v2030
        %v2220 = vunpack.c.l.b16 %v2031
        %v2221 = vunpack.c.h.b16 %v2031
        %v2222 = vunpack.c.l.b16 %v2032
        %v2223 = vunpack.c.h.b16 %v2032
        %v2224 = vunpack.c.l.b16 %v2033
        %v2225 = vunpack.c.h.b16 %v2033
        %v2226 = vpack.c.b16 %v2102, %v2098
        %v2227 = vpack.c.b16 %v2103, %v2099
        %v2228 = vpack.c.b16 %v2104, %v2100
        %v2229 = vpack.c.b16 %v2105, %v2101
        %v2230 = vpack.c.b16 %v2110, %v2106
        %v2231 = vpack.c.b16 %v2111, %v2107
        %v2232 = vpack.c.b16 %v2112, %v2108
        %v2233 = vpack.c.b16 %v2113, %v2109
        %v2234 = vpack.c.b16 %v2118, %v2114
        %v2235 = vpack.c.b16 %v2119, %v2115
        %v2236 = vpack.c.b16 %v2120, %v2116
        %v2237 = vpack.c.b16 %v2121, %v2117
        %v2238 = vpack.c.b16 %v2126, %v2122
        %v2239 = vpack.c.b16 %v2127, %v2123
        %v2240 = vpack.c.b16 %v2128, %v2124
        %v2241 = vpack.c.b16 %v2129, %v2125
        %v2242 = vpack.c.b16 %v2134, %v2130
        %v2243 = vpack.c.b16 %v2135, %v2131
        %v2244 = vpack.c.b16 %v2136, %v2132
        %v2245 = vpack.c.b16 %v2137, %v2133
        %v2246 = vpack.c.b16 %v2142, %v2138
        %v2247 = vpack.c.b16 %v2143, %v2139
        %v2248 = vpack.c.b16 %v2144, %v2140
        %v2249 = vpack.c.b16 %v2145, %v2141
        %v2250 = vpack.c.b16 %v2150, %v2146
        %v2251 = vpack.c.b16 %v2151, %v2147
        %v2252 = vpack.c.b16 %v2152, %v2148
        %v2253 = vpack.c.b16 %v2153, %v2149
        %v2254 = vpack.c.b16 %v2158, %v2154
        %v2255 = vpack.c.b16 %v2159, %v2155
        %v2256 = vpack.c.b16 %v2160, %v2156
        %v2257 = vpack.c.b16 %v2161, %v2157
        %v2258 = vpack.c.b16 %v2166, %v2162
        %v2259 = vpack.c.b16 %v2167, %v2163
        %v2260 = vpack.c.b16 %v2168, %v2164
        %v2261 = vpack.c.b16 %v2169, %v2165
        %v2262 = vpack.c.b16 %v2174, %v2170
        %v2263 = vpack.c.b16 %v2175, %v2171
        %v2264 = vpack.c.b16 %v2176, %v2172
        %v2265 = vpack.c.b16 %v2177, %v2173
        %v2266 = vpack.c.b16 %v2182, %v2178
        %v2267 = vpack.c.b16 %v2183, %v2179
        %v2268 = vpack.c.b16 %v2184, %v2180
        %v2269 = vpack.c.b16 %v2185, %v2181
        %v2270 = vpack.c.b16 %v2190, %v2186
        %v2271 = vpack.c.b16 %v2191, %v2187
        %v2272 = vpack.c.b16 %v2192, %v2188
        %v2273 = vpack.c.b16 %v2193, %v2189
        %v2274 = vpack.c.b16 %v2198, %v2194
        %v2275 = vpack.c.b16 %v2199, %v2195
        %v2276 = vpack.c.b16 %v2200, %v2196
        %v2277 = vpack.c.b16 %v2201, %v2197
        %v2278 = vpack.c.b16 %v2206, %v2202
        %v2279 = vpack.c.b16 %v2207, %v2203
        %v2280 = vpack.c.b16 %v2208, %v2204
        %v2281 = vpack.c.b16 %v2209, %v2205
        %v2282 = vpack.c.b16 %v2214, %v2210
        %v2283 = vpack.c.b16 %v2215, %v2211
        %v2284 = vpack.c.b16 %v2216, %v2212
        %v2285 = vpack.c.b16 %v2217, %v2213
        %v2286 = vpack.c.b16 %v2222, %v2218
        %v2287 = vpack.c.b16 %v2223, %v2219
        %v2288 = vpack.c.b16 %v2224, %v2220
        %v2289 = vpack.c.b16 %v2225, %v2221
        %2354 = vmatprep.subr.bf16.mxu0 %v2255
        %2355 = vmatpush1.bf16.msra.mxu0 %v2254
        %2356 = vmatprep.subr.bf16.mxu0 %v2251
        %2357 = vmatpush1.bf16.msra.mxu0 %v2250
        %2358 = vmatprep.subr.bf16.mxu0 %v2247
        %2359 = vmatpush1.bf16.msra.mxu0 %v2246
        %2360 = vmatprep.subr.bf16.mxu0 %v2243
        %2361 = vmatpush1.bf16.msra.mxu0 %v2242
        %2362 = vmatprep.subr.bf16.mxu0 %v2239
        %2363 = vmatpush1.bf16.msra.mxu0 %v2238
        %2364 = vmatprep.subr.bf16.mxu0 %v2235
        %2365 = vmatpush1.bf16.msra.mxu0 %v2234
        %2366 = vmatprep.subr.bf16.mxu0 %v2231
        %2367 = vmatpush1.bf16.msra.mxu0 %v2230
        %2368 = vmatprep.subr.bf16.mxu0 %v2227
        %2369 = vmatpush1.bf16.msra.mxu0 %v2226
        %2370 = vmatprep.subr.bf16.mxu0 %v2287
        %2371 = vmatpush2.bf16.msra.mxu0 %v2286
        %2372 = vmatprep.subr.bf16.mxu0 %v2283
        %2373 = vmatpush2.bf16.msra.mxu0 %v2282
        %2374 = vmatprep.subr.bf16.mxu0 %v2279
        %2375 = vmatpush2.bf16.msra.mxu0 %v2278
        %2376 = vmatprep.subr.bf16.mxu0 %v2275
        %2377 = vmatpush2.bf16.msra.mxu0 %v2274
        %2378 = vmatprep.subr.bf16.mxu0 %v2271
        %2379 = vmatpush2.bf16.msra.mxu0 %v2270
        %2380 = vmatprep.subr.bf16.mxu0 %v2267
        %2381 = vmatpush2.bf16.msra.mxu0 %v2266
        %2382 = vmatprep.subr.bf16.mxu0 %v2263
        %2383 = vmatpush2.bf16.msra.mxu0 %v2262
        %2384 = vmatprep.subr.bf16.mxu0 %v2259
        %2385 = vmatpush2.bf16.msra.mxu0 %v2258
        %2386 = vmatprep.mubr.bf16.mxu0 %v1968
        %2387 = vmatmul.mubr.bf16.gmra.mxu0 %v1967
        %v2388 = vpop.f32.mrf.mxu0
        %v2389 = vadd.f32 0.0, %v2388
        %v2390 = vpop.f32.mrf.mxu0
        %v2391 = vadd.f32 0.0, %v2390
        %v2392 = vpop.f32.mrf.mxu0
        %v2393 = vadd.f32 0.0, %v2392
        %v2394 = vpop.f32.mrf.mxu0
        %v2395 = vadd.f32 0.0, %v2394
        %2396 = vdwg.mxu0
        %2397 = vmatprep.subr.bf16.mxu0 %v2257
        %2398 = vmatpush1.bf16.msra.mxu0 %v2256
        %2399 = vmatprep.subr.bf16.mxu0 %v2253
        %2400 = vmatpush1.bf16.msra.mxu0 %v2252
        %2401 = vmatprep.subr.bf16.mxu0 %v2249
        %2402 = vmatpush1.bf16.msra.mxu0 %v2248
        %2403 = vmatprep.subr.bf16.mxu0 %v2245
        %2404 = vmatpush1.bf16.msra.mxu0 %v2244
        %2405 = vmatprep.subr.bf16.mxu0 %v2241
        %2406 = vmatpush1.bf16.msra.mxu0 %v2240
        %2407 = vmatprep.subr.bf16.mxu0 %v2237
        %2408 = vmatpush1.bf16.msra.mxu0 %v2236
        %2409 = vmatprep.subr.bf16.mxu0 %v2233
        %2410 = vmatpush1.bf16.msra.mxu0 %v2232
        %2411 = vmatprep.subr.bf16.mxu0 %v2229
        %2412 = vmatpush1.bf16.msra.mxu0 %v2228
        %2413 = vmatprep.subr.bf16.mxu0 %v2289
        %2414 = vmatpush2.bf16.msra.mxu0 %v2288
        %2415 = vmatprep.subr.bf16.mxu0 %v2285
        %2416 = vmatpush2.bf16.msra.mxu0 %v2284
        %2417 = vmatprep.subr.bf16.mxu0 %v2281
        %2418 = vmatpush2.bf16.msra.mxu0 %v2280
        %2419 = vmatprep.subr.bf16.mxu0 %v2277
        %2420 = vmatpush2.bf16.msra.mxu0 %v2276
        %2421 = vmatprep.subr.bf16.mxu0 %v2273
        %2422 = vmatpush2.bf16.msra.mxu0 %v2272
        %2423 = vmatprep.subr.bf16.mxu0 %v2269
        %2424 = vmatpush2.bf16.msra.mxu0 %v2268
        %2425 = vmatprep.subr.bf16.mxu0 %v2265
        %2426 = vmatpush2.bf16.msra.mxu0 %v2264
        %2427 = vmatprep.subr.bf16.mxu0 %v2261
        %2428 = vmatpush2.bf16.msra.mxu0 %v2260
        %2429 = vmatprep.mubr.bf16.mxu0 %v1968
        %2430 = vmatmul.mubr.bf16.gmra.mxu0 %v1967
        %v2431 = vpop.f32.mrf.mxu0
        %v2432 = vadd.f32 0.0, %v2431
        %v2433 = vpop.f32.mrf.mxu0
        %v2434 = vadd.f32 0.0, %v2433
        %v2435 = vpop.f32.mrf.mxu0
        %v2436 = vadd.f32 0.0, %v2435
        %v2437 = vpop.f32.mrf.mxu0
        %v2438 = vadd.f32 0.0, %v2437
        %2439 = vdwg.mxu0
        %v2504 = vunpack.c.l.b16 %v1903
        %v2505 = vunpack.c.h.b16 %v1903
        %v2506 = vunpack.c.l.b16 %v1904
        %v2507 = vunpack.c.h.b16 %v1904
        %v2508 = vunpack.c.l.b16 %v1905
        %v2509 = vunpack.c.h.b16 %v1905
        %v2510 = vunpack.c.l.b16 %v1906
        %v2511 = vunpack.c.h.b16 %v1906
        %v2512 = vunpack.c.l.b16 %v1907
        %v2513 = vunpack.c.h.b16 %v1907
        %v2514 = vunpack.c.l.b16 %v1908
        %v2515 = vunpack.c.h.b16 %v1908
        %v2516 = vunpack.c.l.b16 %v1909
        %v2517 = vunpack.c.h.b16 %v1909
        %v2518 = vunpack.c.l.b16 %v1910
        %v2519 = vunpack.c.h.b16 %v1910
        %v2520 = vunpack.c.l.b16 %v1911
        %v2521 = vunpack.c.h.b16 %v1911
        %v2522 = vunpack.c.l.b16 %v1912
        %v2523 = vunpack.c.h.b16 %v1912
        %v2524 = vunpack.c.l.b16 %v1913
        %v2525 = vunpack.c.h.b16 %v1913
        %v2526 = vunpack.c.l.b16 %v1914
        %v2527 = vunpack.c.h.b16 %v1914
        %v2528 = vunpack.c.l.b16 %v1915
        %v2529 = vunpack.c.h.b16 %v1915
        %v2530 = vunpack.c.l.b16 %v1916
        %v2531 = vunpack.c.h.b16 %v1916
        %v2532 = vunpack.c.l.b16 %v1917
        %v2533 = vunpack.c.h.b16 %v1917
        %v2534 = vunpack.c.l.b16 %v1918
        %v2535 = vunpack.c.h.b16 %v1918
        %v2536 = vunpack.c.l.b16 %v1919
        %v2537 = vunpack.c.h.b16 %v1919
        %v2538 = vunpack.c.l.b16 %v1920
        %v2539 = vunpack.c.h.b16 %v1920
        %v2540 = vunpack.c.l.b16 %v1921
        %v2541 = vunpack.c.h.b16 %v1921
        %v2542 = vunpack.c.l.b16 %v1922
        %v2543 = vunpack.c.h.b16 %v1922
        %v2544 = vunpack.c.l.b16 %v1923
        %v2545 = vunpack.c.h.b16 %v1923
        %v2546 = vunpack.c.l.b16 %v1924
        %v2547 = vunpack.c.h.b16 %v1924
        %v2548 = vunpack.c.l.b16 %v1925
        %v2549 = vunpack.c.h.b16 %v1925
        %v2550 = vunpack.c.l.b16 %v1926
        %v2551 = vunpack.c.h.b16 %v1926
        %v2552 = vunpack.c.l.b16 %v1927
        %v2553 = vunpack.c.h.b16 %v1927
        %v2554 = vunpack.c.l.b16 %v1928
        %v2555 = vunpack.c.h.b16 %v1928
        %v2556 = vunpack.c.l.b16 %v1929
        %v2557 = vunpack.c.h.b16 %v1929
        %v2558 = vunpack.c.l.b16 %v1930
        %v2559 = vunpack.c.h.b16 %v1930
        %v2560 = vunpack.c.l.b16 %v1931
        %v2561 = vunpack.c.h.b16 %v1931
        %v2562 = vunpack.c.l.b16 %v1932
        %v2563 = vunpack.c.h.b16 %v1932
        %v2564 = vunpack.c.l.b16 %v1933
        %v2565 = vunpack.c.h.b16 %v1933
        %v2566 = vunpack.c.l.b16 %v1934
        %v2567 = vunpack.c.h.b16 %v1934
        %v2568 = vunpack.c.l.b16 %v1935
        %v2569 = vunpack.c.h.b16 %v1935
        %v2570 = vunpack.c.l.b16 %v1936
        %v2571 = vunpack.c.h.b16 %v1936
        %v2572 = vunpack.c.l.b16 %v1937
        %v2573 = vunpack.c.h.b16 %v1937
        %v2574 = vunpack.c.l.b16 %v1938
        %v2575 = vunpack.c.h.b16 %v1938
        %v2576 = vunpack.c.l.b16 %v1939
        %v2577 = vunpack.c.h.b16 %v1939
        %v2578 = vunpack.c.l.b16 %v1940
        %v2579 = vunpack.c.h.b16 %v1940
        %v2580 = vunpack.c.l.b16 %v1941
        %v2581 = vunpack.c.h.b16 %v1941
        %v2582 = vunpack.c.l.b16 %v1942
        %v2583 = vunpack.c.h.b16 %v1942
        %v2584 = vunpack.c.l.b16 %v1943
        %v2585 = vunpack.c.h.b16 %v1943
        %v2586 = vunpack.c.l.b16 %v1944
        %v2587 = vunpack.c.h.b16 %v1944
        %v2588 = vunpack.c.l.b16 %v1945
        %v2589 = vunpack.c.h.b16 %v1945
        %v2590 = vunpack.c.l.b16 %v1946
        %v2591 = vunpack.c.h.b16 %v1946
        %v2592 = vunpack.c.l.b16 %v1947
        %v2593 = vunpack.c.h.b16 %v1947
        %v2594 = vunpack.c.l.b16 %v1948
        %v2595 = vunpack.c.h.b16 %v1948
        %v2596 = vunpack.c.l.b16 %v1949
        %v2597 = vunpack.c.h.b16 %v1949
        %v2598 = vunpack.c.l.b16 %v1950
        %v2599 = vunpack.c.h.b16 %v1950
        %v2600 = vunpack.c.l.b16 %v1951
        %v2601 = vunpack.c.h.b16 %v1951
        %v2602 = vunpack.c.l.b16 %v1952
        %v2603 = vunpack.c.h.b16 %v1952
        %v2604 = vunpack.c.l.b16 %v1953
        %v2605 = vunpack.c.h.b16 %v1953
        %v2606 = vunpack.c.l.b16 %v1954
        %v2607 = vunpack.c.h.b16 %v1954
        %v2608 = vunpack.c.l.b16 %v1955
        %v2609 = vunpack.c.h.b16 %v1955
        %v2610 = vunpack.c.l.b16 %v1956
        %v2611 = vunpack.c.h.b16 %v1956
        %v2612 = vunpack.c.l.b16 %v1957
        %v2613 = vunpack.c.h.b16 %v1957
        %v2614 = vunpack.c.l.b16 %v1958
        %v2615 = vunpack.c.h.b16 %v1958
        %v2616 = vunpack.c.l.b16 %v1959
        %v2617 = vunpack.c.h.b16 %v1959
        %v2618 = vunpack.c.l.b16 %v1960
        %v2619 = vunpack.c.h.b16 %v1960
        %v2620 = vunpack.c.l.b16 %v1961
        %v2621 = vunpack.c.h.b16 %v1961
        %v2622 = vunpack.c.l.b16 %v1962
        %v2623 = vunpack.c.h.b16 %v1962
        %v2624 = vunpack.c.l.b16 %v1963
        %v2625 = vunpack.c.h.b16 %v1963
        %v2626 = vunpack.c.l.b16 %v1964
        %v2627 = vunpack.c.h.b16 %v1964
        %v2628 = vunpack.c.l.b16 %v1965
        %v2629 = vunpack.c.h.b16 %v1965
        %v2630 = vunpack.c.l.b16 %v1966
        %v2631 = vunpack.c.h.b16 %v1966
        %v2632 = vpack.c.b16 %v2508, %v2504
        %v2633 = vpack.c.b16 %v2509, %v2505
        %v2634 = vpack.c.b16 %v2510, %v2506
        %v2635 = vpack.c.b16 %v2511, %v2507
        %v2636 = vpack.c.b16 %v2516, %v2512
        %v2637 = vpack.c.b16 %v2517, %v2513
        %v2638 = vpack.c.b16 %v2518, %v2514
        %v2639 = vpack.c.b16 %v2519, %v2515
        %v2640 = vpack.c.b16 %v2524, %v2520
        %v2641 = vpack.c.b16 %v2525, %v2521
        %v2642 = vpack.c.b16 %v2526, %v2522
        %v2643 = vpack.c.b16 %v2527, %v2523
        %v2644 = vpack.c.b16 %v2532, %v2528
        %v2645 = vpack.c.b16 %v2533, %v2529
        %v2646 = vpack.c.b16 %v2534, %v2530
        %v2647 = vpack.c.b16 %v2535, %v2531
        %v2648 = vpack.c.b16 %v2540, %v2536
        %v2649 = vpack.c.b16 %v2541, %v2537
        %v2650 = vpack.c.b16 %v2542, %v2538
        %v2651 = vpack.c.b16 %v2543, %v2539
        %v2652 = vpack.c.b16 %v2548, %v2544
        %v2653 = vpack.c.b16 %v2549, %v2545
        %v2654 = vpack.c.b16 %v2550, %v2546
        %v2655 = vpack.c.b16 %v2551, %v2547
        %v2656 = vpack.c.b16 %v2556, %v2552
        %v2657 = vpack.c.b16 %v2557, %v2553
        %v2658 = vpack.c.b16 %v2558, %v2554
        %v2659 = vpack.c.b16 %v2559, %v2555
        %v2660 = vpack.c.b16 %v2564, %v2560
        %v2661 = vpack.c.b16 %v2565, %v2561
        %v2662 = vpack.c.b16 %v2566, %v2562
        %v2663 = vpack.c.b16 %v2567, %v2563
        %v2664 = vpack.c.b16 %v2572, %v2568
        %v2665 = vpack.c.b16 %v2573, %v2569
        %v2666 = vpack.c.b16 %v2574, %v2570
        %v2667 = vpack.c.b16 %v2575, %v2571
        %v2668 = vpack.c.b16 %v2580, %v2576
        %v2669 = vpack.c.b16 %v2581, %v2577
        %v2670 = vpack.c.b16 %v2582, %v2578
        %v2671 = vpack.c.b16 %v2583, %v2579
        %v2672 = vpack.c.b16 %v2588, %v2584
        %v2673 = vpack.c.b16 %v2589, %v2585
        %v2674 = vpack.c.b16 %v2590, %v2586
        %v2675 = vpack.c.b16 %v2591, %v2587
        %v2676 = vpack.c.b16 %v2596, %v2592
        %v2677 = vpack.c.b16 %v2597, %v2593
        %v2678 = vpack.c.b16 %v2598, %v2594
        %v2679 = vpack.c.b16 %v2599, %v2595
        %v2680 = vpack.c.b16 %v2604, %v2600
        %v2681 = vpack.c.b16 %v2605, %v2601
        %v2682 = vpack.c.b16 %v2606, %v2602
        %v2683 = vpack.c.b16 %v2607, %v2603
        %v2684 = vpack.c.b16 %v2612, %v2608
        %v2685 = vpack.c.b16 %v2613, %v2609
        %v2686 = vpack.c.b16 %v2614, %v2610
        %v2687 = vpack.c.b16 %v2615, %v2611
        %v2688 = vpack.c.b16 %v2620, %v2616
        %v2689 = vpack.c.b16 %v2621, %v2617
        %v2690 = vpack.c.b16 %v2622, %v2618
        %v2691 = vpack.c.b16 %v2623, %v2619
        %v2692 = vpack.c.b16 %v2628, %v2624
        %v2693 = vpack.c.b16 %v2629, %v2625
        %v2694 = vpack.c.b16 %v2630, %v2626
        %v2695 = vpack.c.b16 %v2631, %v2627
        %2760 = vmatprep.subr.bf16.mxu0 %v2661
        %2761 = vmatpush1.bf16.msra.mxu0 %v2660
        %2762 = vmatprep.subr.bf16.mxu0 %v2657
        %2763 = vmatpush1.bf16.msra.mxu0 %v2656
        %2764 = vmatprep.subr.bf16.mxu0 %v2653
        %2765 = vmatpush1.bf16.msra.mxu0 %v2652
        %2766 = vmatprep.subr.bf16.mxu0 %v2649
        %2767 = vmatpush1.bf16.msra.mxu0 %v2648
        %2768 = vmatprep.subr.bf16.mxu0 %v2645
        %2769 = vmatpush1.bf16.msra.mxu0 %v2644
        %2770 = vmatprep.subr.bf16.mxu0 %v2641
        %2771 = vmatpush1.bf16.msra.mxu0 %v2640
        %2772 = vmatprep.subr.bf16.mxu0 %v2637
        %2773 = vmatpush1.bf16.msra.mxu0 %v2636
        %2774 = vmatprep.subr.bf16.mxu0 %v2633
        %2775 = vmatpush1.bf16.msra.mxu0 %v2632
        %2776 = vmatprep.subr.bf16.mxu0 %v2693
        %2777 = vmatpush2.bf16.msra.mxu0 %v2692
        %2778 = vmatprep.subr.bf16.mxu0 %v2689
        %2779 = vmatpush2.bf16.msra.mxu0 %v2688
        %2780 = vmatprep.subr.bf16.mxu0 %v2685
        %2781 = vmatpush2.bf16.msra.mxu0 %v2684
        %2782 = vmatprep.subr.bf16.mxu0 %v2681
        %2783 = vmatpush2.bf16.msra.mxu0 %v2680
        %2784 = vmatprep.subr.bf16.mxu0 %v2677
        %2785 = vmatpush2.bf16.msra.mxu0 %v2676
        %2786 = vmatprep.subr.bf16.mxu0 %v2673
        %2787 = vmatpush2.bf16.msra.mxu0 %v2672
        %2788 = vmatprep.subr.bf16.mxu0 %v2669
        %2789 = vmatpush2.bf16.msra.mxu0 %v2668
        %2790 = vmatprep.subr.bf16.mxu0 %v2665
        %2791 = vmatpush2.bf16.msra.mxu0 %v2664
        %2792 = vmatprep.mubr.bf16.mxu0 %v1902
        %2793 = vmatmul.mubr.bf16.gmra.mxu0 %v1901
        %v2794 = vpop.f32.mrf.mxu0
        %v2795 = vadd.f32 %v2389, %v2794
        %v2796 = vpop.f32.mrf.mxu0
        %v2797 = vadd.f32 %v2391, %v2796
        %v2798 = vpop.f32.mrf.mxu0
        %v2799 = vadd.f32 %v2393, %v2798
        %v2800 = vpop.f32.mrf.mxu0
        %v2801 = vadd.f32 %v2395, %v2800
        %2802 = vdwg.mxu0
        %2803 = vmatprep.subr.bf16.mxu0 %v2663
        %2804 = vmatpush1.bf16.msra.mxu0 %v2662
        %2805 = vmatprep.subr.bf16.mxu0 %v2659
        %2806 = vmatpush1.bf16.msra.mxu0 %v2658
        %2807 = vmatprep.subr.bf16.mxu0 %v2655
        %2808 = vmatpush1.bf16.msra.mxu0 %v2654
        %2809 = vmatprep.subr.bf16.mxu0 %v2651
        %2810 = vmatpush1.bf16.msra.mxu0 %v2650
        %2811 = vmatprep.subr.bf16.mxu0 %v2647
        %2812 = vmatpush1.bf16.msra.mxu0 %v2646
        %2813 = vmatprep.subr.bf16.mxu0 %v2643
        %2814 = vmatpush1.bf16.msra.mxu0 %v2642
        %2815 = vmatprep.subr.bf16.mxu0 %v2639
        %2816 = vmatpush1.bf16.msra.mxu0 %v2638
        %2817 = vmatprep.subr.bf16.mxu0 %v2635
        %2818 = vmatpush1.bf16.msra.mxu0 %v2634
        %2819 = vmatprep.subr.bf16.mxu0 %v2695
        %2820 = vmatpush2.bf16.msra.mxu0 %v2694
        %2821 = vmatprep.subr.bf16.mxu0 %v2691
        %2822 = vmatpush2.bf16.msra.mxu0 %v2690
        %2823 = vmatprep.subr.bf16.mxu0 %v2687
        %2824 = vmatpush2.bf16.msra.mxu0 %v2686
        %2825 = vmatprep.subr.bf16.mxu0 %v2683
        %2826 = vmatpush2.bf16.msra.mxu0 %v2682
        %2827 = vmatprep.subr.bf16.mxu0 %v2679
        %2828 = vmatpush2.bf16.msra.mxu0 %v2678
        %2829 = vmatprep.subr.bf16.mxu0 %v2675
        %2830 = vmatpush2.bf16.msra.mxu0 %v2674
        %2831 = vmatprep.subr.bf16.mxu0 %v2671
        %2832 = vmatpush2.bf16.msra.mxu0 %v2670
        %2833 = vmatprep.subr.bf16.mxu0 %v2667
        %2834 = vmatpush2.bf16.msra.mxu0 %v2666
        %2835 = vmatprep.mubr.bf16.mxu0 %v1902
        %2836 = vmatmul.mubr.bf16.gmra.mxu0 %v1901
        %v2837 = vpop.f32.mrf.mxu0
        %v2838 = vadd.f32 %v2432, %v2837
        %v2839 = vpop.f32.mrf.mxu0
        %v2840 = vadd.f32 %v2434, %v2839
        %v2841 = vpop.f32.mrf.mxu0
        %v2842 = vadd.f32 %v2436, %v2841
        %v2843 = vpop.f32.mrf.mxu0
        %v2844 = vadd.f32 %v2438, %v2843
        %2845 = vdwg.mxu0
        %v2846 = vpack.c.bf16 %v1899, %v1897
        %v2847 = vpack.c.bf16 %v1900, %v1898
        %s2848 = scalar_lea.vmem [#allocation12], 1024
        %v2849 = vld [vmem:[%s2848] sm:$0xff]
        %v2850 = vld [vmem:[%s2848 + $0x8] sm:$0xff]
        %v2851 = vld [vmem:[%s2848 + $0x10] sm:$0xff]
        %v2852 = vld [vmem:[%s2848 + $0x18] sm:$0xff]
        %v2853 = vld [vmem:[%s2848 + $0x20] sm:$0xff]
        %v2854 = vld [vmem:[%s2848 + $0x28] sm:$0xff]
        %v2855 = vld [vmem:[%s2848 + $0x30] sm:$0xff]
        %v2856 = vld [vmem:[%s2848 + $0x38] sm:$0xff]
        %v2857 = vld [vmem:[%s2848 + $0x40] sm:$0xff]
        %v2858 = vld [vmem:[%s2848 + $0x48] sm:$0xff]
        %v2859 = vld [vmem:[%s2848 + $0x50] sm:$0xff]
        %v2860 = vld [vmem:[%s2848 + $0x58] sm:$0xff]
        %v2861 = vld [vmem:[%s2848 + $0x60] sm:$0xff]
        %v2862 = vld [vmem:[%s2848 + $0x68] sm:$0xff]
        %v2863 = vld [vmem:[%s2848 + $0x70] sm:$0xff]
        %v2864 = vld [vmem:[%s2848 + $0x78] sm:$0xff]
        %v2865 = vld [vmem:[%s2848 + $0x80] sm:$0xff]
        %v2866 = vld [vmem:[%s2848 + $0x88] sm:$0xff]
        %v2867 = vld [vmem:[%s2848 + $0x90] sm:$0xff]
        %v2868 = vld [vmem:[%s2848 + $0x98] sm:$0xff]
        %v2869 = vld [vmem:[%s2848 + $0xa0] sm:$0xff]
        %v2870 = vld [vmem:[%s2848 + $0xa8] sm:$0xff]
        %v2871 = vld [vmem:[%s2848 + $0xb0] sm:$0xff]
        %v2872 = vld [vmem:[%s2848 + $0xb8] sm:$0xff]
        %v2873 = vld [vmem:[%s2848 + $0xc0] sm:$0xff]
        %v2874 = vld [vmem:[%s2848 + $0xc8] sm:$0xff]
        %v2875 = vld [vmem:[%s2848 + $0xd0] sm:$0xff]
        %v2876 = vld [vmem:[%s2848 + $0xd8] sm:$0xff]
        %v2877 = vld [vmem:[%s2848 + $0xe0] sm:$0xff]
        %v2878 = vld [vmem:[%s2848 + $0xe8] sm:$0xff]
        %v2879 = vld [vmem:[%s2848 + $0xf0] sm:$0xff]
        %v2880 = vld [vmem:[%s2848 + $0xf8] sm:$0xff]
        %v2881 = vld [vmem:[%s2848 + $0x100] sm:$0xff]
        %v2882 = vld [vmem:[%s2848 + $0x108] sm:$0xff]
        %v2883 = vld [vmem:[%s2848 + $0x110] sm:$0xff]
        %v2884 = vld [vmem:[%s2848 + $0x118] sm:$0xff]
        %v2885 = vld [vmem:[%s2848 + $0x120] sm:$0xff]
        %v2886 = vld [vmem:[%s2848 + $0x128] sm:$0xff]
        %v2887 = vld [vmem:[%s2848 + $0x130] sm:$0xff]
        %v2888 = vld [vmem:[%s2848 + $0x138] sm:$0xff]
        %v2889 = vld [vmem:[%s2848 + $0x140] sm:$0xff]
        %v2890 = vld [vmem:[%s2848 + $0x148] sm:$0xff]
        %v2891 = vld [vmem:[%s2848 + $0x150] sm:$0xff]
        %v2892 = vld [vmem:[%s2848 + $0x158] sm:$0xff]
        %v2893 = vld [vmem:[%s2848 + $0x160] sm:$0xff]
        %v2894 = vld [vmem:[%s2848 + $0x168] sm:$0xff]
        %v2895 = vld [vmem:[%s2848 + $0x170] sm:$0xff]
        %v2896 = vld [vmem:[%s2848 + $0x178] sm:$0xff]
        %v2897 = vld [vmem:[%s2848 + $0x180] sm:$0xff]
        %v2898 = vld [vmem:[%s2848 + $0x188] sm:$0xff]
        %v2899 = vld [vmem:[%s2848 + $0x190] sm:$0xff]
        %v2900 = vld [vmem:[%s2848 + $0x198] sm:$0xff]
        %v2901 = vld [vmem:[%s2848 + $0x1a0] sm:$0xff]
        %v2902 = vld [vmem:[%s2848 + $0x1a8] sm:$0xff]
        %v2903 = vld [vmem:[%s2848 + $0x1b0] sm:$0xff]
        %v2904 = vld [vmem:[%s2848 + $0x1b8] sm:$0xff]
        %v2905 = vld [vmem:[%s2848 + $0x1c0] sm:$0xff]
        %v2906 = vld [vmem:[%s2848 + $0x1c8] sm:$0xff]
        %v2907 = vld [vmem:[%s2848 + $0x1d0] sm:$0xff]
        %v2908 = vld [vmem:[%s2848 + $0x1d8] sm:$0xff]
        %v2909 = vld [vmem:[%s2848 + $0x1e0] sm:$0xff]
        %v2910 = vld [vmem:[%s2848 + $0x1e8] sm:$0xff]
        %v2911 = vld [vmem:[%s2848 + $0x1f0] sm:$0xff]
        %v2912 = vld [vmem:[%s2848 + $0x1f8] sm:$0xff]
        %v2977 = vunpack.c.l.b16 %v2849
        %v2978 = vunpack.c.h.b16 %v2849
        %v2979 = vunpack.c.l.b16 %v2850
        %v2980 = vunpack.c.h.b16 %v2850
        %v2981 = vunpack.c.l.b16 %v2851
        %v2982 = vunpack.c.h.b16 %v2851
        %v2983 = vunpack.c.l.b16 %v2852
        %v2984 = vunpack.c.h.b16 %v2852
        %v2985 = vunpack.c.l.b16 %v2853
        %v2986 = vunpack.c.h.b16 %v2853
        %v2987 = vunpack.c.l.b16 %v2854
        %v2988 = vunpack.c.h.b16 %v2854
        %v2989 = vunpack.c.l.b16 %v2855
        %v2990 = vunpack.c.h.b16 %v2855
        %v2991 = vunpack.c.l.b16 %v2856
        %v2992 = vunpack.c.h.b16 %v2856
        %v2993 = vunpack.c.l.b16 %v2857
        %v2994 = vunpack.c.h.b16 %v2857
        %v2995 = vunpack.c.l.b16 %v2858
        %v2996 = vunpack.c.h.b16 %v2858
        %v2997 = vunpack.c.l.b16 %v2859
        %v2998 = vunpack.c.h.b16 %v2859
        %v2999 = vunpack.c.l.b16 %v2860
        %v3000 = vunpack.c.h.b16 %v2860
        %v3001 = vunpack.c.l.b16 %v2861
        %v3002 = vunpack.c.h.b16 %v2861
        %v3003 = vunpack.c.l.b16 %v2862
        %v3004 = vunpack.c.h.b16 %v2862
        %v3005 = vunpack.c.l.b16 %v2863
        %v3006 = vunpack.c.h.b16 %v2863
        %v3007 = vunpack.c.l.b16 %v2864
        %v3008 = vunpack.c.h.b16 %v2864
        %v3009 = vunpack.c.l.b16 %v2865
        %v3010 = vunpack.c.h.b16 %v2865
        %v3011 = vunpack.c.l.b16 %v2866
        %v3012 = vunpack.c.h.b16 %v2866
        %v3013 = vunpack.c.l.b16 %v2867
        %v3014 = vunpack.c.h.b16 %v2867
        %v3015 = vunpack.c.l.b16 %v2868
        %v3016 = vunpack.c.h.b16 %v2868
        %v3017 = vunpack.c.l.b16 %v2869
        %v3018 = vunpack.c.h.b16 %v2869
        %v3019 = vunpack.c.l.b16 %v2870
        %v3020 = vunpack.c.h.b16 %v2870
        %v3021 = vunpack.c.l.b16 %v2871
        %v3022 = vunpack.c.h.b16 %v2871
        %v3023 = vunpack.c.l.b16 %v2872
        %v3024 = vunpack.c.h.b16 %v2872
        %v3025 = vunpack.c.l.b16 %v2873
        %v3026 = vunpack.c.h.b16 %v2873
        %v3027 = vunpack.c.l.b16 %v2874
        %v3028 = vunpack.c.h.b16 %v2874
        %v3029 = vunpack.c.l.b16 %v2875
        %v3030 = vunpack.c.h.b16 %v2875
        %v3031 = vunpack.c.l.b16 %v2876
        %v3032 = vunpack.c.h.b16 %v2876
        %v3033 = vunpack.c.l.b16 %v2877
        %v3034 = vunpack.c.h.b16 %v2877
        %v3035 = vunpack.c.l.b16 %v2878
        %v3036 = vunpack.c.h.b16 %v2878
        %v3037 = vunpack.c.l.b16 %v2879
        %v3038 = vunpack.c.h.b16 %v2879
        %v3039 = vunpack.c.l.b16 %v2880
        %v3040 = vunpack.c.h.b16 %v2880
        %v3041 = vunpack.c.l.b16 %v2881
        %v3042 = vunpack.c.h.b16 %v2881
        %v3043 = vunpack.c.l.b16 %v2882
        %v3044 = vunpack.c.h.b16 %v2882
        %v3045 = vunpack.c.l.b16 %v2883
        %v3046 = vunpack.c.h.b16 %v2883
        %v3047 = vunpack.c.l.b16 %v2884
        %v3048 = vunpack.c.h.b16 %v2884
        %v3049 = vunpack.c.l.b16 %v2885
        %v3050 = vunpack.c.h.b16 %v2885
        %v3051 = vunpack.c.l.b16 %v2886
        %v3052 = vunpack.c.h.b16 %v2886
        %v3053 = vunpack.c.l.b16 %v2887
        %v3054 = vunpack.c.h.b16 %v2887
        %v3055 = vunpack.c.l.b16 %v2888
        %v3056 = vunpack.c.h.b16 %v2888
        %v3057 = vunpack.c.l.b16 %v2889
        %v3058 = vunpack.c.h.b16 %v2889
        %v3059 = vunpack.c.l.b16 %v2890
        %v3060 = vunpack.c.h.b16 %v2890
        %v3061 = vunpack.c.l.b16 %v2891
        %v3062 = vunpack.c.h.b16 %v2891
        %v3063 = vunpack.c.l.b16 %v2892
        %v3064 = vunpack.c.h.b16 %v2892
        %v3065 = vunpack.c.l.b16 %v2893
        %v3066 = vunpack.c.h.b16 %v2893
        %v3067 = vunpack.c.l.b16 %v2894
        %v3068 = vunpack.c.h.b16 %v2894
        %v3069 = vunpack.c.l.b16 %v2895
        %v3070 = vunpack.c.h.b16 %v2895
        %v3071 = vunpack.c.l.b16 %v2896
        %v3072 = vunpack.c.h.b16 %v2896
        %v3073 = vunpack.c.l.b16 %v2897
        %v3074 = vunpack.c.h.b16 %v2897
        %v3075 = vunpack.c.l.b16 %v2898
        %v3076 = vunpack.c.h.b16 %v2898
        %v3077 = vunpack.c.l.b16 %v2899
        %v3078 = vunpack.c.h.b16 %v2899
        %v3079 = vunpack.c.l.b16 %v2900
        %v3080 = vunpack.c.h.b16 %v2900
        %v3081 = vunpack.c.l.b16 %v2901
        %v3082 = vunpack.c.h.b16 %v2901
        %v3083 = vunpack.c.l.b16 %v2902
        %v3084 = vunpack.c.h.b16 %v2902
        %v3085 = vunpack.c.l.b16 %v2903
        %v3086 = vunpack.c.h.b16 %v2903
        %v3087 = vunpack.c.l.b16 %v2904
        %v3088 = vunpack.c.h.b16 %v2904
        %v3089 = vunpack.c.l.b16 %v2905
        %v3090 = vunpack.c.h.b16 %v2905
        %v3091 = vunpack.c.l.b16 %v2906
        %v3092 = vunpack.c.h.b16 %v2906
        %v3093 = vunpack.c.l.b16 %v2907
        %v3094 = vunpack.c.h.b16 %v2907
        %v3095 = vunpack.c.l.b16 %v2908
        %v3096 = vunpack.c.h.b16 %v2908
        %v3097 = vunpack.c.l.b16 %v2909
        %v3098 = vunpack.c.h.b16 %v2909
        %v3099 = vunpack.c.l.b16 %v2910
        %v3100 = vunpack.c.h.b16 %v2910
        %v3101 = vunpack.c.l.b16 %v2911
        %v3102 = vunpack.c.h.b16 %v2911
        %v3103 = vunpack.c.l.b16 %v2912
        %v3104 = vunpack.c.h.b16 %v2912
        %v3105 = vpack.c.b16 %v2981, %v2977
        %v3106 = vpack.c.b16 %v2982, %v2978
        %v3107 = vpack.c.b16 %v2983, %v2979
        %v3108 = vpack.c.b16 %v2984, %v2980
        %v3109 = vpack.c.b16 %v2989, %v2985
        %v3110 = vpack.c.b16 %v2990, %v2986
        %v3111 = vpack.c.b16 %v2991, %v2987
        %v3112 = vpack.c.b16 %v2992, %v2988
        %v3113 = vpack.c.b16 %v2997, %v2993
        %v3114 = vpack.c.b16 %v2998, %v2994
        %v3115 = vpack.c.b16 %v2999, %v2995
        %v3116 = vpack.c.b16 %v3000, %v2996
        %v3117 = vpack.c.b16 %v3005, %v3001
        %v3118 = vpack.c.b16 %v3006, %v3002
        %v3119 = vpack.c.b16 %v3007, %v3003
        %v3120 = vpack.c.b16 %v3008, %v3004
        %v3121 = vpack.c.b16 %v3013, %v3009
        %v3122 = vpack.c.b16 %v3014, %v3010
        %v3123 = vpack.c.b16 %v3015, %v3011
        %v3124 = vpack.c.b16 %v3016, %v3012
        %v3125 = vpack.c.b16 %v3021, %v3017
        %v3126 = vpack.c.b16 %v3022, %v3018
        %v3127 = vpack.c.b16 %v3023, %v3019
        %v3128 = vpack.c.b16 %v3024, %v3020
        %v3129 = vpack.c.b16 %v3029, %v3025
        %v3130 = vpack.c.b16 %v3030, %v3026
        %v3131 = vpack.c.b16 %v3031, %v3027
        %v3132 = vpack.c.b16 %v3032, %v3028
        %v3133 = vpack.c.b16 %v3037, %v3033
        %v3134 = vpack.c.b16 %v3038, %v3034
        %v3135 = vpack.c.b16 %v3039, %v3035
        %v3136 = vpack.c.b16 %v3040, %v3036
        %v3137 = vpack.c.b16 %v3045, %v3041
        %v3138 = vpack.c.b16 %v3046, %v3042
        %v3139 = vpack.c.b16 %v3047, %v3043
        %v3140 = vpack.c.b16 %v3048, %v3044
        %v3141 = vpack.c.b16 %v3053, %v3049
        %v3142 = vpack.c.b16 %v3054, %v3050
        %v3143 = vpack.c.b16 %v3055, %v3051
        %v3144 = vpack.c.b16 %v3056, %v3052
        %v3145 = vpack.c.b16 %v3061, %v3057
        %v3146 = vpack.c.b16 %v3062, %v3058
        %v3147 = vpack.c.b16 %v3063, %v3059
        %v3148 = vpack.c.b16 %v3064, %v3060
        %v3149 = vpack.c.b16 %v3069, %v3065
        %v3150 = vpack.c.b16 %v3070, %v3066
        %v3151 = vpack.c.b16 %v3071, %v3067
        %v3152 = vpack.c.b16 %v3072, %v3068
        %v3153 = vpack.c.b16 %v3077, %v3073
        %v3154 = vpack.c.b16 %v3078, %v3074
        %v3155 = vpack.c.b16 %v3079, %v3075
        %v3156 = vpack.c.b16 %v3080, %v3076
        %v3157 = vpack.c.b16 %v3085, %v3081
        %v3158 = vpack.c.b16 %v3086, %v3082
        %v3159 = vpack.c.b16 %v3087, %v3083
        %v3160 = vpack.c.b16 %v3088, %v3084
        %v3161 = vpack.c.b16 %v3093, %v3089
        %v3162 = vpack.c.b16 %v3094, %v3090
        %v3163 = vpack.c.b16 %v3095, %v3091
        %v3164 = vpack.c.b16 %v3096, %v3092
        %v3165 = vpack.c.b16 %v3101, %v3097
        %v3166 = vpack.c.b16 %v3102, %v3098
        %v3167 = vpack.c.b16 %v3103, %v3099
        %v3168 = vpack.c.b16 %v3104, %v3100
        %3233 = vmatprep.subr.bf16.mxu0 %v3134
        %3234 = vmatpush1.bf16.msra.mxu0 %v3133
        %3235 = vmatprep.subr.bf16.mxu0 %v3130
        %3236 = vmatpush1.bf16.msra.mxu0 %v3129
        %3237 = vmatprep.subr.bf16.mxu0 %v3126
        %3238 = vmatpush1.bf16.msra.mxu0 %v3125
        %3239 = vmatprep.subr.bf16.mxu0 %v3122
        %3240 = vmatpush1.bf16.msra.mxu0 %v3121
        %3241 = vmatprep.subr.bf16.mxu0 %v3118
        %3242 = vmatpush1.bf16.msra.mxu0 %v3117
        %3243 = vmatprep.subr.bf16.mxu0 %v3114
        %3244 = vmatpush1.bf16.msra.mxu0 %v3113
        %3245 = vmatprep.subr.bf16.mxu0 %v3110
        %3246 = vmatpush1.bf16.msra.mxu0 %v3109
        %3247 = vmatprep.subr.bf16.mxu0 %v3106
        %3248 = vmatpush1.bf16.msra.mxu0 %v3105
        %3249 = vmatprep.subr.bf16.mxu0 %v3166
        %3250 = vmatpush2.bf16.msra.mxu0 %v3165
        %3251 = vmatprep.subr.bf16.mxu0 %v3162
        %3252 = vmatpush2.bf16.msra.mxu0 %v3161
        %3253 = vmatprep.subr.bf16.mxu0 %v3158
        %3254 = vmatpush2.bf16.msra.mxu0 %v3157
        %3255 = vmatprep.subr.bf16.mxu0 %v3154
        %3256 = vmatpush2.bf16.msra.mxu0 %v3153
        %3257 = vmatprep.subr.bf16.mxu0 %v3150
        %3258 = vmatpush2.bf16.msra.mxu0 %v3149
        %3259 = vmatprep.subr.bf16.mxu0 %v3146
        %3260 = vmatpush2.bf16.msra.mxu0 %v3145
        %3261 = vmatprep.subr.bf16.mxu0 %v3142
        %3262 = vmatpush2.bf16.msra.mxu0 %v3141
        %3263 = vmatprep.subr.bf16.mxu0 %v3138
        %3264 = vmatpush2.bf16.msra.mxu0 %v3137
        %3265 = vmatprep.mubr.bf16.mxu0 %v2847
        %3266 = vmatmul.mubr.bf16.gmra.mxu0 %v2846
        %v3267 = vpop.f32.mrf.mxu0
        %v3268 = vadd.f32 0.0, %v3267
        %v3269 = vpop.f32.mrf.mxu0
        %v3270 = vadd.f32 0.0, %v3269
        %v3271 = vpop.f32.mrf.mxu0
        %v3272 = vadd.f32 0.0, %v3271
        %v3273 = vpop.f32.mrf.mxu0
        %v3274 = vadd.f32 0.0, %v3273
        %3275 = vdwg.mxu0
        %3276 = vmatprep.subr.bf16.mxu0 %v3136
        %3277 = vmatpush1.bf16.msra.mxu0 %v3135
        %3278 = vmatprep.subr.bf16.mxu0 %v3132
        %3279 = vmatpush1.bf16.msra.mxu0 %v3131
        %3280 = vmatprep.subr.bf16.mxu0 %v3128
        %3281 = vmatpush1.bf16.msra.mxu0 %v3127
        %3282 = vmatprep.subr.bf16.mxu0 %v3124
        %3283 = vmatpush1.bf16.msra.mxu0 %v3123
        %3284 = vmatprep.subr.bf16.mxu0 %v3120
        %3285 = vmatpush1.bf16.msra.mxu0 %v3119
        %3286 = vmatprep.subr.bf16.mxu0 %v3116
        %3287 = vmatpush1.bf16.msra.mxu0 %v3115
        %3288 = vmatprep.subr.bf16.mxu0 %v3112
        %3289 = vmatpush1.bf16.msra.mxu0 %v3111
        %3290 = vmatprep.subr.bf16.mxu0 %v3108
        %3291 = vmatpush1.bf16.msra.mxu0 %v3107
        %3292 = vmatprep.subr.bf16.mxu0 %v3168
        %3293 = vmatpush2.bf16.msra.mxu0 %v3167
        %3294 = vmatprep.subr.bf16.mxu0 %v3164
        %3295 = vmatpush2.bf16.msra.mxu0 %v3163
        %3296 = vmatprep.subr.bf16.mxu0 %v3160
        %3297 = vmatpush2.bf16.msra.mxu0 %v3159
        %3298 = vmatprep.subr.bf16.mxu0 %v3156
        %3299 = vmatpush2.bf16.msra.mxu0 %v3155
        %3300 = vmatprep.subr.bf16.mxu0 %v3152
        %3301 = vmatpush2.bf16.msra.mxu0 %v3151
        %3302 = vmatprep.subr.bf16.mxu0 %v3148
        %3303 = vmatpush2.bf16.msra.mxu0 %v3147
        %3304 = vmatprep.subr.bf16.mxu0 %v3144
        %3305 = vmatpush2.bf16.msra.mxu0 %v3143
        %3306 = vmatprep.subr.bf16.mxu0 %v3140
        %3307 = vmatpush2.bf16.msra.mxu0 %v3139
        %3308 = vmatprep.mubr.bf16.mxu0 %v2847
        %3309 = vmatmul.mubr.bf16.gmra.mxu0 %v2846
        %v3310 = vpop.f32.mrf.mxu0
        %v3311 = vadd.f32 0.0, %v3310
        %v3312 = vpop.f32.mrf.mxu0
        %v3313 = vadd.f32 0.0, %v3312
        %v3314 = vpop.f32.mrf.mxu0
        %v3315 = vadd.f32 0.0, %v3314
        %v3316 = vpop.f32.mrf.mxu0
        %v3317 = vadd.f32 0.0, %v3316
        %3318 = vdwg.mxu0
        %v3319 = vadd.f32 %v2795, %v3268
        %v3320 = vadd.f32 %v2797, %v3270
        %v3321 = vadd.f32 %v2838, %v3311
        %v3322 = vadd.f32 %v2840, %v3313
        %v3323 = vadd.f32 %v2799, %v3272
        %v3324 = vadd.f32 %v2801, %v3274
        %v3325 = vadd.f32 %v2842, %v3315
        %v3326 = vadd.f32 %v2844, %v3317
        %v3327 = vld [vmem:[#allocation13] sm:$0xf]
        %v3329 = vlaneseq
        %v3330 = vshrl.u32 %v3329, 7
        %v3331 = vsub.s32 0, %v3330
        %v3332 = vrot.slane %v3327, %v3331
        %v3333 = vlaneseq
        %v3334 = vshrl.u32 %v3333, 7
        %v3335 = vsub.s32 1, %v3334
        %v3336 = vrot.slane %v3327, %v3335
        %v3337 = vlaneseq
        %v3338 = vshrl.u32 %v3337, 7
        %v3339 = vsub.s32 2, %v3338
        %v3340 = vrot.slane %v3327, %v3339
        %v3341 = vlaneseq
        %v3342 = vshrl.u32 %v3341, 7
        %v3343 = vsub.s32 3, %v3342
        %v3344 = vrot.slane %v3327, %v3343
        %v3349 = vadd.f32 %v3319, %v3332
        %v3350 = vadd.f32 %v3320, %v3336
        %v3351 = vadd.f32 %v3321, %v3340
        %v3352 = vadd.f32 %v3322, %v3344
        %v3353 = vadd.f32 %v3323, %v3332
        %v3354 = vadd.f32 %v3324, %v3336
        %v3355 = vadd.f32 %v3325, %v3340
        %v3356 = vadd.f32 %v3326, %v3344
        %v3357 = vmax.f32 %v3349, 0.0
        %v3358 = vmax.f32 %v3350, 0.0
        %v3359 = vmax.f32 %v3351, 0.0
        %v3360 = vmax.f32 %v3352, 0.0
        %v3361 = vmax.f32 %v3353, 0.0
        %v3362 = vmax.f32 %v3354, 0.0
        %v3363 = vmax.f32 %v3355, 0.0
        %v3364 = vmax.f32 %v3356, 0.0
        %v3365 = vrot.slane %v3357, 7
        %v3366 = vrot.slane %v3358, 7
        %v3367 = vrot.slane %v3359, 7
        %v3368 = vrot.slane %v3360, 7
        %v3369 = vrot.slane %v3361, 7
        %v3370 = vrot.slane %v3362, 7
        %v3371 = vrot.slane %v3363, 7
        %v3372 = vrot.slane %v3364, 7
        %v3373 = vsel %vm976, %v3365, %v3369
        %v3374 = vsel %vm976, %v3366, %v3370
        %v3375 = vsel %vm976, %v3367, %v3371
        %v3376 = vsel %vm976, %v3368, %v3372
        %v3377 = vsel %vm976, %v3369, %v3365
        %v3378 = vsel %vm976, %v3370, %v3366
        %v3379 = vsel %vm976, %v3371, %v3367
        %v3380 = vsel %vm976, %v3372, %v3368
        %v3381 = vsel %vm981, %v3377, 0.0
        %v3382 = vsel %vm981, %v3378, 0.0
        %v3383 = vsel %vm981, %v3379, 0.0
        %v3384 = vsel %vm981, %v3380, 0.0
        %v3385 = vsel %vm982, %v3373, 0.0
        %v3386 = vsel %vm982, %v3374, 0.0
        %v3387 = vsel %vm982, %v3375, 0.0
        %v3388 = vsel %vm982, %v3376, 0.0
        %v3389 = vrot.slane %v3357, 1
        %v3390 = vrot.slane %v3358, 1
        %v3391 = vrot.slane %v3359, 1
        %v3392 = vrot.slane %v3360, 1
        %v3393 = vrot.slane %v3361, 1
        %v3394 = vrot.slane %v3362, 1
        %v3395 = vrot.slane %v3363, 1
        %v3396 = vrot.slane %v3364, 1
        %v3397 = vsel %vm987, %v3389, %v3393
        %v3398 = vsel %vm987, %v3390, %v3394
        %v3399 = vsel %vm987, %v3391, %v3395
        %v3400 = vsel %vm987, %v3392, %v3396
        %v3401 = vsel %vm987, %v3393, %v3389
        %v3402 = vsel %vm987, %v3394, %v3390
        %v3403 = vsel %vm987, %v3395, %v3391
        %v3404 = vsel %vm987, %v3396, %v3392
        %v3405 = vsel %vm992, %v3397, 0.0
        %v3406 = vsel %vm992, %v3398, 0.0
        %v3407 = vsel %vm992, %v3399, 0.0
        %v3408 = vsel %vm992, %v3400, 0.0
        %v3409 = vsel %vm993, %v3401, 0.0
        %v3410 = vsel %vm993, %v3402, 0.0
        %v3411 = vsel %vm993, %v3403, 0.0
        %v3412 = vsel %vm993, %v3404, 0.0
        %v3413 = vpack.c.bf16 %v3385, %v3381
        %v3414 = vpack.c.bf16 %v3386, %v3382
        %v3415 = vpack.c.bf16 %v3387, %v3383
        %v3416 = vpack.c.bf16 %v3388, %v3384
        %v3417 = vld [vmem:[#allocation15] sm:$0xff]
        %v3418 = vld [vmem:[#allocation15 + $0x8] sm:$0xff]
        %v3419 = vld [vmem:[#allocation15 + $0x10] sm:$0xff]
        %v3420 = vld [vmem:[#allocation15 + $0x18] sm:$0xff]
        %v3421 = vld [vmem:[#allocation15 + $0x20] sm:$0xff]
        %v3422 = vld [vmem:[#allocation15 + $0x28] sm:$0xff]
        %v3423 = vld [vmem:[#allocation15 + $0x30] sm:$0xff]
        %v3424 = vld [vmem:[#allocation15 + $0x38] sm:$0xff]
        %v3425 = vld [vmem:[#allocation15 + $0x40] sm:$0xff]
        %v3426 = vld [vmem:[#allocation15 + $0x48] sm:$0xff]
        %v3427 = vld [vmem:[#allocation15 + $0x50] sm:$0xff]
        %v3428 = vld [vmem:[#allocation15 + $0x58] sm:$0xff]
        %v3429 = vld [vmem:[#allocation15 + $0x60] sm:$0xff]
        %v3430 = vld [vmem:[#allocation15 + $0x68] sm:$0xff]
        %v3431 = vld [vmem:[#allocation15 + $0x70] sm:$0xff]
        %v3432 = vld [vmem:[#allocation15 + $0x78] sm:$0xff]
        %v3433 = vld [vmem:[#allocation15 + $0x80] sm:$0xff]
        %v3434 = vld [vmem:[#allocation15 + $0x88] sm:$0xff]
        %v3435 = vld [vmem:[#allocation15 + $0x90] sm:$0xff]
        %v3436 = vld [vmem:[#allocation15 + $0x98] sm:$0xff]
        %v3437 = vld [vmem:[#allocation15 + $0xa0] sm:$0xff]
        %v3438 = vld [vmem:[#allocation15 + $0xa8] sm:$0xff]
        %v3439 = vld [vmem:[#allocation15 + $0xb0] sm:$0xff]
        %v3440 = vld [vmem:[#allocation15 + $0xb8] sm:$0xff]
        %v3441 = vld [vmem:[#allocation15 + $0xc0] sm:$0xff]
        %v3442 = vld [vmem:[#allocation15 + $0xc8] sm:$0xff]
        %v3443 = vld [vmem:[#allocation15 + $0xd0] sm:$0xff]
        %v3444 = vld [vmem:[#allocation15 + $0xd8] sm:$0xff]
        %v3445 = vld [vmem:[#allocation15 + $0xe0] sm:$0xff]
        %v3446 = vld [vmem:[#allocation15 + $0xe8] sm:$0xff]
        %v3447 = vld [vmem:[#allocation15 + $0xf0] sm:$0xff]
        %v3448 = vld [vmem:[#allocation15 + $0xf8] sm:$0xff]
        %v3449 = vld [vmem:[#allocation15 + $0x100] sm:$0xff]
        %v3450 = vld [vmem:[#allocation15 + $0x108] sm:$0xff]
        %v3451 = vld [vmem:[#allocation15 + $0x110] sm:$0xff]
        %v3452 = vld [vmem:[#allocation15 + $0x118] sm:$0xff]
        %v3453 = vld [vmem:[#allocation15 + $0x120] sm:$0xff]
        %v3454 = vld [vmem:[#allocation15 + $0x128] sm:$0xff]
        %v3455 = vld [vmem:[#allocation15 + $0x130] sm:$0xff]
        %v3456 = vld [vmem:[#allocation15 + $0x138] sm:$0xff]
        %v3457 = vld [vmem:[#allocation15 + $0x140] sm:$0xff]
        %v3458 = vld [vmem:[#allocation15 + $0x148] sm:$0xff]
        %v3459 = vld [vmem:[#allocation15 + $0x150] sm:$0xff]
        %v3460 = vld [vmem:[#allocation15 + $0x158] sm:$0xff]
        %v3461 = vld [vmem:[#allocation15 + $0x160] sm:$0xff]
        %v3462 = vld [vmem:[#allocation15 + $0x168] sm:$0xff]
        %v3463 = vld [vmem:[#allocation15 + $0x170] sm:$0xff]
        %v3464 = vld [vmem:[#allocation15 + $0x178] sm:$0xff]
        %v3465 = vld [vmem:[#allocation15 + $0x180] sm:$0xff]
        %v3466 = vld [vmem:[#allocation15 + $0x188] sm:$0xff]
        %v3467 = vld [vmem:[#allocation15 + $0x190] sm:$0xff]
        %v3468 = vld [vmem:[#allocation15 + $0x198] sm:$0xff]
        %v3469 = vld [vmem:[#allocation15 + $0x1a0] sm:$0xff]
        %v3470 = vld [vmem:[#allocation15 + $0x1a8] sm:$0xff]
        %v3471 = vld [vmem:[#allocation15 + $0x1b0] sm:$0xff]
        %v3472 = vld [vmem:[#allocation15 + $0x1b8] sm:$0xff]
        %v3473 = vld [vmem:[#allocation15 + $0x1c0] sm:$0xff]
        %v3474 = vld [vmem:[#allocation15 + $0x1c8] sm:$0xff]
        %v3475 = vld [vmem:[#allocation15 + $0x1d0] sm:$0xff]
        %v3476 = vld [vmem:[#allocation15 + $0x1d8] sm:$0xff]
        %v3477 = vld [vmem:[#allocation15 + $0x1e0] sm:$0xff]
        %v3478 = vld [vmem:[#allocation15 + $0x1e8] sm:$0xff]
        %v3479 = vld [vmem:[#allocation15 + $0x1f0] sm:$0xff]
        %v3480 = vld [vmem:[#allocation15 + $0x1f8] sm:$0xff]
        %v3481 = vpack.c.bf16 %v3361, %v3357
        %v3482 = vpack.c.bf16 %v3362, %v3358
        %v3483 = vpack.c.bf16 %v3363, %v3359
        %v3484 = vpack.c.bf16 %v3364, %v3360
        %s3485 = scalar_lea.vmem [#allocation15], 512
        %v3486 = vld [vmem:[%s3485] sm:$0xff]
        %v3487 = vld [vmem:[%s3485 + $0x8] sm:$0xff]
        %v3488 = vld [vmem:[%s3485 + $0x10] sm:$0xff]
        %v3489 = vld [vmem:[%s3485 + $0x18] sm:$0xff]
        %v3490 = vld [vmem:[%s3485 + $0x20] sm:$0xff]
        %v3491 = vld [vmem:[%s3485 + $0x28] sm:$0xff]
        %v3492 = vld [vmem:[%s3485 + $0x30] sm:$0xff]
        %v3493 = vld [vmem:[%s3485 + $0x38] sm:$0xff]
        %v3494 = vld [vmem:[%s3485 + $0x40] sm:$0xff]
        %v3495 = vld [vmem:[%s3485 + $0x48] sm:$0xff]
        %v3496 = vld [vmem:[%s3485 + $0x50] sm:$0xff]
        %v3497 = vld [vmem:[%s3485 + $0x58] sm:$0xff]
        %v3498 = vld [vmem:[%s3485 + $0x60] sm:$0xff]
        %v3499 = vld [vmem:[%s3485 + $0x68] sm:$0xff]
        %v3500 = vld [vmem:[%s3485 + $0x70] sm:$0xff]
        %v3501 = vld [vmem:[%s3485 + $0x78] sm:$0xff]
        %v3502 = vld [vmem:[%s3485 + $0x80] sm:$0xff]
        %v3503 = vld [vmem:[%s3485 + $0x88] sm:$0xff]
        %v3504 = vld [vmem:[%s3485 + $0x90] sm:$0xff]
        %v3505 = vld [vmem:[%s3485 + $0x98] sm:$0xff]
        %v3506 = vld [vmem:[%s3485 + $0xa0] sm:$0xff]
        %v3507 = vld [vmem:[%s3485 + $0xa8] sm:$0xff]
        %v3508 = vld [vmem:[%s3485 + $0xb0] sm:$0xff]
        %v3509 = vld [vmem:[%s3485 + $0xb8] sm:$0xff]
        %v3510 = vld [vmem:[%s3485 + $0xc0] sm:$0xff]
        %v3511 = vld [vmem:[%s3485 + $0xc8] sm:$0xff]
        %v3512 = vld [vmem:[%s3485 + $0xd0] sm:$0xff]
        %v3513 = vld [vmem:[%s3485 + $0xd8] sm:$0xff]
        %v3514 = vld [vmem:[%s3485 + $0xe0] sm:$0xff]
        %v3515 = vld [vmem:[%s3485 + $0xe8] sm:$0xff]
        %v3516 = vld [vmem:[%s3485 + $0xf0] sm:$0xff]
        %v3517 = vld [vmem:[%s3485 + $0xf8] sm:$0xff]
        %v3518 = vld [vmem:[%s3485 + $0x100] sm:$0xff]
        %v3519 = vld [vmem:[%s3485 + $0x108] sm:$0xff]
        %v3520 = vld [vmem:[%s3485 + $0x110] sm:$0xff]
        %v3521 = vld [vmem:[%s3485 + $0x118] sm:$0xff]
        %v3522 = vld [vmem:[%s3485 + $0x120] sm:$0xff]
        %v3523 = vld [vmem:[%s3485 + $0x128] sm:$0xff]
        %v3524 = vld [vmem:[%s3485 + $0x130] sm:$0xff]
        %v3525 = vld [vmem:[%s3485 + $0x138] sm:$0xff]
        %v3526 = vld [vmem:[%s3485 + $0x140] sm:$0xff]
        %v3527 = vld [vmem:[%s3485 + $0x148] sm:$0xff]
        %v3528 = vld [vmem:[%s3485 + $0x150] sm:$0xff]
        %v3529 = vld [vmem:[%s3485 + $0x158] sm:$0xff]
        %v3530 = vld [vmem:[%s3485 + $0x160] sm:$0xff]
        %v3531 = vld [vmem:[%s3485 + $0x168] sm:$0xff]
        %v3532 = vld [vmem:[%s3485 + $0x170] sm:$0xff]
        %v3533 = vld [vmem:[%s3485 + $0x178] sm:$0xff]
        %v3534 = vld [vmem:[%s3485 + $0x180] sm:$0xff]
        %v3535 = vld [vmem:[%s3485 + $0x188] sm:$0xff]
        %v3536 = vld [vmem:[%s3485 + $0x190] sm:$0xff]
        %v3537 = vld [vmem:[%s3485 + $0x198] sm:$0xff]
        %v3538 = vld [vmem:[%s3485 + $0x1a0] sm:$0xff]
        %v3539 = vld [vmem:[%s3485 + $0x1a8] sm:$0xff]
        %v3540 = vld [vmem:[%s3485 + $0x1b0] sm:$0xff]
        %v3541 = vld [vmem:[%s3485 + $0x1b8] sm:$0xff]
        %v3542 = vld [vmem:[%s3485 + $0x1c0] sm:$0xff]
        %v3543 = vld [vmem:[%s3485 + $0x1c8] sm:$0xff]
        %v3544 = vld [vmem:[%s3485 + $0x1d0] sm:$0xff]
        %v3545 = vld [vmem:[%s3485 + $0x1d8] sm:$0xff]
        %v3546 = vld [vmem:[%s3485 + $0x1e0] sm:$0xff]
        %v3547 = vld [vmem:[%s3485 + $0x1e8] sm:$0xff]
        %v3548 = vld [vmem:[%s3485 + $0x1f0] sm:$0xff]
        %v3549 = vld [vmem:[%s3485 + $0x1f8] sm:$0xff]
        %v3614 = vunpack.c.l.b16 %v3486
        %v3615 = vunpack.c.h.b16 %v3486
        %v3616 = vunpack.c.l.b16 %v3487
        %v3617 = vunpack.c.h.b16 %v3487
        %v3618 = vunpack.c.l.b16 %v3488
        %v3619 = vunpack.c.h.b16 %v3488
        %v3620 = vunpack.c.l.b16 %v3489
        %v3621 = vunpack.c.h.b16 %v3489
        %v3622 = vunpack.c.l.b16 %v3490
        %v3623 = vunpack.c.h.b16 %v3490
        %v3624 = vunpack.c.l.b16 %v3491
        %v3625 = vunpack.c.h.b16 %v3491
        %v3626 = vunpack.c.l.b16 %v3492
        %v3627 = vunpack.c.h.b16 %v3492
        %v3628 = vunpack.c.l.b16 %v3493
        %v3629 = vunpack.c.h.b16 %v3493
        %v3630 = vunpack.c.l.b16 %v3494
        %v3631 = vunpack.c.h.b16 %v3494
        %v3632 = vunpack.c.l.b16 %v3495
        %v3633 = vunpack.c.h.b16 %v3495
        %v3634 = vunpack.c.l.b16 %v3496
        %v3635 = vunpack.c.h.b16 %v3496
        %v3636 = vunpack.c.l.b16 %v3497
        %v3637 = vunpack.c.h.b16 %v3497
        %v3638 = vunpack.c.l.b16 %v3498
        %v3639 = vunpack.c.h.b16 %v3498
        %v3640 = vunpack.c.l.b16 %v3499
        %v3641 = vunpack.c.h.b16 %v3499
        %v3642 = vunpack.c.l.b16 %v3500
        %v3643 = vunpack.c.h.b16 %v3500
        %v3644 = vunpack.c.l.b16 %v3501
        %v3645 = vunpack.c.h.b16 %v3501
        %v3646 = vunpack.c.l.b16 %v3502
        %v3647 = vunpack.c.h.b16 %v3502
        %v3648 = vunpack.c.l.b16 %v3503
        %v3649 = vunpack.c.h.b16 %v3503
        %v3650 = vunpack.c.l.b16 %v3504
        %v3651 = vunpack.c.h.b16 %v3504
        %v3652 = vunpack.c.l.b16 %v3505
        %v3653 = vunpack.c.h.b16 %v3505
        %v3654 = vunpack.c.l.b16 %v3506
        %v3655 = vunpack.c.h.b16 %v3506
        %v3656 = vunpack.c.l.b16 %v3507
        %v3657 = vunpack.c.h.b16 %v3507
        %v3658 = vunpack.c.l.b16 %v3508
        %v3659 = vunpack.c.h.b16 %v3508
        %v3660 = vunpack.c.l.b16 %v3509
        %v3661 = vunpack.c.h.b16 %v3509
        %v3662 = vunpack.c.l.b16 %v3510
        %v3663 = vunpack.c.h.b16 %v3510
        %v3664 = vunpack.c.l.b16 %v3511
        %v3665 = vunpack.c.h.b16 %v3511
        %v3666 = vunpack.c.l.b16 %v3512
        %v3667 = vunpack.c.h.b16 %v3512
        %v3668 = vunpack.c.l.b16 %v3513
        %v3669 = vunpack.c.h.b16 %v3513
        %v3670 = vunpack.c.l.b16 %v3514
        %v3671 = vunpack.c.h.b16 %v3514
        %v3672 = vunpack.c.l.b16 %v3515
        %v3673 = vunpack.c.h.b16 %v3515
        %v3674 = vunpack.c.l.b16 %v3516
        %v3675 = vunpack.c.h.b16 %v3516
        %v3676 = vunpack.c.l.b16 %v3517
        %v3677 = vunpack.c.h.b16 %v3517
        %v3678 = vunpack.c.l.b16 %v3518
        %v3679 = vunpack.c.h.b16 %v3518
        %v3680 = vunpack.c.l.b16 %v3519
        %v3681 = vunpack.c.h.b16 %v3519
        %v3682 = vunpack.c.l.b16 %v3520
        %v3683 = vunpack.c.h.b16 %v3520
        %v3684 = vunpack.c.l.b16 %v3521
        %v3685 = vunpack.c.h.b16 %v3521
        %v3686 = vunpack.c.l.b16 %v3522
        %v3687 = vunpack.c.h.b16 %v3522
        %v3688 = vunpack.c.l.b16 %v3523
        %v3689 = vunpack.c.h.b16 %v3523
        %v3690 = vunpack.c.l.b16 %v3524
        %v3691 = vunpack.c.h.b16 %v3524
        %v3692 = vunpack.c.l.b16 %v3525
        %v3693 = vunpack.c.h.b16 %v3525
        %v3694 = vunpack.c.l.b16 %v3526
        %v3695 = vunpack.c.h.b16 %v3526
        %v3696 = vunpack.c.l.b16 %v3527
        %v3697 = vunpack.c.h.b16 %v3527
        %v3698 = vunpack.c.l.b16 %v3528
        %v3699 = vunpack.c.h.b16 %v3528
        %v3700 = vunpack.c.l.b16 %v3529
        %v3701 = vunpack.c.h.b16 %v3529
        %v3702 = vunpack.c.l.b16 %v3530
        %v3703 = vunpack.c.h.b16 %v3530
        %v3704 = vunpack.c.l.b16 %v3531
        %v3705 = vunpack.c.h.b16 %v3531
        %v3706 = vunpack.c.l.b16 %v3532
        %v3707 = vunpack.c.h.b16 %v3532
        %v3708 = vunpack.c.l.b16 %v3533
        %v3709 = vunpack.c.h.b16 %v3533
        %v3710 = vunpack.c.l.b16 %v3534
        %v3711 = vunpack.c.h.b16 %v3534
        %v3712 = vunpack.c.l.b16 %v3535
        %v3713 = vunpack.c.h.b16 %v3535
        %v3714 = vunpack.c.l.b16 %v3536
        %v3715 = vunpack.c.h.b16 %v3536
        %v3716 = vunpack.c.l.b16 %v3537
        %v3717 = vunpack.c.h.b16 %v3537
        %v3718 = vunpack.c.l.b16 %v3538
        %v3719 = vunpack.c.h.b16 %v3538
        %v3720 = vunpack.c.l.b16 %v3539
        %v3721 = vunpack.c.h.b16 %v3539
        %v3722 = vunpack.c.l.b16 %v3540
        %v3723 = vunpack.c.h.b16 %v3540
        %v3724 = vunpack.c.l.b16 %v3541
        %v3725 = vunpack.c.h.b16 %v3541
        %v3726 = vunpack.c.l.b16 %v3542
        %v3727 = vunpack.c.h.b16 %v3542
        %v3728 = vunpack.c.l.b16 %v3543
        %v3729 = vunpack.c.h.b16 %v3543
        %v3730 = vunpack.c.l.b16 %v3544
        %v3731 = vunpack.c.h.b16 %v3544
        %v3732 = vunpack.c.l.b16 %v3545
        %v3733 = vunpack.c.h.b16 %v3545
        %v3734 = vunpack.c.l.b16 %v3546
        %v3735 = vunpack.c.h.b16 %v3546
        %v3736 = vunpack.c.l.b16 %v3547
        %v3737 = vunpack.c.h.b16 %v3547
        %v3738 = vunpack.c.l.b16 %v3548
        %v3739 = vunpack.c.h.b16 %v3548
        %v3740 = vunpack.c.l.b16 %v3549
        %v3741 = vunpack.c.h.b16 %v3549
        %v3742 = vpack.c.b16 %v3616, %v3614
        %v3743 = vpack.c.b16 %v3617, %v3615
        %v3744 = vpack.c.b16 %v3620, %v3618
        %v3745 = vpack.c.b16 %v3621, %v3619
        %v3746 = vpack.c.b16 %v3624, %v3622
        %v3747 = vpack.c.b16 %v3625, %v3623
        %v3748 = vpack.c.b16 %v3628, %v3626
        %v3749 = vpack.c.b16 %v3629, %v3627
        %v3750 = vpack.c.b16 %v3632, %v3630
        %v3751 = vpack.c.b16 %v3633, %v3631
        %v3752 = vpack.c.b16 %v3636, %v3634
        %v3753 = vpack.c.b16 %v3637, %v3635
        %v3754 = vpack.c.b16 %v3640, %v3638
        %v3755 = vpack.c.b16 %v3641, %v3639
        %v3756 = vpack.c.b16 %v3644, %v3642
        %v3757 = vpack.c.b16 %v3645, %v3643
        %v3758 = vpack.c.b16 %v3648, %v3646
        %v3759 = vpack.c.b16 %v3649, %v3647
        %v3760 = vpack.c.b16 %v3652, %v3650
        %v3761 = vpack.c.b16 %v3653, %v3651
        %v3762 = vpack.c.b16 %v3656, %v3654
        %v3763 = vpack.c.b16 %v3657, %v3655
        %v3764 = vpack.c.b16 %v3660, %v3658
        %v3765 = vpack.c.b16 %v3661, %v3659
        %v3766 = vpack.c.b16 %v3664, %v3662
        %v3767 = vpack.c.b16 %v3665, %v3663
        %v3768 = vpack.c.b16 %v3668, %v3666
        %v3769 = vpack.c.b16 %v3669, %v3667
        %v3770 = vpack.c.b16 %v3672, %v3670
        %v3771 = vpack.c.b16 %v3673, %v3671
        %v3772 = vpack.c.b16 %v3676, %v3674
        %v3773 = vpack.c.b16 %v3677, %v3675
        %v3774 = vpack.c.b16 %v3680, %v3678
        %v3775 = vpack.c.b16 %v3681, %v3679
        %v3776 = vpack.c.b16 %v3684, %v3682
        %v3777 = vpack.c.b16 %v3685, %v3683
        %v3778 = vpack.c.b16 %v3688, %v3686
        %v3779 = vpack.c.b16 %v3689, %v3687
        %v3780 = vpack.c.b16 %v3692, %v3690
        %v3781 = vpack.c.b16 %v3693, %v3691
        %v3782 = vpack.c.b16 %v3696, %v3694
        %v3783 = vpack.c.b16 %v3697, %v3695
        %v3784 = vpack.c.b16 %v3700, %v3698
        %v3785 = vpack.c.b16 %v3701, %v3699
        %v3786 = vpack.c.b16 %v3704, %v3702
        %v3787 = vpack.c.b16 %v3705, %v3703
        %v3788 = vpack.c.b16 %v3708, %v3706
        %v3789 = vpack.c.b16 %v3709, %v3707
        %v3790 = vpack.c.b16 %v3712, %v3710
        %v3791 = vpack.c.b16 %v3713, %v3711
        %v3792 = vpack.c.b16 %v3716, %v3714
        %v3793 = vpack.c.b16 %v3717, %v3715
        %v3794 = vpack.c.b16 %v3720, %v3718
        %v3795 = vpack.c.b16 %v3721, %v3719
        %v3796 = vpack.c.b16 %v3724, %v3722
        %v3797 = vpack.c.b16 %v3725, %v3723
        %v3798 = vpack.c.b16 %v3728, %v3726
        %v3799 = vpack.c.b16 %v3729, %v3727
        %v3800 = vpack.c.b16 %v3732, %v3730
        %v3801 = vpack.c.b16 %v3733, %v3731
        %v3802 = vpack.c.b16 %v3736, %v3734
        %v3803 = vpack.c.b16 %v3737, %v3735
        %v3804 = vpack.c.b16 %v3740, %v3738
        %v3805 = vpack.c.b16 %v3741, %v3739
        %3870 = vmatprep.subr.bf16.mxu0 %v3757
        %3871 = vmatpush1.bf16.msra.mxu0 %v3756
        %3872 = vmatprep.subr.bf16.mxu0 %v3755
        %3873 = vmatpush1.bf16.msra.mxu0 %v3754
        %3874 = vmatprep.subr.bf16.mxu0 %v3753
        %3875 = vmatpush1.bf16.msra.mxu0 %v3752
        %3876 = vmatprep.subr.bf16.mxu0 %v3751
        %3877 = vmatpush1.bf16.msra.mxu0 %v3750
        %3878 = vmatprep.subr.bf16.mxu0 %v3749
        %3879 = vmatpush1.bf16.msra.mxu0 %v3748
        %3880 = vmatprep.subr.bf16.mxu0 %v3747
        %3881 = vmatpush1.bf16.msra.mxu0 %v3746
        %3882 = vmatprep.subr.bf16.mxu0 %v3745
        %3883 = vmatpush1.bf16.msra.mxu0 %v3744
        %3884 = vmatprep.subr.bf16.mxu0 %v3743
        %3885 = vmatpush1.bf16.msra.mxu0 %v3742
        %3886 = vmatprep.subr.bf16.mxu0 %v3773
        %3887 = vmatpush2.bf16.msra.mxu0 %v3772
        %3888 = vmatprep.subr.bf16.mxu0 %v3771
        %3889 = vmatpush2.bf16.msra.mxu0 %v3770
        %3890 = vmatprep.subr.bf16.mxu0 %v3769
        %3891 = vmatpush2.bf16.msra.mxu0 %v3768
        %3892 = vmatprep.subr.bf16.mxu0 %v3767
        %3893 = vmatpush2.bf16.msra.mxu0 %v3766
        %3894 = vmatprep.subr.bf16.mxu0 %v3765
        %3895 = vmatpush2.bf16.msra.mxu0 %v3764
        %3896 = vmatprep.subr.bf16.mxu0 %v3763
        %3897 = vmatpush2.bf16.msra.mxu0 %v3762
        %3898 = vmatprep.subr.bf16.mxu0 %v3761
        %3899 = vmatpush2.bf16.msra.mxu0 %v3760
        %3900 = vmatprep.subr.bf16.mxu0 %v3759
        %3901 = vmatpush2.bf16.msra.mxu0 %v3758
        %3902 = vmatprep.mubr.bf16.mxu0 %v3482
        %3903 = vmatmul.mubr.bf16.gmra.mxu0 %v3481
        %v3904 = vpop.f32.mrf.mxu0
        %v3905 = vadd.f32 0.0, %v3904
        %v3906 = vpop.f32.mrf.mxu0
        %v3907 = vadd.f32 0.0, %v3906
        %v3908 = vpop.f32.mrf.mxu0
        %v3909 = vadd.f32 0.0, %v3908
        %v3910 = vpop.f32.mrf.mxu0
        %v3911 = vadd.f32 0.0, %v3910
        %3912 = vdwg.mxu0
        %3913 = vmatprep.subr.bf16.mxu0 %v3789
        %3914 = vmatpush1.bf16.msra.mxu0 %v3788
        %3915 = vmatprep.subr.bf16.mxu0 %v3787
        %3916 = vmatpush1.bf16.msra.mxu0 %v3786
        %3917 = vmatprep.subr.bf16.mxu0 %v3785
        %3918 = vmatpush1.bf16.msra.mxu0 %v3784
        %3919 = vmatprep.subr.bf16.mxu0 %v3783
        %3920 = vmatpush1.bf16.msra.mxu0 %v3782
        %3921 = vmatprep.subr.bf16.mxu0 %v3781
        %3922 = vmatpush1.bf16.msra.mxu0 %v3780
        %3923 = vmatprep.subr.bf16.mxu0 %v3779
        %3924 = vmatpush1.bf16.msra.mxu0 %v3778
        %3925 = vmatprep.subr.bf16.mxu0 %v3777
        %3926 = vmatpush1.bf16.msra.mxu0 %v3776
        %3927 = vmatprep.subr.bf16.mxu0 %v3775
        %3928 = vmatpush1.bf16.msra.mxu0 %v3774
        %3929 = vmatprep.subr.bf16.mxu0 %v3805
        %3930 = vmatpush2.bf16.msra.mxu0 %v3804
        %3931 = vmatprep.subr.bf16.mxu0 %v3803
        %3932 = vmatpush2.bf16.msra.mxu0 %v3802
        %3933 = vmatprep.subr.bf16.mxu0 %v3801
        %3934 = vmatpush2.bf16.msra.mxu0 %v3800
        %3935 = vmatprep.subr.bf16.mxu0 %v3799
        %3936 = vmatpush2.bf16.msra.mxu0 %v3798
        %3937 = vmatprep.subr.bf16.mxu0 %v3797
        %3938 = vmatpush2.bf16.msra.mxu0 %v3796
        %3939 = vmatprep.subr.bf16.mxu0 %v3795
        %3940 = vmatpush2.bf16.msra.mxu0 %v3794
        %3941 = vmatprep.subr.bf16.mxu0 %v3793
        %3942 = vmatpush2.bf16.msra.mxu0 %v3792
        %3943 = vmatprep.subr.bf16.mxu0 %v3791
        %3944 = vmatpush2.bf16.msra.mxu0 %v3790
        %3945 = vmatprep.mubr.bf16.mxu0 %v3484
        %3946 = vmatmul.mubr.bf16.gmra.mxu0 %v3483
        %v3947 = vpop.f32.mrf.mxu0
        %v3948 = vadd.f32 %v3905, %v3947
        %v3949 = vpop.f32.mrf.mxu0
        %v3950 = vadd.f32 %v3907, %v3949
        %v3951 = vpop.f32.mrf.mxu0
        %v3952 = vadd.f32 %v3909, %v3951
        %v3953 = vpop.f32.mrf.mxu0
        %v3954 = vadd.f32 %v3911, %v3953
        %3955 = vdwg.mxu0
        %v4020 = vunpack.c.l.b16 %v3417
        %v4021 = vunpack.c.h.b16 %v3417
        %v4022 = vunpack.c.l.b16 %v3418
        %v4023 = vunpack.c.h.b16 %v3418
        %v4024 = vunpack.c.l.b16 %v3419
        %v4025 = vunpack.c.h.b16 %v3419
        %v4026 = vunpack.c.l.b16 %v3420
        %v4027 = vunpack.c.h.b16 %v3420
        %v4028 = vunpack.c.l.b16 %v3421
        %v4029 = vunpack.c.h.b16 %v3421
        %v4030 = vunpack.c.l.b16 %v3422
        %v4031 = vunpack.c.h.b16 %v3422
        %v4032 = vunpack.c.l.b16 %v3423
        %v4033 = vunpack.c.h.b16 %v3423
        %v4034 = vunpack.c.l.b16 %v3424
        %v4035 = vunpack.c.h.b16 %v3424
        %v4036 = vunpack.c.l.b16 %v3425
        %v4037 = vunpack.c.h.b16 %v3425
        %v4038 = vunpack.c.l.b16 %v3426
        %v4039 = vunpack.c.h.b16 %v3426
        %v4040 = vunpack.c.l.b16 %v3427
        %v4041 = vunpack.c.h.b16 %v3427
        %v4042 = vunpack.c.l.b16 %v3428
        %v4043 = vunpack.c.h.b16 %v3428
        %v4044 = vunpack.c.l.b16 %v3429
        %v4045 = vunpack.c.h.b16 %v3429
        %v4046 = vunpack.c.l.b16 %v3430
        %v4047 = vunpack.c.h.b16 %v3430
        %v4048 = vunpack.c.l.b16 %v3431
        %v4049 = vunpack.c.h.b16 %v3431
        %v4050 = vunpack.c.l.b16 %v3432
        %v4051 = vunpack.c.h.b16 %v3432
        %v4052 = vunpack.c.l.b16 %v3433
        %v4053 = vunpack.c.h.b16 %v3433
        %v4054 = vunpack.c.l.b16 %v3434
        %v4055 = vunpack.c.h.b16 %v3434
        %v4056 = vunpack.c.l.b16 %v3435
        %v4057 = vunpack.c.h.b16 %v3435
        %v4058 = vunpack.c.l.b16 %v3436
        %v4059 = vunpack.c.h.b16 %v3436
        %v4060 = vunpack.c.l.b16 %v3437
        %v4061 = vunpack.c.h.b16 %v3437
        %v4062 = vunpack.c.l.b16 %v3438
        %v4063 = vunpack.c.h.b16 %v3438
        %v4064 = vunpack.c.l.b16 %v3439
        %v4065 = vunpack.c.h.b16 %v3439
        %v4066 = vunpack.c.l.b16 %v3440
        %v4067 = vunpack.c.h.b16 %v3440
        %v4068 = vunpack.c.l.b16 %v3441
        %v4069 = vunpack.c.h.b16 %v3441
        %v4070 = vunpack.c.l.b16 %v3442
        %v4071 = vunpack.c.h.b16 %v3442
        %v4072 = vunpack.c.l.b16 %v3443
        %v4073 = vunpack.c.h.b16 %v3443
        %v4074 = vunpack.c.l.b16 %v3444
        %v4075 = vunpack.c.h.b16 %v3444
        %v4076 = vunpack.c.l.b16 %v3445
        %v4077 = vunpack.c.h.b16 %v3445
        %v4078 = vunpack.c.l.b16 %v3446
        %v4079 = vunpack.c.h.b16 %v3446
        %v4080 = vunpack.c.l.b16 %v3447
        %v4081 = vunpack.c.h.b16 %v3447
        %v4082 = vunpack.c.l.b16 %v3448
        %v4083 = vunpack.c.h.b16 %v3448
        %v4084 = vunpack.c.l.b16 %v3449
        %v4085 = vunpack.c.h.b16 %v3449
        %v4086 = vunpack.c.l.b16 %v3450
        %v4087 = vunpack.c.h.b16 %v3450
        %v4088 = vunpack.c.l.b16 %v3451
        %v4089 = vunpack.c.h.b16 %v3451
        %v4090 = vunpack.c.l.b16 %v3452
        %v4091 = vunpack.c.h.b16 %v3452
        %v4092 = vunpack.c.l.b16 %v3453
        %v4093 = vunpack.c.h.b16 %v3453
        %v4094 = vunpack.c.l.b16 %v3454
        %v4095 = vunpack.c.h.b16 %v3454
        %v4096 = vunpack.c.l.b16 %v3455
        %v4097 = vunpack.c.h.b16 %v3455
        %v4098 = vunpack.c.l.b16 %v3456
        %v4099 = vunpack.c.h.b16 %v3456
        %v4100 = vunpack.c.l.b16 %v3457
        %v4101 = vunpack.c.h.b16 %v3457
        %v4102 = vunpack.c.l.b16 %v3458
        %v4103 = vunpack.c.h.b16 %v3458
        %v4104 = vunpack.c.l.b16 %v3459
        %v4105 = vunpack.c.h.b16 %v3459
        %v4106 = vunpack.c.l.b16 %v3460
        %v4107 = vunpack.c.h.b16 %v3460
        %v4108 = vunpack.c.l.b16 %v3461
        %v4109 = vunpack.c.h.b16 %v3461
        %v4110 = vunpack.c.l.b16 %v3462
        %v4111 = vunpack.c.h.b16 %v3462
        %v4112 = vunpack.c.l.b16 %v3463
        %v4113 = vunpack.c.h.b16 %v3463
        %v4114 = vunpack.c.l.b16 %v3464
        %v4115 = vunpack.c.h.b16 %v3464
        %v4116 = vunpack.c.l.b16 %v3465
        %v4117 = vunpack.c.h.b16 %v3465
        %v4118 = vunpack.c.l.b16 %v3466
        %v4119 = vunpack.c.h.b16 %v3466
        %v4120 = vunpack.c.l.b16 %v3467
        %v4121 = vunpack.c.h.b16 %v3467
        %v4122 = vunpack.c.l.b16 %v3468
        %v4123 = vunpack.c.h.b16 %v3468
        %v4124 = vunpack.c.l.b16 %v3469
        %v4125 = vunpack.c.h.b16 %v3469
        %v4126 = vunpack.c.l.b16 %v3470
        %v4127 = vunpack.c.h.b16 %v3470
        %v4128 = vunpack.c.l.b16 %v3471
        %v4129 = vunpack.c.h.b16 %v3471
        %v4130 = vunpack.c.l.b16 %v3472
        %v4131 = vunpack.c.h.b16 %v3472
        %v4132 = vunpack.c.l.b16 %v3473
        %v4133 = vunpack.c.h.b16 %v3473
        %v4134 = vunpack.c.l.b16 %v3474
        %v4135 = vunpack.c.h.b16 %v3474
        %v4136 = vunpack.c.l.b16 %v3475
        %v4137 = vunpack.c.h.b16 %v3475
        %v4138 = vunpack.c.l.b16 %v3476
        %v4139 = vunpack.c.h.b16 %v3476
        %v4140 = vunpack.c.l.b16 %v3477
        %v4141 = vunpack.c.h.b16 %v3477
        %v4142 = vunpack.c.l.b16 %v3478
        %v4143 = vunpack.c.h.b16 %v3478
        %v4144 = vunpack.c.l.b16 %v3479
        %v4145 = vunpack.c.h.b16 %v3479
        %v4146 = vunpack.c.l.b16 %v3480
        %v4147 = vunpack.c.h.b16 %v3480
        %v4148 = vpack.c.b16 %v4022, %v4020
        %v4149 = vpack.c.b16 %v4023, %v4021
        %v4150 = vpack.c.b16 %v4026, %v4024
        %v4151 = vpack.c.b16 %v4027, %v4025
        %v4152 = vpack.c.b16 %v4030, %v4028
        %v4153 = vpack.c.b16 %v4031, %v4029
        %v4154 = vpack.c.b16 %v4034, %v4032
        %v4155 = vpack.c.b16 %v4035, %v4033
        %v4156 = vpack.c.b16 %v4038, %v4036
        %v4157 = vpack.c.b16 %v4039, %v4037
        %v4158 = vpack.c.b16 %v4042, %v4040
        %v4159 = vpack.c.b16 %v4043, %v4041
        %v4160 = vpack.c.b16 %v4046, %v4044
        %v4161 = vpack.c.b16 %v4047, %v4045
        %v4162 = vpack.c.b16 %v4050, %v4048
        %v4163 = vpack.c.b16 %v4051, %v4049
        %v4164 = vpack.c.b16 %v4054, %v4052
        %v4165 = vpack.c.b16 %v4055, %v4053
        %v4166 = vpack.c.b16 %v4058, %v4056
        %v4167 = vpack.c.b16 %v4059, %v4057
        %v4168 = vpack.c.b16 %v4062, %v4060
        %v4169 = vpack.c.b16 %v4063, %v4061
        %v4170 = vpack.c.b16 %v4066, %v4064
        %v4171 = vpack.c.b16 %v4067, %v4065
        %v4172 = vpack.c.b16 %v4070, %v4068
        %v4173 = vpack.c.b16 %v4071, %v4069
        %v4174 = vpack.c.b16 %v4074, %v4072
        %v4175 = vpack.c.b16 %v4075, %v4073
        %v4176 = vpack.c.b16 %v4078, %v4076
        %v4177 = vpack.c.b16 %v4079, %v4077
        %v4178 = vpack.c.b16 %v4082, %v4080
        %v4179 = vpack.c.b16 %v4083, %v4081
        %v4180 = vpack.c.b16 %v4086, %v4084
        %v4181 = vpack.c.b16 %v4087, %v4085
        %v4182 = vpack.c.b16 %v4090, %v4088
        %v4183 = vpack.c.b16 %v4091, %v4089
        %v4184 = vpack.c.b16 %v4094, %v4092
        %v4185 = vpack.c.b16 %v4095, %v4093
        %v4186 = vpack.c.b16 %v4098, %v4096
        %v4187 = vpack.c.b16 %v4099, %v4097
        %v4188 = vpack.c.b16 %v4102, %v4100
        %v4189 = vpack.c.b16 %v4103, %v4101
        %v4190 = vpack.c.b16 %v4106, %v4104
        %v4191 = vpack.c.b16 %v4107, %v4105
        %v4192 = vpack.c.b16 %v4110, %v4108
        %v4193 = vpack.c.b16 %v4111, %v4109
        %v4194 = vpack.c.b16 %v4114, %v4112
        %v4195 = vpack.c.b16 %v4115, %v4113
        %v4196 = vpack.c.b16 %v4118, %v4116
        %v4197 = vpack.c.b16 %v4119, %v4117
        %v4198 = vpack.c.b16 %v4122, %v4120
        %v4199 = vpack.c.b16 %v4123, %v4121
        %v4200 = vpack.c.b16 %v4126, %v4124
        %v4201 = vpack.c.b16 %v4127, %v4125
        %v4202 = vpack.c.b16 %v4130, %v4128
        %v4203 = vpack.c.b16 %v4131, %v4129
        %v4204 = vpack.c.b16 %v4134, %v4132
        %v4205 = vpack.c.b16 %v4135, %v4133
        %v4206 = vpack.c.b16 %v4138, %v4136
        %v4207 = vpack.c.b16 %v4139, %v4137
        %v4208 = vpack.c.b16 %v4142, %v4140
        %v4209 = vpack.c.b16 %v4143, %v4141
        %v4210 = vpack.c.b16 %v4146, %v4144
        %v4211 = vpack.c.b16 %v4147, %v4145
        %4276 = vmatprep.subr.bf16.mxu0 %v4163
        %4277 = vmatpush1.bf16.msra.mxu0 %v4162
        %4278 = vmatprep.subr.bf16.mxu0 %v4161
        %4279 = vmatpush1.bf16.msra.mxu0 %v4160
        %4280 = vmatprep.subr.bf16.mxu0 %v4159
        %4281 = vmatpush1.bf16.msra.mxu0 %v4158
        %4282 = vmatprep.subr.bf16.mxu0 %v4157
        %4283 = vmatpush1.bf16.msra.mxu0 %v4156
        %4284 = vmatprep.subr.bf16.mxu0 %v4155
        %4285 = vmatpush1.bf16.msra.mxu0 %v4154
        %4286 = vmatprep.subr.bf16.mxu0 %v4153
        %4287 = vmatpush1.bf16.msra.mxu0 %v4152
        %4288 = vmatprep.subr.bf16.mxu0 %v4151
        %4289 = vmatpush1.bf16.msra.mxu0 %v4150
        %4290 = vmatprep.subr.bf16.mxu0 %v4149
        %4291 = vmatpush1.bf16.msra.mxu0 %v4148
        %4292 = vmatprep.subr.bf16.mxu0 %v4179
        %4293 = vmatpush2.bf16.msra.mxu0 %v4178
        %4294 = vmatprep.subr.bf16.mxu0 %v4177
        %4295 = vmatpush2.bf16.msra.mxu0 %v4176
        %4296 = vmatprep.subr.bf16.mxu0 %v4175
        %4297 = vmatpush2.bf16.msra.mxu0 %v4174
        %4298 = vmatprep.subr.bf16.mxu0 %v4173
        %4299 = vmatpush2.bf16.msra.mxu0 %v4172
        %4300 = vmatprep.subr.bf16.mxu0 %v4171
        %4301 = vmatpush2.bf16.msra.mxu0 %v4170
        %4302 = vmatprep.subr.bf16.mxu0 %v4169
        %4303 = vmatpush2.bf16.msra.mxu0 %v4168
        %4304 = vmatprep.subr.bf16.mxu0 %v4167
        %4305 = vmatpush2.bf16.msra.mxu0 %v4166
        %4306 = vmatprep.subr.bf16.mxu0 %v4165
        %4307 = vmatpush2.bf16.msra.mxu0 %v4164
        %4308 = vmatprep.mubr.bf16.mxu0 %v3414
        %4309 = vmatmul.mubr.bf16.gmra.mxu0 %v3413
        %v4310 = vpop.f32.mrf.mxu0
        %v4311 = vadd.f32 %v3948, %v4310
        %v4312 = vpop.f32.mrf.mxu0
        %v4313 = vadd.f32 %v3950, %v4312
        %v4314 = vpop.f32.mrf.mxu0
        %v4315 = vadd.f32 %v3952, %v4314
        %v4316 = vpop.f32.mrf.mxu0
        %v4317 = vadd.f32 %v3954, %v4316
        %4318 = vdwg.mxu0
        %4319 = vmatprep.subr.bf16.mxu0 %v4195
        %4320 = vmatpush1.bf16.msra.mxu0 %v4194
        %4321 = vmatprep.subr.bf16.mxu0 %v4193
        %4322 = vmatpush1.bf16.msra.mxu0 %v4192
        %4323 = vmatprep.subr.bf16.mxu0 %v4191
        %4324 = vmatpush1.bf16.msra.mxu0 %v4190
        %4325 = vmatprep.subr.bf16.mxu0 %v4189
        %4326 = vmatpush1.bf16.msra.mxu0 %v4188
        %4327 = vmatprep.subr.bf16.mxu0 %v4187
        %4328 = vmatpush1.bf16.msra.mxu0 %v4186
        %4329 = vmatprep.subr.bf16.mxu0 %v4185
        %4330 = vmatpush1.bf16.msra.mxu0 %v4184
        %4331 = vmatprep.subr.bf16.mxu0 %v4183
        %4332 = vmatpush1.bf16.msra.mxu0 %v4182
        %4333 = vmatprep.subr.bf16.mxu0 %v4181
        %4334 = vmatpush1.bf16.msra.mxu0 %v4180
        %4335 = vmatprep.subr.bf16.mxu0 %v4211
        %4336 = vmatpush2.bf16.msra.mxu0 %v4210
        %4337 = vmatprep.subr.bf16.mxu0 %v4209
        %4338 = vmatpush2.bf16.msra.mxu0 %v4208
        %4339 = vmatprep.subr.bf16.mxu0 %v4207
        %4340 = vmatpush2.bf16.msra.mxu0 %v4206
        %4341 = vmatprep.subr.bf16.mxu0 %v4205
        %4342 = vmatpush2.bf16.msra.mxu0 %v4204
        %4343 = vmatprep.subr.bf16.mxu0 %v4203
        %4344 = vmatpush2.bf16.msra.mxu0 %v4202
        %4345 = vmatprep.subr.bf16.mxu0 %v4201
        %4346 = vmatpush2.bf16.msra.mxu0 %v4200
        %4347 = vmatprep.subr.bf16.mxu0 %v4199
        %4348 = vmatpush2.bf16.msra.mxu0 %v4198
        %4349 = vmatprep.subr.bf16.mxu0 %v4197
        %4350 = vmatpush2.bf16.msra.mxu0 %v4196
        %4351 = vmatprep.mubr.bf16.mxu0 %v3416
        %4352 = vmatmul.mubr.bf16.gmra.mxu0 %v3415
        %v4353 = vpop.f32.mrf.mxu0
        %v4354 = vadd.f32 %v4311, %v4353
        %v4355 = vpop.f32.mrf.mxu0
        %v4356 = vadd.f32 %v4313, %v4355
        %v4357 = vpop.f32.mrf.mxu0
        %v4358 = vadd.f32 %v4315, %v4357
        %v4359 = vpop.f32.mrf.mxu0
        %v4360 = vadd.f32 %v4317, %v4359
        %4361 = vdwg.mxu0
        %v4362 = vpack.c.bf16 %v3409, %v3405
        %v4363 = vpack.c.bf16 %v3410, %v3406
        %v4364 = vpack.c.bf16 %v3411, %v3407
        %v4365 = vpack.c.bf16 %v3412, %v3408
        %s4366 = scalar_lea.vmem [#allocation15], 1024
        %v4367 = vld [vmem:[%s4366] sm:$0xff]
        %v4368 = vld [vmem:[%s4366 + $0x8] sm:$0xff]
        %v4369 = vld [vmem:[%s4366 + $0x10] sm:$0xff]
        %v4370 = vld [vmem:[%s4366 + $0x18] sm:$0xff]
        %v4371 = vld [vmem:[%s4366 + $0x20] sm:$0xff]
        %v4372 = vld [vmem:[%s4366 + $0x28] sm:$0xff]
        %v4373 = vld [vmem:[%s4366 + $0x30] sm:$0xff]
        %v4374 = vld [vmem:[%s4366 + $0x38] sm:$0xff]
        %v4375 = vld [vmem:[%s4366 + $0x40] sm:$0xff]
        %v4376 = vld [vmem:[%s4366 + $0x48] sm:$0xff]
        %v4377 = vld [vmem:[%s4366 + $0x50] sm:$0xff]
        %v4378 = vld [vmem:[%s4366 + $0x58] sm:$0xff]
        %v4379 = vld [vmem:[%s4366 + $0x60] sm:$0xff]
        %v4380 = vld [vmem:[%s4366 + $0x68] sm:$0xff]
        %v4381 = vld [vmem:[%s4366 + $0x70] sm:$0xff]
        %v4382 = vld [vmem:[%s4366 + $0x78] sm:$0xff]
        %v4383 = vld [vmem:[%s4366 + $0x80] sm:$0xff]
        %v4384 = vld [vmem:[%s4366 + $0x88] sm:$0xff]
        %v4385 = vld [vmem:[%s4366 + $0x90] sm:$0xff]
        %v4386 = vld [vmem:[%s4366 + $0x98] sm:$0xff]
        %v4387 = vld [vmem:[%s4366 + $0xa0] sm:$0xff]
        %v4388 = vld [vmem:[%s4366 + $0xa8] sm:$0xff]
        %v4389 = vld [vmem:[%s4366 + $0xb0] sm:$0xff]
        %v4390 = vld [vmem:[%s4366 + $0xb8] sm:$0xff]
        %v4391 = vld [vmem:[%s4366 + $0xc0] sm:$0xff]
        %v4392 = vld [vmem:[%s4366 + $0xc8] sm:$0xff]
        %v4393 = vld [vmem:[%s4366 + $0xd0] sm:$0xff]
        %v4394 = vld [vmem:[%s4366 + $0xd8] sm:$0xff]
        %v4395 = vld [vmem:[%s4366 + $0xe0] sm:$0xff]
        %v4396 = vld [vmem:[%s4366 + $0xe8] sm:$0xff]
        %v4397 = vld [vmem:[%s4366 + $0xf0] sm:$0xff]
        %v4398 = vld [vmem:[%s4366 + $0xf8] sm:$0xff]
        %v4399 = vld [vmem:[%s4366 + $0x100] sm:$0xff]
        %v4400 = vld [vmem:[%s4366 + $0x108] sm:$0xff]
        %v4401 = vld [vmem:[%s4366 + $0x110] sm:$0xff]
        %v4402 = vld [vmem:[%s4366 + $0x118] sm:$0xff]
        %v4403 = vld [vmem:[%s4366 + $0x120] sm:$0xff]
        %v4404 = vld [vmem:[%s4366 + $0x128] sm:$0xff]
        %v4405 = vld [vmem:[%s4366 + $0x130] sm:$0xff]
        %v4406 = vld [vmem:[%s4366 + $0x138] sm:$0xff]
        %v4407 = vld [vmem:[%s4366 + $0x140] sm:$0xff]
        %v4408 = vld [vmem:[%s4366 + $0x148] sm:$0xff]
        %v4409 = vld [vmem:[%s4366 + $0x150] sm:$0xff]
        %v4410 = vld [vmem:[%s4366 + $0x158] sm:$0xff]
        %v4411 = vld [vmem:[%s4366 + $0x160] sm:$0xff]
        %v4412 = vld [vmem:[%s4366 + $0x168] sm:$0xff]
        %v4413 = vld [vmem:[%s4366 + $0x170] sm:$0xff]
        %v4414 = vld [vmem:[%s4366 + $0x178] sm:$0xff]
        %v4415 = vld [vmem:[%s4366 + $0x180] sm:$0xff]
        %v4416 = vld [vmem:[%s4366 + $0x188] sm:$0xff]
        %v4417 = vld [vmem:[%s4366 + $0x190] sm:$0xff]
        %v4418 = vld [vmem:[%s4366 + $0x198] sm:$0xff]
        %v4419 = vld [vmem:[%s4366 + $0x1a0] sm:$0xff]
        %v4420 = vld [vmem:[%s4366 + $0x1a8] sm:$0xff]
        %v4421 = vld [vmem:[%s4366 + $0x1b0] sm:$0xff]
        %v4422 = vld [vmem:[%s4366 + $0x1b8] sm:$0xff]
        %v4423 = vld [vmem:[%s4366 + $0x1c0] sm:$0xff]
        %v4424 = vld [vmem:[%s4366 + $0x1c8] sm:$0xff]
        %v4425 = vld [vmem:[%s4366 + $0x1d0] sm:$0xff]
        %v4426 = vld [vmem:[%s4366 + $0x1d8] sm:$0xff]
        %v4427 = vld [vmem:[%s4366 + $0x1e0] sm:$0xff]
        %v4428 = vld [vmem:[%s4366 + $0x1e8] sm:$0xff]
        %v4429 = vld [vmem:[%s4366 + $0x1f0] sm:$0xff]
        %v4430 = vld [vmem:[%s4366 + $0x1f8] sm:$0xff]
        %v4495 = vunpack.c.l.b16 %v4367
        %v4496 = vunpack.c.h.b16 %v4367
        %v4497 = vunpack.c.l.b16 %v4368
        %v4498 = vunpack.c.h.b16 %v4368
        %v4499 = vunpack.c.l.b16 %v4369
        %v4500 = vunpack.c.h.b16 %v4369
        %v4501 = vunpack.c.l.b16 %v4370
        %v4502 = vunpack.c.h.b16 %v4370
        %v4503 = vunpack.c.l.b16 %v4371
        %v4504 = vunpack.c.h.b16 %v4371
        %v4505 = vunpack.c.l.b16 %v4372
        %v4506 = vunpack.c.h.b16 %v4372
        %v4507 = vunpack.c.l.b16 %v4373
        %v4508 = vunpack.c.h.b16 %v4373
        %v4509 = vunpack.c.l.b16 %v4374
        %v4510 = vunpack.c.h.b16 %v4374
        %v4511 = vunpack.c.l.b16 %v4375
        %v4512 = vunpack.c.h.b16 %v4375
        %v4513 = vunpack.c.l.b16 %v4376
        %v4514 = vunpack.c.h.b16 %v4376
        %v4515 = vunpack.c.l.b16 %v4377
        %v4516 = vunpack.c.h.b16 %v4377
        %v4517 = vunpack.c.l.b16 %v4378
        %v4518 = vunpack.c.h.b16 %v4378
        %v4519 = vunpack.c.l.b16 %v4379
        %v4520 = vunpack.c.h.b16 %v4379
        %v4521 = vunpack.c.l.b16 %v4380
        %v4522 = vunpack.c.h.b16 %v4380
        %v4523 = vunpack.c.l.b16 %v4381
        %v4524 = vunpack.c.h.b16 %v4381
        %v4525 = vunpack.c.l.b16 %v4382
        %v4526 = vunpack.c.h.b16 %v4382
        %v4527 = vunpack.c.l.b16 %v4383
        %v4528 = vunpack.c.h.b16 %v4383
        %v4529 = vunpack.c.l.b16 %v4384
        %v4530 = vunpack.c.h.b16 %v4384
        %v4531 = vunpack.c.l.b16 %v4385
        %v4532 = vunpack.c.h.b16 %v4385
        %v4533 = vunpack.c.l.b16 %v4386
        %v4534 = vunpack.c.h.b16 %v4386
        %v4535 = vunpack.c.l.b16 %v4387
        %v4536 = vunpack.c.h.b16 %v4387
        %v4537 = vunpack.c.l.b16 %v4388
        %v4538 = vunpack.c.h.b16 %v4388
        %v4539 = vunpack.c.l.b16 %v4389
        %v4540 = vunpack.c.h.b16 %v4389
        %v4541 = vunpack.c.l.b16 %v4390
        %v4542 = vunpack.c.h.b16 %v4390
        %v4543 = vunpack.c.l.b16 %v4391
        %v4544 = vunpack.c.h.b16 %v4391
        %v4545 = vunpack.c.l.b16 %v4392
        %v4546 = vunpack.c.h.b16 %v4392
        %v4547 = vunpack.c.l.b16 %v4393
        %v4548 = vunpack.c.h.b16 %v4393
        %v4549 = vunpack.c.l.b16 %v4394
        %v4550 = vunpack.c.h.b16 %v4394
        %v4551 = vunpack.c.l.b16 %v4395
        %v4552 = vunpack.c.h.b16 %v4395
        %v4553 = vunpack.c.l.b16 %v4396
        %v4554 = vunpack.c.h.b16 %v4396
        %v4555 = vunpack.c.l.b16 %v4397
        %v4556 = vunpack.c.h.b16 %v4397
        %v4557 = vunpack.c.l.b16 %v4398
        %v4558 = vunpack.c.h.b16 %v4398
        %v4559 = vunpack.c.l.b16 %v4399
        %v4560 = vunpack.c.h.b16 %v4399
        %v4561 = vunpack.c.l.b16 %v4400
        %v4562 = vunpack.c.h.b16 %v4400
        %v4563 = vunpack.c.l.b16 %v4401
        %v4564 = vunpack.c.h.b16 %v4401
        %v4565 = vunpack.c.l.b16 %v4402
        %v4566 = vunpack.c.h.b16 %v4402
        %v4567 = vunpack.c.l.b16 %v4403
        %v4568 = vunpack.c.h.b16 %v4403
        %v4569 = vunpack.c.l.b16 %v4404
        %v4570 = vunpack.c.h.b16 %v4404
        %v4571 = vunpack.c.l.b16 %v4405
        %v4572 = vunpack.c.h.b16 %v4405
        %v4573 = vunpack.c.l.b16 %v4406
        %v4574 = vunpack.c.h.b16 %v4406
        %v4575 = vunpack.c.l.b16 %v4407
        %v4576 = vunpack.c.h.b16 %v4407
        %v4577 = vunpack.c.l.b16 %v4408
        %v4578 = vunpack.c.h.b16 %v4408
        %v4579 = vunpack.c.l.b16 %v4409
        %v4580 = vunpack.c.h.b16 %v4409
        %v4581 = vunpack.c.l.b16 %v4410
        %v4582 = vunpack.c.h.b16 %v4410
        %v4583 = vunpack.c.l.b16 %v4411
        %v4584 = vunpack.c.h.b16 %v4411
        %v4585 = vunpack.c.l.b16 %v4412
        %v4586 = vunpack.c.h.b16 %v4412
        %v4587 = vunpack.c.l.b16 %v4413
        %v4588 = vunpack.c.h.b16 %v4413
        %v4589 = vunpack.c.l.b16 %v4414
        %v4590 = vunpack.c.h.b16 %v4414
        %v4591 = vunpack.c.l.b16 %v4415
        %v4592 = vunpack.c.h.b16 %v4415
        %v4593 = vunpack.c.l.b16 %v4416
        %v4594 = vunpack.c.h.b16 %v4416
        %v4595 = vunpack.c.l.b16 %v4417
        %v4596 = vunpack.c.h.b16 %v4417
        %v4597 = vunpack.c.l.b16 %v4418
        %v4598 = vunpack.c.h.b16 %v4418
        %v4599 = vunpack.c.l.b16 %v4419
        %v4600 = vunpack.c.h.b16 %v4419
        %v4601 = vunpack.c.l.b16 %v4420
        %v4602 = vunpack.c.h.b16 %v4420
        %v4603 = vunpack.c.l.b16 %v4421
        %v4604 = vunpack.c.h.b16 %v4421
        %v4605 = vunpack.c.l.b16 %v4422
        %v4606 = vunpack.c.h.b16 %v4422
        %v4607 = vunpack.c.l.b16 %v4423
        %v4608 = vunpack.c.h.b16 %v4423
        %v4609 = vunpack.c.l.b16 %v4424
        %v4610 = vunpack.c.h.b16 %v4424
        %v4611 = vunpack.c.l.b16 %v4425
        %v4612 = vunpack.c.h.b16 %v4425
        %v4613 = vunpack.c.l.b16 %v4426
        %v4614 = vunpack.c.h.b16 %v4426
        %v4615 = vunpack.c.l.b16 %v4427
        %v4616 = vunpack.c.h.b16 %v4427
        %v4617 = vunpack.c.l.b16 %v4428
        %v4618 = vunpack.c.h.b16 %v4428
        %v4619 = vunpack.c.l.b16 %v4429
        %v4620 = vunpack.c.h.b16 %v4429
        %v4621 = vunpack.c.l.b16 %v4430
        %v4622 = vunpack.c.h.b16 %v4430
        %v4623 = vpack.c.b16 %v4497, %v4495
        %v4624 = vpack.c.b16 %v4498, %v4496
        %v4625 = vpack.c.b16 %v4501, %v4499
        %v4626 = vpack.c.b16 %v4502, %v4500
        %v4627 = vpack.c.b16 %v4505, %v4503
        %v4628 = vpack.c.b16 %v4506, %v4504
        %v4629 = vpack.c.b16 %v4509, %v4507
        %v4630 = vpack.c.b16 %v4510, %v4508
        %v4631 = vpack.c.b16 %v4513, %v4511
        %v4632 = vpack.c.b16 %v4514, %v4512
        %v4633 = vpack.c.b16 %v4517, %v4515
        %v4634 = vpack.c.b16 %v4518, %v4516
        %v4635 = vpack.c.b16 %v4521, %v4519
        %v4636 = vpack.c.b16 %v4522, %v4520
        %v4637 = vpack.c.b16 %v4525, %v4523
        %v4638 = vpack.c.b16 %v4526, %v4524
        %v4639 = vpack.c.b16 %v4529, %v4527
        %v4640 = vpack.c.b16 %v4530, %v4528
        %v4641 = vpack.c.b16 %v4533, %v4531
        %v4642 = vpack.c.b16 %v4534, %v4532
        %v4643 = vpack.c.b16 %v4537, %v4535
        %v4644 = vpack.c.b16 %v4538, %v4536
        %v4645 = vpack.c.b16 %v4541, %v4539
        %v4646 = vpack.c.b16 %v4542, %v4540
        %v4647 = vpack.c.b16 %v4545, %v4543
        %v4648 = vpack.c.b16 %v4546, %v4544
        %v4649 = vpack.c.b16 %v4549, %v4547
        %v4650 = vpack.c.b16 %v4550, %v4548
        %v4651 = vpack.c.b16 %v4553, %v4551
        %v4652 = vpack.c.b16 %v4554, %v4552
        %v4653 = vpack.c.b16 %v4557, %v4555
        %v4654 = vpack.c.b16 %v4558, %v4556
        %v4655 = vpack.c.b16 %v4561, %v4559
        %v4656 = vpack.c.b16 %v4562, %v4560
        %v4657 = vpack.c.b16 %v4565, %v4563
        %v4658 = vpack.c.b16 %v4566, %v4564
        %v4659 = vpack.c.b16 %v4569, %v4567
        %v4660 = vpack.c.b16 %v4570, %v4568
        %v4661 = vpack.c.b16 %v4573, %v4571
        %v4662 = vpack.c.b16 %v4574, %v4572
        %v4663 = vpack.c.b16 %v4577, %v4575
        %v4664 = vpack.c.b16 %v4578, %v4576
        %v4665 = vpack.c.b16 %v4581, %v4579
        %v4666 = vpack.c.b16 %v4582, %v4580
        %v4667 = vpack.c.b16 %v4585, %v4583
        %v4668 = vpack.c.b16 %v4586, %v4584
        %v4669 = vpack.c.b16 %v4589, %v4587
        %v4670 = vpack.c.b16 %v4590, %v4588
        %v4671 = vpack.c.b16 %v4593, %v4591
        %v4672 = vpack.c.b16 %v4594, %v4592
        %v4673 = vpack.c.b16 %v4597, %v4595
        %v4674 = vpack.c.b16 %v4598, %v4596
        %v4675 = vpack.c.b16 %v4601, %v4599
        %v4676 = vpack.c.b16 %v4602, %v4600
        %v4677 = vpack.c.b16 %v4605, %v4603
        %v4678 = vpack.c.b16 %v4606, %v4604
        %v4679 = vpack.c.b16 %v4609, %v4607
        %v4680 = vpack.c.b16 %v4610, %v4608
        %v4681 = vpack.c.b16 %v4613, %v4611
        %v4682 = vpack.c.b16 %v4614, %v4612
        %v4683 = vpack.c.b16 %v4617, %v4615
        %v4684 = vpack.c.b16 %v4618, %v4616
        %v4685 = vpack.c.b16 %v4621, %v4619
        %v4686 = vpack.c.b16 %v4622, %v4620
        %4751 = vmatprep.subr.bf16.mxu0 %v4638
        %4752 = vmatpush1.bf16.msra.mxu0 %v4637
        %4753 = vmatprep.subr.bf16.mxu0 %v4636
        %4754 = vmatpush1.bf16.msra.mxu0 %v4635
        %4755 = vmatprep.subr.bf16.mxu0 %v4634
        %4756 = vmatpush1.bf16.msra.mxu0 %v4633
        %4757 = vmatprep.subr.bf16.mxu0 %v4632
        %4758 = vmatpush1.bf16.msra.mxu0 %v4631
        %4759 = vmatprep.subr.bf16.mxu0 %v4630
        %4760 = vmatpush1.bf16.msra.mxu0 %v4629
        %4761 = vmatprep.subr.bf16.mxu0 %v4628
        %4762 = vmatpush1.bf16.msra.mxu0 %v4627
        %4763 = vmatprep.subr.bf16.mxu0 %v4626
        %4764 = vmatpush1.bf16.msra.mxu0 %v4625
        %4765 = vmatprep.subr.bf16.mxu0 %v4624
        %4766 = vmatpush1.bf16.msra.mxu0 %v4623
        %4767 = vmatprep.subr.bf16.mxu0 %v4654
        %4768 = vmatpush2.bf16.msra.mxu0 %v4653
        %4769 = vmatprep.subr.bf16.mxu0 %v4652
        %4770 = vmatpush2.bf16.msra.mxu0 %v4651
        %4771 = vmatprep.subr.bf16.mxu0 %v4650
        %4772 = vmatpush2.bf16.msra.mxu0 %v4649
        %4773 = vmatprep.subr.bf16.mxu0 %v4648
        %4774 = vmatpush2.bf16.msra.mxu0 %v4647
        %4775 = vmatprep.subr.bf16.mxu0 %v4646
        %4776 = vmatpush2.bf16.msra.mxu0 %v4645
        %4777 = vmatprep.subr.bf16.mxu0 %v4644
        %4778 = vmatpush2.bf16.msra.mxu0 %v4643
        %4779 = vmatprep.subr.bf16.mxu0 %v4642
        %4780 = vmatpush2.bf16.msra.mxu0 %v4641
        %4781 = vmatprep.subr.bf16.mxu0 %v4640
        %4782 = vmatpush2.bf16.msra.mxu0 %v4639
        %4783 = vmatprep.mubr.bf16.mxu0 %v4363
        %4784 = vmatmul.mubr.bf16.gmra.mxu0 %v4362
        %v4785 = vpop.f32.mrf.mxu0
        %v4786 = vadd.f32 0.0, %v4785
        %v4787 = vpop.f32.mrf.mxu0
        %v4788 = vadd.f32 0.0, %v4787
        %v4789 = vpop.f32.mrf.mxu0
        %v4790 = vadd.f32 0.0, %v4789
        %v4791 = vpop.f32.mrf.mxu0
        %v4792 = vadd.f32 0.0, %v4791
        %4793 = vdwg.mxu0
        %4794 = vmatprep.subr.bf16.mxu0 %v4670
        %4795 = vmatpush1.bf16.msra.mxu0 %v4669
        %4796 = vmatprep.subr.bf16.mxu0 %v4668
        %4797 = vmatpush1.bf16.msra.mxu0 %v4667
        %4798 = vmatprep.subr.bf16.mxu0 %v4666
        %4799 = vmatpush1.bf16.msra.mxu0 %v4665
        %4800 = vmatprep.subr.bf16.mxu0 %v4664
        %4801 = vmatpush1.bf16.msra.mxu0 %v4663
        %4802 = vmatprep.subr.bf16.mxu0 %v4662
        %4803 = vmatpush1.bf16.msra.mxu0 %v4661
        %4804 = vmatprep.subr.bf16.mxu0 %v4660
        %4805 = vmatpush1.bf16.msra.mxu0 %v4659
        %4806 = vmatprep.subr.bf16.mxu0 %v4658
        %4807 = vmatpush1.bf16.msra.mxu0 %v4657
        %4808 = vmatprep.subr.bf16.mxu0 %v4656
        %4809 = vmatpush1.bf16.msra.mxu0 %v4655
        %4810 = vmatprep.subr.bf16.mxu0 %v4686
        %4811 = vmatpush2.bf16.msra.mxu0 %v4685
        %4812 = vmatprep.subr.bf16.mxu0 %v4684
        %4813 = vmatpush2.bf16.msra.mxu0 %v4683
        %4814 = vmatprep.subr.bf16.mxu0 %v4682
        %4815 = vmatpush2.bf16.msra.mxu0 %v4681
        %4816 = vmatprep.subr.bf16.mxu0 %v4680
        %4817 = vmatpush2.bf16.msra.mxu0 %v4679
        %4818 = vmatprep.subr.bf16.mxu0 %v4678
        %4819 = vmatpush2.bf16.msra.mxu0 %v4677
        %4820 = vmatprep.subr.bf16.mxu0 %v4676
        %4821 = vmatpush2.bf16.msra.mxu0 %v4675
        %4822 = vmatprep.subr.bf16.mxu0 %v4674
        %4823 = vmatpush2.bf16.msra.mxu0 %v4673
        %4824 = vmatprep.subr.bf16.mxu0 %v4672
        %4825 = vmatpush2.bf16.msra.mxu0 %v4671
        %4826 = vmatprep.mubr.bf16.mxu0 %v4365
        %4827 = vmatmul.mubr.bf16.gmra.mxu0 %v4364
        %v4828 = vpop.f32.mrf.mxu0
        %v4829 = vadd.f32 %v4786, %v4828
        %v4830 = vpop.f32.mrf.mxu0
        %v4831 = vadd.f32 %v4788, %v4830
        %v4832 = vpop.f32.mrf.mxu0
        %v4833 = vadd.f32 %v4790, %v4832
        %v4834 = vpop.f32.mrf.mxu0
        %v4835 = vadd.f32 %v4792, %v4834
        %4836 = vdwg.mxu0
        %v4837 = vadd.f32 %v4354, %v4829
        %v4838 = vadd.f32 %v4356, %v4831
        %v4839 = vadd.f32 %v4358, %v4833
        %v4840 = vadd.f32 %v4360, %v4835
        %v4841 = vld [vmem:[%s10] sm:$0x3]
        %v4843 = vlaneseq
        %v4844 = vshrl.u32 %v4843, 7
        %v4845 = vsub.s32 0, %v4844
        %v4846 = vrot.slane %v4841, %v4845
        %v4847 = vlaneseq
        %v4848 = vshrl.u32 %v4847, 7
        %v4849 = vsub.s32 1, %v4848
        %v4850 = vrot.slane %v4841, %v4849
        %v4853 = vadd.f32 %v4837, %v4846
        %v4854 = vadd.f32 %v4838, %v4850
        %v4855 = vadd.f32 %v4839, %v4846
        %v4856 = vadd.f32 %v4840, %v4850
        %v4857 = vmax.f32 %v4853, 0.0
        %v4858 = vmax.f32 %v4854, 0.0
        %v4859 = vmax.f32 %v4855, 0.0
        %v4860 = vmax.f32 %v4856, 0.0
        %v4861 = vld [vmem:[#allocation16] sm:$0xff]
        %v4862 = vld [vmem:[#allocation16 + $0x8] sm:$0xff]
        %v4863 = vld [vmem:[#allocation16 + $0x10] sm:$0xff]
        %v4864 = vld [vmem:[#allocation16 + $0x18] sm:$0xff]
        %v4865 = vld [vmem:[#allocation16 + $0x20] sm:$0xff]
        %v4866 = vld [vmem:[#allocation16 + $0x28] sm:$0xff]
        %v4867 = vld [vmem:[#allocation16 + $0x30] sm:$0xff]
        %v4868 = vld [vmem:[#allocation16 + $0x38] sm:$0xff]
        %v4869 = vld [vmem:[#allocation16 + $0x40] sm:$0xff]
        %v4870 = vld [vmem:[#allocation16 + $0x48] sm:$0xff]
        %v4871 = vld [vmem:[#allocation16 + $0x50] sm:$0xff]
        %v4872 = vld [vmem:[#allocation16 + $0x58] sm:$0xff]
        %v4873 = vld [vmem:[#allocation16 + $0x60] sm:$0xff]
        %v4874 = vld [vmem:[#allocation16 + $0x68] sm:$0xff]
        %v4875 = vld [vmem:[#allocation16 + $0x70] sm:$0xff]
        %v4876 = vld [vmem:[#allocation16 + $0x78] sm:$0xff]
        %v4877 = vld [vmem:[#allocation16 + $0x80] sm:$0xff]
        %v4878 = vld [vmem:[#allocation16 + $0x88] sm:$0xff]
        %v4879 = vld [vmem:[#allocation16 + $0x90] sm:$0xff]
        %v4880 = vld [vmem:[#allocation16 + $0x98] sm:$0xff]
        %v4881 = vld [vmem:[#allocation16 + $0xa0] sm:$0xff]
        %v4882 = vld [vmem:[#allocation16 + $0xa8] sm:$0xff]
        %v4883 = vld [vmem:[#allocation16 + $0xb0] sm:$0xff]
        %v4884 = vld [vmem:[#allocation16 + $0xb8] sm:$0xff]
        %v4885 = vld [vmem:[#allocation16 + $0xc0] sm:$0xff]
        %v4886 = vld [vmem:[#allocation16 + $0xc8] sm:$0xff]
        %v4887 = vld [vmem:[#allocation16 + $0xd0] sm:$0xff]
        %v4888 = vld [vmem:[#allocation16 + $0xd8] sm:$0xff]
        %v4889 = vld [vmem:[#allocation16 + $0xe0] sm:$0xff]
        %v4890 = vld [vmem:[#allocation16 + $0xe8] sm:$0xff]
        %v4891 = vld [vmem:[#allocation16 + $0xf0] sm:$0xff]
        %v4892 = vld [vmem:[#allocation16 + $0xf8] sm:$0xff]
        %s4893 = scalar_lea.vmem [#allocation16], 256
        %v4894 = vld [vmem:[%s4893] sm:$0xff]
        %v4895 = vld [vmem:[%s4893 + $0x8] sm:$0xff]
        %v4896 = vld [vmem:[%s4893 + $0x10] sm:$0xff]
        %v4897 = vld [vmem:[%s4893 + $0x18] sm:$0xff]
        %v4898 = vld [vmem:[%s4893 + $0x20] sm:$0xff]
        %v4899 = vld [vmem:[%s4893 + $0x28] sm:$0xff]
        %v4900 = vld [vmem:[%s4893 + $0x30] sm:$0xff]
        %v4901 = vld [vmem:[%s4893 + $0x38] sm:$0xff]
        %v4902 = vld [vmem:[%s4893 + $0x40] sm:$0xff]
        %v4903 = vld [vmem:[%s4893 + $0x48] sm:$0xff]
        %v4904 = vld [vmem:[%s4893 + $0x50] sm:$0xff]
        %v4905 = vld [vmem:[%s4893 + $0x58] sm:$0xff]
        %v4906 = vld [vmem:[%s4893 + $0x60] sm:$0xff]
        %v4907 = vld [vmem:[%s4893 + $0x68] sm:$0xff]
        %v4908 = vld [vmem:[%s4893 + $0x70] sm:$0xff]
        %v4909 = vld [vmem:[%s4893 + $0x78] sm:$0xff]
        %v4910 = vld [vmem:[%s4893 + $0x80] sm:$0xff]
        %v4911 = vld [vmem:[%s4893 + $0x88] sm:$0xff]
        %v4912 = vld [vmem:[%s4893 + $0x90] sm:$0xff]
        %v4913 = vld [vmem:[%s4893 + $0x98] sm:$0xff]
        %v4914 = vld [vmem:[%s4893 + $0xa0] sm:$0xff]
        %v4915 = vld [vmem:[%s4893 + $0xa8] sm:$0xff]
        %v4916 = vld [vmem:[%s4893 + $0xb0] sm:$0xff]
        %v4917 = vld [vmem:[%s4893 + $0xb8] sm:$0xff]
        %v4918 = vld [vmem:[%s4893 + $0xc0] sm:$0xff]
        %v4919 = vld [vmem:[%s4893 + $0xc8] sm:$0xff]
        %v4920 = vld [vmem:[%s4893 + $0xd0] sm:$0xff]
        %v4921 = vld [vmem:[%s4893 + $0xd8] sm:$0xff]
        %v4922 = vld [vmem:[%s4893 + $0xe0] sm:$0xff]
        %v4923 = vld [vmem:[%s4893 + $0xe8] sm:$0xff]
        %v4924 = vld [vmem:[%s4893 + $0xf0] sm:$0xff]
        %v4925 = vld [vmem:[%s4893 + $0xf8] sm:$0xff]
        %v4958 = vunpack.c.l.b16 %v4894
        %v4959 = vunpack.c.h.b16 %v4894
        %v4960 = vunpack.c.l.b16 %v4895
        %v4961 = vunpack.c.h.b16 %v4895
        %v4962 = vunpack.c.l.b16 %v4896
        %v4963 = vunpack.c.h.b16 %v4896
        %v4964 = vunpack.c.l.b16 %v4897
        %v4965 = vunpack.c.h.b16 %v4897
        %v4966 = vunpack.c.l.b16 %v4898
        %v4967 = vunpack.c.h.b16 %v4898
        %v4968 = vunpack.c.l.b16 %v4899
        %v4969 = vunpack.c.h.b16 %v4899
        %v4970 = vunpack.c.l.b16 %v4900
        %v4971 = vunpack.c.h.b16 %v4900
        %v4972 = vunpack.c.l.b16 %v4901
        %v4973 = vunpack.c.h.b16 %v4901
        %v4974 = vunpack.c.l.b16 %v4902
        %v4975 = vunpack.c.h.b16 %v4902
        %v4976 = vunpack.c.l.b16 %v4903
        %v4977 = vunpack.c.h.b16 %v4903
        %v4978 = vunpack.c.l.b16 %v4904
        %v4979 = vunpack.c.h.b16 %v4904
        %v4980 = vunpack.c.l.b16 %v4905
        %v4981 = vunpack.c.h.b16 %v4905
        %v4982 = vunpack.c.l.b16 %v4906
        %v4983 = vunpack.c.h.b16 %v4906
        %v4984 = vunpack.c.l.b16 %v4907
        %v4985 = vunpack.c.h.b16 %v4907
        %v4986 = vunpack.c.l.b16 %v4908
        %v4987 = vunpack.c.h.b16 %v4908
        %v4988 = vunpack.c.l.b16 %v4909
        %v4989 = vunpack.c.h.b16 %v4909
        %v4990 = vunpack.c.l.b16 %v4910
        %v4991 = vunpack.c.h.b16 %v4910
        %v4992 = vunpack.c.l.b16 %v4911
        %v4993 = vunpack.c.h.b16 %v4911
        %v4994 = vunpack.c.l.b16 %v4912
        %v4995 = vunpack.c.h.b16 %v4912
        %v4996 = vunpack.c.l.b16 %v4913
        %v4997 = vunpack.c.h.b16 %v4913
        %v4998 = vunpack.c.l.b16 %v4914
        %v4999 = vunpack.c.h.b16 %v4914
        %v5000 = vunpack.c.l.b16 %v4915
        %v5001 = vunpack.c.h.b16 %v4915
        %v5002 = vunpack.c.l.b16 %v4916
        %v5003 = vunpack.c.h.b16 %v4916
        %v5004 = vunpack.c.l.b16 %v4917
        %v5005 = vunpack.c.h.b16 %v4917
        %v5006 = vunpack.c.l.b16 %v4918
        %v5007 = vunpack.c.h.b16 %v4918
        %v5008 = vunpack.c.l.b16 %v4919
        %v5009 = vunpack.c.h.b16 %v4919
        %v5010 = vunpack.c.l.b16 %v4920
        %v5011 = vunpack.c.h.b16 %v4920
        %v5012 = vunpack.c.l.b16 %v4921
        %v5013 = vunpack.c.h.b16 %v4921
        %v5014 = vunpack.c.l.b16 %v4922
        %v5015 = vunpack.c.h.b16 %v4922
        %v5016 = vunpack.c.l.b16 %v4923
        %v5017 = vunpack.c.h.b16 %v4923
        %v5018 = vunpack.c.l.b16 %v4924
        %v5019 = vunpack.c.h.b16 %v4924
        %v5020 = vunpack.c.l.b16 %v4925
        %v5021 = vunpack.c.h.b16 %v4925
        %v5022 = vpack.c.b16 %v4960, %v4958
        %v5023 = vpack.c.b16 %v4961, %v4959
        %v5024 = vpack.c.b16 %v4964, %v4962
        %v5025 = vpack.c.b16 %v4965, %v4963
        %v5026 = vpack.c.b16 %v4968, %v4966
        %v5027 = vpack.c.b16 %v4969, %v4967
        %v5028 = vpack.c.b16 %v4972, %v4970
        %v5029 = vpack.c.b16 %v4973, %v4971
        %v5030 = vpack.c.b16 %v4976, %v4974
        %v5031 = vpack.c.b16 %v4977, %v4975
        %v5032 = vpack.c.b16 %v4980, %v4978
        %v5033 = vpack.c.b16 %v4981, %v4979
        %v5034 = vpack.c.b16 %v4984, %v4982
        %v5035 = vpack.c.b16 %v4985, %v4983
        %v5036 = vpack.c.b16 %v4988, %v4986
        %v5037 = vpack.c.b16 %v4989, %v4987
        %v5038 = vpack.c.b16 %v4992, %v4990
        %v5039 = vpack.c.b16 %v4993, %v4991
        %v5040 = vpack.c.b16 %v4996, %v4994
        %v5041 = vpack.c.b16 %v4997, %v4995
        %v5042 = vpack.c.b16 %v5000, %v4998
        %v5043 = vpack.c.b16 %v5001, %v4999
        %v5044 = vpack.c.b16 %v5004, %v5002
        %v5045 = vpack.c.b16 %v5005, %v5003
        %v5046 = vpack.c.b16 %v5008, %v5006
        %v5047 = vpack.c.b16 %v5009, %v5007
        %v5048 = vpack.c.b16 %v5012, %v5010
        %v5049 = vpack.c.b16 %v5013, %v5011
        %v5050 = vpack.c.b16 %v5016, %v5014
        %v5051 = vpack.c.b16 %v5017, %v5015
        %v5052 = vpack.c.b16 %v5020, %v5018
        %v5053 = vpack.c.b16 %v5021, %v5019
        %5086 = vmatprep.subr.bf16.mxu0 %v5037
        %5087 = vmatpush1.bf16.msra.mxu0 %v5036
        %5088 = vmatprep.subr.bf16.mxu0 %v5035
        %5089 = vmatpush1.bf16.msra.mxu0 %v5034
        %5090 = vmatprep.subr.bf16.mxu0 %v5033
        %5091 = vmatpush1.bf16.msra.mxu0 %v5032
        %5092 = vmatprep.subr.bf16.mxu0 %v5031
        %5093 = vmatpush1.bf16.msra.mxu0 %v5030
        %5094 = vmatprep.subr.bf16.mxu0 %v5029
        %5095 = vmatpush1.bf16.msra.mxu0 %v5028
        %5096 = vmatprep.subr.bf16.mxu0 %v5027
        %5097 = vmatpush1.bf16.msra.mxu0 %v5026
        %5098 = vmatprep.subr.bf16.mxu0 %v5025
        %5099 = vmatpush1.bf16.msra.mxu0 %v5024
        %5100 = vmatprep.subr.bf16.mxu0 %v5023
        %5101 = vmatpush1.bf16.msra.mxu0 %v5022
        %5102 = vmatprep.subr.bf16.mxu0 %v5053
        %5103 = vmatpush2.bf16.msra.mxu0 %v5052
        %5104 = vmatprep.subr.bf16.mxu0 %v5051
        %5105 = vmatpush2.bf16.msra.mxu0 %v5050
        %5106 = vmatprep.subr.bf16.mxu0 %v5049
        %5107 = vmatpush2.bf16.msra.mxu0 %v5048
        %5108 = vmatprep.subr.bf16.mxu0 %v5047
        %5109 = vmatpush2.bf16.msra.mxu0 %v5046
        %5110 = vmatprep.subr.bf16.mxu0 %v5045
        %5111 = vmatpush2.bf16.msra.mxu0 %v5044
        %5112 = vmatprep.subr.bf16.mxu0 %v5043
        %5113 = vmatpush2.bf16.msra.mxu0 %v5042
        %5114 = vmatprep.subr.bf16.mxu0 %v5041
        %5115 = vmatpush2.bf16.msra.mxu0 %v5040
        %5116 = vmatprep.subr.bf16.mxu0 %v5039
        %5117 = vmatpush2.bf16.msra.mxu0 %v5038
        %5118 = vmatprep.mubr.bf16.mxu0 %v1968
        %5119 = vmatmul.mubr.bf16.gmra.mxu0 %v1967
        %v5120 = vpop.f32.mrf.mxu0
        %v5121 = vadd.f32 0.0, %v5120
        %v5122 = vpop.f32.mrf.mxu0
        %v5123 = vadd.f32 0.0, %v5122
        %v5124 = vpop.f32.mrf.mxu0
        %v5125 = vadd.f32 0.0, %v5124
        %v5126 = vpop.f32.mrf.mxu0
        %v5127 = vadd.f32 0.0, %v5126
        %5128 = vdwg.mxu0
        %v5161 = vunpack.c.l.b16 %v4861
        %v5162 = vunpack.c.h.b16 %v4861
        %v5163 = vunpack.c.l.b16 %v4862
        %v5164 = vunpack.c.h.b16 %v4862
        %v5165 = vunpack.c.l.b16 %v4863
        %v5166 = vunpack.c.h.b16 %v4863
        %v5167 = vunpack.c.l.b16 %v4864
        %v5168 = vunpack.c.h.b16 %v4864
        %v5169 = vunpack.c.l.b16 %v4865
        %v5170 = vunpack.c.h.b16 %v4865
        %v5171 = vunpack.c.l.b16 %v4866
        %v5172 = vunpack.c.h.b16 %v4866
        %v5173 = vunpack.c.l.b16 %v4867
        %v5174 = vunpack.c.h.b16 %v4867
        %v5175 = vunpack.c.l.b16 %v4868
        %v5176 = vunpack.c.h.b16 %v4868
        %v5177 = vunpack.c.l.b16 %v4869
        %v5178 = vunpack.c.h.b16 %v4869
        %v5179 = vunpack.c.l.b16 %v4870
        %v5180 = vunpack.c.h.b16 %v4870
        %v5181 = vunpack.c.l.b16 %v4871
        %v5182 = vunpack.c.h.b16 %v4871
        %v5183 = vunpack.c.l.b16 %v4872
        %v5184 = vunpack.c.h.b16 %v4872
        %v5185 = vunpack.c.l.b16 %v4873
        %v5186 = vunpack.c.h.b16 %v4873
        %v5187 = vunpack.c.l.b16 %v4874
        %v5188 = vunpack.c.h.b16 %v4874
        %v5189 = vunpack.c.l.b16 %v4875
        %v5190 = vunpack.c.h.b16 %v4875
        %v5191 = vunpack.c.l.b16 %v4876
        %v5192 = vunpack.c.h.b16 %v4876
        %v5193 = vunpack.c.l.b16 %v4877
        %v5194 = vunpack.c.h.b16 %v4877
        %v5195 = vunpack.c.l.b16 %v4878
        %v5196 = vunpack.c.h.b16 %v4878
        %v5197 = vunpack.c.l.b16 %v4879
        %v5198 = vunpack.c.h.b16 %v4879
        %v5199 = vunpack.c.l.b16 %v4880
        %v5200 = vunpack.c.h.b16 %v4880
        %v5201 = vunpack.c.l.b16 %v4881
        %v5202 = vunpack.c.h.b16 %v4881
        %v5203 = vunpack.c.l.b16 %v4882
        %v5204 = vunpack.c.h.b16 %v4882
        %v5205 = vunpack.c.l.b16 %v4883
        %v5206 = vunpack.c.h.b16 %v4883
        %v5207 = vunpack.c.l.b16 %v4884
        %v5208 = vunpack.c.h.b16 %v4884
        %v5209 = vunpack.c.l.b16 %v4885
        %v5210 = vunpack.c.h.b16 %v4885
        %v5211 = vunpack.c.l.b16 %v4886
        %v5212 = vunpack.c.h.b16 %v4886
        %v5213 = vunpack.c.l.b16 %v4887
        %v5214 = vunpack.c.h.b16 %v4887
        %v5215 = vunpack.c.l.b16 %v4888
        %v5216 = vunpack.c.h.b16 %v4888
        %v5217 = vunpack.c.l.b16 %v4889
        %v5218 = vunpack.c.h.b16 %v4889
        %v5219 = vunpack.c.l.b16 %v4890
        %v5220 = vunpack.c.h.b16 %v4890
        %v5221 = vunpack.c.l.b16 %v4891
        %v5222 = vunpack.c.h.b16 %v4891
        %v5223 = vunpack.c.l.b16 %v4892
        %v5224 = vunpack.c.h.b16 %v4892
        %v5225 = vpack.c.b16 %v5163, %v5161
        %v5226 = vpack.c.b16 %v5164, %v5162
        %v5227 = vpack.c.b16 %v5167, %v5165
        %v5228 = vpack.c.b16 %v5168, %v5166
        %v5229 = vpack.c.b16 %v5171, %v5169
        %v5230 = vpack.c.b16 %v5172, %v5170
        %v5231 = vpack.c.b16 %v5175, %v5173
        %v5232 = vpack.c.b16 %v5176, %v5174
        %v5233 = vpack.c.b16 %v5179, %v5177
        %v5234 = vpack.c.b16 %v5180, %v5178
        %v5235 = vpack.c.b16 %v5183, %v5181
        %v5236 = vpack.c.b16 %v5184, %v5182
        %v5237 = vpack.c.b16 %v5187, %v5185
        %v5238 = vpack.c.b16 %v5188, %v5186
        %v5239 = vpack.c.b16 %v5191, %v5189
        %v5240 = vpack.c.b16 %v5192, %v5190
        %v5241 = vpack.c.b16 %v5195, %v5193
        %v5242 = vpack.c.b16 %v5196, %v5194
        %v5243 = vpack.c.b16 %v5199, %v5197
        %v5244 = vpack.c.b16 %v5200, %v5198
        %v5245 = vpack.c.b16 %v5203, %v5201
        %v5246 = vpack.c.b16 %v5204, %v5202
        %v5247 = vpack.c.b16 %v5207, %v5205
        %v5248 = vpack.c.b16 %v5208, %v5206
        %v5249 = vpack.c.b16 %v5211, %v5209
        %v5250 = vpack.c.b16 %v5212, %v5210
        %v5251 = vpack.c.b16 %v5215, %v5213
        %v5252 = vpack.c.b16 %v5216, %v5214
        %v5253 = vpack.c.b16 %v5219, %v5217
        %v5254 = vpack.c.b16 %v5220, %v5218
        %v5255 = vpack.c.b16 %v5223, %v5221
        %v5256 = vpack.c.b16 %v5224, %v5222
        %5289 = vmatprep.subr.bf16.mxu0 %v5240
        %5290 = vmatpush1.bf16.msra.mxu0 %v5239
        %5291 = vmatprep.subr.bf16.mxu0 %v5238
        %5292 = vmatpush1.bf16.msra.mxu0 %v5237
        %5293 = vmatprep.subr.bf16.mxu0 %v5236
        %5294 = vmatpush1.bf16.msra.mxu0 %v5235
        %5295 = vmatprep.subr.bf16.mxu0 %v5234
        %5296 = vmatpush1.bf16.msra.mxu0 %v5233
        %5297 = vmatprep.subr.bf16.mxu0 %v5232
        %5298 = vmatpush1.bf16.msra.mxu0 %v5231
        %5299 = vmatprep.subr.bf16.mxu0 %v5230
        %5300 = vmatpush1.bf16.msra.mxu0 %v5229
        %5301 = vmatprep.subr.bf16.mxu0 %v5228
        %5302 = vmatpush1.bf16.msra.mxu0 %v5227
        %5303 = vmatprep.subr.bf16.mxu0 %v5226
        %5304 = vmatpush1.bf16.msra.mxu0 %v5225
        %5305 = vmatprep.subr.bf16.mxu0 %v5256
        %5306 = vmatpush2.bf16.msra.mxu0 %v5255
        %5307 = vmatprep.subr.bf16.mxu0 %v5254
        %5308 = vmatpush2.bf16.msra.mxu0 %v5253
        %5309 = vmatprep.subr.bf16.mxu0 %v5252
        %5310 = vmatpush2.bf16.msra.mxu0 %v5251
        %5311 = vmatprep.subr.bf16.mxu0 %v5250
        %5312 = vmatpush2.bf16.msra.mxu0 %v5249
        %5313 = vmatprep.subr.bf16.mxu0 %v5248
        %5314 = vmatpush2.bf16.msra.mxu0 %v5247
        %5315 = vmatprep.subr.bf16.mxu0 %v5246
        %5316 = vmatpush2.bf16.msra.mxu0 %v5245
        %5317 = vmatprep.subr.bf16.mxu0 %v5244
        %5318 = vmatpush2.bf16.msra.mxu0 %v5243
        %5319 = vmatprep.subr.bf16.mxu0 %v5242
        %5320 = vmatpush2.bf16.msra.mxu0 %v5241
        %5321 = vmatprep.mubr.bf16.mxu0 %v1902
        %5322 = vmatmul.mubr.bf16.gmra.mxu0 %v1901
        %v5323 = vpop.f32.mrf.mxu0
        %v5324 = vadd.f32 %v5121, %v5323
        %v5325 = vpop.f32.mrf.mxu0
        %v5326 = vadd.f32 %v5123, %v5325
        %v5327 = vpop.f32.mrf.mxu0
        %v5328 = vadd.f32 %v5125, %v5327
        %v5329 = vpop.f32.mrf.mxu0
        %v5330 = vadd.f32 %v5127, %v5329
        %5331 = vdwg.mxu0
        %s5332 = scalar_lea.vmem [#allocation16], 512
        %v5333 = vld [vmem:[%s5332] sm:$0xff]
        %v5334 = vld [vmem:[%s5332 + $0x8] sm:$0xff]
        %v5335 = vld [vmem:[%s5332 + $0x10] sm:$0xff]
        %v5336 = vld [vmem:[%s5332 + $0x18] sm:$0xff]
        %v5337 = vld [vmem:[%s5332 + $0x20] sm:$0xff]
        %v5338 = vld [vmem:[%s5332 + $0x28] sm:$0xff]
        %v5339 = vld [vmem:[%s5332 + $0x30] sm:$0xff]
        %v5340 = vld [vmem:[%s5332 + $0x38] sm:$0xff]
        %v5341 = vld [vmem:[%s5332 + $0x40] sm:$0xff]
        %v5342 = vld [vmem:[%s5332 + $0x48] sm:$0xff]
        %v5343 = vld [vmem:[%s5332 + $0x50] sm:$0xff]
        %v5344 = vld [vmem:[%s5332 + $0x58] sm:$0xff]
        %v5345 = vld [vmem:[%s5332 + $0x60] sm:$0xff]
        %v5346 = vld [vmem:[%s5332 + $0x68] sm:$0xff]
        %v5347 = vld [vmem:[%s5332 + $0x70] sm:$0xff]
        %v5348 = vld [vmem:[%s5332 + $0x78] sm:$0xff]
        %v5349 = vld [vmem:[%s5332 + $0x80] sm:$0xff]
        %v5350 = vld [vmem:[%s5332 + $0x88] sm:$0xff]
        %v5351 = vld [vmem:[%s5332 + $0x90] sm:$0xff]
        %v5352 = vld [vmem:[%s5332 + $0x98] sm:$0xff]
        %v5353 = vld [vmem:[%s5332 + $0xa0] sm:$0xff]
        %v5354 = vld [vmem:[%s5332 + $0xa8] sm:$0xff]
        %v5355 = vld [vmem:[%s5332 + $0xb0] sm:$0xff]
        %v5356 = vld [vmem:[%s5332 + $0xb8] sm:$0xff]
        %v5357 = vld [vmem:[%s5332 + $0xc0] sm:$0xff]
        %v5358 = vld [vmem:[%s5332 + $0xc8] sm:$0xff]
        %v5359 = vld [vmem:[%s5332 + $0xd0] sm:$0xff]
        %v5360 = vld [vmem:[%s5332 + $0xd8] sm:$0xff]
        %v5361 = vld [vmem:[%s5332 + $0xe0] sm:$0xff]
        %v5362 = vld [vmem:[%s5332 + $0xe8] sm:$0xff]
        %v5363 = vld [vmem:[%s5332 + $0xf0] sm:$0xff]
        %v5364 = vld [vmem:[%s5332 + $0xf8] sm:$0xff]
        %v5397 = vunpack.c.l.b16 %v5333
        %v5398 = vunpack.c.h.b16 %v5333
        %v5399 = vunpack.c.l.b16 %v5334
        %v5400 = vunpack.c.h.b16 %v5334
        %v5401 = vunpack.c.l.b16 %v5335
        %v5402 = vunpack.c.h.b16 %v5335
        %v5403 = vunpack.c.l.b16 %v5336
        %v5404 = vunpack.c.h.b16 %v5336
        %v5405 = vunpack.c.l.b16 %v5337
        %v5406 = vunpack.c.h.b16 %v5337
        %v5407 = vunpack.c.l.b16 %v5338
        %v5408 = vunpack.c.h.b16 %v5338
        %v5409 = vunpack.c.l.b16 %v5339
        %v5410 = vunpack.c.h.b16 %v5339
        %v5411 = vunpack.c.l.b16 %v5340
        %v5412 = vunpack.c.h.b16 %v5340
        %v5413 = vunpack.c.l.b16 %v5341
        %v5414 = vunpack.c.h.b16 %v5341
        %v5415 = vunpack.c.l.b16 %v5342
        %v5416 = vunpack.c.h.b16 %v5342
        %v5417 = vunpack.c.l.b16 %v5343
        %v5418 = vunpack.c.h.b16 %v5343
        %v5419 = vunpack.c.l.b16 %v5344
        %v5420 = vunpack.c.h.b16 %v5344
        %v5421 = vunpack.c.l.b16 %v5345
        %v5422 = vunpack.c.h.b16 %v5345
        %v5423 = vunpack.c.l.b16 %v5346
        %v5424 = vunpack.c.h.b16 %v5346
        %v5425 = vunpack.c.l.b16 %v5347
        %v5426 = vunpack.c.h.b16 %v5347
        %v5427 = vunpack.c.l.b16 %v5348
        %v5428 = vunpack.c.h.b16 %v5348
        %v5429 = vunpack.c.l.b16 %v5349
        %v5430 = vunpack.c.h.b16 %v5349
        %v5431 = vunpack.c.l.b16 %v5350
        %v5432 = vunpack.c.h.b16 %v5350
        %v5433 = vunpack.c.l.b16 %v5351
        %v5434 = vunpack.c.h.b16 %v5351
        %v5435 = vunpack.c.l.b16 %v5352
        %v5436 = vunpack.c.h.b16 %v5352
        %v5437 = vunpack.c.l.b16 %v5353
        %v5438 = vunpack.c.h.b16 %v5353
        %v5439 = vunpack.c.l.b16 %v5354
        %v5440 = vunpack.c.h.b16 %v5354
        %v5441 = vunpack.c.l.b16 %v5355
        %v5442 = vunpack.c.h.b16 %v5355
        %v5443 = vunpack.c.l.b16 %v5356
        %v5444 = vunpack.c.h.b16 %v5356
        %v5445 = vunpack.c.l.b16 %v5357
        %v5446 = vunpack.c.h.b16 %v5357
        %v5447 = vunpack.c.l.b16 %v5358
        %v5448 = vunpack.c.h.b16 %v5358
        %v5449 = vunpack.c.l.b16 %v5359
        %v5450 = vunpack.c.h.b16 %v5359
        %v5451 = vunpack.c.l.b16 %v5360
        %v5452 = vunpack.c.h.b16 %v5360
        %v5453 = vunpack.c.l.b16 %v5361
        %v5454 = vunpack.c.h.b16 %v5361
        %v5455 = vunpack.c.l.b16 %v5362
        %v5456 = vunpack.c.h.b16 %v5362
        %v5457 = vunpack.c.l.b16 %v5363
        %v5458 = vunpack.c.h.b16 %v5363
        %v5459 = vunpack.c.l.b16 %v5364
        %v5460 = vunpack.c.h.b16 %v5364
        %v5461 = vpack.c.b16 %v5399, %v5397
        %v5462 = vpack.c.b16 %v5400, %v5398
        %v5463 = vpack.c.b16 %v5403, %v5401
        %v5464 = vpack.c.b16 %v5404, %v5402
        %v5465 = vpack.c.b16 %v5407, %v5405
        %v5466 = vpack.c.b16 %v5408, %v5406
        %v5467 = vpack.c.b16 %v5411, %v5409
        %v5468 = vpack.c.b16 %v5412, %v5410
        %v5469 = vpack.c.b16 %v5415, %v5413
        %v5470 = vpack.c.b16 %v5416, %v5414
        %v5471 = vpack.c.b16 %v5419, %v5417
        %v5472 = vpack.c.b16 %v5420, %v5418
        %v5473 = vpack.c.b16 %v5423, %v5421
        %v5474 = vpack.c.b16 %v5424, %v5422
        %v5475 = vpack.c.b16 %v5427, %v5425
        %v5476 = vpack.c.b16 %v5428, %v5426
        %v5477 = vpack.c.b16 %v5431, %v5429
        %v5478 = vpack.c.b16 %v5432, %v5430
        %v5479 = vpack.c.b16 %v5435, %v5433
        %v5480 = vpack.c.b16 %v5436, %v5434
        %v5481 = vpack.c.b16 %v5439, %v5437
        %v5482 = vpack.c.b16 %v5440, %v5438
        %v5483 = vpack.c.b16 %v5443, %v5441
        %v5484 = vpack.c.b16 %v5444, %v5442
        %v5485 = vpack.c.b16 %v5447, %v5445
        %v5486 = vpack.c.b16 %v5448, %v5446
        %v5487 = vpack.c.b16 %v5451, %v5449
        %v5488 = vpack.c.b16 %v5452, %v5450
        %v5489 = vpack.c.b16 %v5455, %v5453
        %v5490 = vpack.c.b16 %v5456, %v5454
        %v5491 = vpack.c.b16 %v5459, %v5457
        %v5492 = vpack.c.b16 %v5460, %v5458
        %5525 = vmatprep.subr.bf16.mxu0 %v5476
        %5526 = vmatpush1.bf16.msra.mxu0 %v5475
        %5527 = vmatprep.subr.bf16.mxu0 %v5474
        %5528 = vmatpush1.bf16.msra.mxu0 %v5473
        %5529 = vmatprep.subr.bf16.mxu0 %v5472
        %5530 = vmatpush1.bf16.msra.mxu0 %v5471
        %5531 = vmatprep.subr.bf16.mxu0 %v5470
        %5532 = vmatpush1.bf16.msra.mxu0 %v5469
        %5533 = vmatprep.subr.bf16.mxu0 %v5468
        %5534 = vmatpush1.bf16.msra.mxu0 %v5467
        %5535 = vmatprep.subr.bf16.mxu0 %v5466
        %5536 = vmatpush1.bf16.msra.mxu0 %v5465
        %5537 = vmatprep.subr.bf16.mxu0 %v5464
        %5538 = vmatpush1.bf16.msra.mxu0 %v5463
        %5539 = vmatprep.subr.bf16.mxu0 %v5462
        %5540 = vmatpush1.bf16.msra.mxu0 %v5461
        %5541 = vmatprep.subr.bf16.mxu0 %v5492
        %5542 = vmatpush2.bf16.msra.mxu0 %v5491
        %5543 = vmatprep.subr.bf16.mxu0 %v5490
        %5544 = vmatpush2.bf16.msra.mxu0 %v5489
        %5545 = vmatprep.subr.bf16.mxu0 %v5488
        %5546 = vmatpush2.bf16.msra.mxu0 %v5487
        %5547 = vmatprep.subr.bf16.mxu0 %v5486
        %5548 = vmatpush2.bf16.msra.mxu0 %v5485
        %5549 = vmatprep.subr.bf16.mxu0 %v5484
        %5550 = vmatpush2.bf16.msra.mxu0 %v5483
        %5551 = vmatprep.subr.bf16.mxu0 %v5482
        %5552 = vmatpush2.bf16.msra.mxu0 %v5481
        %5553 = vmatprep.subr.bf16.mxu0 %v5480
        %5554 = vmatpush2.bf16.msra.mxu0 %v5479
        %5555 = vmatprep.subr.bf16.mxu0 %v5478
        %5556 = vmatpush2.bf16.msra.mxu0 %v5477
        %5557 = vmatprep.mubr.bf16.mxu0 %v2847
        %5558 = vmatmul.mubr.bf16.gmra.mxu0 %v2846
        %v5559 = vpop.f32.mrf.mxu0
        %v5560 = vadd.f32 0.0, %v5559
        %v5561 = vpop.f32.mrf.mxu0
        %v5562 = vadd.f32 0.0, %v5561
        %v5563 = vpop.f32.mrf.mxu0
        %v5564 = vadd.f32 0.0, %v5563
        %v5565 = vpop.f32.mrf.mxu0
        %v5566 = vadd.f32 0.0, %v5565
        %5567 = vdwg.mxu0
        %v5568 = vadd.f32 %v5324, %v5560
        %v5569 = vadd.f32 %v5326, %v5562
        %v5570 = vadd.f32 %v5328, %v5564
        %v5571 = vadd.f32 %v5330, %v5566
        %v5572 = vrot.slane %v4857, 7
        %v5573 = vrot.slane %v4858, 7
        %v5574 = vrot.slane %v4859, 7
        %v5575 = vrot.slane %v4860, 7
        %v5576 = vsel %vm976, %v5572, %v5574
        %v5577 = vsel %vm976, %v5573, %v5575
        %v5578 = vsel %vm976, %v5574, %v5572
        %v5579 = vsel %vm976, %v5575, %v5573
        %v5580 = vsel %vm981, %v5578, 0.0
        %v5581 = vsel %vm981, %v5579, 0.0
        %v5582 = vsel %vm982, %v5576, 0.0
        %v5583 = vsel %vm982, %v5577, 0.0
        %v5584 = vrot.slane %v4857, 1
        %v5585 = vrot.slane %v4858, 1
        %v5586 = vrot.slane %v4859, 1
        %v5587 = vrot.slane %v4860, 1
        %v5588 = vsel %vm987, %v5584, %v5586
        %v5589 = vsel %vm987, %v5585, %v5587
        %v5590 = vsel %vm987, %v5586, %v5584
        %v5591 = vsel %vm987, %v5587, %v5585
        %v5592 = vsel %vm992, %v5588, 0.0
        %v5593 = vsel %vm992, %v5589, 0.0
        %v5594 = vsel %vm993, %v5590, 0.0
        %v5595 = vsel %vm993, %v5591, 0.0
        %v5596 = vpack.c.bf16 %v5582, %v5580
        %v5597 = vpack.c.bf16 %v5583, %v5581
        %v5598 = vld [vmem:[#allocation18] sm:$0xff]
        %v5599 = vld [vmem:[#allocation18 + $0x8] sm:$0xff]
        %v5600 = vld [vmem:[#allocation18 + $0x10] sm:$0xff]
        %v5601 = vld [vmem:[#allocation18 + $0x18] sm:$0xff]
        %v5602 = vld [vmem:[#allocation18 + $0x20] sm:$0xff]
        %v5603 = vld [vmem:[#allocation18 + $0x28] sm:$0xff]
        %v5604 = vld [vmem:[#allocation18 + $0x30] sm:$0xff]
        %v5605 = vld [vmem:[#allocation18 + $0x38] sm:$0xff]
        %v5606 = vld [vmem:[#allocation18 + $0x40] sm:$0xff]
        %v5607 = vld [vmem:[#allocation18 + $0x48] sm:$0xff]
        %v5608 = vld [vmem:[#allocation18 + $0x50] sm:$0xff]
        %v5609 = vld [vmem:[#allocation18 + $0x58] sm:$0xff]
        %v5610 = vld [vmem:[#allocation18 + $0x60] sm:$0xff]
        %v5611 = vld [vmem:[#allocation18 + $0x68] sm:$0xff]
        %v5612 = vld [vmem:[#allocation18 + $0x70] sm:$0xff]
        %v5613 = vld [vmem:[#allocation18 + $0x78] sm:$0xff]
        %v5614 = vld [vmem:[#allocation18 + $0x80] sm:$0xff]
        %v5615 = vld [vmem:[#allocation18 + $0x88] sm:$0xff]
        %v5616 = vld [vmem:[#allocation18 + $0x90] sm:$0xff]
        %v5617 = vld [vmem:[#allocation18 + $0x98] sm:$0xff]
        %v5618 = vld [vmem:[#allocation18 + $0xa0] sm:$0xff]
        %v5619 = vld [vmem:[#allocation18 + $0xa8] sm:$0xff]
        %v5620 = vld [vmem:[#allocation18 + $0xb0] sm:$0xff]
        %v5621 = vld [vmem:[#allocation18 + $0xb8] sm:$0xff]
        %v5622 = vld [vmem:[#allocation18 + $0xc0] sm:$0xff]
        %v5623 = vld [vmem:[#allocation18 + $0xc8] sm:$0xff]
        %v5624 = vld [vmem:[#allocation18 + $0xd0] sm:$0xff]
        %v5625 = vld [vmem:[#allocation18 + $0xd8] sm:$0xff]
        %v5626 = vld [vmem:[#allocation18 + $0xe0] sm:$0xff]
        %v5627 = vld [vmem:[#allocation18 + $0xe8] sm:$0xff]
        %v5628 = vld [vmem:[#allocation18 + $0xf0] sm:$0xff]
        %v5629 = vld [vmem:[#allocation18 + $0xf8] sm:$0xff]
        %v5630 = vpack.c.bf16 %v4859, %v4857
        %v5631 = vpack.c.bf16 %v4860, %v4858
        %s5632 = scalar_lea.vmem [#allocation18], 256
        %v5633 = vld [vmem:[%s5632] sm:$0xff]
        %v5634 = vld [vmem:[%s5632 + $0x8] sm:$0xff]
        %v5635 = vld [vmem:[%s5632 + $0x10] sm:$0xff]
        %v5636 = vld [vmem:[%s5632 + $0x18] sm:$0xff]
        %v5637 = vld [vmem:[%s5632 + $0x20] sm:$0xff]
        %v5638 = vld [vmem:[%s5632 + $0x28] sm:$0xff]
        %v5639 = vld [vmem:[%s5632 + $0x30] sm:$0xff]
        %v5640 = vld [vmem:[%s5632 + $0x38] sm:$0xff]
        %v5641 = vld [vmem:[%s5632 + $0x40] sm:$0xff]
        %v5642 = vld [vmem:[%s5632 + $0x48] sm:$0xff]
        %v5643 = vld [vmem:[%s5632 + $0x50] sm:$0xff]
        %v5644 = vld [vmem:[%s5632 + $0x58] sm:$0xff]
        %v5645 = vld [vmem:[%s5632 + $0x60] sm:$0xff]
        %v5646 = vld [vmem:[%s5632 + $0x68] sm:$0xff]
        %v5647 = vld [vmem:[%s5632 + $0x70] sm:$0xff]
        %v5648 = vld [vmem:[%s5632 + $0x78] sm:$0xff]
        %v5649 = vld [vmem:[%s5632 + $0x80] sm:$0xff]
        %v5650 = vld [vmem:[%s5632 + $0x88] sm:$0xff]
        %v5651 = vld [vmem:[%s5632 + $0x90] sm:$0xff]
        %v5652 = vld [vmem:[%s5632 + $0x98] sm:$0xff]
        %v5653 = vld [vmem:[%s5632 + $0xa0] sm:$0xff]
        %v5654 = vld [vmem:[%s5632 + $0xa8] sm:$0xff]
        %v5655 = vld [vmem:[%s5632 + $0xb0] sm:$0xff]
        %v5656 = vld [vmem:[%s5632 + $0xb8] sm:$0xff]
        %v5657 = vld [vmem:[%s5632 + $0xc0] sm:$0xff]
        %v5658 = vld [vmem:[%s5632 + $0xc8] sm:$0xff]
        %v5659 = vld [vmem:[%s5632 + $0xd0] sm:$0xff]
        %v5660 = vld [vmem:[%s5632 + $0xd8] sm:$0xff]
        %v5661 = vld [vmem:[%s5632 + $0xe0] sm:$0xff]
        %v5662 = vld [vmem:[%s5632 + $0xe8] sm:$0xff]
        %v5663 = vld [vmem:[%s5632 + $0xf0] sm:$0xff]
        %v5664 = vld [vmem:[%s5632 + $0xf8] sm:$0xff]
        %v5697 = vunpack.c.l.b16 %v5633
        %v5698 = vunpack.c.h.b16 %v5633
        %v5699 = vunpack.c.l.b16 %v5634
        %v5700 = vunpack.c.h.b16 %v5634
        %v5701 = vunpack.c.l.b16 %v5635
        %v5702 = vunpack.c.h.b16 %v5635
        %v5703 = vunpack.c.l.b16 %v5636
        %v5704 = vunpack.c.h.b16 %v5636
        %v5705 = vunpack.c.l.b16 %v5637
        %v5706 = vunpack.c.h.b16 %v5637
        %v5707 = vunpack.c.l.b16 %v5638
        %v5708 = vunpack.c.h.b16 %v5638
        %v5709 = vunpack.c.l.b16 %v5639
        %v5710 = vunpack.c.h.b16 %v5639
        %v5711 = vunpack.c.l.b16 %v5640
        %v5712 = vunpack.c.h.b16 %v5640
        %v5713 = vunpack.c.l.b16 %v5641
        %v5714 = vunpack.c.h.b16 %v5641
        %v5715 = vunpack.c.l.b16 %v5642
        %v5716 = vunpack.c.h.b16 %v5642
        %v5717 = vunpack.c.l.b16 %v5643
        %v5718 = vunpack.c.h.b16 %v5643
        %v5719 = vunpack.c.l.b16 %v5644
        %v5720 = vunpack.c.h.b16 %v5644
        %v5721 = vunpack.c.l.b16 %v5645
        %v5722 = vunpack.c.h.b16 %v5645
        %v5723 = vunpack.c.l.b16 %v5646
        %v5724 = vunpack.c.h.b16 %v5646
        %v5725 = vunpack.c.l.b16 %v5647
        %v5726 = vunpack.c.h.b16 %v5647
        %v5727 = vunpack.c.l.b16 %v5648
        %v5728 = vunpack.c.h.b16 %v5648
        %v5729 = vunpack.c.l.b16 %v5649
        %v5730 = vunpack.c.h.b16 %v5649
        %v5731 = vunpack.c.l.b16 %v5650
        %v5732 = vunpack.c.h.b16 %v5650
        %v5733 = vunpack.c.l.b16 %v5651
        %v5734 = vunpack.c.h.b16 %v5651
        %v5735 = vunpack.c.l.b16 %v5652
        %v5736 = vunpack.c.h.b16 %v5652
        %v5737 = vunpack.c.l.b16 %v5653
        %v5738 = vunpack.c.h.b16 %v5653
        %v5739 = vunpack.c.l.b16 %v5654
        %v5740 = vunpack.c.h.b16 %v5654
        %v5741 = vunpack.c.l.b16 %v5655
        %v5742 = vunpack.c.h.b16 %v5655
        %v5743 = vunpack.c.l.b16 %v5656
        %v5744 = vunpack.c.h.b16 %v5656
        %v5745 = vunpack.c.l.b16 %v5657
        %v5746 = vunpack.c.h.b16 %v5657
        %v5747 = vunpack.c.l.b16 %v5658
        %v5748 = vunpack.c.h.b16 %v5658
        %v5749 = vunpack.c.l.b16 %v5659
        %v5750 = vunpack.c.h.b16 %v5659
        %v5751 = vunpack.c.l.b16 %v5660
        %v5752 = vunpack.c.h.b16 %v5660
        %v5753 = vunpack.c.l.b16 %v5661
        %v5754 = vunpack.c.h.b16 %v5661
        %v5755 = vunpack.c.l.b16 %v5662
        %v5756 = vunpack.c.h.b16 %v5662
        %v5757 = vunpack.c.l.b16 %v5663
        %v5758 = vunpack.c.h.b16 %v5663
        %v5759 = vunpack.c.l.b16 %v5664
        %v5760 = vunpack.c.h.b16 %v5664
        %v5761 = vpack.c.b16 %v5699, %v5697
        %v5762 = vpack.c.b16 %v5700, %v5698
        %v5763 = vpack.c.b16 %v5703, %v5701
        %v5764 = vpack.c.b16 %v5704, %v5702
        %v5765 = vpack.c.b16 %v5707, %v5705
        %v5766 = vpack.c.b16 %v5708, %v5706
        %v5767 = vpack.c.b16 %v5711, %v5709
        %v5768 = vpack.c.b16 %v5712, %v5710
        %v5769 = vpack.c.b16 %v5715, %v5713
        %v5770 = vpack.c.b16 %v5716, %v5714
        %v5771 = vpack.c.b16 %v5719, %v5717
        %v5772 = vpack.c.b16 %v5720, %v5718
        %v5773 = vpack.c.b16 %v5723, %v5721
        %v5774 = vpack.c.b16 %v5724, %v5722
        %v5775 = vpack.c.b16 %v5727, %v5725
        %v5776 = vpack.c.b16 %v5728, %v5726
        %v5777 = vpack.c.b16 %v5731, %v5729
        %v5778 = vpack.c.b16 %v5732, %v5730
        %v5779 = vpack.c.b16 %v5735, %v5733
        %v5780 = vpack.c.b16 %v5736, %v5734
        %v5781 = vpack.c.b16 %v5739, %v5737
        %v5782 = vpack.c.b16 %v5740, %v5738
        %v5783 = vpack.c.b16 %v5743, %v5741
        %v5784 = vpack.c.b16 %v5744, %v5742
        %v5785 = vpack.c.b16 %v5747, %v5745
        %v5786 = vpack.c.b16 %v5748, %v5746
        %v5787 = vpack.c.b16 %v5751, %v5749
        %v5788 = vpack.c.b16 %v5752, %v5750
        %v5789 = vpack.c.b16 %v5755, %v5753
        %v5790 = vpack.c.b16 %v5756, %v5754
        %v5791 = vpack.c.b16 %v5759, %v5757
        %v5792 = vpack.c.b16 %v5760, %v5758
        %5825 = vmatprep.subr.bf16.mxu0 %v5776
        %5826 = vmatpush1.bf16.msra.mxu0 %v5775
        %5827 = vmatprep.subr.bf16.mxu0 %v5774
        %5828 = vmatpush1.bf16.msra.mxu0 %v5773
        %5829 = vmatprep.subr.bf16.mxu0 %v5772
        %5830 = vmatpush1.bf16.msra.mxu0 %v5771
        %5831 = vmatprep.subr.bf16.mxu0 %v5770
        %5832 = vmatpush1.bf16.msra.mxu0 %v5769
        %5833 = vmatprep.subr.bf16.mxu0 %v5768
        %5834 = vmatpush1.bf16.msra.mxu0 %v5767
        %5835 = vmatprep.subr.bf16.mxu0 %v5766
        %5836 = vmatpush1.bf16.msra.mxu0 %v5765
        %5837 = vmatprep.subr.bf16.mxu0 %v5764
        %5838 = vmatpush1.bf16.msra.mxu0 %v5763
        %5839 = vmatprep.subr.bf16.mxu0 %v5762
        %5840 = vmatpush1.bf16.msra.mxu0 %v5761
        %5841 = vmatprep.subr.bf16.mxu0 %v5792
        %5842 = vmatpush2.bf16.msra.mxu0 %v5791
        %5843 = vmatprep.subr.bf16.mxu0 %v5790
        %5844 = vmatpush2.bf16.msra.mxu0 %v5789
        %5845 = vmatprep.subr.bf16.mxu0 %v5788
        %5846 = vmatpush2.bf16.msra.mxu0 %v5787
        %5847 = vmatprep.subr.bf16.mxu0 %v5786
        %5848 = vmatpush2.bf16.msra.mxu0 %v5785
        %5849 = vmatprep.subr.bf16.mxu0 %v5784
        %5850 = vmatpush2.bf16.msra.mxu0 %v5783
        %5851 = vmatprep.subr.bf16.mxu0 %v5782
        %5852 = vmatpush2.bf16.msra.mxu0 %v5781
        %5853 = vmatprep.subr.bf16.mxu0 %v5780
        %5854 = vmatpush2.bf16.msra.mxu0 %v5779
        %5855 = vmatprep.subr.bf16.mxu0 %v5778
        %5856 = vmatpush2.bf16.msra.mxu0 %v5777
        %5857 = vmatprep.mubr.bf16.mxu0 %v5631
        %5858 = vmatmul.mubr.bf16.gmra.mxu0 %v5630
        %v5859 = vpop.f32.mrf.mxu0
        %v5860 = vadd.f32 0.0, %v5859
        %v5861 = vpop.f32.mrf.mxu0
        %v5862 = vadd.f32 0.0, %v5861
        %v5863 = vpop.f32.mrf.mxu0
        %v5864 = vadd.f32 0.0, %v5863
        %v5865 = vpop.f32.mrf.mxu0
        %v5866 = vadd.f32 0.0, %v5865
        %5867 = vdwg.mxu0
        %v5900 = vunpack.c.l.b16 %v5598
        %v5901 = vunpack.c.h.b16 %v5598
        %v5902 = vunpack.c.l.b16 %v5599
        %v5903 = vunpack.c.h.b16 %v5599
        %v5904 = vunpack.c.l.b16 %v5600
        %v5905 = vunpack.c.h.b16 %v5600
        %v5906 = vunpack.c.l.b16 %v5601
        %v5907 = vunpack.c.h.b16 %v5601
        %v5908 = vunpack.c.l.b16 %v5602
        %v5909 = vunpack.c.h.b16 %v5602
        %v5910 = vunpack.c.l.b16 %v5603
        %v5911 = vunpack.c.h.b16 %v5603
        %v5912 = vunpack.c.l.b16 %v5604
        %v5913 = vunpack.c.h.b16 %v5604
        %v5914 = vunpack.c.l.b16 %v5605
        %v5915 = vunpack.c.h.b16 %v5605
        %v5916 = vunpack.c.l.b16 %v5606
        %v5917 = vunpack.c.h.b16 %v5606
        %v5918 = vunpack.c.l.b16 %v5607
        %v5919 = vunpack.c.h.b16 %v5607
        %v5920 = vunpack.c.l.b16 %v5608
        %v5921 = vunpack.c.h.b16 %v5608
        %v5922 = vunpack.c.l.b16 %v5609
        %v5923 = vunpack.c.h.b16 %v5609
        %v5924 = vunpack.c.l.b16 %v5610
        %v5925 = vunpack.c.h.b16 %v5610
        %v5926 = vunpack.c.l.b16 %v5611
        %v5927 = vunpack.c.h.b16 %v5611
        %v5928 = vunpack.c.l.b16 %v5612
        %v5929 = vunpack.c.h.b16 %v5612
        %v5930 = vunpack.c.l.b16 %v5613
        %v5931 = vunpack.c.h.b16 %v5613
        %v5932 = vunpack.c.l.b16 %v5614
        %v5933 = vunpack.c.h.b16 %v5614
        %v5934 = vunpack.c.l.b16 %v5615
        %v5935 = vunpack.c.h.b16 %v5615
        %v5936 = vunpack.c.l.b16 %v5616
        %v5937 = vunpack.c.h.b16 %v5616
        %v5938 = vunpack.c.l.b16 %v5617
        %v5939 = vunpack.c.h.b16 %v5617
        %v5940 = vunpack.c.l.b16 %v5618
        %v5941 = vunpack.c.h.b16 %v5618
        %v5942 = vunpack.c.l.b16 %v5619
        %v5943 = vunpack.c.h.b16 %v5619
        %v5944 = vunpack.c.l.b16 %v5620
        %v5945 = vunpack.c.h.b16 %v5620
        %v5946 = vunpack.c.l.b16 %v5621
        %v5947 = vunpack.c.h.b16 %v5621
        %v5948 = vunpack.c.l.b16 %v5622
        %v5949 = vunpack.c.h.b16 %v5622
        %v5950 = vunpack.c.l.b16 %v5623
        %v5951 = vunpack.c.h.b16 %v5623
        %v5952 = vunpack.c.l.b16 %v5624
        %v5953 = vunpack.c.h.b16 %v5624
        %v5954 = vunpack.c.l.b16 %v5625
        %v5955 = vunpack.c.h.b16 %v5625
        %v5956 = vunpack.c.l.b16 %v5626
        %v5957 = vunpack.c.h.b16 %v5626
        %v5958 = vunpack.c.l.b16 %v5627
        %v5959 = vunpack.c.h.b16 %v5627
        %v5960 = vunpack.c.l.b16 %v5628
        %v5961 = vunpack.c.h.b16 %v5628
        %v5962 = vunpack.c.l.b16 %v5629
        %v5963 = vunpack.c.h.b16 %v5629
        %v5964 = vpack.c.b16 %v5902, %v5900
        %v5965 = vpack.c.b16 %v5903, %v5901
        %v5966 = vpack.c.b16 %v5906, %v5904
        %v5967 = vpack.c.b16 %v5907, %v5905
        %v5968 = vpack.c.b16 %v5910, %v5908
        %v5969 = vpack.c.b16 %v5911, %v5909
        %v5970 = vpack.c.b16 %v5914, %v5912
        %v5971 = vpack.c.b16 %v5915, %v5913
        %v5972 = vpack.c.b16 %v5918, %v5916
        %v5973 = vpack.c.b16 %v5919, %v5917
        %v5974 = vpack.c.b16 %v5922, %v5920
        %v5975 = vpack.c.b16 %v5923, %v5921
        %v5976 = vpack.c.b16 %v5926, %v5924
        %v5977 = vpack.c.b16 %v5927, %v5925
        %v5978 = vpack.c.b16 %v5930, %v5928
        %v5979 = vpack.c.b16 %v5931, %v5929
        %v5980 = vpack.c.b16 %v5934, %v5932
        %v5981 = vpack.c.b16 %v5935, %v5933
        %v5982 = vpack.c.b16 %v5938, %v5936
        %v5983 = vpack.c.b16 %v5939, %v5937
        %v5984 = vpack.c.b16 %v5942, %v5940
        %v5985 = vpack.c.b16 %v5943, %v5941
        %v5986 = vpack.c.b16 %v5946, %v5944
        %v5987 = vpack.c.b16 %v5947, %v5945
        %v5988 = vpack.c.b16 %v5950, %v5948
        %v5989 = vpack.c.b16 %v5951, %v5949
        %v5990 = vpack.c.b16 %v5954, %v5952
        %v5991 = vpack.c.b16 %v5955, %v5953
        %v5992 = vpack.c.b16 %v5958, %v5956
        %v5993 = vpack.c.b16 %v5959, %v5957
        %v5994 = vpack.c.b16 %v5962, %v5960
        %v5995 = vpack.c.b16 %v5963, %v5961
        %6028 = vmatprep.subr.bf16.mxu0 %v5979
        %6029 = vmatpush1.bf16.msra.mxu0 %v5978
        %6030 = vmatprep.subr.bf16.mxu0 %v5977
        %6031 = vmatpush1.bf16.msra.mxu0 %v5976
        %6032 = vmatprep.subr.bf16.mxu0 %v5975
        %6033 = vmatpush1.bf16.msra.mxu0 %v5974
        %6034 = vmatprep.subr.bf16.mxu0 %v5973
        %6035 = vmatpush1.bf16.msra.mxu0 %v5972
        %6036 = vmatprep.subr.bf16.mxu0 %v5971
        %6037 = vmatpush1.bf16.msra.mxu0 %v5970
        %6038 = vmatprep.subr.bf16.mxu0 %v5969
        %6039 = vmatpush1.bf16.msra.mxu0 %v5968
        %6040 = vmatprep.subr.bf16.mxu0 %v5967
        %6041 = vmatpush1.bf16.msra.mxu0 %v5966
        %6042 = vmatprep.subr.bf16.mxu0 %v5965
        %6043 = vmatpush1.bf16.msra.mxu0 %v5964
        %6044 = vmatprep.subr.bf16.mxu0 %v5995
        %6045 = vmatpush2.bf16.msra.mxu0 %v5994
        %6046 = vmatprep.subr.bf16.mxu0 %v5993
        %6047 = vmatpush2.bf16.msra.mxu0 %v5992
        %6048 = vmatprep.subr.bf16.mxu0 %v5991
        %6049 = vmatpush2.bf16.msra.mxu0 %v5990
        %6050 = vmatprep.subr.bf16.mxu0 %v5989
        %6051 = vmatpush2.bf16.msra.mxu0 %v5988
        %6052 = vmatprep.subr.bf16.mxu0 %v5987
        %6053 = vmatpush2.bf16.msra.mxu0 %v5986
        %6054 = vmatprep.subr.bf16.mxu0 %v5985
        %6055 = vmatpush2.bf16.msra.mxu0 %v5984
        %6056 = vmatprep.subr.bf16.mxu0 %v5983
        %6057 = vmatpush2.bf16.msra.mxu0 %v5982
        %6058 = vmatprep.subr.bf16.mxu0 %v5981
        %6059 = vmatpush2.bf16.msra.mxu0 %v5980
        %6060 = vmatprep.mubr.bf16.mxu0 %v5597
        %6061 = vmatmul.mubr.bf16.gmra.mxu0 %v5596
        %v6062 = vpop.f32.mrf.mxu0
        %v6063 = vadd.f32 %v5860, %v6062
        %v6064 = vpop.f32.mrf.mxu0
        %v6065 = vadd.f32 %v5862, %v6064
        %v6066 = vpop.f32.mrf.mxu0
        %v6067 = vadd.f32 %v5864, %v6066
        %v6068 = vpop.f32.mrf.mxu0
        %v6069 = vadd.f32 %v5866, %v6068
        %6070 = vdwg.mxu0
        %v6071 = vpack.c.bf16 %v5594, %v5592
        %v6072 = vpack.c.bf16 %v5595, %v5593
        %s6073 = scalar_lea.vmem [#allocation18], 512
        %v6074 = vld [vmem:[%s6073] sm:$0xff]
        %v6075 = vld [vmem:[%s6073 + $0x8] sm:$0xff]
        %v6076 = vld [vmem:[%s6073 + $0x10] sm:$0xff]
        %v6077 = vld [vmem:[%s6073 + $0x18] sm:$0xff]
        %v6078 = vld [vmem:[%s6073 + $0x20] sm:$0xff]
        %v6079 = vld [vmem:[%s6073 + $0x28] sm:$0xff]
        %v6080 = vld [vmem:[%s6073 + $0x30] sm:$0xff]
        %v6081 = vld [vmem:[%s6073 + $0x38] sm:$0xff]
        %v6082 = vld [vmem:[%s6073 + $0x40] sm:$0xff]
        %v6083 = vld [vmem:[%s6073 + $0x48] sm:$0xff]
        %v6084 = vld [vmem:[%s6073 + $0x50] sm:$0xff]
        %v6085 = vld [vmem:[%s6073 + $0x58] sm:$0xff]
        %v6086 = vld [vmem:[%s6073 + $0x60] sm:$0xff]
        %v6087 = vld [vmem:[%s6073 + $0x68] sm:$0xff]
        %v6088 = vld [vmem:[%s6073 + $0x70] sm:$0xff]
        %v6089 = vld [vmem:[%s6073 + $0x78] sm:$0xff]
        %v6090 = vld [vmem:[%s6073 + $0x80] sm:$0xff]
        %v6091 = vld [vmem:[%s6073 + $0x88] sm:$0xff]
        %v6092 = vld [vmem:[%s6073 + $0x90] sm:$0xff]
        %v6093 = vld [vmem:[%s6073 + $0x98] sm:$0xff]
        %v6094 = vld [vmem:[%s6073 + $0xa0] sm:$0xff]
        %v6095 = vld [vmem:[%s6073 + $0xa8] sm:$0xff]
        %v6096 = vld [vmem:[%s6073 + $0xb0] sm:$0xff]
        %v6097 = vld [vmem:[%s6073 + $0xb8] sm:$0xff]
        %v6098 = vld [vmem:[%s6073 + $0xc0] sm:$0xff]
        %v6099 = vld [vmem:[%s6073 + $0xc8] sm:$0xff]
        %v6100 = vld [vmem:[%s6073 + $0xd0] sm:$0xff]
        %v6101 = vld [vmem:[%s6073 + $0xd8] sm:$0xff]
        %v6102 = vld [vmem:[%s6073 + $0xe0] sm:$0xff]
        %v6103 = vld [vmem:[%s6073 + $0xe8] sm:$0xff]
        %v6104 = vld [vmem:[%s6073 + $0xf0] sm:$0xff]
        %v6105 = vld [vmem:[%s6073 + $0xf8] sm:$0xff]
        %v6138 = vunpack.c.l.b16 %v6074
        %v6139 = vunpack.c.h.b16 %v6074
        %v6140 = vunpack.c.l.b16 %v6075
        %v6141 = vunpack.c.h.b16 %v6075
        %v6142 = vunpack.c.l.b16 %v6076
        %v6143 = vunpack.c.h.b16 %v6076
        %v6144 = vunpack.c.l.b16 %v6077
        %v6145 = vunpack.c.h.b16 %v6077
        %v6146 = vunpack.c.l.b16 %v6078
        %v6147 = vunpack.c.h.b16 %v6078
        %v6148 = vunpack.c.l.b16 %v6079
        %v6149 = vunpack.c.h.b16 %v6079
        %v6150 = vunpack.c.l.b16 %v6080
        %v6151 = vunpack.c.h.b16 %v6080
        %v6152 = vunpack.c.l.b16 %v6081
        %v6153 = vunpack.c.h.b16 %v6081
        %v6154 = vunpack.c.l.b16 %v6082
        %v6155 = vunpack.c.h.b16 %v6082
        %v6156 = vunpack.c.l.b16 %v6083
        %v6157 = vunpack.c.h.b16 %v6083
        %v6158 = vunpack.c.l.b16 %v6084
        %v6159 = vunpack.c.h.b16 %v6084
        %v6160 = vunpack.c.l.b16 %v6085
        %v6161 = vunpack.c.h.b16 %v6085
        %v6162 = vunpack.c.l.b16 %v6086
        %v6163 = vunpack.c.h.b16 %v6086
        %v6164 = vunpack.c.l.b16 %v6087
        %v6165 = vunpack.c.h.b16 %v6087
        %v6166 = vunpack.c.l.b16 %v6088
        %v6167 = vunpack.c.h.b16 %v6088
        %v6168 = vunpack.c.l.b16 %v6089
        %v6169 = vunpack.c.h.b16 %v6089
        %v6170 = vunpack.c.l.b16 %v6090
        %v6171 = vunpack.c.h.b16 %v6090
        %v6172 = vunpack.c.l.b16 %v6091
        %v6173 = vunpack.c.h.b16 %v6091
        %v6174 = vunpack.c.l.b16 %v6092
        %v6175 = vunpack.c.h.b16 %v6092
        %v6176 = vunpack.c.l.b16 %v6093
        %v6177 = vunpack.c.h.b16 %v6093
        %v6178 = vunpack.c.l.b16 %v6094
        %v6179 = vunpack.c.h.b16 %v6094
        %v6180 = vunpack.c.l.b16 %v6095
        %v6181 = vunpack.c.h.b16 %v6095
        %v6182 = vunpack.c.l.b16 %v6096
        %v6183 = vunpack.c.h.b16 %v6096
        %v6184 = vunpack.c.l.b16 %v6097
        %v6185 = vunpack.c.h.b16 %v6097
        %v6186 = vunpack.c.l.b16 %v6098
        %v6187 = vunpack.c.h.b16 %v6098
        %v6188 = vunpack.c.l.b16 %v6099
        %v6189 = vunpack.c.h.b16 %v6099
        %v6190 = vunpack.c.l.b16 %v6100
        %v6191 = vunpack.c.h.b16 %v6100
        %v6192 = vunpack.c.l.b16 %v6101
        %v6193 = vunpack.c.h.b16 %v6101
        %v6194 = vunpack.c.l.b16 %v6102
        %v6195 = vunpack.c.h.b16 %v6102
        %v6196 = vunpack.c.l.b16 %v6103
        %v6197 = vunpack.c.h.b16 %v6103
        %v6198 = vunpack.c.l.b16 %v6104
        %v6199 = vunpack.c.h.b16 %v6104
        %v6200 = vunpack.c.l.b16 %v6105
        %v6201 = vunpack.c.h.b16 %v6105
        %v6202 = vpack.c.b16 %v6140, %v6138
        %v6203 = vpack.c.b16 %v6141, %v6139
        %v6204 = vpack.c.b16 %v6144, %v6142
        %v6205 = vpack.c.b16 %v6145, %v6143
        %v6206 = vpack.c.b16 %v6148, %v6146
        %v6207 = vpack.c.b16 %v6149, %v6147
        %v6208 = vpack.c.b16 %v6152, %v6150
        %v6209 = vpack.c.b16 %v6153, %v6151
        %v6210 = vpack.c.b16 %v6156, %v6154
        %v6211 = vpack.c.b16 %v6157, %v6155
        %v6212 = vpack.c.b16 %v6160, %v6158
        %v6213 = vpack.c.b16 %v6161, %v6159
        %v6214 = vpack.c.b16 %v6164, %v6162
        %v6215 = vpack.c.b16 %v6165, %v6163
        %v6216 = vpack.c.b16 %v6168, %v6166
        %v6217 = vpack.c.b16 %v6169, %v6167
        %v6218 = vpack.c.b16 %v6172, %v6170
        %v6219 = vpack.c.b16 %v6173, %v6171
        %v6220 = vpack.c.b16 %v6176, %v6174
        %v6221 = vpack.c.b16 %v6177, %v6175
        %v6222 = vpack.c.b16 %v6180, %v6178
        %v6223 = vpack.c.b16 %v6181, %v6179
        %v6224 = vpack.c.b16 %v6184, %v6182
        %v6225 = vpack.c.b16 %v6185, %v6183
        %v6226 = vpack.c.b16 %v6188, %v6186
        %v6227 = vpack.c.b16 %v6189, %v6187
        %v6228 = vpack.c.b16 %v6192, %v6190
        %v6229 = vpack.c.b16 %v6193, %v6191
        %v6230 = vpack.c.b16 %v6196, %v6194
        %v6231 = vpack.c.b16 %v6197, %v6195
        %v6232 = vpack.c.b16 %v6200, %v6198
        %v6233 = vpack.c.b16 %v6201, %v6199
        %6266 = vmatprep.subr.bf16.mxu0 %v6217
        %6267 = vmatpush1.bf16.msra.mxu0 %v6216
        %6268 = vmatprep.subr.bf16.mxu0 %v6215
        %6269 = vmatpush1.bf16.msra.mxu0 %v6214
        %6270 = vmatprep.subr.bf16.mxu0 %v6213
        %6271 = vmatpush1.bf16.msra.mxu0 %v6212
        %6272 = vmatprep.subr.bf16.mxu0 %v6211
        %6273 = vmatpush1.bf16.msra.mxu0 %v6210
        %6274 = vmatprep.subr.bf16.mxu0 %v6209
        %6275 = vmatpush1.bf16.msra.mxu0 %v6208
        %6276 = vmatprep.subr.bf16.mxu0 %v6207
        %6277 = vmatpush1.bf16.msra.mxu0 %v6206
        %6278 = vmatprep.subr.bf16.mxu0 %v6205
        %6279 = vmatpush1.bf16.msra.mxu0 %v6204
        %6280 = vmatprep.subr.bf16.mxu0 %v6203
        %6281 = vmatpush1.bf16.msra.mxu0 %v6202
        %6282 = vmatprep.subr.bf16.mxu0 %v6233
        %6283 = vmatpush2.bf16.msra.mxu0 %v6232
        %6284 = vmatprep.subr.bf16.mxu0 %v6231
        %6285 = vmatpush2.bf16.msra.mxu0 %v6230
        %6286 = vmatprep.subr.bf16.mxu0 %v6229
        %6287 = vmatpush2.bf16.msra.mxu0 %v6228
        %6288 = vmatprep.subr.bf16.mxu0 %v6227
        %6289 = vmatpush2.bf16.msra.mxu0 %v6226
        %6290 = vmatprep.subr.bf16.mxu0 %v6225
        %6291 = vmatpush2.bf16.msra.mxu0 %v6224
        %6292 = vmatprep.subr.bf16.mxu0 %v6223
        %6293 = vmatpush2.bf16.msra.mxu0 %v6222
        %6294 = vmatprep.subr.bf16.mxu0 %v6221
        %6295 = vmatpush2.bf16.msra.mxu0 %v6220
        %6296 = vmatprep.subr.bf16.mxu0 %v6219
        %6297 = vmatpush2.bf16.msra.mxu0 %v6218
        %6298 = vmatprep.mubr.bf16.mxu0 %v6072
        %6299 = vmatmul.mubr.bf16.gmra.mxu0 %v6071
        %v6300 = vpop.f32.mrf.mxu0
        %v6301 = vadd.f32 0.0, %v6300
        %v6302 = vpop.f32.mrf.mxu0
        %v6303 = vadd.f32 0.0, %v6302
        %v6304 = vpop.f32.mrf.mxu0
        %v6305 = vadd.f32 0.0, %v6304
        %v6306 = vpop.f32.mrf.mxu0
        %v6307 = vadd.f32 0.0, %v6306
        %6308 = vdwg.mxu0
        %v6309 = vadd.f32 %v6063, %v6301
        %v6310 = vadd.f32 %v6065, %v6303
        %v6311 = vadd.f32 %v6067, %v6305
        %v6312 = vadd.f32 %v6069, %v6307
        %v6313 = vadd.f32 %v5568, %v6309
        %v6314 = vadd.f32 %v5569, %v6310
        %v6315 = vadd.f32 %v5570, %v6311
        %v6316 = vadd.f32 %v5571, %v6312
        %v6317 = vld [vmem:[#allocation19] sm:$0x3]
        %v6319 = vlaneseq
        %v6320 = vshrl.u32 %v6319, 7
        %v6321 = vsub.s32 0, %v6320
        %v6322 = vrot.slane %v6317, %v6321
        %v6323 = vlaneseq
        %v6324 = vshrl.u32 %v6323, 7
        %v6325 = vsub.s32 1, %v6324
        %v6326 = vrot.slane %v6317, %v6325
        %v6329 = vadd.f32 %v6313, %v6322
        %v6330 = vadd.f32 %v6314, %v6326
        %v6331 = vadd.f32 %v6315, %v6322
        %v6332 = vadd.f32 %v6316, %v6326
        %v6333 = vmax.f32 %v6329, 0.0
        %v6334 = vmax.f32 %v6330, 0.0
        %v6335 = vmax.f32 %v6331, 0.0
        %v6336 = vmax.f32 %v6332, 0.0
        %v6337 = vpack.c.bf16 %v6335, %v6333
        %v6338 = vpack.c.bf16 %v6336, %v6334
        %v6339 = vld [vmem:[%s14] sm:$0xf]
        %v6340 = vld [vmem:[%s14 + $0x4] sm:$0xf]
        %v6341 = vld [vmem:[%s14 + $0x8] sm:$0xf]
        %v6342 = vld [vmem:[%s14 + $0xc] sm:$0xf]
        %v6343 = vld [vmem:[%s14 + $0x10] sm:$0xf]
        %v6344 = vld [vmem:[%s14 + $0x14] sm:$0xf]
        %v6345 = vld [vmem:[%s14 + $0x18] sm:$0xf]
        %v6346 = vld [vmem:[%s14 + $0x1c] sm:$0xf]
        %v6347 = vld [vmem:[%s14 + $0x20] sm:$0xf]
        %v6348 = vld [vmem:[%s14 + $0x24] sm:$0xf]
        %v6349 = vld [vmem:[%s14 + $0x28] sm:$0xf]
        %v6350 = vld [vmem:[%s14 + $0x2c] sm:$0xf]
        %v6351 = vld [vmem:[%s14 + $0x30] sm:$0xf]
        %v6352 = vld [vmem:[%s14 + $0x34] sm:$0xf]
        %v6353 = vld [vmem:[%s14 + $0x38] sm:$0xf]
        %v6354 = vld [vmem:[%s14 + $0x3c] sm:$0xf]
        %v6355 = vld [vmem:[%s14 + $0x40] sm:$0xf]
        %v6356 = vld [vmem:[%s14 + $0x44] sm:$0xf]
        %v6357 = vld [vmem:[%s14 + $0x48] sm:$0xf]
        %v6358 = vld [vmem:[%s14 + $0x4c] sm:$0xf]
        %v6359 = vld [vmem:[%s14 + $0x50] sm:$0xf]
        %v6360 = vld [vmem:[%s14 + $0x54] sm:$0xf]
        %v6361 = vld [vmem:[%s14 + $0x58] sm:$0xf]
        %v6362 = vld [vmem:[%s14 + $0x5c] sm:$0xf]
        %v6363 = vld [vmem:[%s14 + $0x60] sm:$0xf]
        %v6364 = vld [vmem:[%s14 + $0x64] sm:$0xf]
        %v6365 = vld [vmem:[%s14 + $0x68] sm:$0xf]
        %v6366 = vld [vmem:[%s14 + $0x6c] sm:$0xf]
        %v6367 = vld [vmem:[%s14 + $0x70] sm:$0xf]
        %v6368 = vld [vmem:[%s14 + $0x74] sm:$0xf]
        %v6369 = vld [vmem:[%s14 + $0x78] sm:$0xf]
        %v6370 = vld [vmem:[%s14 + $0x7c] sm:$0xf]
        %v6371 = vld [vmem:[%s15] sm:$0x1]
        %v6373 = vlaneseq
        %v6374 = vshrl.u32 %v6373, 7
        %v6375 = vsub.s32 0, %v6374
        %v6376 = vrot.slane %v6371, %v6375
        %v6410 = vunpack.c.l.b16 %v6339
        %v6411 = vunpack.c.l.b16 %v6340
        %v6412 = vunpack.c.l.b16 %v6341
        %v6413 = vunpack.c.l.b16 %v6342
        %v6414 = vunpack.c.l.b16 %v6343
        %v6415 = vunpack.c.l.b16 %v6344
        %v6416 = vunpack.c.l.b16 %v6345
        %v6417 = vunpack.c.l.b16 %v6346
        %v6418 = vunpack.c.l.b16 %v6347
        %v6419 = vunpack.c.l.b16 %v6348
        %v6420 = vunpack.c.l.b16 %v6349
        %v6421 = vunpack.c.l.b16 %v6350
        %v6422 = vunpack.c.l.b16 %v6351
        %v6423 = vunpack.c.l.b16 %v6352
        %v6424 = vunpack.c.l.b16 %v6353
        %v6425 = vunpack.c.l.b16 %v6354
        %v6426 = vunpack.c.l.b16 %v6355
        %v6427 = vunpack.c.l.b16 %v6356
        %v6428 = vunpack.c.l.b16 %v6357
        %v6429 = vunpack.c.l.b16 %v6358
        %v6430 = vunpack.c.l.b16 %v6359
        %v6431 = vunpack.c.l.b16 %v6360
        %v6432 = vunpack.c.l.b16 %v6361
        %v6433 = vunpack.c.l.b16 %v6362
        %v6434 = vunpack.c.l.b16 %v6363
        %v6435 = vunpack.c.l.b16 %v6364
        %v6436 = vunpack.c.l.b16 %v6365
        %v6437 = vunpack.c.l.b16 %v6366
        %v6438 = vunpack.c.l.b16 %v6367
        %v6439 = vunpack.c.l.b16 %v6368
        %v6440 = vunpack.c.l.b16 %v6369
        %v6441 = vunpack.c.l.b16 %v6370
        %v6442 = vpack.c.b16 %v6411, %v6410
        %v6443 = vpack.c.b16 %v6413, %v6412
        %v6444 = vpack.c.b16 %v6415, %v6414
        %v6445 = vpack.c.b16 %v6417, %v6416
        %v6446 = vpack.c.b16 %v6419, %v6418
        %v6447 = vpack.c.b16 %v6421, %v6420
        %v6448 = vpack.c.b16 %v6423, %v6422
        %v6449 = vpack.c.b16 %v6425, %v6424
        %v6450 = vpack.c.b16 %v6427, %v6426
        %v6451 = vpack.c.b16 %v6429, %v6428
        %v6452 = vpack.c.b16 %v6431, %v6430
        %v6453 = vpack.c.b16 %v6433, %v6432
        %v6454 = vpack.c.b16 %v6435, %v6434
        %v6455 = vpack.c.b16 %v6437, %v6436
        %v6456 = vpack.c.b16 %v6439, %v6438
        %v6457 = vpack.c.b16 %v6441, %v6440
        %6474 = vmatprep.subr.bf16.mxu0 0
        %6475 = vmatpush1.bf16.msra.mxu0 %v6449
        %6476 = vmatprep.subr.bf16.mxu0 0
        %6477 = vmatpush1.bf16.msra.mxu0 %v6448
        %6478 = vmatprep.subr.bf16.mxu0 0
        %6479 = vmatpush1.bf16.msra.mxu0 %v6447
        %6480 = vmatprep.subr.bf16.mxu0 0
        %6481 = vmatpush1.bf16.msra.mxu0 %v6446
        %6482 = vmatprep.subr.bf16.mxu0 0
        %6483 = vmatpush1.bf16.msra.mxu0 %v6445
        %6484 = vmatprep.subr.bf16.mxu0 0
        %6485 = vmatpush1.bf16.msra.mxu0 %v6444
        %6486 = vmatprep.subr.bf16.mxu0 0
        %6487 = vmatpush1.bf16.msra.mxu0 %v6443
        %6488 = vmatprep.subr.bf16.mxu0 0
        %6489 = vmatpush1.bf16.msra.mxu0 %v6442
        %6490 = vmatprep.subr.bf16.mxu0 0
        %6491 = vmatpush2.bf16.msra.mxu0 %v6457
        %6492 = vmatprep.subr.bf16.mxu0 0
        %6493 = vmatpush2.bf16.msra.mxu0 %v6456
        %6494 = vmatprep.subr.bf16.mxu0 0
        %6495 = vmatpush2.bf16.msra.mxu0 %v6455
        %6496 = vmatprep.subr.bf16.mxu0 0
        %6497 = vmatpush2.bf16.msra.mxu0 %v6454
        %6498 = vmatprep.subr.bf16.mxu0 0
        %6499 = vmatpush2.bf16.msra.mxu0 %v6453
        %6500 = vmatprep.subr.bf16.mxu0 0
        %6501 = vmatpush2.bf16.msra.mxu0 %v6452
        %6502 = vmatprep.subr.bf16.mxu0 0
        %6503 = vmatpush2.bf16.msra.mxu0 %v6451
        %6504 = vmatprep.subr.bf16.mxu0 0
        %6505 = vmatpush2.bf16.msra.mxu0 %v6450
        %6506 = vmatprep.mubr.bf16.mxu0 %v6338
        %6507 = vmatmul.mubr.bf16.gmra.mxu0 %v6337
        %v6508 = vpop.f32.mrf.mxu0
        %v6509 = vadd.f32 %v6376, %v6508
        %v6510 = vpop.f32.mrf.mxu0
        %v6511 = vpop.f32.mrf.mxu0
        %v6512 = vadd.f32 %v6376, %v6511
        %v6513 = vpop.f32.mrf.mxu0
        %6514 = vdwg.mxu0
        %v6515 = vmax.f32 %v6509, 0.0
        %v6516 = vmax.f32 %v6512, 0.0
        %v6517 = vpack.c.bf16 %v6516, %v6515
        %v6518 = vld [vmem:[%s16] sm:$0xf]
        %v6519 = vld [vmem:[%s16 + $0x4] sm:$0xf]
        %v6520 = vld [vmem:[%s16 + $0x8] sm:$0xf]
        %v6521 = vld [vmem:[%s16 + $0xc] sm:$0xf]
        %v6522 = vld [vmem:[%s16 + $0x10] sm:$0xf]
        %v6523 = vld [vmem:[%s16 + $0x14] sm:$0xf]
        %v6524 = vld [vmem:[%s16 + $0x18] sm:$0xf]
        %v6525 = vld [vmem:[%s16 + $0x1c] sm:$0xf]
        %v6526 = vld [vmem:[%s16 + $0x20] sm:$0xf]
        %v6527 = vld [vmem:[%s16 + $0x24] sm:$0xf]
        %v6528 = vld [vmem:[%s16 + $0x28] sm:$0xf]
        %v6529 = vld [vmem:[%s16 + $0x2c] sm:$0xf]
        %v6530 = vld [vmem:[%s16 + $0x30] sm:$0xf]
        %v6531 = vld [vmem:[%s16 + $0x34] sm:$0xf]
        %v6532 = vld [vmem:[%s16 + $0x38] sm:$0xf]
        %v6533 = vld [vmem:[%s16 + $0x3c] sm:$0xf]
        %v6534 = vld [vmem:[%s16 + $0x40] sm:$0xf]
        %v6535 = vld [vmem:[%s16 + $0x44] sm:$0xf]
        %v6536 = vld [vmem:[%s16 + $0x48] sm:$0xf]
        %v6537 = vld [vmem:[%s16 + $0x4c] sm:$0xf]
        %v6538 = vld [vmem:[%s16 + $0x50] sm:$0xf]
        %v6539 = vld [vmem:[%s16 + $0x54] sm:$0xf]
        %v6540 = vld [vmem:[%s16 + $0x58] sm:$0xf]
        %v6541 = vld [vmem:[%s16 + $0x5c] sm:$0xf]
        %v6542 = vld [vmem:[%s16 + $0x60] sm:$0xf]
        %v6543 = vld [vmem:[%s16 + $0x64] sm:$0xf]
        %v6544 = vld [vmem:[%s16 + $0x68] sm:$0xf]
        %v6545 = vld [vmem:[%s16 + $0x6c] sm:$0xf]
        %v6546 = vld [vmem:[%s16 + $0x70] sm:$0xf]
        %v6547 = vld [vmem:[%s16 + $0x74] sm:$0xf]
        %v6548 = vld [vmem:[%s16 + $0x78] sm:$0xf]
        %v6549 = vld [vmem:[%s16 + $0x7c] sm:$0xf]
        %v6550 = vld [vmem:[#allocation21] sm:$0x1]
        %v6552 = vlaneseq
        %v6553 = vshrl.u32 %v6552, 7
        %v6554 = vsub.s32 0, %v6553
        %v6555 = vrot.slane %v6550, %v6554
        %v6589 = vunpack.c.l.b16 %v6518
        %v6590 = vunpack.c.l.b16 %v6519
        %v6591 = vunpack.c.l.b16 %v6520
        %v6592 = vunpack.c.l.b16 %v6521
        %v6593 = vunpack.c.l.b16 %v6522
        %v6594 = vunpack.c.l.b16 %v6523
        %v6595 = vunpack.c.l.b16 %v6524
        %v6596 = vunpack.c.l.b16 %v6525
        %v6597 = vunpack.c.l.b16 %v6526
        %v6598 = vunpack.c.l.b16 %v6527
        %v6599 = vunpack.c.l.b16 %v6528
        %v6600 = vunpack.c.l.b16 %v6529
        %v6601 = vunpack.c.l.b16 %v6530
        %v6602 = vunpack.c.l.b16 %v6531
        %v6603 = vunpack.c.l.b16 %v6532
        %v6604 = vunpack.c.l.b16 %v6533
        %v6605 = vunpack.c.l.b16 %v6534
        %v6606 = vunpack.c.l.b16 %v6535
        %v6607 = vunpack.c.l.b16 %v6536
        %v6608 = vunpack.c.l.b16 %v6537
        %v6609 = vunpack.c.l.b16 %v6538
        %v6610 = vunpack.c.l.b16 %v6539
        %v6611 = vunpack.c.l.b16 %v6540
        %v6612 = vunpack.c.l.b16 %v6541
        %v6613 = vunpack.c.l.b16 %v6542
        %v6614 = vunpack.c.l.b16 %v6543
        %v6615 = vunpack.c.l.b16 %v6544
        %v6616 = vunpack.c.l.b16 %v6545
        %v6617 = vunpack.c.l.b16 %v6546
        %v6618 = vunpack.c.l.b16 %v6547
        %v6619 = vunpack.c.l.b16 %v6548
        %v6620 = vunpack.c.l.b16 %v6549
        %v6621 = vpack.c.b16 %v6590, %v6589
        %v6622 = vpack.c.b16 %v6592, %v6591
        %v6623 = vpack.c.b16 %v6594, %v6593
        %v6624 = vpack.c.b16 %v6596, %v6595
        %v6625 = vpack.c.b16 %v6598, %v6597
        %v6626 = vpack.c.b16 %v6600, %v6599
        %v6627 = vpack.c.b16 %v6602, %v6601
        %v6628 = vpack.c.b16 %v6604, %v6603
        %v6629 = vpack.c.b16 %v6606, %v6605
        %v6630 = vpack.c.b16 %v6608, %v6607
        %v6631 = vpack.c.b16 %v6610, %v6609
        %v6632 = vpack.c.b16 %v6612, %v6611
        %v6633 = vpack.c.b16 %v6614, %v6613
        %v6634 = vpack.c.b16 %v6616, %v6615
        %v6635 = vpack.c.b16 %v6618, %v6617
        %v6636 = vpack.c.b16 %v6620, %v6619
        %6653 = vmatprep.subr.bf16.mxu0 0
        %6654 = vmatpush1.bf16.msra.mxu0 %v6628
        %6655 = vmatprep.subr.bf16.mxu0 0
        %6656 = vmatpush1.bf16.msra.mxu0 %v6627
        %6657 = vmatprep.subr.bf16.mxu0 0
        %6658 = vmatpush1.bf16.msra.mxu0 %v6626
        %6659 = vmatprep.subr.bf16.mxu0 0
        %6660 = vmatpush1.bf16.msra.mxu0 %v6625
        %6661 = vmatprep.subr.bf16.mxu0 0
        %6662 = vmatpush1.bf16.msra.mxu0 %v6624
        %6663 = vmatprep.subr.bf16.mxu0 0
        %6664 = vmatpush1.bf16.msra.mxu0 %v6623
        %6665 = vmatprep.subr.bf16.mxu0 0
        %6666 = vmatpush1.bf16.msra.mxu0 %v6622
        %6667 = vmatprep.subr.bf16.mxu0 0
        %6668 = vmatpush1.bf16.msra.mxu0 %v6621
        %6669 = vmatprep.subr.bf16.mxu0 0
        %6670 = vmatpush2.bf16.msra.mxu0 %v6636
        %6671 = vmatprep.subr.bf16.mxu0 0
        %6672 = vmatpush2.bf16.msra.mxu0 %v6635
        %6673 = vmatprep.subr.bf16.mxu0 0
        %6674 = vmatpush2.bf16.msra.mxu0 %v6634
        %6675 = vmatprep.subr.bf16.mxu0 0
        %6676 = vmatpush2.bf16.msra.mxu0 %v6633
        %6677 = vmatprep.subr.bf16.mxu0 0
        %6678 = vmatpush2.bf16.msra.mxu0 %v6632
        %6679 = vmatprep.subr.bf16.mxu0 0
        %6680 = vmatpush2.bf16.msra.mxu0 %v6631
        %6681 = vmatprep.subr.bf16.mxu0 0
        %6682 = vmatpush2.bf16.msra.mxu0 %v6630
        %6683 = vmatprep.subr.bf16.mxu0 0
        %6684 = vmatpush2.bf16.msra.mxu0 %v6629
        %6685 = vmatprep.mubr.bf16.mxu0 %v6517
        %6686 = vmatmul.mubr.bf16.gmra.mxu0 %v1448
        %v6687 = vpop.f32.mrf.mxu0
        %v6688 = vadd.f32 %v6555, %v6687
        %v6689 = vpop.f32.mrf.mxu0
        %v6690 = vpop.f32.mrf.mxu0
        %v6691 = vadd.f32 %v6555, %v6690
        %v6692 = vpop.f32.mrf.mxu0
        %6693 = vdwg.mxu0
        %v6694 = vmax.f32 %v6688, 0.0
        %v6695 = vmax.f32 %v6691, 0.0
        %v6696 = vpack.c.bf16 %v6695, %v6694
        %v6697 = vld [vmem:[%s18] sm:$0xf]
        %v6698 = vld [vmem:[%s18 + $0x4] sm:$0xf]
        %v6699 = vld [vmem:[%s18 + $0x8] sm:$0xf]
        %v6700 = vld [vmem:[%s18 + $0xc] sm:$0xf]
        %v6701 = vld [vmem:[%s18 + $0x10] sm:$0xf]
        %v6702 = vld [vmem:[%s18 + $0x14] sm:$0xf]
        %v6703 = vld [vmem:[%s18 + $0x18] sm:$0xf]
        %v6704 = vld [vmem:[%s18 + $0x1c] sm:$0xf]
        %v6705 = vld [vmem:[%s18 + $0x20] sm:$0xf]
        %v6706 = vld [vmem:[%s18 + $0x24] sm:$0xf]
        %v6707 = vld [vmem:[%s18 + $0x28] sm:$0xf]
        %v6708 = vld [vmem:[%s18 + $0x2c] sm:$0xf]
        %v6709 = vld [vmem:[%s18 + $0x30] sm:$0xf]
        %v6710 = vld [vmem:[%s18 + $0x34] sm:$0xf]
        %v6711 = vld [vmem:[%s18 + $0x38] sm:$0xf]
        %v6712 = vld [vmem:[%s18 + $0x3c] sm:$0xf]
        %v6713 = vld [vmem:[%s19] sm:$0x1]
        %v6715 = vlaneseq
        %v6716 = vshrl.u32 %v6715, 7
        %v6717 = vsub.s32 0, %v6716
        %v6718 = vrot.slane %v6713, %v6717
        %v6736 = vunpack.c.l.b16 %v6697
        %v6737 = vunpack.c.l.b16 %v6698
        %v6738 = vunpack.c.l.b16 %v6699
        %v6739 = vunpack.c.l.b16 %v6700
        %v6740 = vunpack.c.l.b16 %v6701
        %v6741 = vunpack.c.l.b16 %v6702
        %v6742 = vunpack.c.l.b16 %v6703
        %v6743 = vunpack.c.l.b16 %v6704
        %v6744 = vunpack.c.l.b16 %v6705
        %v6745 = vunpack.c.l.b16 %v6706
        %v6746 = vunpack.c.l.b16 %v6707
        %v6747 = vunpack.c.l.b16 %v6708
        %v6748 = vunpack.c.l.b16 %v6709
        %v6749 = vunpack.c.l.b16 %v6710
        %v6750 = vunpack.c.l.b16 %v6711
        %v6751 = vunpack.c.l.b16 %v6712
        %v6752 = vpack.c.b16 %v6737, %v6736
        %v6753 = vpack.c.b16 %v6739, %v6738
        %v6754 = vpack.c.b16 %v6741, %v6740
        %v6755 = vpack.c.b16 %v6743, %v6742
        %v6756 = vpack.c.b16 %v6745, %v6744
        %v6757 = vpack.c.b16 %v6747, %v6746
        %v6758 = vpack.c.b16 %v6749, %v6748
        %v6759 = vpack.c.b16 %v6751, %v6750
        %6768 = vmatprep.subr.bf16.mxu0 0
        %6769 = vmatpush1.bf16.msra.mxu0 %v6759
        %6770 = vmatprep.subr.bf16.mxu0 0
        %6771 = vmatpush1.bf16.msra.mxu0 %v6758
        %6772 = vmatprep.subr.bf16.mxu0 0
        %6773 = vmatpush1.bf16.msra.mxu0 %v6757
        %6774 = vmatprep.subr.bf16.mxu0 0
        %6775 = vmatpush1.bf16.msra.mxu0 %v6756
        %6776 = vmatprep.subr.bf16.mxu0 0
        %6777 = vmatpush1.bf16.msra.mxu0 %v6755
        %6778 = vmatprep.subr.bf16.mxu0 0
        %6779 = vmatpush1.bf16.msra.mxu0 %v6754
        %6780 = vmatprep.subr.bf16.mxu0 0
        %6781 = vmatpush1.bf16.msra.mxu0 %v6753
        %6782 = vmatprep.subr.bf16.mxu0 0
        %6783 = vmatpush1.bf16.msra.mxu0 %v6752
        %6784 = vmatprep.subr.bf16.mxu0 0
        %6785 = vmatpush2.bf16.msra.mxu0 0
        %6786 = vmatprep.subr.bf16.mxu0 0
        %6787 = vmatpush2.bf16.msra.mxu0 0
        %6788 = vmatprep.subr.bf16.mxu0 0
        %6789 = vmatpush2.bf16.msra.mxu0 0
        %6790 = vmatprep.subr.bf16.mxu0 0
        %6791 = vmatpush2.bf16.msra.mxu0 0
        %6792 = vmatprep.subr.bf16.mxu0 0
        %6793 = vmatpush2.bf16.msra.mxu0 0
        %6794 = vmatprep.subr.bf16.mxu0 0
        %6795 = vmatpush2.bf16.msra.mxu0 0
        %6796 = vmatprep.subr.bf16.mxu0 0
        %6797 = vmatpush2.bf16.msra.mxu0 0
        %6798 = vmatprep.subr.bf16.mxu0 0
        %6799 = vmatpush2.bf16.msra.mxu0 0
        %6800 = vmatprep.mubr.bf16.mxu0 0
        %6801 = vmatmul.mubr.bf16.gmra.mxu0 %v6696
        %v6802 = vpop.f32.mrf.mxu0
        %v6803 = vadd.f32 %v6718, %v6802
        %v6804 = vpop.f32.mrf.mxu0
        %v6805 = vpop.f32.mrf.mxu0
        %v6806 = vadd.f32 %v6718, %v6805
        %v6807 = vpop.f32.mrf.mxu0
        %6808 = vdwg.mxu0
        %v6809 = vmax.f32 %v6803, 0.0
        %v6810 = vmax.f32 %v6806, 0.0
        %6813 = vrot.lane.b32.xlu0 %v6809, 64
        %v6814 = vpop.permute.xlu0 %6813
        %6815 = vrot.lane.b32.xlu0 %v6810, 64
        %v6816 = vpop.permute.xlu0 %6815
        %v6819 = vsel %vm1215, %v1158, %v6814
        %v6820 = vsel %vm1215, %v1159, %v6816
        %v6821 = vpack.c.bf16 %v6820, %v6819
        %v6822 = vld [vmem:[%s20] sm:$0xf]
        %v6823 = vld [vmem:[%s20 + $0x4] sm:$0xf]
        %v6824 = vld [vmem:[%s20 + $0x8] sm:$0xf]
        %v6825 = vld [vmem:[%s20 + $0xc] sm:$0xf]
        %v6826 = vld [vmem:[%s20 + $0x10] sm:$0xf]
        %v6827 = vld [vmem:[%s20 + $0x14] sm:$0xf]
        %v6828 = vld [vmem:[%s20 + $0x18] sm:$0xf]
        %v6829 = vld [vmem:[%s20 + $0x1c] sm:$0xf]
        %v6830 = vld [vmem:[%s20 + $0x20] sm:$0xf]
        %v6831 = vld [vmem:[%s20 + $0x24] sm:$0xf]
        %v6832 = vld [vmem:[%s20 + $0x28] sm:$0xf]
        %v6833 = vld [vmem:[%s20 + $0x2c] sm:$0xf]
        %v6834 = vld [vmem:[%s20 + $0x30] sm:$0xf]
        %v6835 = vld [vmem:[%s20 + $0x34] sm:$0xf]
        %v6836 = vld [vmem:[%s20 + $0x38] sm:$0xf]
        %v6837 = vld [vmem:[%s20 + $0x3c] sm:$0xf]
        %v6838 = vld [vmem:[#allocation22] sm:$0x1]
        %v6840 = vlaneseq
        %v6841 = vshrl.u32 %v6840, 7
        %v6842 = vsub.s32 0, %v6841
        %v6843 = vrot.slane %v6838, %v6842
        %v6861 = vunpack.c.l.b16 %v6822
        %v6862 = vunpack.c.l.b16 %v6823
        %v6863 = vunpack.c.l.b16 %v6824
        %v6864 = vunpack.c.l.b16 %v6825
        %v6865 = vunpack.c.l.b16 %v6826
        %v6866 = vunpack.c.l.b16 %v6827
        %v6867 = vunpack.c.l.b16 %v6828
        %v6868 = vunpack.c.l.b16 %v6829
        %v6869 = vunpack.c.l.b16 %v6830
        %v6870 = vunpack.c.l.b16 %v6831
        %v6871 = vunpack.c.l.b16 %v6832
        %v6872 = vunpack.c.l.b16 %v6833
        %v6873 = vunpack.c.l.b16 %v6834
        %v6874 = vunpack.c.l.b16 %v6835
        %v6875 = vunpack.c.l.b16 %v6836
        %v6876 = vunpack.c.l.b16 %v6837
        %v6877 = vpack.c.b16 %v6862, %v6861
        %v6878 = vpack.c.b16 %v6864, %v6863
        %v6879 = vpack.c.b16 %v6866, %v6865
        %v6880 = vpack.c.b16 %v6868, %v6867
        %v6881 = vpack.c.b16 %v6870, %v6869
        %v6882 = vpack.c.b16 %v6872, %v6871
        %v6883 = vpack.c.b16 %v6874, %v6873
        %v6884 = vpack.c.b16 %v6876, %v6875
        %6893 = vmatprep.subr.bf16.mxu0 0
        %6894 = vmatpush1.bf16.msra.mxu0 %v6884
        %6895 = vmatprep.subr.bf16.mxu0 0
        %6896 = vmatpush1.bf16.msra.mxu0 %v6883
        %6897 = vmatprep.subr.bf16.mxu0 0
        %6898 = vmatpush1.bf16.msra.mxu0 %v6882
        %6899 = vmatprep.subr.bf16.mxu0 0
        %6900 = vmatpush1.bf16.msra.mxu0 %v6881
        %6901 = vmatprep.subr.bf16.mxu0 0
        %6902 = vmatpush1.bf16.msra.mxu0 %v6880
        %6903 = vmatprep.subr.bf16.mxu0 0
        %6904 = vmatpush1.bf16.msra.mxu0 %v6879
        %6905 = vmatprep.subr.bf16.mxu0 0
        %6906 = vmatpush1.bf16.msra.mxu0 %v6878
        %6907 = vmatprep.subr.bf16.mxu0 0
        %6908 = vmatpush1.bf16.msra.mxu0 %v6877
        %6909 = vmatprep.subr.bf16.mxu0 0
        %6910 = vmatpush2.bf16.msra.mxu0 0
        %6911 = vmatprep.subr.bf16.mxu0 0
        %6912 = vmatpush2.bf16.msra.mxu0 0
        %6913 = vmatprep.subr.bf16.mxu0 0
        %6914 = vmatpush2.bf16.msra.mxu0 0
        %6915 = vmatprep.subr.bf16.mxu0 0
        %6916 = vmatpush2.bf16.msra.mxu0 0
        %6917 = vmatprep.subr.bf16.mxu0 0
        %6918 = vmatpush2.bf16.msra.mxu0 0
        %6919 = vmatprep.subr.bf16.mxu0 0
        %6920 = vmatpush2.bf16.msra.mxu0 0
        %6921 = vmatprep.subr.bf16.mxu0 0
        %6922 = vmatpush2.bf16.msra.mxu0 0
        %6923 = vmatprep.subr.bf16.mxu0 0
        %6924 = vmatpush2.bf16.msra.mxu0 0
        %6925 = vmatprep.mubr.bf16.mxu0 0
        %6926 = vmatmul.mubr.bf16.gmra.mxu0 %v6821
        %v6927 = vpop.f32.mrf.mxu0
        %v6928 = vadd.f32 %v6843, %v6927
        %v6929 = vpop.f32.mrf.mxu0
        %v6930 = vpop.f32.mrf.mxu0
        %v6931 = vadd.f32 %v6843, %v6930
        %v6932 = vpop.f32.mrf.mxu0
        %6933 = vdwg.mxu0
        %v6934 = vmax.f32 %v6928, 0.0
        %v6935 = vmax.f32 %v6931, 0.0
        %v6936 = vpack.c.bf16 %v6935, %v6934
        %v6937 = vld [vmem:[%s22] sm:$0xf]
        %v6938 = vld [vmem:[%s22 + $0x4] sm:$0xf]
        %v6939 = vld [vmem:[%s22 + $0x8] sm:$0xf]
        %v6940 = vld [vmem:[%s22 + $0xc] sm:$0xf]
        %v6941 = vld [vmem:[%s22 + $0x10] sm:$0xf]
        %v6942 = vld [vmem:[%s22 + $0x14] sm:$0xf]
        %v6943 = vld [vmem:[%s22 + $0x18] sm:$0xf]
        %v6944 = vld [vmem:[%s22 + $0x1c] sm:$0xf]
        %v6945 = vld [vmem:[#allocation24] sm:$0x1]
        %v6947 = vlaneseq
        %v6948 = vshrl.u32 %v6947, 7
        %v6949 = vsub.s32 0, %v6948
        %v6950 = vrot.slane %v6945, %v6949
        %v6960 = vunpack.c.l.b16 %v6937
        %v6961 = vunpack.c.l.b16 %v6938
        %v6962 = vunpack.c.l.b16 %v6939
        %v6963 = vunpack.c.l.b16 %v6940
        %v6964 = vunpack.c.l.b16 %v6941
        %v6965 = vunpack.c.l.b16 %v6942
        %v6966 = vunpack.c.l.b16 %v6943
        %v6967 = vunpack.c.l.b16 %v6944
        %v6968 = vpack.c.b16 %v6961, %v6960
        %v6969 = vpack.c.b16 %v6963, %v6962
        %v6970 = vpack.c.b16 %v6965, %v6964
        %v6971 = vpack.c.b16 %v6967, %v6966
        %v6977 = vsel %vm1215, %v6936, 0
        %6979 = vmatprep.subr.bf16.mxu0 0
        %6980 = vmatpush1.bf16.msra.mxu0 0
        %6981 = vmatprep.subr.bf16.mxu0 0
        %6982 = vmatpush1.bf16.msra.mxu0 0
        %6983 = vmatprep.subr.bf16.mxu0 0
        %6984 = vmatpush1.bf16.msra.mxu0 0
        %6985 = vmatprep.subr.bf16.mxu0 0
        %6986 = vmatpush1.bf16.msra.mxu0 0
        %6987 = vmatprep.subr.bf16.mxu0 0
        %6988 = vmatpush1.bf16.msra.mxu0 %v6971
        %6989 = vmatprep.subr.bf16.mxu0 0
        %6990 = vmatpush1.bf16.msra.mxu0 %v6970
        %6991 = vmatprep.subr.bf16.mxu0 0
        %6992 = vmatpush1.bf16.msra.mxu0 %v6969
        %6993 = vmatprep.subr.bf16.mxu0 0
        %6994 = vmatpush1.bf16.msra.mxu0 %v6968
        %6995 = vmatprep.subr.bf16.mxu0 0
        %6996 = vmatpush2.bf16.msra.mxu0 0
        %6997 = vmatprep.subr.bf16.mxu0 0
        %6998 = vmatpush2.bf16.msra.mxu0 0
        %6999 = vmatprep.subr.bf16.mxu0 0
        %7000 = vmatpush2.bf16.msra.mxu0 0
        %7001 = vmatprep.subr.bf16.mxu0 0
        %7002 = vmatpush2.bf16.msra.mxu0 0
        %7003 = vmatprep.subr.bf16.mxu0 0
        %7004 = vmatpush2.bf16.msra.mxu0 0
        %7005 = vmatprep.subr.bf16.mxu0 0
        %7006 = vmatpush2.bf16.msra.mxu0 0
        %7007 = vmatprep.subr.bf16.mxu0 0
        %7008 = vmatpush2.bf16.msra.mxu0 0
        %7009 = vmatprep.subr.bf16.mxu0 0
        %7010 = vmatpush2.bf16.msra.mxu0 0
        %7011 = vmatprep.mubr.bf16.mxu0 0
        %7012 = vmatmul.mubr.bf16.gmra.mxu0 %v6977
        %v7013 = vpop.f32.mrf.mxu0
        %v7014 = vadd.f32 %v6950, %v7013
        %v7015 = vpop.f32.mrf.mxu0
        %v7016 = vpop.f32.mrf.mxu0
        %v7017 = vadd.f32 %v6950, %v7016
        %v7018 = vpop.f32.mrf.mxu0
        %7019 = vdwg.mxu0
        %v7020 = vxor.u32 %v7014, 2147483648
        %v7021 = vxor.u32 %v7017, 2147483648
        %v7022 = vmul.f32 %v7020, 1.442695
        %v7023 = vpow.pop %v7022
        %v7024 = vmul.f32 %v7021, 1.442695
        %v7025 = vpow.pop %v7024
        %v7026 = vadd.f32 %v7023, 1.0
        %v7027 = vadd.f32 %v7025, 1.0
        %v7028 = vrcp.pop %v7026
        %v7029 = vmul.f32 1.0, %v7028
        %v7030 = vrcp.pop %v7027
        %v7031 = vmul.f32 1.0, %v7030
        %7032 = vst.msk [vmem:[%s939] sm:$0xff] %vm1001, %v7029
        %7033 = vst.msk [vmem:[%s939 + $0x8] sm:$0xff] %vm1001, %v7031
        %p7034 = scmp.lt.s32.totalorder %s43, 1
        %s7035 = scalar_select %p7034, %s43, 1
        %s7036 = smul.addr %s7035, 2
        %s7037 = smul.addr %s7036, 8
        %s7038 = scalar_lea.vmem %s24, %s7037
        // Predicated region
        $region177: #{unet_forward.1} parent=115 // pred_check
          %p7039 = pneg %p570
        $region178: #{unet_forward.1} parent=115 // pred_check_branch
          %7041 = sbr.rel (%p7039) target = $region180
        $region179: #{unet_forward.1} parent=115 // pred_region
          _
        $region180: #{unet_forward.1} parent=115 // pred_fallthru
          _
      $region116: #{unet_forward.1} parent=5 // pred_fallthru
        _
      %p7042 = scmp.le.s32.totalorder 2, %s38
      // Predicated region
      $region181: #{unet_forward.1} parent=5 // pred_check
        %p7043 = pneg %p7042
      $region182: #{unet_forward.1} parent=5 // pred_check_branch
        %7045 = sbr.rel (%p7043) target = $region184
      $region183: #{unet_forward.1} parent=5 // pred_region
        %s7046 = ssub.s32 %s38, 2
        // Predicated region
        $region185: #{unet_forward.1} parent=183 // pred_check
          %p7047 = pneg %p576
        $region186: #{unet_forward.1} parent=183 // pred_check_branch
          %7049 = sbr.rel (%p7047) target = $region188
        $region187: #{unet_forward.1} parent=183 // pred_region
          %p7050 = scmp.lt.s32.totalorder %s44, 1
          %s7051 = scalar_select %p7050, %s44, 1
          %s7052 = smul.addr %s7051, 2
          %s7053 = smul.addr %s7052, 8
          %s7054 = scalar_lea.vmem %s24, %s7053
        $region188: #{unet_forward.1} parent=183 // pred_fallthru
          _
      $region184: #{unet_forward.1} parent=5 // pred_fallthru
        _
    $region6: #{unet_forward.1} parent=1 // loop_footer
      %s42 = sadd.s32 1, %s38
    $region7: #{unet_forward.1} parent=1 // loop_footer_branch
      %37 = sbr.rel target = $region3
    $region8: #{unet_forward.1} parent=1 // loop_exit
      _
    %7055 = vsyncpa [#allocation3], 1
    %s7056 = scalar_lea.sflag [#allocation3], 1
    %7057 = vsyncpa %s7056, 1
    %7058 = vsyncpa [#allocation5], 1
    %7059 = vsyncpa [#allocation8], 1
    %7060 = vsyncpa [#allocation11], 1
    %7061 = vsyncpa [#allocation14], 1
    %7062 = vsyncpa [#allocation17], 1
    %7063 = vsyncpa [#allocation20], 1
    %7064 = vsyncpa [#allocation23], 1

</llo_original>
